<compile_context>
chip_gen: v7x
topology: tpu7x:2x2x1
jax: 0.10.0
libtpu: 0.0.40
codegen_flags: <defaults>
</compile_context>

<pallas_src>
import functools

import jax
import jax.numpy as jnp
import numpy as np
from jax.experimental import pallas as pl
from jax.experimental.pallas import tpu as pltpu

HIGHEST = jax.lax.Precision.HIGHEST


def _txa_kernel(x_ref, r2_ref, e2_ref, wt_ref, wck_ref, scales_ref, y_ref,
                *, bb, t, hw, n_chunk):
    # x_ref   : (M, CHW)        lane-dense input slab, M = bb*t
    # r2_ref  : (2*CHW, C) bf16 [R; R], R[c*HW+hw, c] = 1   (spatial reduce)
    # e2_ref  : (2*C, CHW) bf16 [E; E], E[c, c*HW+hw] = 1   (lane expansion)
    # wt_ref  : (t, 3t)   f32   folded conv_t weights
    # wck_ref : (18*C, C) bf16  [wc_hi; wc_hi; wc_lo]       (conv_c, hi/lo)
    # scales_ref : (2,)   SMEM  [scale_t, scale_c]
    m, chw = x_ref.shape
    c = r2_ref.shape[1]
    f32 = jnp.float32

    # ---- 1. spatial mean over HW --------------------------------------
    # Single K-stacked hi/lo bf16 matmul; the MXU's f32 accumulation does the
    # hi+lo sum for free.  1/HW applied exactly in f32 afterwards.
    x = x_ref[...].astype(f32)
    x_hi = x.astype(jnp.bfloat16)
    x_lo = (x - x_hi.astype(f32)).astype(jnp.bfloat16)
    xk = jnp.concatenate([x_hi, x_lo], axis=-1)                  # (m, 2*chw)
    x_t2 = jnp.dot(xk, r2_ref[...],
                   preferred_element_type=f32) * (1.0 / hw)      # (m, c)
    x_t3 = x_t2.reshape(bb, t, c)                                # (bb, t, c)

    # ---- 2. conv_t : Conv1d(T->T, k=3, pad 1/1) over the C axis --------
    # x3[b, j*t + i, l] = x_t[b, i, l + j - 1]  (zero padded)
    zl = jnp.zeros((bb, t, 1), f32)
    xp = jnp.concatenate([zl, x_t3, zl], axis=-1)                # (bb, t, c+2)
    x3 = jnp.concatenate([xp[:, :, j:j + c] for j in range(3)], axis=1)
    wt_b = jnp.broadcast_to(wt_ref[...], (bb, t, 3 * t))
    conv_t = jnp.einsum('bok,bkl->bol', wt_b, x3,
                        precision=HIGHEST,
                        preferred_element_type=f32)              # (bb, t, c)
    conv_t = conv_t.reshape(m, c)

    # ---- 3. conv_c : Conv1d(C->C, k=6, pad 2/3) over the T axis --------
    # X6[b*t + tt, j*c + i] = x_t[b, tt + j - 2, i]  (zero padded)
    z2 = jnp.zeros((bb, 2, c), f32)
    z3 = jnp.zeros((bb, 3, c), f32)
    xq = jnp.concatenate([z2, x_t3, z3], axis=1)                 # (bb, t+5, c)
    x6 = jnp.concatenate([xq[:, j:j + t, :] for j in range(6)], axis=-1)
    x6 = x6.reshape(m, 6 * c)
    x6_hi = x6.astype(jnp.bfloat16)
    x6_lo = (x6 - x6_hi.astype(f32)).astype(jnp.bfloat16)
    # [x6_hi | x6_lo | x6_hi] @ [wc_hi; wc_hi; wc_lo] = hi*hi + lo*hi + hi*lo
    x6k = jnp.concatenate([x6_hi, x6_lo, x6_hi], axis=-1)        # (m, 18c)
    conv_c = jnp.dot(x6k, wck_ref[...],
                     preferred_element_type=f32)                 # (m, c)

    # ---- 4. sigmoid gates, folded into a sum and a product --------------
    a_t = jax.nn.sigmoid(conv_t) * scales_ref[0]
    a_c = jax.nn.sigmoid(conv_c) * scales_ref[1]
    # (x + A_t)(x + A_c) = x*(x + expand(a_t + a_c)) + expand(a_t * a_c)
    gsum = a_t + a_c
    gprod = a_t * a_c

    def _hilo(v):
        hi = v.astype(jnp.bfloat16)
        return hi, (v - hi.astype(f32)).astype(jnp.bfloat16)

    s_hi, s_lo = _hilo(gsum)
    p_hi, p_lo = _hilo(gprod)
    gates = jnp.concatenate(
        [jnp.concatenate([s_hi, s_lo], axis=-1),
         jnp.concatenate([p_hi, p_lo], axis=-1)], axis=0)        # (2m, 2c)

    # ---- 5. lane expansion + gating + store, chunked over the lane axis --
    # One (2m, 2c) @ (2c, n_chunk) matmul per chunk: hi/lo summed by the MXU,
    # sum/product gates share the issue.  Chunking caps the f32 intermediates.
    for n0 in range(0, chw, n_chunk):
        sp = jnp.dot(gates, e2_ref[:, n0:n0 + n_chunk],
                     preferred_element_type=f32)                 # (2m, n_chunk)
        xch = x_ref[:, n0:n0 + n_chunk].astype(f32)
        y_ref[:, n0:n0 + n_chunk] = (
            xch * (xch + sp[:m, :]) + sp[m:, :]).astype(y_ref.dtype)


def _is_dual_tensorcore():
    # v7x packs 2 TensorCores/chip; single-TC v5e/v6e should not split blocks
    # just to create extra (serial) grid steps.
    try:
        kind = jax.devices()[0].device_kind.lower()
    except Exception:
        return False
    return "v7" in kind


def _pick_bb(batch, t, *, max_rows=256, want_multi_step=False):
    """Batch elements packed per grid step.

    Largest divisor of `batch` whose row count bb*t fits `max_rows` (MXU-filled
    but VMEM-safe on v7x) while keeping the block 8-row aligned as the
    BlockSpec (8,128) rule requires; falls back to the smallest aligned
    divisor.  On dual-TC chips keep >=2 grid steps only if each step still
    gets >=128 rows.
    """
    divisors = [d for d in range(1, batch + 1) if batch % d == 0]
    aligned = [d for d in divisors if (d * t) % 8 == 0] or [batch]
    fitting = [d for d in aligned if d * t <= max_rows] or [min(aligned)]
    best = max(fitting)
    if want_multi_step:
        multi = [d for d in fitting if batch // d >= 2 and d * t >= 128]
        if multi:
            best = max(multi)
    return best
    # TODO(synk): split very long T across grid steps when a single batch
    # element alone exceeds the row budget.


def t_xa_forward(x_seq, w_t, w_c, scale_t, scale_c):
    B, T, C, H, W = x_seq.shape
    HW = H * W
    CHW = C * HW

    bb = _pick_bb(B, T, max_rows=256, want_multi_step=_is_dual_tensorcore())
    blk_rows = bb * T
    grid = (B // bb,)
    n_chunk = 2048 if (CHW > 2048 and CHW % 2048 == 0) else CHW

    # lane-dense view: free reshape, no data movement
    x = x_seq.reshape(B * T, CHW)

    # conv_t folded weights: Wt[o, j*T + i] = w_t[o, i, j]
    wt_cat = jnp.transpose(w_t, (0, 2, 1)).reshape(T, 3 * T).astype(jnp.float32)

    # conv_c folded weights with host-side hi/lo bf16 split:
    #   Wc[j*C + i, o] = w_c[o, i, j];  kernel pairs [x6_hi|x6_lo|x6_hi] with
    #   [wc_hi; wc_hi; wc_lo]  ->  hi*hi + lo*hi + hi*lo  (lo*lo dropped).
    wc_cat = jnp.transpose(w_c, (2, 1, 0)).reshape(6 * C, C).astype(jnp.float32)
    wc_hi = wc_cat.astype(jnp.bfloat16)
    wc_lo = (wc_cat - wc_hi.astype(jnp.float32)).astype(jnp.bfloat16)
    wck = jnp.concatenate([wc_hi, wc_hi, wc_lo], axis=0)         # (18C, C)

    # Exact 0/1 selection matrices (bf16): E expands channel gates to lanes,
    # R = E.T reduces lanes to channels (1/HW applied in f32 inside the kernel).
    grp = jnp.arange(CHW, dtype=jnp.int32) // HW
    e_mat = (jnp.arange(C, dtype=jnp.int32)[:, None] == grp[None, :])
    e_mat = e_mat.astype(jnp.bfloat16)                           # (C, CHW)
    e2 = jnp.concatenate([e_mat, e_mat], axis=0)                 # (2C, CHW)
    r2 = jnp.concatenate([e_mat.T, e_mat.T], axis=0)             # (2CHW, C)

    scales = jnp.stack([scale_t, scale_c]).astype(jnp.float32)

    kernel = functools.partial(_txa_kernel, bb=bb, t=T, hw=HW, n_chunk=n_chunk)

    n_elem = B * T * CHW
    mt = B * T
    cost = pl.CostEstimate(
        flops=int(4 * n_elem                       # gating elementwise
                  + 2 * mt * (2 * CHW) * C         # K-stacked reduce
                  + 2 * (2 * mt) * (2 * C) * CHW   # fused gate expansion
                  + 2 * mt * (18 * C) * C          # conv_c
                  + 2 * mt * (3 * T) * T),         # conv_t
        transcendentals=int(2 * mt * C),
        bytes_accessed=int(2 * n_elem * 4 + 4 * CHW * C * 2 + 18 * C * C * 2),
    )

    # Resident constants: constant index_map + single buffer (no re-fetch,
    # no double-buffer VMEM cost).
    resident = functools.partial(pl.BlockSpec, pipeline_mode=pl.Buffered(1))

    y = pl.pallas_call(
        kernel,
        out_shape=jax.ShapeDtypeStruct((B * T, CHW), x_seq.dtype),
        grid_spec=pltpu.PrefetchScalarGridSpec(
            num_scalar_prefetch=0,
            grid=grid,
            in_specs=[
                pl.BlockSpec((blk_rows, CHW), lambda i: (i, 0)),
                resident((2 * CHW, C), lambda i: (0, 0)),        # R2
                resident((2 * C, CHW), lambda i: (0, 0)),        # E2
                resident((T, 3 * T), lambda i: (0, 0)),          # Wt
                resident((18 * C, C), lambda i: (0, 0)),         # Wc (hi/lo)
                pl.BlockSpec(memory_space=pltpu.MemorySpace.SMEM),  # scales
            ],
            out_specs=pl.BlockSpec((blk_rows, CHW), lambda i: (i, 0)),
        ),
        compiler_params=pltpu.CompilerParams(
            dimension_semantics=("parallel",),
            vmem_limit_bytes=40 * 1024 * 1024,
        ),
        cost_estimate=cost,
    )(x, r2, e2, wt_cat, wck, scales)

    return y.reshape(B, T, C, H, W)


def t_xa_reference(x_seq, w_t, w_c, scale_t, scale_c):
    # Pure-JAX reference mirroring the PyTorch forward exactly.
    B, T, C, H, W = x_seq.shape
    x_t = jnp.mean(x_seq, axis=(3, 4))                           # (B, T, C)

    # conv_t: channels T, length C, k=3, pad (1, 1)
    xt_pad = jnp.pad(x_t, ((0, 0), (0, 0), (1, 1)))
    conv_t = jnp.zeros_like(x_t)
    for j in range(3):
        conv_t = conv_t + jnp.einsum('oi,bil->bol', w_t[:, :, j],
                                     xt_pad[:, :, j:j + C], precision=HIGHEST)
    attn_t = jax.nn.sigmoid(conv_t)

    # conv_c: channels C, length T, k=6, pad (2, 3)
    x_c = jnp.transpose(x_t, (0, 2, 1))                          # (B, C, T)
    xc_pad = jnp.pad(x_c, ((0, 0), (0, 0), (2, 3)))
    conv_c = jnp.zeros_like(x_c)
    for j in range(6):
        conv_c = conv_c + jnp.einsum('oi,bil->bol', w_c[:, :, j],
                                     xc_pad[:, :, j:j + T], precision=HIGHEST)
    attn_c = jax.nn.sigmoid(jnp.transpose(conv_c, (0, 2, 1)))

    a_t = attn_t * scale_t
    a_c = attn_c * scale_c
    return (x_seq + a_t[..., None, None]) * (x_seq + a_c[..., None, None])


if __name__ == "__main__":
    B, T, C, H, W = 2, 8, 64, 8, 8        # C must be 64 (conv_c in_channels)
    key = jax.random.PRNGKey(0)
    kx, kt, kc = jax.random.split(key, 3)

    x_seq = jax.random.normal(kx, (B, T, C, H, W), dtype=jnp.float32)
    w_t = jax.random.normal(kt, (T, T, 3), dtype=jnp.float32) * 0.1   # Conv1d(T,T,3)
    w_c = jax.random.normal(kc, (C, C, 6), dtype=jnp.float32) * 0.05  # Conv1d(64,64,6)
    scale_t = jnp.float32(1.0)
    scale_c = jnp.float32(1.0)

    y = jax.block_until_ready(t_xa_forward(x_seq, w_t, w_c, scale_t, scale_c))

    y_ref = t_xa_reference(x_seq, w_t, w_c, scale_t, scale_c)
    np.testing.assert_allclose(np.asarray(y), np.asarray(y_ref),
                               rtol=1e-4, atol=1e-4)
    print("KERNEL_OK")
</pallas_src>

<mosaic_0001>
module attributes {stable_mosaic.version = 11 : i64} {
  func.func @_txa_kernel(%arg0: i32, %arg1: memref<16x4096xf32, #tpu.memory_space<vmem>>, %arg2: memref<8192x64xbf16, #tpu.memory_space<vmem>>, %arg3: memref<128x4096xbf16, #tpu.memory_space<vmem>>, %arg4: memref<8x24xf32, #tpu.memory_space<vmem>>, %arg5: memref<1152x64xbf16, #tpu.memory_space<vmem>>, %arg6: memref<2xf32, #tpu.memory_space<smem>>, %arg7: memref<16x4096xf32, #tpu.memory_space<vmem>>) attributes {dimension_semantics = [#tpu.dimension_semantics<parallel>], iteration_bounds = array<i64: 1>, scalar_prefetch = 0 : i64, scratch_operands = 0 : i64, tpu.core_type = #tpu.core_type<tc>, window_params = [{transform_indices = @transform_0, window_bounds = array<i64: 16, 4096>}, {pipeline_mode = #tpu.pipeline_mode<synchronous>, transform_indices = @transform_1, window_bounds = array<i64: 8192, 64>}, {pipeline_mode = #tpu.pipeline_mode<synchronous>, transform_indices = @transform_2, window_bounds = array<i64: 128, 4096>}, {pipeline_mode = #tpu.pipeline_mode<synchronous>, transform_indices = @transform_3, window_bounds = array<i64: 8, 24>}, {pipeline_mode = #tpu.pipeline_mode<synchronous>, transform_indices = @transform_4, window_bounds = array<i64: 1152, 64>}, {transform_indices = @transform_5, window_bounds = array<i64: 2>}, {transform_indices = @transform_6, window_bounds = array<i64: 16, 4096>}]} {
    %c0 = arith.constant 0 : index
    %c0_0 = arith.constant 0 : index
    %0 = vector.load %arg1[%c0, %c0_0] : memref<16x4096xf32, #tpu.memory_space<vmem>>, vector<16x4096xf32>
    %1 = arith.truncf %0 : vector<16x4096xf32> to vector<16x4096xbf16>
    %2 = arith.extf %1 : vector<16x4096xbf16> to vector<16x4096xf32>
    %3 = arith.subf %0, %2 : vector<16x4096xf32>
    %4 = arith.truncf %3 : vector<16x4096xf32> to vector<16x4096xbf16>
    %5 = tpu.concatenate %1, %4 in 1 : vector<16x4096xbf16>, vector<16x4096xbf16> -> vector<16x8192xbf16>
    %c0_1 = arith.constant 0 : index
    %c0_2 = arith.constant 0 : index
    %6 = vector.load %arg2[%c0_1, %c0_2] : memref<8192x64xbf16, #tpu.memory_space<vmem>>, vector<8192x64xbf16>
    %cst = arith.constant dense<0.000000e+00> : vector<16x64xf32>
    %7 = tpu.matmul %5, %6, %cst {dimension_numbers = #tpu.dot_dimension_numbers<[1], [0], [0], [1], [0, 0, 1, 1], [], []>} : vector<16x8192xbf16>, vector<8192x64xbf16>, vector<16x64xf32> -> vector<16x64xf32>
    %cst_3 = arith.constant 1.562500e-02 : f32
    %8 = vector.broadcast %cst_3 : f32 to vector<16x64xf32>
    %9 = arith.mulf %7, %8 : vector<16x64xf32>
    %10 = vector.shape_cast %9 : vector<16x64xf32> to vector<2x8x64xf32>
    %cst_4 = arith.constant 0.000000e+00 : f32
    %11 = vector.broadcast %cst_4 : f32 to vector<2x8x1xf32>
    %12 = tpu.concatenate %11, %10, %11 in 2 : vector<2x8x1xf32>, vector<2x8x64xf32>, vector<2x8x1xf32> -> vector<2x8x66xf32>
    %13 = vector.extract_strided_slice %12 {offsets = [0, 0, 0], sizes = [2, 8, 64], strides = [1, 1, 1]} : vector<2x8x66xf32> to vector<2x8x64xf32>
    %14 = vector.extract_strided_slice %12 {offsets = [0, 0, 1], sizes = [2, 8, 64], strides = [1, 1, 1]} : vector<2x8x66xf32> to vector<2x8x64xf32>
    %15 = vector.extract_strided_slice %12 {offsets = [0, 0, 2], sizes = [2, 8, 64], strides = [1, 1, 1]} : vector<2x8x66xf32> to vector<2x8x64xf32>
    %16 = tpu.concatenate %13, %14, %15 in 1 : vector<2x8x64xf32>, vector<2x8x64xf32>, vector<2x8x64xf32> -> vector<2x24x64xf32>
    %c0_5 = arith.constant 0 : index
    %c0_6 = arith.constant 0 : index
    %17 = vector.load %arg4[%c0_5, %c0_6] : memref<8x24xf32, #tpu.memory_space<vmem>>, vector<8x24xf32>
    %18 = vector.shape_cast %17 : vector<8x24xf32> to vector<1x8x24xf32>
    %19 = vector.broadcast %18 : vector<1x8x24xf32> to vector<2x8x24xf32>
    "tpu.trace_start"() <{level = 10 : i32, message = "bok,bkl->bol"}> : () -> ()
    %cst_7 = arith.constant dense<0.000000e+00> : vector<2x8x64xf32>
    %20 = tpu.matmul %19, %16, %cst_7 {dimension_numbers = #tpu.dot_dimension_numbers<[2], [1], [1], [2], [0, 0, 0, 1, 1, 2], [0], [0]>, precision = #tpu.contract_precision<fp32>} : vector<2x8x24xf32>, vector<2x24x64xf32>, vector<2x8x64xf32> -> vector<2x8x64xf32>
    "tpu.trace_stop"() : () -> ()
    %21 = vector.shape_cast %20 : vector<2x8x64xf32> to vector<16x64xf32>
    %cst_8 = arith.constant 0.000000e+00 : f32
    %22 = vector.broadcast %cst_8 : f32 to vector<2x2x64xf32>
    %cst_9 = arith.constant 0.000000e+00 : f32
    %23 = vector.broadcast %cst_9 : f32 to vector<2x3x64xf32>
    %24 = tpu.concatenate %22, %10, %23 in 1 : vector<2x2x64xf32>, vector<2x8x64xf32>, vector<2x3x64xf32> -> vector<2x13x64xf32>
    %25 = vector.extract_strided_slice %24 {offsets = [0, 0, 0], sizes = [2, 8, 64], strides = [1, 1, 1]} : vector<2x13x64xf32> to vector<2x8x64xf32>
    %26 = vector.extract_strided_slice %24 {offsets = [0, 1, 0], sizes = [2, 8, 64], strides = [1, 1, 1]} : vector<2x13x64xf32> to vector<2x8x64xf32>
    %27 = vector.extract_strided_slice %24 {offsets = [0, 2, 0], sizes = [2, 8, 64], strides = [1, 1, 1]} : vector<2x13x64xf32> to vector<2x8x64xf32>
    %28 = vector.extract_strided_slice %24 {offsets = [0, 3, 0], sizes = [2, 8, 64], strides = [1, 1, 1]} : vector<2x13x64xf32> to vector<2x8x64xf32>
    %29 = vector.extract_strided_slice %24 {offsets = [0, 4, 0], sizes = [2, 8, 64], strides = [1, 1, 1]} : vector<2x13x64xf32> to vector<2x8x64xf32>
    %30 = vector.extract_strided_slice %24 {offsets = [0, 5, 0], sizes = [2, 8, 64], strides = [1, 1, 1]} : vector<2x13x64xf32> to vector<2x8x64xf32>
    %31 = tpu.concatenate %25, %26, %27, %28, %29, %30 in 2 : vector<2x8x64xf32>, vector<2x8x64xf32>, vector<2x8x64xf32>, vector<2x8x64xf32>, vector<2x8x64xf32>, vector<2x8x64xf32> -> vector<2x8x384xf32>
    %32 = vector.shape_cast %31 : vector<2x8x384xf32> to vector<16x384xf32>
    %33 = arith.truncf %32 : vector<16x384xf32> to vector<16x384xbf16>
    %34 = arith.extf %33 : vector<16x384xbf16> to vector<16x384xf32>
    %35 = arith.subf %32, %34 : vector<16x384xf32>
    %36 = arith.truncf %35 : vector<16x384xf32> to vector<16x384xbf16>
    %37 = tpu.concatenate %33, %36, %33 in 1 : vector<16x384xbf16>, vector<16x384xbf16>, vector<16x384xbf16> -> vector<16x1152xbf16>
    %c0_10 = arith.constant 0 : index
    %c0_11 = arith.constant 0 : index
    %38 = vector.load %arg5[%c0_10, %c0_11] : memref<1152x64xbf16, #tpu.memory_space<vmem>>, vector<1152x64xbf16>
    %cst_12 = arith.constant dense<0.000000e+00> : vector<16x64xf32>
    %39 = tpu.matmul %37, %38, %cst_12 {dimension_numbers = #tpu.dot_dimension_numbers<[1], [0], [0], [1], [0, 0, 1, 1], [], []>} : vector<16x1152xbf16>, vector<1152x64xbf16>, vector<16x64xf32> -> vector<16x64xf32>
    %40 = arith.negf %21 : vector<16x64xf32>
    %41 = math.exp %40 : vector<16x64xf32>
    %cst_13 = arith.constant 1.000000e+00 : f32
    %42 = vector.broadcast %cst_13 : f32 to vector<16x64xf32>
    %43 = arith.addf %42, %41 : vector<16x64xf32>
    %44 = arith.divf %42, %43 : vector<16x64xf32>
    %c0_14 = arith.constant 0 : index
    %45 = memref.load %arg6[%c0_14] : memref<2xf32, #tpu.memory_space<smem>>
    %46 = vector.broadcast %45 : f32 to vector<16x64xf32>
    %47 = arith.mulf %44, %46 : vector<16x64xf32>
    %48 = arith.negf %39 : vector<16x64xf32>
    %49 = math.exp %48 : vector<16x64xf32>
    %cst_15 = arith.constant 1.000000e+00 : f32
    %50 = vector.broadcast %cst_15 : f32 to vector<16x64xf32>
    %51 = arith.addf %50, %49 : vector<16x64xf32>
    %52 = arith.divf %50, %51 : vector<16x64xf32>
    %c1 = arith.constant 1 : index
    %53 = memref.load %arg6[%c1] : memref<2xf32, #tpu.memory_space<smem>>
    %54 = vector.broadcast %53 : f32 to vector<16x64xf32>
    %55 = arith.mulf %52, %54 : vector<16x64xf32>
    %56 = arith.addf %47, %55 : vector<16x64xf32>
    %57 = arith.mulf %47, %55 : vector<16x64xf32>
    %58 = arith.truncf %56 : vector<16x64xf32> to vector<16x64xbf16>
    %59 = arith.extf %58 : vector<16x64xbf16> to vector<16x64xf32>
    %60 = arith.subf %56, %59 : vector<16x64xf32>
    %61 = arith.truncf %60 : vector<16x64xf32> to vector<16x64xbf16>
    %62 = arith.truncf %57 : vector<16x64xf32> to vector<16x64xbf16>
    %63 = arith.extf %62 : vector<16x64xbf16> to vector<16x64xf32>
    %64 = arith.subf %57, %63 : vector<16x64xf32>
    %65 = arith.truncf %64 : vector<16x64xf32> to vector<16x64xbf16>
    %66 = tpu.concatenate %58, %61 in 1 : vector<16x64xbf16>, vector<16x64xbf16> -> vector<16x128xbf16>
    %67 = tpu.concatenate %62, %65 in 1 : vector<16x64xbf16>, vector<16x64xbf16> -> vector<16x128xbf16>
    %68 = tpu.concatenate %66, %67 in 0 : vector<16x128xbf16>, vector<16x128xbf16> -> vector<32x128xbf16>
    %c0_16 = arith.constant 0 : index
    %c0_17 = arith.constant 0 : index
    %69 = vector.load %arg3[%c0_16, %c0_17] : memref<128x4096xbf16, #tpu.memory_space<vmem>>, vector<128x2048xbf16>
    %cst_18 = arith.constant dense<0.000000e+00> : vector<32x2048xf32>
    %70 = tpu.matmul %68, %69, %cst_18 {dimension_numbers = #tpu.dot_dimension_numbers<[1], [0], [0], [1], [0, 0, 1, 1], [], []>} : vector<32x128xbf16>, vector<128x2048xbf16>, vector<32x2048xf32> -> vector<32x2048xf32>
    %c0_19 = arith.constant 0 : index
    %c0_20 = arith.constant 0 : index
    %71 = vector.load %arg1[%c0_19, %c0_20] : memref<16x4096xf32, #tpu.memory_space<vmem>>, vector<16x2048xf32>
    %72 = vector.extract_strided_slice %70 {offsets = [0, 0], sizes = [16, 2048], strides = [1, 1]} : vector<32x2048xf32> to vector<16x2048xf32>
    %73 = arith.addf %71, %72 : vector<16x2048xf32>
    %74 = arith.mulf %71, %73 : vector<16x2048xf32>
    %75 = vector.extract_strided_slice %70 {offsets = [16, 0], sizes = [16, 2048], strides = [1, 1]} : vector<32x2048xf32> to vector<16x2048xf32>
    %76 = arith.addf %74, %75 : vector<16x2048xf32>
    %c0_21 = arith.constant 0 : index
    %c0_22 = arith.constant 0 : index
    %77 = vector.load %arg7[%c0_21, %c0_22] : memref<16x4096xf32, #tpu.memory_space<vmem>>, vector<16x2048xf32>
    tpu.vector_store %arg7[%c0_21, %c0_22], %76 {strides = array<i32>} : memref<16x4096xf32, #tpu.memory_space<vmem>>, vector<16x2048xf32>,
    %c0_23 = arith.constant 0 : index
    %c2048 = arith.constant 2048 : index
    %78 = vector.load %arg3[%c0_23, %c2048] : memref<128x4096xbf16, #tpu.memory_space<vmem>>, vector<128x2048xbf16>
    %cst_24 = arith.constant dense<0.000000e+00> : vector<32x2048xf32>
    %79 = tpu.matmul %68, %78, %cst_24 {dimension_numbers = #tpu.dot_dimension_numbers<[1], [0], [0], [1], [0, 0, 1, 1], [], []>} : vector<32x128xbf16>, vector<128x2048xbf16>, vector<32x2048xf32> -> vector<32x2048xf32>
    %c0_25 = arith.constant 0 : index
    %c2048_26 = arith.constant 2048 : index
    %80 = vector.load %arg1[%c0_25, %c2048_26] : memref<16x4096xf32, #tpu.memory_space<vmem>>, vector<16x2048xf32>
    %81 = vector.extract_strided_slice %79 {offsets = [0, 0], sizes = [16, 2048], strides = [1, 1]} : vector<32x2048xf32> to vector<16x2048xf32>
    %82 = arith.addf %80, %81 : vector<16x2048xf32>
    %83 = arith.mulf %80, %82 : vector<16x2048xf32>
    %84 = vector.extract_strided_slice %79 {offsets = [16, 0], sizes = [16, 2048], strides = [1, 1]} : vector<32x2048xf32> to vector<16x2048xf32>
    %85 = arith.addf %83, %84 : vector<16x2048xf32>
    %c0_27 = arith.constant 0 : index
    %c2048_28 = arith.constant 2048 : index
    %86 = vector.load %arg7[%c0_27, %c2048_28] : memref<16x4096xf32, #tpu.memory_space<vmem>>, vector<16x2048xf32>
    tpu.vector_store %arg7[%c0_27, %c2048_28], %85 {strides = array<i32>} : memref<16x4096xf32, #tpu.memory_space<vmem>>, vector<16x2048xf32>,
    return
  }
  func.func @transform_0(%arg0: i32) -> (i32, i32) {
    %c0_i32 = arith.constant 0 : i32
    %c0_i32_0 = arith.constant 0 : i32
    return %arg0, %c0_i32 : i32, i32
  }
  func.func @transform_1(%arg0: i32) -> (i32, i32) {
    %c0_i32 = arith.constant 0 : i32
    %c0_i32_0 = arith.constant 0 : i32
    %c0_i32_1 = arith.constant 0 : i32
    return %c0_i32, %c0_i32_0 : i32, i32
  }
  func.func @transform_2(%arg0: i32) -> (i32, i32) {
    %c0_i32 = arith.constant 0 : i32
    %c0_i32_0 = arith.constant 0 : i32
    %c0_i32_1 = arith.constant 0 : i32
    return %c0_i32, %c0_i32_0 : i32, i32
  }
  func.func @transform_3(%arg0: i32) -> (i32, i32) {
    %c0_i32 = arith.constant 0 : i32
    %c0_i32_0 = arith.constant 0 : i32
    %c0_i32_1 = arith.constant 0 : i32
    return %c0_i32, %c0_i32_0 : i32, i32
  }
  func.func @transform_4(%arg0: i32) -> (i32, i32) {
    %c0_i32 = arith.constant 0 : i32
    %c0_i32_0 = arith.constant 0 : i32
    %c0_i32_1 = arith.constant 0 : i32
    return %c0_i32, %c0_i32_0 : i32, i32
  }
  func.func @transform_5(%arg0: i32) -> i32 {
    %c0_i32 = arith.constant 0 : i32
    %c0_i32_0 = arith.constant 0 : i32
    return %c0_i32 : i32
  }
  func.func @transform_6(%arg0: i32) -> (i32, i32) {
    %c0_i32 = arith.constant 0 : i32
    %c0_i32_0 = arith.constant 0 : i32
    return %arg0, %c0_i32 : i32, i32
  }
}

</mosaic_0001>

<llo_original>
// kernel: tpu_custom_call.1
$region0: #{tpu_custom_call.1}
  #allocation0 [shape = 'u32[]', space=smem, size = 0x4, offset = 0x4, fixed_abs, tag = 'smem constant byte address 0x4 - core index']
  #allocation1 [shape = 'u32[144,128]{1,0:T(1,128)}', space=vmem, size = 0x12000, scoped, tag = 'internal scratch']
  %s0 = inlined_call_operand.vmem [shape: f32[16,4096], index: 0, kind: input, shape index: {}]
  %s1 = inlined_call_operand.vmem [shape: bf16[8192,64], index: 1, kind: input, shape index: {}]
  %s2 = inlined_call_operand.vmem [shape: bf16[128,4096], index: 2, kind: input, shape index: {}]
  %s3 = inlined_call_operand.vmem [shape: f32[8,24], index: 3, kind: input, shape index: {}]
  %s4 = inlined_call_operand.vmem [shape: bf16[1152,64], index: 4, kind: input, shape index: {}]
  %s5 = inlined_call_operand.vmem [shape: f32[2], index: 5, kind: input, shape index: {}]
  %s6 = inlined_call_operand.hbm [shape: f32[16,4096], index: 6, kind: output, shape index: {}]
  %s7 = sld [smem:[#allocation0]]
  $region38: #{tpu_custom_call.1} parent=0
    _
  %s9 = ssub.s32 1, %s7
  %s10 = scalar_select 0, %s9, %s7
  $region1: #{tpu_custom_call.1} parent=0
    #allocation2 [shape = 'u8[512]{0}', space=smem, size = 0x200, scoped, tag = 'input window, operand 5, single buffered']
    #allocation3 [shape = 's32[1]{0}', space=sflag, size = 0x4, scoped, tag = 'scoped memory for tpu_custom_call.1']
    #allocation4 [shape = 's32[1]{0}', space=sflag, size = 0x4, scoped, tag = 'scoped memory for tpu_custom_call.1']
    #allocation5 [shape = 'u8[262144]{0}', space=vmem, size = 0x40000, scoped, tag = 'output window, operand 0, single buffered']
    %11 = vsyncpa [#allocation4], 0
    %12 = vsyncpa [#allocation3], 0
    // Predicated region
    $region2: #{tpu_custom_call.1} parent=1 // pred_check
      _
    $region3: #{tpu_custom_call.1} parent=1 // pred_check_branch
      %14 = sbr.rel (0) target = $region5
    $region4: #{tpu_custom_call.1} parent=1 // pred_region
      _
    $region5: #{tpu_custom_call.1} parent=1 // pred_fallthru
      _
    // Predicated region
    $region6: #{tpu_custom_call.1} parent=1 // pred_check
      _
    $region7: #{tpu_custom_call.1} parent=1 // pred_check_branch
      %16 = sbr.rel (0) target = $region9
    $region8: #{tpu_custom_call.1} parent=1 // pred_region
      _
    $region9: #{tpu_custom_call.1} parent=1 // pred_fallthru
      _
    // Predicated region
    $region10: #{tpu_custom_call.1} parent=1 // pred_check
      _
    $region11: #{tpu_custom_call.1} parent=1 // pred_check_branch
      %18 = sbr.rel (0) target = $region13
    $region12: #{tpu_custom_call.1} parent=1 // pred_region
      _
    $region13: #{tpu_custom_call.1} parent=1 // pred_fallthru
      _
    // Predicated region
    $region14: #{tpu_custom_call.1} parent=1 // pred_check
      _
    $region15: #{tpu_custom_call.1} parent=1 // pred_check_branch
      %20 = sbr.rel (0) target = $region17
    $region16: #{tpu_custom_call.1} parent=1 // pred_region
      _
    $region17: #{tpu_custom_call.1} parent=1 // pred_fallthru
      _
    // Predicated region
    $region18: #{tpu_custom_call.1} parent=1 // pred_check
      _
    $region19: #{tpu_custom_call.1} parent=1 // pred_check_branch
      %22 = sbr.rel (0) target = $region21
    $region20: #{tpu_custom_call.1} parent=1 // pred_region
      _
    $region21: #{tpu_custom_call.1} parent=1 // pred_fallthru
      _
    // Predicated region
    $region22: #{tpu_custom_call.1} parent=1 // pred_check
      _
    $region23: #{tpu_custom_call.1} parent=1 // pred_check_branch
      %24 = sbr.rel (0) target = $region25
    $region24: #{tpu_custom_call.1} parent=1 // pred_region
      %s26 = ssub.s32 16, 16
      %27 = vsyncadd [#allocation4], %s26
      %s29 = sshll.u32 %s5, 4
      %s30 = int_to_ptr.vmem [resolvable:$true] %s29
      %32 = dma.vmem_to_smem %s30, 16, [#allocation2], [#allocation4]
    $region25: #{tpu_custom_call.1} parent=1 // pred_fallthru
      _
    // Predicated region
    $region26: #{tpu_custom_call.1} parent=1 // pred_check
      _
    $region27: #{tpu_custom_call.1} parent=1 // pred_check_branch
      %34 = sbr.rel (0) target = $region29
    $region28: #{tpu_custom_call.1} parent=1 // pred_region
      %35 = dma.done [#allocation4], 16
    $region29: #{tpu_custom_call.1} parent=1 // pred_fallthru
      _
    %36 = sfence
    %v38 = vld [vmem:[%s0] sm:$0xff]
    %v39 = vld [vmem:[%s0 + $0x8] sm:$0xff]
    %v40 = vld [vmem:[%s0 + $0x10] sm:$0xff]
    %v41 = vld [vmem:[%s0 + $0x18] sm:$0xff]
    %v42 = vld [vmem:[%s0 + $0x20] sm:$0xff]
    %v43 = vld [vmem:[%s0 + $0x28] sm:$0xff]
    %v44 = vld [vmem:[%s0 + $0x30] sm:$0xff]
    %v45 = vld [vmem:[%s0 + $0x38] sm:$0xff]
    %v46 = vld [vmem:[%s0 + $0x40] sm:$0xff]
    %v47 = vld [vmem:[%s0 + $0x48] sm:$0xff]
    %v48 = vld [vmem:[%s0 + $0x50] sm:$0xff]
    %v49 = vld [vmem:[%s0 + $0x58] sm:$0xff]
    %v50 = vld [vmem:[%s0 + $0x60] sm:$0xff]
    %v51 = vld [vmem:[%s0 + $0x68] sm:$0xff]
    %v52 = vld [vmem:[%s0 + $0x70] sm:$0xff]
    %v53 = vld [vmem:[%s0 + $0x78] sm:$0xff]
    %v54 = vld [vmem:[%s0 + $0x80] sm:$0xff]
    %v55 = vld [vmem:[%s0 + $0x88] sm:$0xff]
    %v56 = vld [vmem:[%s0 + $0x90] sm:$0xff]
    %v57 = vld [vmem:[%s0 + $0x98] sm:$0xff]
    %v58 = vld [vmem:[%s0 + $0xa0] sm:$0xff]
    %v59 = vld [vmem:[%s0 + $0xa8] sm:$0xff]
    %v60 = vld [vmem:[%s0 + $0xb0] sm:$0xff]
    %v61 = vld [vmem:[%s0 + $0xb8] sm:$0xff]
    %v62 = vld [vmem:[%s0 + $0xc0] sm:$0xff]
    %v63 = vld [vmem:[%s0 + $0xc8] sm:$0xff]
    %v64 = vld [vmem:[%s0 + $0xd0] sm:$0xff]
    %v65 = vld [vmem:[%s0 + $0xd8] sm:$0xff]
    %v66 = vld [vmem:[%s0 + $0xe0] sm:$0xff]
    %v67 = vld [vmem:[%s0 + $0xe8] sm:$0xff]
    %v68 = vld [vmem:[%s0 + $0xf0] sm:$0xff]
    %v69 = vld [vmem:[%s0 + $0xf8] sm:$0xff]
    %v70 = vld [vmem:[%s0 + $0x100] sm:$0xff]
    %v71 = vld [vmem:[%s0 + $0x108] sm:$0xff]
    %v72 = vld [vmem:[%s0 + $0x110] sm:$0xff]
    %v73 = vld [vmem:[%s0 + $0x118] sm:$0xff]
    %v74 = vld [vmem:[%s0 + $0x120] sm:$0xff]
    %v75 = vld [vmem:[%s0 + $0x128] sm:$0xff]
    %v76 = vld [vmem:[%s0 + $0x130] sm:$0xff]
    %v77 = vld [vmem:[%s0 + $0x138] sm:$0xff]
    %v78 = vld [vmem:[%s0 + $0x140] sm:$0xff]
    %v79 = vld [vmem:[%s0 + $0x148] sm:$0xff]
    %v80 = vld [vmem:[%s0 + $0x150] sm:$0xff]
    %v81 = vld [vmem:[%s0 + $0x158] sm:$0xff]
    %v82 = vld [vmem:[%s0 + $0x160] sm:$0xff]
    %v83 = vld [vmem:[%s0 + $0x168] sm:$0xff]
    %v84 = vld [vmem:[%s0 + $0x170] sm:$0xff]
    %v85 = vld [vmem:[%s0 + $0x178] sm:$0xff]
    %v86 = vld [vmem:[%s0 + $0x180] sm:$0xff]
    %v87 = vld [vmem:[%s0 + $0x188] sm:$0xff]
    %v88 = vld [vmem:[%s0 + $0x190] sm:$0xff]
    %v89 = vld [vmem:[%s0 + $0x198] sm:$0xff]
    %v90 = vld [vmem:[%s0 + $0x1a0] sm:$0xff]
    %v91 = vld [vmem:[%s0 + $0x1a8] sm:$0xff]
    %v92 = vld [vmem:[%s0 + $0x1b0] sm:$0xff]
    %v93 = vld [vmem:[%s0 + $0x1b8] sm:$0xff]
    %v94 = vld [vmem:[%s0 + $0x1c0] sm:$0xff]
    %v95 = vld [vmem:[%s0 + $0x1c8] sm:$0xff]
    %v96 = vld [vmem:[%s0 + $0x1d0] sm:$0xff]
    %v97 = vld [vmem:[%s0 + $0x1d8] sm:$0xff]
    %v98 = vld [vmem:[%s0 + $0x1e0] sm:$0xff]
    %v99 = vld [vmem:[%s0 + $0x1e8] sm:$0xff]
    %v100 = vld [vmem:[%s0 + $0x1f0] sm:$0xff]
    %v101 = vld [vmem:[%s0 + $0x1f8] sm:$0xff]
    %v102 = vpack.c.bf16 %v70, %v38
    %v103 = vpack.c.bf16 %v71, %v39
    %v104 = vpack.c.bf16 %v72, %v40
    %v105 = vpack.c.bf16 %v73, %v41
    %v106 = vpack.c.bf16 %v74, %v42
    %v107 = vpack.c.bf16 %v75, %v43
    %v108 = vpack.c.bf16 %v76, %v44
    %v109 = vpack.c.bf16 %v77, %v45
    %v110 = vpack.c.bf16 %v78, %v46
    %v111 = vpack.c.bf16 %v79, %v47
    %v112 = vpack.c.bf16 %v80, %v48
    %v113 = vpack.c.bf16 %v81, %v49
    %v114 = vpack.c.bf16 %v82, %v50
    %v115 = vpack.c.bf16 %v83, %v51
    %v116 = vpack.c.bf16 %v84, %v52
    %v117 = vpack.c.bf16 %v85, %v53
    %v118 = vpack.c.bf16 %v86, %v54
    %v119 = vpack.c.bf16 %v87, %v55
    %v120 = vpack.c.bf16 %v88, %v56
    %v121 = vpack.c.bf16 %v89, %v57
    %v122 = vpack.c.bf16 %v90, %v58
    %v123 = vpack.c.bf16 %v91, %v59
    %v124 = vpack.c.bf16 %v92, %v60
    %v125 = vpack.c.bf16 %v93, %v61
    %v126 = vpack.c.bf16 %v94, %v62
    %v127 = vpack.c.bf16 %v95, %v63
    %v128 = vpack.c.bf16 %v96, %v64
    %v129 = vpack.c.bf16 %v97, %v65
    %v130 = vpack.c.bf16 %v98, %v66
    %v131 = vpack.c.bf16 %v99, %v67
    %v132 = vpack.c.bf16 %v100, %v68
    %v133 = vpack.c.bf16 %v101, %v69
    %v134 = vunpack.c.l.bf16 %v102
    %v135 = vunpack.c.l.bf16 %v103
    %v136 = vunpack.c.l.bf16 %v104
    %v137 = vunpack.c.l.bf16 %v105
    %v138 = vunpack.c.l.bf16 %v106
    %v139 = vunpack.c.l.bf16 %v107
    %v140 = vunpack.c.l.bf16 %v108
    %v141 = vunpack.c.l.bf16 %v109
    %v142 = vunpack.c.l.bf16 %v110
    %v143 = vunpack.c.l.bf16 %v111
    %v144 = vunpack.c.l.bf16 %v112
    %v145 = vunpack.c.l.bf16 %v113
    %v146 = vunpack.c.l.bf16 %v114
    %v147 = vunpack.c.l.bf16 %v115
    %v148 = vunpack.c.l.bf16 %v116
    %v149 = vunpack.c.l.bf16 %v117
    %v150 = vunpack.c.l.bf16 %v118
    %v151 = vunpack.c.l.bf16 %v119
    %v152 = vunpack.c.l.bf16 %v120
    %v153 = vunpack.c.l.bf16 %v121
    %v154 = vunpack.c.l.bf16 %v122
    %v155 = vunpack.c.l.bf16 %v123
    %v156 = vunpack.c.l.bf16 %v124
    %v157 = vunpack.c.l.bf16 %v125
    %v158 = vunpack.c.l.bf16 %v126
    %v159 = vunpack.c.l.bf16 %v127
    %v160 = vunpack.c.l.bf16 %v128
    %v161 = vunpack.c.l.bf16 %v129
    %v162 = vunpack.c.l.bf16 %v130
    %v163 = vunpack.c.l.bf16 %v131
    %v164 = vunpack.c.l.bf16 %v132
    %v165 = vunpack.c.l.bf16 %v133
    %v166 = vunpack.c.h.bf16 %v102
    %v167 = vunpack.c.h.bf16 %v103
    %v168 = vunpack.c.h.bf16 %v104
    %v169 = vunpack.c.h.bf16 %v105
    %v170 = vunpack.c.h.bf16 %v106
    %v171 = vunpack.c.h.bf16 %v107
    %v172 = vunpack.c.h.bf16 %v108
    %v173 = vunpack.c.h.bf16 %v109
    %v174 = vunpack.c.h.bf16 %v110
    %v175 = vunpack.c.h.bf16 %v111
    %v176 = vunpack.c.h.bf16 %v112
    %v177 = vunpack.c.h.bf16 %v113
    %v178 = vunpack.c.h.bf16 %v114
    %v179 = vunpack.c.h.bf16 %v115
    %v180 = vunpack.c.h.bf16 %v116
    %v181 = vunpack.c.h.bf16 %v117
    %v182 = vunpack.c.h.bf16 %v118
    %v183 = vunpack.c.h.bf16 %v119
    %v184 = vunpack.c.h.bf16 %v120
    %v185 = vunpack.c.h.bf16 %v121
    %v186 = vunpack.c.h.bf16 %v122
    %v187 = vunpack.c.h.bf16 %v123
    %v188 = vunpack.c.h.bf16 %v124
    %v189 = vunpack.c.h.bf16 %v125
    %v190 = vunpack.c.h.bf16 %v126
    %v191 = vunpack.c.h.bf16 %v127
    %v192 = vunpack.c.h.bf16 %v128
    %v193 = vunpack.c.h.bf16 %v129
    %v194 = vunpack.c.h.bf16 %v130
    %v195 = vunpack.c.h.bf16 %v131
    %v196 = vunpack.c.h.bf16 %v132
    %v197 = vunpack.c.h.bf16 %v133
    %v198 = vsub.f32 %v38, %v134
    %v199 = vsub.f32 %v39, %v135
    %v200 = vsub.f32 %v40, %v136
    %v201 = vsub.f32 %v41, %v137
    %v202 = vsub.f32 %v42, %v138
    %v203 = vsub.f32 %v43, %v139
    %v204 = vsub.f32 %v44, %v140
    %v205 = vsub.f32 %v45, %v141
    %v206 = vsub.f32 %v46, %v142
    %v207 = vsub.f32 %v47, %v143
    %v208 = vsub.f32 %v48, %v144
    %v209 = vsub.f32 %v49, %v145
    %v210 = vsub.f32 %v50, %v146
    %v211 = vsub.f32 %v51, %v147
    %v212 = vsub.f32 %v52, %v148
    %v213 = vsub.f32 %v53, %v149
    %v214 = vsub.f32 %v54, %v150
    %v215 = vsub.f32 %v55, %v151
    %v216 = vsub.f32 %v56, %v152
    %v217 = vsub.f32 %v57, %v153
    %v218 = vsub.f32 %v58, %v154
    %v219 = vsub.f32 %v59, %v155
    %v220 = vsub.f32 %v60, %v156
    %v221 = vsub.f32 %v61, %v157
    %v222 = vsub.f32 %v62, %v158
    %v223 = vsub.f32 %v63, %v159
    %v224 = vsub.f32 %v64, %v160
    %v225 = vsub.f32 %v65, %v161
    %v226 = vsub.f32 %v66, %v162
    %v227 = vsub.f32 %v67, %v163
    %v228 = vsub.f32 %v68, %v164
    %v229 = vsub.f32 %v69, %v165
    %v230 = vsub.f32 %v70, %v166
    %v231 = vsub.f32 %v71, %v167
    %v232 = vsub.f32 %v72, %v168
    %v233 = vsub.f32 %v73, %v169
    %v234 = vsub.f32 %v74, %v170
    %v235 = vsub.f32 %v75, %v171
    %v236 = vsub.f32 %v76, %v172
    %v237 = vsub.f32 %v77, %v173
    %v238 = vsub.f32 %v78, %v174
    %v239 = vsub.f32 %v79, %v175
    %v240 = vsub.f32 %v80, %v176
    %v241 = vsub.f32 %v81, %v177
    %v242 = vsub.f32 %v82, %v178
    %v243 = vsub.f32 %v83, %v179
    %v244 = vsub.f32 %v84, %v180
    %v245 = vsub.f32 %v85, %v181
    %v246 = vsub.f32 %v86, %v182
    %v247 = vsub.f32 %v87, %v183
    %v248 = vsub.f32 %v88, %v184
    %v249 = vsub.f32 %v89, %v185
    %v250 = vsub.f32 %v90, %v186
    %v251 = vsub.f32 %v91, %v187
    %v252 = vsub.f32 %v92, %v188
    %v253 = vsub.f32 %v93, %v189
    %v254 = vsub.f32 %v94, %v190
    %v255 = vsub.f32 %v95, %v191
    %v256 = vsub.f32 %v96, %v192
    %v257 = vsub.f32 %v97, %v193
    %v258 = vsub.f32 %v98, %v194
    %v259 = vsub.f32 %v99, %v195
    %v260 = vsub.f32 %v100, %v196
    %v261 = vsub.f32 %v101, %v197
    %v262 = vpack.c.bf16 %v230, %v198
    %v263 = vpack.c.bf16 %v231, %v199
    %v264 = vpack.c.bf16 %v232, %v200
    %v265 = vpack.c.bf16 %v233, %v201
    %v266 = vpack.c.bf16 %v234, %v202
    %v267 = vpack.c.bf16 %v235, %v203
    %v268 = vpack.c.bf16 %v236, %v204
    %v269 = vpack.c.bf16 %v237, %v205
    %v270 = vpack.c.bf16 %v238, %v206
    %v271 = vpack.c.bf16 %v239, %v207
    %v272 = vpack.c.bf16 %v240, %v208
    %v273 = vpack.c.bf16 %v241, %v209
    %v274 = vpack.c.bf16 %v242, %v210
    %v275 = vpack.c.bf16 %v243, %v211
    %v276 = vpack.c.bf16 %v244, %v212
    %v277 = vpack.c.bf16 %v245, %v213
    %v278 = vpack.c.bf16 %v246, %v214
    %v279 = vpack.c.bf16 %v247, %v215
    %v280 = vpack.c.bf16 %v248, %v216
    %v281 = vpack.c.bf16 %v249, %v217
    %v282 = vpack.c.bf16 %v250, %v218
    %v283 = vpack.c.bf16 %v251, %v219
    %v284 = vpack.c.bf16 %v252, %v220
    %v285 = vpack.c.bf16 %v253, %v221
    %v286 = vpack.c.bf16 %v254, %v222
    %v287 = vpack.c.bf16 %v255, %v223
    %v288 = vpack.c.bf16 %v256, %v224
    %v289 = vpack.c.bf16 %v257, %v225
    %v290 = vpack.c.bf16 %v258, %v226
    %v291 = vpack.c.bf16 %v259, %v227
    %v292 = vpack.c.bf16 %v260, %v228
    %v293 = vpack.c.bf16 %v261, %v229
    %v294 = vld [vmem:[%s1] sm:$0xf]
    %v295 = vld [vmem:[%s1 + $0x4] sm:$0xf]
    %v296 = vld [vmem:[%s1 + $0x8] sm:$0xf]
    %v297 = vld [vmem:[%s1 + $0xc] sm:$0xf]
    %v298 = vld [vmem:[%s1 + $0x10] sm:$0xf]
    %v299 = vld [vmem:[%s1 + $0x14] sm:$0xf]
    %v300 = vld [vmem:[%s1 + $0x18] sm:$0xf]
    %v301 = vld [vmem:[%s1 + $0x1c] sm:$0xf]
    %v302 = vld [vmem:[%s1 + $0x20] sm:$0xf]
    %v303 = vld [vmem:[%s1 + $0x24] sm:$0xf]
    %v304 = vld [vmem:[%s1 + $0x28] sm:$0xf]
    %v305 = vld [vmem:[%s1 + $0x2c] sm:$0xf]
    %v306 = vld [vmem:[%s1 + $0x30] sm:$0xf]
    %v307 = vld [vmem:[%s1 + $0x34] sm:$0xf]
    %v308 = vld [vmem:[%s1 + $0x38] sm:$0xf]
    %v309 = vld [vmem:[%s1 + $0x3c] sm:$0xf]
    %v310 = vld [vmem:[%s1 + $0x40] sm:$0xf]
    %v311 = vld [vmem:[%s1 + $0x44] sm:$0xf]
    %v312 = vld [vmem:[%s1 + $0x48] sm:$0xf]
    %v313 = vld [vmem:[%s1 + $0x4c] sm:$0xf]
    %v314 = vld [vmem:[%s1 + $0x50] sm:$0xf]
    %v315 = vld [vmem:[%s1 + $0x54] sm:$0xf]
    %v316 = vld [vmem:[%s1 + $0x58] sm:$0xf]
    %v317 = vld [vmem:[%s1 + $0x5c] sm:$0xf]
    %v318 = vld [vmem:[%s1 + $0x60] sm:$0xf]
    %v319 = vld [vmem:[%s1 + $0x64] sm:$0xf]
    %v320 = vld [vmem:[%s1 + $0x68] sm:$0xf]
    %v321 = vld [vmem:[%s1 + $0x6c] sm:$0xf]
    %v322 = vld [vmem:[%s1 + $0x70] sm:$0xf]
    %v323 = vld [vmem:[%s1 + $0x74] sm:$0xf]
    %v324 = vld [vmem:[%s1 + $0x78] sm:$0xf]
    %v325 = vld [vmem:[%s1 + $0x7c] sm:$0xf]
    %v326 = vld [vmem:[%s1 + $0x80] sm:$0xf]
    %v327 = vld [vmem:[%s1 + $0x84] sm:$0xf]
    %v328 = vld [vmem:[%s1 + $0x88] sm:$0xf]
    %v329 = vld [vmem:[%s1 + $0x8c] sm:$0xf]
    %v330 = vld [vmem:[%s1 + $0x90] sm:$0xf]
    %v331 = vld [vmem:[%s1 + $0x94] sm:$0xf]
    %v332 = vld [vmem:[%s1 + $0x98] sm:$0xf]
    %v333 = vld [vmem:[%s1 + $0x9c] sm:$0xf]
    %v334 = vld [vmem:[%s1 + $0xa0] sm:$0xf]
    %v335 = vld [vmem:[%s1 + $0xa4] sm:$0xf]
    %v336 = vld [vmem:[%s1 + $0xa8] sm:$0xf]
    %v337 = vld [vmem:[%s1 + $0xac] sm:$0xf]
    %v338 = vld [vmem:[%s1 + $0xb0] sm:$0xf]
    %v339 = vld [vmem:[%s1 + $0xb4] sm:$0xf]
    %v340 = vld [vmem:[%s1 + $0xb8] sm:$0xf]
    %v341 = vld [vmem:[%s1 + $0xbc] sm:$0xf]
    %v342 = vld [vmem:[%s1 + $0xc0] sm:$0xf]
    %v343 = vld [vmem:[%s1 + $0xc4] sm:$0xf]
    %v344 = vld [vmem:[%s1 + $0xc8] sm:$0xf]
    %v345 = vld [vmem:[%s1 + $0xcc] sm:$0xf]
    %v346 = vld [vmem:[%s1 + $0xd0] sm:$0xf]
    %v347 = vld [vmem:[%s1 + $0xd4] sm:$0xf]
    %v348 = vld [vmem:[%s1 + $0xd8] sm:$0xf]
    %v349 = vld [vmem:[%s1 + $0xdc] sm:$0xf]
    %v350 = vld [vmem:[%s1 + $0xe0] sm:$0xf]
    %v351 = vld [vmem:[%s1 + $0xe4] sm:$0xf]
    %v352 = vld [vmem:[%s1 + $0xe8] sm:$0xf]
    %v353 = vld [vmem:[%s1 + $0xec] sm:$0xf]
    %v354 = vld [vmem:[%s1 + $0xf0] sm:$0xf]
    %v355 = vld [vmem:[%s1 + $0xf4] sm:$0xf]
    %v356 = vld [vmem:[%s1 + $0xf8] sm:$0xf]
    %v357 = vld [vmem:[%s1 + $0xfc] sm:$0xf]
    %v358 = vld [vmem:[%s1 + $0x100] sm:$0xf]
    %v359 = vld [vmem:[%s1 + $0x104] sm:$0xf]
    %v360 = vld [vmem:[%s1 + $0x108] sm:$0xf]
    %v361 = vld [vmem:[%s1 + $0x10c] sm:$0xf]
    %v362 = vld [vmem:[%s1 + $0x110] sm:$0xf]
    %v363 = vld [vmem:[%s1 + $0x114] sm:$0xf]
    %v364 = vld [vmem:[%s1 + $0x118] sm:$0xf]
    %v365 = vld [vmem:[%s1 + $0x11c] sm:$0xf]
    %v366 = vld [vmem:[%s1 + $0x120] sm:$0xf]
    %v367 = vld [vmem:[%s1 + $0x124] sm:$0xf]
    %v368 = vld [vmem:[%s1 + $0x128] sm:$0xf]
    %v369 = vld [vmem:[%s1 + $0x12c] sm:$0xf]
    %v370 = vld [vmem:[%s1 + $0x130] sm:$0xf]
    %v371 = vld [vmem:[%s1 + $0x134] sm:$0xf]
    %v372 = vld [vmem:[%s1 + $0x138] sm:$0xf]
    %v373 = vld [vmem:[%s1 + $0x13c] sm:$0xf]
    %v374 = vld [vmem:[%s1 + $0x140] sm:$0xf]
    %v375 = vld [vmem:[%s1 + $0x144] sm:$0xf]
    %v376 = vld [vmem:[%s1 + $0x148] sm:$0xf]
    %v377 = vld [vmem:[%s1 + $0x14c] sm:$0xf]
    %v378 = vld [vmem:[%s1 + $0x150] sm:$0xf]
    %v379 = vld [vmem:[%s1 + $0x154] sm:$0xf]
    %v380 = vld [vmem:[%s1 + $0x158] sm:$0xf]
    %v381 = vld [vmem:[%s1 + $0x15c] sm:$0xf]
    %v382 = vld [vmem:[%s1 + $0x160] sm:$0xf]
    %v383 = vld [vmem:[%s1 + $0x164] sm:$0xf]
    %v384 = vld [vmem:[%s1 + $0x168] sm:$0xf]
    %v385 = vld [vmem:[%s1 + $0x16c] sm:$0xf]
    %v386 = vld [vmem:[%s1 + $0x170] sm:$0xf]
    %v387 = vld [vmem:[%s1 + $0x174] sm:$0xf]
    %v388 = vld [vmem:[%s1 + $0x178] sm:$0xf]
    %v389 = vld [vmem:[%s1 + $0x17c] sm:$0xf]
    %v390 = vld [vmem:[%s1 + $0x180] sm:$0xf]
    %v391 = vld [vmem:[%s1 + $0x184] sm:$0xf]
    %v392 = vld [vmem:[%s1 + $0x188] sm:$0xf]
    %v393 = vld [vmem:[%s1 + $0x18c] sm:$0xf]
    %v394 = vld [vmem:[%s1 + $0x190] sm:$0xf]
    %v395 = vld [vmem:[%s1 + $0x194] sm:$0xf]
    %v396 = vld [vmem:[%s1 + $0x198] sm:$0xf]
    %v397 = vld [vmem:[%s1 + $0x19c] sm:$0xf]
    %v398 = vld [vmem:[%s1 + $0x1a0] sm:$0xf]
    %v399 = vld [vmem:[%s1 + $0x1a4] sm:$0xf]
    %v400 = vld [vmem:[%s1 + $0x1a8] sm:$0xf]
    %v401 = vld [vmem:[%s1 + $0x1ac] sm:$0xf]
    %v402 = vld [vmem:[%s1 + $0x1b0] sm:$0xf]
    %v403 = vld [vmem:[%s1 + $0x1b4] sm:$0xf]
    %v404 = vld [vmem:[%s1 + $0x1b8] sm:$0xf]
    %v405 = vld [vmem:[%s1 + $0x1bc] sm:$0xf]
    %v406 = vld [vmem:[%s1 + $0x1c0] sm:$0xf]
    %v407 = vld [vmem:[%s1 + $0x1c4] sm:$0xf]
    %v408 = vld [vmem:[%s1 + $0x1c8] sm:$0xf]
    %v409 = vld [vmem:[%s1 + $0x1cc] sm:$0xf]
    %v410 = vld [vmem:[%s1 + $0x1d0] sm:$0xf]
    %v411 = vld [vmem:[%s1 + $0x1d4] sm:$0xf]
    %v412 = vld [vmem:[%s1 + $0x1d8] sm:$0xf]
    %v413 = vld [vmem:[%s1 + $0x1dc] sm:$0xf]
    %v414 = vld [vmem:[%s1 + $0x1e0] sm:$0xf]
    %v415 = vld [vmem:[%s1 + $0x1e4] sm:$0xf]
    %v416 = vld [vmem:[%s1 + $0x1e8] sm:$0xf]
    %v417 = vld [vmem:[%s1 + $0x1ec] sm:$0xf]
    %v418 = vld [vmem:[%s1 + $0x1f0] sm:$0xf]
    %v419 = vld [vmem:[%s1 + $0x1f4] sm:$0xf]
    %v420 = vld [vmem:[%s1 + $0x1f8] sm:$0xf]
    %v421 = vld [vmem:[%s1 + $0x1fc] sm:$0xf]
    %v422 = vld [vmem:[%s1 + $0x200] sm:$0xf]
    %v423 = vld [vmem:[%s1 + $0x204] sm:$0xf]
    %v424 = vld [vmem:[%s1 + $0x208] sm:$0xf]
    %v425 = vld [vmem:[%s1 + $0x20c] sm:$0xf]
    %v426 = vld [vmem:[%s1 + $0x210] sm:$0xf]
    %v427 = vld [vmem:[%s1 + $0x214] sm:$0xf]
    %v428 = vld [vmem:[%s1 + $0x218] sm:$0xf]
    %v429 = vld [vmem:[%s1 + $0x21c] sm:$0xf]
    %v430 = vld [vmem:[%s1 + $0x220] sm:$0xf]
    %v431 = vld [vmem:[%s1 + $0x224] sm:$0xf]
    %v432 = vld [vmem:[%s1 + $0x228] sm:$0xf]
    %v433 = vld [vmem:[%s1 + $0x22c] sm:$0xf]
    %v434 = vld [vmem:[%s1 + $0x230] sm:$0xf]
    %v435 = vld [vmem:[%s1 + $0x234] sm:$0xf]
    %v436 = vld [vmem:[%s1 + $0x238] sm:$0xf]
    %v437 = vld [vmem:[%s1 + $0x23c] sm:$0xf]
    %v438 = vld [vmem:[%s1 + $0x240] sm:$0xf]
    %v439 = vld [vmem:[%s1 + $0x244] sm:$0xf]
    %v440 = vld [vmem:[%s1 + $0x248] sm:$0xf]
    %v441 = vld [vmem:[%s1 + $0x24c] sm:$0xf]
    %v442 = vld [vmem:[%s1 + $0x250] sm:$0xf]
    %v443 = vld [vmem:[%s1 + $0x254] sm:$0xf]
    %v444 = vld [vmem:[%s1 + $0x258] sm:$0xf]
    %v445 = vld [vmem:[%s1 + $0x25c] sm:$0xf]
    %v446 = vld [vmem:[%s1 + $0x260] sm:$0xf]
    %v447 = vld [vmem:[%s1 + $0x264] sm:$0xf]
    %v448 = vld [vmem:[%s1 + $0x268] sm:$0xf]
    %v449 = vld [vmem:[%s1 + $0x26c] sm:$0xf]
    %v450 = vld [vmem:[%s1 + $0x270] sm:$0xf]
    %v451 = vld [vmem:[%s1 + $0x274] sm:$0xf]
    %v452 = vld [vmem:[%s1 + $0x278] sm:$0xf]
    %v453 = vld [vmem:[%s1 + $0x27c] sm:$0xf]
    %v454 = vld [vmem:[%s1 + $0x280] sm:$0xf]
    %v455 = vld [vmem:[%s1 + $0x284] sm:$0xf]
    %v456 = vld [vmem:[%s1 + $0x288] sm:$0xf]
    %v457 = vld [vmem:[%s1 + $0x28c] sm:$0xf]
    %v458 = vld [vmem:[%s1 + $0x290] sm:$0xf]
    %v459 = vld [vmem:[%s1 + $0x294] sm:$0xf]
    %v460 = vld [vmem:[%s1 + $0x298] sm:$0xf]
    %v461 = vld [vmem:[%s1 + $0x29c] sm:$0xf]
    %v462 = vld [vmem:[%s1 + $0x2a0] sm:$0xf]
    %v463 = vld [vmem:[%s1 + $0x2a4] sm:$0xf]
    %v464 = vld [vmem:[%s1 + $0x2a8] sm:$0xf]
    %v465 = vld [vmem:[%s1 + $0x2ac] sm:$0xf]
    %v466 = vld [vmem:[%s1 + $0x2b0] sm:$0xf]
    %v467 = vld [vmem:[%s1 + $0x2b4] sm:$0xf]
    %v468 = vld [vmem:[%s1 + $0x2b8] sm:$0xf]
    %v469 = vld [vmem:[%s1 + $0x2bc] sm:$0xf]
    %v470 = vld [vmem:[%s1 + $0x2c0] sm:$0xf]
    %v471 = vld [vmem:[%s1 + $0x2c4] sm:$0xf]
    %v472 = vld [vmem:[%s1 + $0x2c8] sm:$0xf]
    %v473 = vld [vmem:[%s1 + $0x2cc] sm:$0xf]
    %v474 = vld [vmem:[%s1 + $0x2d0] sm:$0xf]
    %v475 = vld [vmem:[%s1 + $0x2d4] sm:$0xf]
    %v476 = vld [vmem:[%s1 + $0x2d8] sm:$0xf]
    %v477 = vld [vmem:[%s1 + $0x2dc] sm:$0xf]
    %v478 = vld [vmem:[%s1 + $0x2e0] sm:$0xf]
    %v479 = vld [vmem:[%s1 + $0x2e4] sm:$0xf]
    %v480 = vld [vmem:[%s1 + $0x2e8] sm:$0xf]
    %v481 = vld [vmem:[%s1 + $0x2ec] sm:$0xf]
    %v482 = vld [vmem:[%s1 + $0x2f0] sm:$0xf]
    %v483 = vld [vmem:[%s1 + $0x2f4] sm:$0xf]
    %v484 = vld [vmem:[%s1 + $0x2f8] sm:$0xf]
    %v485 = vld [vmem:[%s1 + $0x2fc] sm:$0xf]
    %v486 = vld [vmem:[%s1 + $0x300] sm:$0xf]
    %v487 = vld [vmem:[%s1 + $0x304] sm:$0xf]
    %v488 = vld [vmem:[%s1 + $0x308] sm:$0xf]
    %v489 = vld [vmem:[%s1 + $0x30c] sm:$0xf]
    %v490 = vld [vmem:[%s1 + $0x310] sm:$0xf]
    %v491 = vld [vmem:[%s1 + $0x314] sm:$0xf]
    %v492 = vld [vmem:[%s1 + $0x318] sm:$0xf]
    %v493 = vld [vmem:[%s1 + $0x31c] sm:$0xf]
    %v494 = vld [vmem:[%s1 + $0x320] sm:$0xf]
    %v495 = vld [vmem:[%s1 + $0x324] sm:$0xf]
    %v496 = vld [vmem:[%s1 + $0x328] sm:$0xf]
    %v497 = vld [vmem:[%s1 + $0x32c] sm:$0xf]
    %v498 = vld [vmem:[%s1 + $0x330] sm:$0xf]
    %v499 = vld [vmem:[%s1 + $0x334] sm:$0xf]
    %v500 = vld [vmem:[%s1 + $0x338] sm:$0xf]
    %v501 = vld [vmem:[%s1 + $0x33c] sm:$0xf]
    %v502 = vld [vmem:[%s1 + $0x340] sm:$0xf]
    %v503 = vld [vmem:[%s1 + $0x344] sm:$0xf]
    %v504 = vld [vmem:[%s1 + $0x348] sm:$0xf]
    %v505 = vld [vmem:[%s1 + $0x34c] sm:$0xf]
    %v506 = vld [vmem:[%s1 + $0x350] sm:$0xf]
    %v507 = vld [vmem:[%s1 + $0x354] sm:$0xf]
    %v508 = vld [vmem:[%s1 + $0x358] sm:$0xf]
    %v509 = vld [vmem:[%s1 + $0x35c] sm:$0xf]
    %v510 = vld [vmem:[%s1 + $0x360] sm:$0xf]
    %v511 = vld [vmem:[%s1 + $0x364] sm:$0xf]
    %v512 = vld [vmem:[%s1 + $0x368] sm:$0xf]
    %v513 = vld [vmem:[%s1 + $0x36c] sm:$0xf]
    %v514 = vld [vmem:[%s1 + $0x370] sm:$0xf]
    %v515 = vld [vmem:[%s1 + $0x374] sm:$0xf]
    %v516 = vld [vmem:[%s1 + $0x378] sm:$0xf]
    %v517 = vld [vmem:[%s1 + $0x37c] sm:$0xf]
    %v518 = vld [vmem:[%s1 + $0x380] sm:$0xf]
    %v519 = vld [vmem:[%s1 + $0x384] sm:$0xf]
    %v520 = vld [vmem:[%s1 + $0x388] sm:$0xf]
    %v521 = vld [vmem:[%s1 + $0x38c] sm:$0xf]
    %v522 = vld [vmem:[%s1 + $0x390] sm:$0xf]
    %v523 = vld [vmem:[%s1 + $0x394] sm:$0xf]
    %v524 = vld [vmem:[%s1 + $0x398] sm:$0xf]
    %v525 = vld [vmem:[%s1 + $0x39c] sm:$0xf]
    %v526 = vld [vmem:[%s1 + $0x3a0] sm:$0xf]
    %v527 = vld [vmem:[%s1 + $0x3a4] sm:$0xf]
    %v528 = vld [vmem:[%s1 + $0x3a8] sm:$0xf]
    %v529 = vld [vmem:[%s1 + $0x3ac] sm:$0xf]
    %v530 = vld [vmem:[%s1 + $0x3b0] sm:$0xf]
    %v531 = vld [vmem:[%s1 + $0x3b4] sm:$0xf]
    %v532 = vld [vmem:[%s1 + $0x3b8] sm:$0xf]
    %v533 = vld [vmem:[%s1 + $0x3bc] sm:$0xf]
    %v534 = vld [vmem:[%s1 + $0x3c0] sm:$0xf]
    %v535 = vld [vmem:[%s1 + $0x3c4] sm:$0xf]
    %v536 = vld [vmem:[%s1 + $0x3c8] sm:$0xf]
    %v537 = vld [vmem:[%s1 + $0x3cc] sm:$0xf]
    %v538 = vld [vmem:[%s1 + $0x3d0] sm:$0xf]
    %v539 = vld [vmem:[%s1 + $0x3d4] sm:$0xf]
    %v540 = vld [vmem:[%s1 + $0x3d8] sm:$0xf]
    %v541 = vld [vmem:[%s1 + $0x3dc] sm:$0xf]
    %v542 = vld [vmem:[%s1 + $0x3e0] sm:$0xf]
    %v543 = vld [vmem:[%s1 + $0x3e4] sm:$0xf]
    %v544 = vld [vmem:[%s1 + $0x3e8] sm:$0xf]
    %v545 = vld [vmem:[%s1 + $0x3ec] sm:$0xf]
    %v546 = vld [vmem:[%s1 + $0x3f0] sm:$0xf]
    %v547 = vld [vmem:[%s1 + $0x3f4] sm:$0xf]
    %v548 = vld [vmem:[%s1 + $0x3f8] sm:$0xf]
    %v549 = vld [vmem:[%s1 + $0x3fc] sm:$0xf]
    %v550 = vld [vmem:[%s1 + $0x400] sm:$0xf]
    %v551 = vld [vmem:[%s1 + $0x404] sm:$0xf]
    %v552 = vld [vmem:[%s1 + $0x408] sm:$0xf]
    %v553 = vld [vmem:[%s1 + $0x40c] sm:$0xf]
    %v554 = vld [vmem:[%s1 + $0x410] sm:$0xf]
    %v555 = vld [vmem:[%s1 + $0x414] sm:$0xf]
    %v556 = vld [vmem:[%s1 + $0x418] sm:$0xf]
    %v557 = vld [vmem:[%s1 + $0x41c] sm:$0xf]
    %v558 = vld [vmem:[%s1 + $0x420] sm:$0xf]
    %v559 = vld [vmem:[%s1 + $0x424] sm:$0xf]
    %v560 = vld [vmem:[%s1 + $0x428] sm:$0xf]
    %v561 = vld [vmem:[%s1 + $0x42c] sm:$0xf]
    %v562 = vld [vmem:[%s1 + $0x430] sm:$0xf]
    %v563 = vld [vmem:[%s1 + $0x434] sm:$0xf]
    %v564 = vld [vmem:[%s1 + $0x438] sm:$0xf]
    %v565 = vld [vmem:[%s1 + $0x43c] sm:$0xf]
    %v566 = vld [vmem:[%s1 + $0x440] sm:$0xf]
    %v567 = vld [vmem:[%s1 + $0x444] sm:$0xf]
    %v568 = vld [vmem:[%s1 + $0x448] sm:$0xf]
    %v569 = vld [vmem:[%s1 + $0x44c] sm:$0xf]
    %v570 = vld [vmem:[%s1 + $0x450] sm:$0xf]
    %v571 = vld [vmem:[%s1 + $0x454] sm:$0xf]
    %v572 = vld [vmem:[%s1 + $0x458] sm:$0xf]
    %v573 = vld [vmem:[%s1 + $0x45c] sm:$0xf]
    %v574 = vld [vmem:[%s1 + $0x460] sm:$0xf]
    %v575 = vld [vmem:[%s1 + $0x464] sm:$0xf]
    %v576 = vld [vmem:[%s1 + $0x468] sm:$0xf]
    %v577 = vld [vmem:[%s1 + $0x46c] sm:$0xf]
    %v578 = vld [vmem:[%s1 + $0x470] sm:$0xf]
    %v579 = vld [vmem:[%s1 + $0x474] sm:$0xf]
    %v580 = vld [vmem:[%s1 + $0x478] sm:$0xf]
    %v581 = vld [vmem:[%s1 + $0x47c] sm:$0xf]
    %v582 = vld [vmem:[%s1 + $0x480] sm:$0xf]
    %v583 = vld [vmem:[%s1 + $0x484] sm:$0xf]
    %v584 = vld [vmem:[%s1 + $0x488] sm:$0xf]
    %v585 = vld [vmem:[%s1 + $0x48c] sm:$0xf]
    %v586 = vld [vmem:[%s1 + $0x490] sm:$0xf]
    %v587 = vld [vmem:[%s1 + $0x494] sm:$0xf]
    %v588 = vld [vmem:[%s1 + $0x498] sm:$0xf]
    %v589 = vld [vmem:[%s1 + $0x49c] sm:$0xf]
    %v590 = vld [vmem:[%s1 + $0x4a0] sm:$0xf]
    %v591 = vld [vmem:[%s1 + $0x4a4] sm:$0xf]
    %v592 = vld [vmem:[%s1 + $0x4a8] sm:$0xf]
    %v593 = vld [vmem:[%s1 + $0x4ac] sm:$0xf]
    %v594 = vld [vmem:[%s1 + $0x4b0] sm:$0xf]
    %v595 = vld [vmem:[%s1 + $0x4b4] sm:$0xf]
    %v596 = vld [vmem:[%s1 + $0x4b8] sm:$0xf]
    %v597 = vld [vmem:[%s1 + $0x4bc] sm:$0xf]
    %v598 = vld [vmem:[%s1 + $0x4c0] sm:$0xf]
    %v599 = vld [vmem:[%s1 + $0x4c4] sm:$0xf]
    %v600 = vld [vmem:[%s1 + $0x4c8] sm:$0xf]
    %v601 = vld [vmem:[%s1 + $0x4cc] sm:$0xf]
    %v602 = vld [vmem:[%s1 + $0x4d0] sm:$0xf]
    %v603 = vld [vmem:[%s1 + $0x4d4] sm:$0xf]
    %v604 = vld [vmem:[%s1 + $0x4d8] sm:$0xf]
    %v605 = vld [vmem:[%s1 + $0x4dc] sm:$0xf]
    %v606 = vld [vmem:[%s1 + $0x4e0] sm:$0xf]
    %v607 = vld [vmem:[%s1 + $0x4e4] sm:$0xf]
    %v608 = vld [vmem:[%s1 + $0x4e8] sm:$0xf]
    %v609 = vld [vmem:[%s1 + $0x4ec] sm:$0xf]
    %v610 = vld [vmem:[%s1 + $0x4f0] sm:$0xf]
    %v611 = vld [vmem:[%s1 + $0x4f4] sm:$0xf]
    %v612 = vld [vmem:[%s1 + $0x4f8] sm:$0xf]
    %v613 = vld [vmem:[%s1 + $0x4fc] sm:$0xf]
    %v614 = vld [vmem:[%s1 + $0x500] sm:$0xf]
    %v615 = vld [vmem:[%s1 + $0x504] sm:$0xf]
    %v616 = vld [vmem:[%s1 + $0x508] sm:$0xf]
    %v617 = vld [vmem:[%s1 + $0x50c] sm:$0xf]
    %v618 = vld [vmem:[%s1 + $0x510] sm:$0xf]
    %v619 = vld [vmem:[%s1 + $0x514] sm:$0xf]
    %v620 = vld [vmem:[%s1 + $0x518] sm:$0xf]
    %v621 = vld [vmem:[%s1 + $0x51c] sm:$0xf]
    %v622 = vld [vmem:[%s1 + $0x520] sm:$0xf]
    %v623 = vld [vmem:[%s1 + $0x524] sm:$0xf]
    %v624 = vld [vmem:[%s1 + $0x528] sm:$0xf]
    %v625 = vld [vmem:[%s1 + $0x52c] sm:$0xf]
    %v626 = vld [vmem:[%s1 + $0x530] sm:$0xf]
    %v627 = vld [vmem:[%s1 + $0x534] sm:$0xf]
    %v628 = vld [vmem:[%s1 + $0x538] sm:$0xf]
    %v629 = vld [vmem:[%s1 + $0x53c] sm:$0xf]
    %v630 = vld [vmem:[%s1 + $0x540] sm:$0xf]
    %v631 = vld [vmem:[%s1 + $0x544] sm:$0xf]
    %v632 = vld [vmem:[%s1 + $0x548] sm:$0xf]
    %v633 = vld [vmem:[%s1 + $0x54c] sm:$0xf]
    %v634 = vld [vmem:[%s1 + $0x550] sm:$0xf]
    %v635 = vld [vmem:[%s1 + $0x554] sm:$0xf]
    %v636 = vld [vmem:[%s1 + $0x558] sm:$0xf]
    %v637 = vld [vmem:[%s1 + $0x55c] sm:$0xf]
    %v638 = vld [vmem:[%s1 + $0x560] sm:$0xf]
    %v639 = vld [vmem:[%s1 + $0x564] sm:$0xf]
    %v640 = vld [vmem:[%s1 + $0x568] sm:$0xf]
    %v641 = vld [vmem:[%s1 + $0x56c] sm:$0xf]
    %v642 = vld [vmem:[%s1 + $0x570] sm:$0xf]
    %v643 = vld [vmem:[%s1 + $0x574] sm:$0xf]
    %v644 = vld [vmem:[%s1 + $0x578] sm:$0xf]
    %v645 = vld [vmem:[%s1 + $0x57c] sm:$0xf]
    %v646 = vld [vmem:[%s1 + $0x580] sm:$0xf]
    %v647 = vld [vmem:[%s1 + $0x584] sm:$0xf]
    %v648 = vld [vmem:[%s1 + $0x588] sm:$0xf]
    %v649 = vld [vmem:[%s1 + $0x58c] sm:$0xf]
    %v650 = vld [vmem:[%s1 + $0x590] sm:$0xf]
    %v651 = vld [vmem:[%s1 + $0x594] sm:$0xf]
    %v652 = vld [vmem:[%s1 + $0x598] sm:$0xf]
    %v653 = vld [vmem:[%s1 + $0x59c] sm:$0xf]
    %v654 = vld [vmem:[%s1 + $0x5a0] sm:$0xf]
    %v655 = vld [vmem:[%s1 + $0x5a4] sm:$0xf]
    %v656 = vld [vmem:[%s1 + $0x5a8] sm:$0xf]
    %v657 = vld [vmem:[%s1 + $0x5ac] sm:$0xf]
    %v658 = vld [vmem:[%s1 + $0x5b0] sm:$0xf]
    %v659 = vld [vmem:[%s1 + $0x5b4] sm:$0xf]
    %v660 = vld [vmem:[%s1 + $0x5b8] sm:$0xf]
    %v661 = vld [vmem:[%s1 + $0x5bc] sm:$0xf]
    %v662 = vld [vmem:[%s1 + $0x5c0] sm:$0xf]
    %v663 = vld [vmem:[%s1 + $0x5c4] sm:$0xf]
    %v664 = vld [vmem:[%s1 + $0x5c8] sm:$0xf]
    %v665 = vld [vmem:[%s1 + $0x5cc] sm:$0xf]
    %v666 = vld [vmem:[%s1 + $0x5d0] sm:$0xf]
    %v667 = vld [vmem:[%s1 + $0x5d4] sm:$0xf]
    %v668 = vld [vmem:[%s1 + $0x5d8] sm:$0xf]
    %v669 = vld [vmem:[%s1 + $0x5dc] sm:$0xf]
    %v670 = vld [vmem:[%s1 + $0x5e0] sm:$0xf]
    %v671 = vld [vmem:[%s1 + $0x5e4] sm:$0xf]
    %v672 = vld [vmem:[%s1 + $0x5e8] sm:$0xf]
    %v673 = vld [vmem:[%s1 + $0x5ec] sm:$0xf]
    %v674 = vld [vmem:[%s1 + $0x5f0] sm:$0xf]
    %v675 = vld [vmem:[%s1 + $0x5f4] sm:$0xf]
    %v676 = vld [vmem:[%s1 + $0x5f8] sm:$0xf]
    %v677 = vld [vmem:[%s1 + $0x5fc] sm:$0xf]
    %v678 = vld [vmem:[%s1 + $0x600] sm:$0xf]
    %v679 = vld [vmem:[%s1 + $0x604] sm:$0xf]
    %v680 = vld [vmem:[%s1 + $0x608] sm:$0xf]
    %v681 = vld [vmem:[%s1 + $0x60c] sm:$0xf]
    %v682 = vld [vmem:[%s1 + $0x610] sm:$0xf]
    %v683 = vld [vmem:[%s1 + $0x614] sm:$0xf]
    %v684 = vld [vmem:[%s1 + $0x618] sm:$0xf]
    %v685 = vld [vmem:[%s1 + $0x61c] sm:$0xf]
    %v686 = vld [vmem:[%s1 + $0x620] sm:$0xf]
    %v687 = vld [vmem:[%s1 + $0x624] sm:$0xf]
    %v688 = vld [vmem:[%s1 + $0x628] sm:$0xf]
    %v689 = vld [vmem:[%s1 + $0x62c] sm:$0xf]
    %v690 = vld [vmem:[%s1 + $0x630] sm:$0xf]
    %v691 = vld [vmem:[%s1 + $0x634] sm:$0xf]
    %v692 = vld [vmem:[%s1 + $0x638] sm:$0xf]
    %v693 = vld [vmem:[%s1 + $0x63c] sm:$0xf]
    %v694 = vld [vmem:[%s1 + $0x640] sm:$0xf]
    %v695 = vld [vmem:[%s1 + $0x644] sm:$0xf]
    %v696 = vld [vmem:[%s1 + $0x648] sm:$0xf]
    %v697 = vld [vmem:[%s1 + $0x64c] sm:$0xf]
    %v698 = vld [vmem:[%s1 + $0x650] sm:$0xf]
    %v699 = vld [vmem:[%s1 + $0x654] sm:$0xf]
    %v700 = vld [vmem:[%s1 + $0x658] sm:$0xf]
    %v701 = vld [vmem:[%s1 + $0x65c] sm:$0xf]
    %v702 = vld [vmem:[%s1 + $0x660] sm:$0xf]
    %v703 = vld [vmem:[%s1 + $0x664] sm:$0xf]
    %v704 = vld [vmem:[%s1 + $0x668] sm:$0xf]
    %v705 = vld [vmem:[%s1 + $0x66c] sm:$0xf]
    %v706 = vld [vmem:[%s1 + $0x670] sm:$0xf]
    %v707 = vld [vmem:[%s1 + $0x674] sm:$0xf]
    %v708 = vld [vmem:[%s1 + $0x678] sm:$0xf]
    %v709 = vld [vmem:[%s1 + $0x67c] sm:$0xf]
    %v710 = vld [vmem:[%s1 + $0x680] sm:$0xf]
    %v711 = vld [vmem:[%s1 + $0x684] sm:$0xf]
    %v712 = vld [vmem:[%s1 + $0x688] sm:$0xf]
    %v713 = vld [vmem:[%s1 + $0x68c] sm:$0xf]
    %v714 = vld [vmem:[%s1 + $0x690] sm:$0xf]
    %v715 = vld [vmem:[%s1 + $0x694] sm:$0xf]
    %v716 = vld [vmem:[%s1 + $0x698] sm:$0xf]
    %v717 = vld [vmem:[%s1 + $0x69c] sm:$0xf]
    %v718 = vld [vmem:[%s1 + $0x6a0] sm:$0xf]
    %v719 = vld [vmem:[%s1 + $0x6a4] sm:$0xf]
    %v720 = vld [vmem:[%s1 + $0x6a8] sm:$0xf]
    %v721 = vld [vmem:[%s1 + $0x6ac] sm:$0xf]
    %v722 = vld [vmem:[%s1 + $0x6b0] sm:$0xf]
    %v723 = vld [vmem:[%s1 + $0x6b4] sm:$0xf]
    %v724 = vld [vmem:[%s1 + $0x6b8] sm:$0xf]
    %v725 = vld [vmem:[%s1 + $0x6bc] sm:$0xf]
    %v726 = vld [vmem:[%s1 + $0x6c0] sm:$0xf]
    %v727 = vld [vmem:[%s1 + $0x6c4] sm:$0xf]
    %v728 = vld [vmem:[%s1 + $0x6c8] sm:$0xf]
    %v729 = vld [vmem:[%s1 + $0x6cc] sm:$0xf]
    %v730 = vld [vmem:[%s1 + $0x6d0] sm:$0xf]
    %v731 = vld [vmem:[%s1 + $0x6d4] sm:$0xf]
    %v732 = vld [vmem:[%s1 + $0x6d8] sm:$0xf]
    %v733 = vld [vmem:[%s1 + $0x6dc] sm:$0xf]
    %v734 = vld [vmem:[%s1 + $0x6e0] sm:$0xf]
    %v735 = vld [vmem:[%s1 + $0x6e4] sm:$0xf]
    %v736 = vld [vmem:[%s1 + $0x6e8] sm:$0xf]
    %v737 = vld [vmem:[%s1 + $0x6ec] sm:$0xf]
    %v738 = vld [vmem:[%s1 + $0x6f0] sm:$0xf]
    %v739 = vld [vmem:[%s1 + $0x6f4] sm:$0xf]
    %v740 = vld [vmem:[%s1 + $0x6f8] sm:$0xf]
    %v741 = vld [vmem:[%s1 + $0x6fc] sm:$0xf]
    %v742 = vld [vmem:[%s1 + $0x700] sm:$0xf]
    %v743 = vld [vmem:[%s1 + $0x704] sm:$0xf]
    %v744 = vld [vmem:[%s1 + $0x708] sm:$0xf]
    %v745 = vld [vmem:[%s1 + $0x70c] sm:$0xf]
    %v746 = vld [vmem:[%s1 + $0x710] sm:$0xf]
    %v747 = vld [vmem:[%s1 + $0x714] sm:$0xf]
    %v748 = vld [vmem:[%s1 + $0x718] sm:$0xf]
    %v749 = vld [vmem:[%s1 + $0x71c] sm:$0xf]
    %v750 = vld [vmem:[%s1 + $0x720] sm:$0xf]
    %v751 = vld [vmem:[%s1 + $0x724] sm:$0xf]
    %v752 = vld [vmem:[%s1 + $0x728] sm:$0xf]
    %v753 = vld [vmem:[%s1 + $0x72c] sm:$0xf]
    %v754 = vld [vmem:[%s1 + $0x730] sm:$0xf]
    %v755 = vld [vmem:[%s1 + $0x734] sm:$0xf]
    %v756 = vld [vmem:[%s1 + $0x738] sm:$0xf]
    %v757 = vld [vmem:[%s1 + $0x73c] sm:$0xf]
    %v758 = vld [vmem:[%s1 + $0x740] sm:$0xf]
    %v759 = vld [vmem:[%s1 + $0x744] sm:$0xf]
    %v760 = vld [vmem:[%s1 + $0x748] sm:$0xf]
    %v761 = vld [vmem:[%s1 + $0x74c] sm:$0xf]
    %v762 = vld [vmem:[%s1 + $0x750] sm:$0xf]
    %v763 = vld [vmem:[%s1 + $0x754] sm:$0xf]
    %v764 = vld [vmem:[%s1 + $0x758] sm:$0xf]
    %v765 = vld [vmem:[%s1 + $0x75c] sm:$0xf]
    %v766 = vld [vmem:[%s1 + $0x760] sm:$0xf]
    %v767 = vld [vmem:[%s1 + $0x764] sm:$0xf]
    %v768 = vld [vmem:[%s1 + $0x768] sm:$0xf]
    %v769 = vld [vmem:[%s1 + $0x76c] sm:$0xf]
    %v770 = vld [vmem:[%s1 + $0x770] sm:$0xf]
    %v771 = vld [vmem:[%s1 + $0x774] sm:$0xf]
    %v772 = vld [vmem:[%s1 + $0x778] sm:$0xf]
    %v773 = vld [vmem:[%s1 + $0x77c] sm:$0xf]
    %v774 = vld [vmem:[%s1 + $0x780] sm:$0xf]
    %v775 = vld [vmem:[%s1 + $0x784] sm:$0xf]
    %v776 = vld [vmem:[%s1 + $0x788] sm:$0xf]
    %v777 = vld [vmem:[%s1 + $0x78c] sm:$0xf]
    %v778 = vld [vmem:[%s1 + $0x790] sm:$0xf]
    %v779 = vld [vmem:[%s1 + $0x794] sm:$0xf]
    %v780 = vld [vmem:[%s1 + $0x798] sm:$0xf]
    %v781 = vld [vmem:[%s1 + $0x79c] sm:$0xf]
    %v782 = vld [vmem:[%s1 + $0x7a0] sm:$0xf]
    %v783 = vld [vmem:[%s1 + $0x7a4] sm:$0xf]
    %v784 = vld [vmem:[%s1 + $0x7a8] sm:$0xf]
    %v785 = vld [vmem:[%s1 + $0x7ac] sm:$0xf]
    %v786 = vld [vmem:[%s1 + $0x7b0] sm:$0xf]
    %v787 = vld [vmem:[%s1 + $0x7b4] sm:$0xf]
    %v788 = vld [vmem:[%s1 + $0x7b8] sm:$0xf]
    %v789 = vld [vmem:[%s1 + $0x7bc] sm:$0xf]
    %v790 = vld [vmem:[%s1 + $0x7c0] sm:$0xf]
    %v791 = vld [vmem:[%s1 + $0x7c4] sm:$0xf]
    %v792 = vld [vmem:[%s1 + $0x7c8] sm:$0xf]
    %v793 = vld [vmem:[%s1 + $0x7cc] sm:$0xf]
    %v794 = vld [vmem:[%s1 + $0x7d0] sm:$0xf]
    %v795 = vld [vmem:[%s1 + $0x7d4] sm:$0xf]
    %v796 = vld [vmem:[%s1 + $0x7d8] sm:$0xf]
    %v797 = vld [vmem:[%s1 + $0x7dc] sm:$0xf]
    %v798 = vld [vmem:[%s1 + $0x7e0] sm:$0xf]
    %v799 = vld [vmem:[%s1 + $0x7e4] sm:$0xf]
    %v800 = vld [vmem:[%s1 + $0x7e8] sm:$0xf]
    %v801 = vld [vmem:[%s1 + $0x7ec] sm:$0xf]
    %v802 = vld [vmem:[%s1 + $0x7f0] sm:$0xf]
    %v803 = vld [vmem:[%s1 + $0x7f4] sm:$0xf]
    %v804 = vld [vmem:[%s1 + $0x7f8] sm:$0xf]
    %v805 = vld [vmem:[%s1 + $0x7fc] sm:$0xf]
    %v806 = vld [vmem:[%s1 + $0x800] sm:$0xf]
    %v807 = vld [vmem:[%s1 + $0x804] sm:$0xf]
    %v808 = vld [vmem:[%s1 + $0x808] sm:$0xf]
    %v809 = vld [vmem:[%s1 + $0x80c] sm:$0xf]
    %v810 = vld [vmem:[%s1 + $0x810] sm:$0xf]
    %v811 = vld [vmem:[%s1 + $0x814] sm:$0xf]
    %v812 = vld [vmem:[%s1 + $0x818] sm:$0xf]
    %v813 = vld [vmem:[%s1 + $0x81c] sm:$0xf]
    %v814 = vld [vmem:[%s1 + $0x820] sm:$0xf]
    %v815 = vld [vmem:[%s1 + $0x824] sm:$0xf]
    %v816 = vld [vmem:[%s1 + $0x828] sm:$0xf]
    %v817 = vld [vmem:[%s1 + $0x82c] sm:$0xf]
    %v818 = vld [vmem:[%s1 + $0x830] sm:$0xf]
    %v819 = vld [vmem:[%s1 + $0x834] sm:$0xf]
    %v820 = vld [vmem:[%s1 + $0x838] sm:$0xf]
    %v821 = vld [vmem:[%s1 + $0x83c] sm:$0xf]
    %v822 = vld [vmem:[%s1 + $0x840] sm:$0xf]
    %v823 = vld [vmem:[%s1 + $0x844] sm:$0xf]
    %v824 = vld [vmem:[%s1 + $0x848] sm:$0xf]
    %v825 = vld [vmem:[%s1 + $0x84c] sm:$0xf]
    %v826 = vld [vmem:[%s1 + $0x850] sm:$0xf]
    %v827 = vld [vmem:[%s1 + $0x854] sm:$0xf]
    %v828 = vld [vmem:[%s1 + $0x858] sm:$0xf]
    %v829 = vld [vmem:[%s1 + $0x85c] sm:$0xf]
    %v830 = vld [vmem:[%s1 + $0x860] sm:$0xf]
    %v831 = vld [vmem:[%s1 + $0x864] sm:$0xf]
    %v832 = vld [vmem:[%s1 + $0x868] sm:$0xf]
    %v833 = vld [vmem:[%s1 + $0x86c] sm:$0xf]
    %v834 = vld [vmem:[%s1 + $0x870] sm:$0xf]
    %v835 = vld [vmem:[%s1 + $0x874] sm:$0xf]
    %v836 = vld [vmem:[%s1 + $0x878] sm:$0xf]
    %v837 = vld [vmem:[%s1 + $0x87c] sm:$0xf]
    %v838 = vld [vmem:[%s1 + $0x880] sm:$0xf]
    %v839 = vld [vmem:[%s1 + $0x884] sm:$0xf]
    %v840 = vld [vmem:[%s1 + $0x888] sm:$0xf]
    %v841 = vld [vmem:[%s1 + $0x88c] sm:$0xf]
    %v842 = vld [vmem:[%s1 + $0x890] sm:$0xf]
    %v843 = vld [vmem:[%s1 + $0x894] sm:$0xf]
    %v844 = vld [vmem:[%s1 + $0x898] sm:$0xf]
    %v845 = vld [vmem:[%s1 + $0x89c] sm:$0xf]
    %v846 = vld [vmem:[%s1 + $0x8a0] sm:$0xf]
    %v847 = vld [vmem:[%s1 + $0x8a4] sm:$0xf]
    %v848 = vld [vmem:[%s1 + $0x8a8] sm:$0xf]
    %v849 = vld [vmem:[%s1 + $0x8ac] sm:$0xf]
    %v850 = vld [vmem:[%s1 + $0x8b0] sm:$0xf]
    %v851 = vld [vmem:[%s1 + $0x8b4] sm:$0xf]
    %v852 = vld [vmem:[%s1 + $0x8b8] sm:$0xf]
    %v853 = vld [vmem:[%s1 + $0x8bc] sm:$0xf]
    %v854 = vld [vmem:[%s1 + $0x8c0] sm:$0xf]
    %v855 = vld [vmem:[%s1 + $0x8c4] sm:$0xf]
    %v856 = vld [vmem:[%s1 + $0x8c8] sm:$0xf]
    %v857 = vld [vmem:[%s1 + $0x8cc] sm:$0xf]
    %v858 = vld [vmem:[%s1 + $0x8d0] sm:$0xf]
    %v859 = vld [vmem:[%s1 + $0x8d4] sm:$0xf]
    %v860 = vld [vmem:[%s1 + $0x8d8] sm:$0xf]
    %v861 = vld [vmem:[%s1 + $0x8dc] sm:$0xf]
    %v862 = vld [vmem:[%s1 + $0x8e0] sm:$0xf]
    %v863 = vld [vmem:[%s1 + $0x8e4] sm:$0xf]
    %v864 = vld [vmem:[%s1 + $0x8e8] sm:$0xf]
    %v865 = vld [vmem:[%s1 + $0x8ec] sm:$0xf]
    %v866 = vld [vmem:[%s1 + $0x8f0] sm:$0xf]
    %v867 = vld [vmem:[%s1 + $0x8f4] sm:$0xf]
    %v868 = vld [vmem:[%s1 + $0x8f8] sm:$0xf]
    %v869 = vld [vmem:[%s1 + $0x8fc] sm:$0xf]
    %v870 = vld [vmem:[%s1 + $0x900] sm:$0xf]
    %v871 = vld [vmem:[%s1 + $0x904] sm:$0xf]
    %v872 = vld [vmem:[%s1 + $0x908] sm:$0xf]
    %v873 = vld [vmem:[%s1 + $0x90c] sm:$0xf]
    %v874 = vld [vmem:[%s1 + $0x910] sm:$0xf]
    %v875 = vld [vmem:[%s1 + $0x914] sm:$0xf]
    %v876 = vld [vmem:[%s1 + $0x918] sm:$0xf]
    %v877 = vld [vmem:[%s1 + $0x91c] sm:$0xf]
    %v878 = vld [vmem:[%s1 + $0x920] sm:$0xf]
    %v879 = vld [vmem:[%s1 + $0x924] sm:$0xf]
    %v880 = vld [vmem:[%s1 + $0x928] sm:$0xf]
    %v881 = vld [vmem:[%s1 + $0x92c] sm:$0xf]
    %v882 = vld [vmem:[%s1 + $0x930] sm:$0xf]
    %v883 = vld [vmem:[%s1 + $0x934] sm:$0xf]
    %v884 = vld [vmem:[%s1 + $0x938] sm:$0xf]
    %v885 = vld [vmem:[%s1 + $0x93c] sm:$0xf]
    %v886 = vld [vmem:[%s1 + $0x940] sm:$0xf]
    %v887 = vld [vmem:[%s1 + $0x944] sm:$0xf]
    %v888 = vld [vmem:[%s1 + $0x948] sm:$0xf]
    %v889 = vld [vmem:[%s1 + $0x94c] sm:$0xf]
    %v890 = vld [vmem:[%s1 + $0x950] sm:$0xf]
    %v891 = vld [vmem:[%s1 + $0x954] sm:$0xf]
    %v892 = vld [vmem:[%s1 + $0x958] sm:$0xf]
    %v893 = vld [vmem:[%s1 + $0x95c] sm:$0xf]
    %v894 = vld [vmem:[%s1 + $0x960] sm:$0xf]
    %v895 = vld [vmem:[%s1 + $0x964] sm:$0xf]
    %v896 = vld [vmem:[%s1 + $0x968] sm:$0xf]
    %v897 = vld [vmem:[%s1 + $0x96c] sm:$0xf]
    %v898 = vld [vmem:[%s1 + $0x970] sm:$0xf]
    %v899 = vld [vmem:[%s1 + $0x974] sm:$0xf]
    %v900 = vld [vmem:[%s1 + $0x978] sm:$0xf]
    %v901 = vld [vmem:[%s1 + $0x97c] sm:$0xf]
    %v902 = vld [vmem:[%s1 + $0x980] sm:$0xf]
    %v903 = vld [vmem:[%s1 + $0x984] sm:$0xf]
    %v904 = vld [vmem:[%s1 + $0x988] sm:$0xf]
    %v905 = vld [vmem:[%s1 + $0x98c] sm:$0xf]
    %v906 = vld [vmem:[%s1 + $0x990] sm:$0xf]
    %v907 = vld [vmem:[%s1 + $0x994] sm:$0xf]
    %v908 = vld [vmem:[%s1 + $0x998] sm:$0xf]
    %v909 = vld [vmem:[%s1 + $0x99c] sm:$0xf]
    %v910 = vld [vmem:[%s1 + $0x9a0] sm:$0xf]
    %v911 = vld [vmem:[%s1 + $0x9a4] sm:$0xf]
    %v912 = vld [vmem:[%s1 + $0x9a8] sm:$0xf]
    %v913 = vld [vmem:[%s1 + $0x9ac] sm:$0xf]
    %v914 = vld [vmem:[%s1 + $0x9b0] sm:$0xf]
    %v915 = vld [vmem:[%s1 + $0x9b4] sm:$0xf]
    %v916 = vld [vmem:[%s1 + $0x9b8] sm:$0xf]
    %v917 = vld [vmem:[%s1 + $0x9bc] sm:$0xf]
    %v918 = vld [vmem:[%s1 + $0x9c0] sm:$0xf]
    %v919 = vld [vmem:[%s1 + $0x9c4] sm:$0xf]
    %v920 = vld [vmem:[%s1 + $0x9c8] sm:$0xf]
    %v921 = vld [vmem:[%s1 + $0x9cc] sm:$0xf]
    %v922 = vld [vmem:[%s1 + $0x9d0] sm:$0xf]
    %v923 = vld [vmem:[%s1 + $0x9d4] sm:$0xf]
    %v924 = vld [vmem:[%s1 + $0x9d8] sm:$0xf]
    %v925 = vld [vmem:[%s1 + $0x9dc] sm:$0xf]
    %v926 = vld [vmem:[%s1 + $0x9e0] sm:$0xf]
    %v927 = vld [vmem:[%s1 + $0x9e4] sm:$0xf]
    %v928 = vld [vmem:[%s1 + $0x9e8] sm:$0xf]
    %v929 = vld [vmem:[%s1 + $0x9ec] sm:$0xf]
    %v930 = vld [vmem:[%s1 + $0x9f0] sm:$0xf]
    %v931 = vld [vmem:[%s1 + $0x9f4] sm:$0xf]
    %v932 = vld [vmem:[%s1 + $0x9f8] sm:$0xf]
    %v933 = vld [vmem:[%s1 + $0x9fc] sm:$0xf]
    %v934 = vld [vmem:[%s1 + $0xa00] sm:$0xf]
    %v935 = vld [vmem:[%s1 + $0xa04] sm:$0xf]
    %v936 = vld [vmem:[%s1 + $0xa08] sm:$0xf]
    %v937 = vld [vmem:[%s1 + $0xa0c] sm:$0xf]
    %v938 = vld [vmem:[%s1 + $0xa10] sm:$0xf]
    %v939 = vld [vmem:[%s1 + $0xa14] sm:$0xf]
    %v940 = vld [vmem:[%s1 + $0xa18] sm:$0xf]
    %v941 = vld [vmem:[%s1 + $0xa1c] sm:$0xf]
    %v942 = vld [vmem:[%s1 + $0xa20] sm:$0xf]
    %v943 = vld [vmem:[%s1 + $0xa24] sm:$0xf]
    %v944 = vld [vmem:[%s1 + $0xa28] sm:$0xf]
    %v945 = vld [vmem:[%s1 + $0xa2c] sm:$0xf]
    %v946 = vld [vmem:[%s1 + $0xa30] sm:$0xf]
    %v947 = vld [vmem:[%s1 + $0xa34] sm:$0xf]
    %v948 = vld [vmem:[%s1 + $0xa38] sm:$0xf]
    %v949 = vld [vmem:[%s1 + $0xa3c] sm:$0xf]
    %v950 = vld [vmem:[%s1 + $0xa40] sm:$0xf]
    %v951 = vld [vmem:[%s1 + $0xa44] sm:$0xf]
    %v952 = vld [vmem:[%s1 + $0xa48] sm:$0xf]
    %v953 = vld [vmem:[%s1 + $0xa4c] sm:$0xf]
    %v954 = vld [vmem:[%s1 + $0xa50] sm:$0xf]
    %v955 = vld [vmem:[%s1 + $0xa54] sm:$0xf]
    %v956 = vld [vmem:[%s1 + $0xa58] sm:$0xf]
    %v957 = vld [vmem:[%s1 + $0xa5c] sm:$0xf]
    %v958 = vld [vmem:[%s1 + $0xa60] sm:$0xf]
    %v959 = vld [vmem:[%s1 + $0xa64] sm:$0xf]
    %v960 = vld [vmem:[%s1 + $0xa68] sm:$0xf]
    %v961 = vld [vmem:[%s1 + $0xa6c] sm:$0xf]
    %v962 = vld [vmem:[%s1 + $0xa70] sm:$0xf]
    %v963 = vld [vmem:[%s1 + $0xa74] sm:$0xf]
    %v964 = vld [vmem:[%s1 + $0xa78] sm:$0xf]
    %v965 = vld [vmem:[%s1 + $0xa7c] sm:$0xf]
    %v966 = vld [vmem:[%s1 + $0xa80] sm:$0xf]
    %v967 = vld [vmem:[%s1 + $0xa84] sm:$0xf]
    %v968 = vld [vmem:[%s1 + $0xa88] sm:$0xf]
    %v969 = vld [vmem:[%s1 + $0xa8c] sm:$0xf]
    %v970 = vld [vmem:[%s1 + $0xa90] sm:$0xf]
    %v971 = vld [vmem:[%s1 + $0xa94] sm:$0xf]
    %v972 = vld [vmem:[%s1 + $0xa98] sm:$0xf]
    %v973 = vld [vmem:[%s1 + $0xa9c] sm:$0xf]
    %v974 = vld [vmem:[%s1 + $0xaa0] sm:$0xf]
    %v975 = vld [vmem:[%s1 + $0xaa4] sm:$0xf]
    %v976 = vld [vmem:[%s1 + $0xaa8] sm:$0xf]
    %v977 = vld [vmem:[%s1 + $0xaac] sm:$0xf]
    %v978 = vld [vmem:[%s1 + $0xab0] sm:$0xf]
    %v979 = vld [vmem:[%s1 + $0xab4] sm:$0xf]
    %v980 = vld [vmem:[%s1 + $0xab8] sm:$0xf]
    %v981 = vld [vmem:[%s1 + $0xabc] sm:$0xf]
    %v982 = vld [vmem:[%s1 + $0xac0] sm:$0xf]
    %v983 = vld [vmem:[%s1 + $0xac4] sm:$0xf]
    %v984 = vld [vmem:[%s1 + $0xac8] sm:$0xf]
    %v985 = vld [vmem:[%s1 + $0xacc] sm:$0xf]
    %v986 = vld [vmem:[%s1 + $0xad0] sm:$0xf]
    %v987 = vld [vmem:[%s1 + $0xad4] sm:$0xf]
    %v988 = vld [vmem:[%s1 + $0xad8] sm:$0xf]
    %v989 = vld [vmem:[%s1 + $0xadc] sm:$0xf]
    %v990 = vld [vmem:[%s1 + $0xae0] sm:$0xf]
    %v991 = vld [vmem:[%s1 + $0xae4] sm:$0xf]
    %v992 = vld [vmem:[%s1 + $0xae8] sm:$0xf]
    %v993 = vld [vmem:[%s1 + $0xaec] sm:$0xf]
    %v994 = vld [vmem:[%s1 + $0xaf0] sm:$0xf]
    %v995 = vld [vmem:[%s1 + $0xaf4] sm:$0xf]
    %v996 = vld [vmem:[%s1 + $0xaf8] sm:$0xf]
    %v997 = vld [vmem:[%s1 + $0xafc] sm:$0xf]
    %v998 = vld [vmem:[%s1 + $0xb00] sm:$0xf]
    %v999 = vld [vmem:[%s1 + $0xb04] sm:$0xf]
    %v1000 = vld [vmem:[%s1 + $0xb08] sm:$0xf]
    %v1001 = vld [vmem:[%s1 + $0xb0c] sm:$0xf]
    %v1002 = vld [vmem:[%s1 + $0xb10] sm:$0xf]
    %v1003 = vld [vmem:[%s1 + $0xb14] sm:$0xf]
    %v1004 = vld [vmem:[%s1 + $0xb18] sm:$0xf]
    %v1005 = vld [vmem:[%s1 + $0xb1c] sm:$0xf]
    %v1006 = vld [vmem:[%s1 + $0xb20] sm:$0xf]
    %v1007 = vld [vmem:[%s1 + $0xb24] sm:$0xf]
    %v1008 = vld [vmem:[%s1 + $0xb28] sm:$0xf]
    %v1009 = vld [vmem:[%s1 + $0xb2c] sm:$0xf]
    %v1010 = vld [vmem:[%s1 + $0xb30] sm:$0xf]
    %v1011 = vld [vmem:[%s1 + $0xb34] sm:$0xf]
    %v1012 = vld [vmem:[%s1 + $0xb38] sm:$0xf]
    %v1013 = vld [vmem:[%s1 + $0xb3c] sm:$0xf]
    %v1014 = vld [vmem:[%s1 + $0xb40] sm:$0xf]
    %v1015 = vld [vmem:[%s1 + $0xb44] sm:$0xf]
    %v1016 = vld [vmem:[%s1 + $0xb48] sm:$0xf]
    %v1017 = vld [vmem:[%s1 + $0xb4c] sm:$0xf]
    %v1018 = vld [vmem:[%s1 + $0xb50] sm:$0xf]
    %v1019 = vld [vmem:[%s1 + $0xb54] sm:$0xf]
    %v1020 = vld [vmem:[%s1 + $0xb58] sm:$0xf]
    %v1021 = vld [vmem:[%s1 + $0xb5c] sm:$0xf]
    %v1022 = vld [vmem:[%s1 + $0xb60] sm:$0xf]
    %v1023 = vld [vmem:[%s1 + $0xb64] sm:$0xf]
    %v1024 = vld [vmem:[%s1 + $0xb68] sm:$0xf]
    %v1025 = vld [vmem:[%s1 + $0xb6c] sm:$0xf]
    %v1026 = vld [vmem:[%s1 + $0xb70] sm:$0xf]
    %v1027 = vld [vmem:[%s1 + $0xb74] sm:$0xf]
    %v1028 = vld [vmem:[%s1 + $0xb78] sm:$0xf]
    %v1029 = vld [vmem:[%s1 + $0xb7c] sm:$0xf]
    %v1030 = vld [vmem:[%s1 + $0xb80] sm:$0xf]
    %v1031 = vld [vmem:[%s1 + $0xb84] sm:$0xf]
    %v1032 = vld [vmem:[%s1 + $0xb88] sm:$0xf]
    %v1033 = vld [vmem:[%s1 + $0xb8c] sm:$0xf]
    %v1034 = vld [vmem:[%s1 + $0xb90] sm:$0xf]
    %v1035 = vld [vmem:[%s1 + $0xb94] sm:$0xf]
    %v1036 = vld [vmem:[%s1 + $0xb98] sm:$0xf]
    %v1037 = vld [vmem:[%s1 + $0xb9c] sm:$0xf]
    %v1038 = vld [vmem:[%s1 + $0xba0] sm:$0xf]
    %v1039 = vld [vmem:[%s1 + $0xba4] sm:$0xf]
    %v1040 = vld [vmem:[%s1 + $0xba8] sm:$0xf]
    %v1041 = vld [vmem:[%s1 + $0xbac] sm:$0xf]
    %v1042 = vld [vmem:[%s1 + $0xbb0] sm:$0xf]
    %v1043 = vld [vmem:[%s1 + $0xbb4] sm:$0xf]
    %v1044 = vld [vmem:[%s1 + $0xbb8] sm:$0xf]
    %v1045 = vld [vmem:[%s1 + $0xbbc] sm:$0xf]
    %v1046 = vld [vmem:[%s1 + $0xbc0] sm:$0xf]
    %v1047 = vld [vmem:[%s1 + $0xbc4] sm:$0xf]
    %v1048 = vld [vmem:[%s1 + $0xbc8] sm:$0xf]
    %v1049 = vld [vmem:[%s1 + $0xbcc] sm:$0xf]
    %v1050 = vld [vmem:[%s1 + $0xbd0] sm:$0xf]
    %v1051 = vld [vmem:[%s1 + $0xbd4] sm:$0xf]
    %v1052 = vld [vmem:[%s1 + $0xbd8] sm:$0xf]
    %v1053 = vld [vmem:[%s1 + $0xbdc] sm:$0xf]
    %v1054 = vld [vmem:[%s1 + $0xbe0] sm:$0xf]
    %v1055 = vld [vmem:[%s1 + $0xbe4] sm:$0xf]
    %v1056 = vld [vmem:[%s1 + $0xbe8] sm:$0xf]
    %v1057 = vld [vmem:[%s1 + $0xbec] sm:$0xf]
    %v1058 = vld [vmem:[%s1 + $0xbf0] sm:$0xf]
    %v1059 = vld [vmem:[%s1 + $0xbf4] sm:$0xf]
    %v1060 = vld [vmem:[%s1 + $0xbf8] sm:$0xf]
    %v1061 = vld [vmem:[%s1 + $0xbfc] sm:$0xf]
    %v1062 = vld [vmem:[%s1 + $0xc00] sm:$0xf]
    %v1063 = vld [vmem:[%s1 + $0xc04] sm:$0xf]
    %v1064 = vld [vmem:[%s1 + $0xc08] sm:$0xf]
    %v1065 = vld [vmem:[%s1 + $0xc0c] sm:$0xf]
    %v1066 = vld [vmem:[%s1 + $0xc10] sm:$0xf]
    %v1067 = vld [vmem:[%s1 + $0xc14] sm:$0xf]
    %v1068 = vld [vmem:[%s1 + $0xc18] sm:$0xf]
    %v1069 = vld [vmem:[%s1 + $0xc1c] sm:$0xf]
    %v1070 = vld [vmem:[%s1 + $0xc20] sm:$0xf]
    %v1071 = vld [vmem:[%s1 + $0xc24] sm:$0xf]
    %v1072 = vld [vmem:[%s1 + $0xc28] sm:$0xf]
    %v1073 = vld [vmem:[%s1 + $0xc2c] sm:$0xf]
    %v1074 = vld [vmem:[%s1 + $0xc30] sm:$0xf]
    %v1075 = vld [vmem:[%s1 + $0xc34] sm:$0xf]
    %v1076 = vld [vmem:[%s1 + $0xc38] sm:$0xf]
    %v1077 = vld [vmem:[%s1 + $0xc3c] sm:$0xf]
    %v1078 = vld [vmem:[%s1 + $0xc40] sm:$0xf]
    %v1079 = vld [vmem:[%s1 + $0xc44] sm:$0xf]
    %v1080 = vld [vmem:[%s1 + $0xc48] sm:$0xf]
    %v1081 = vld [vmem:[%s1 + $0xc4c] sm:$0xf]
    %v1082 = vld [vmem:[%s1 + $0xc50] sm:$0xf]
    %v1083 = vld [vmem:[%s1 + $0xc54] sm:$0xf]
    %v1084 = vld [vmem:[%s1 + $0xc58] sm:$0xf]
    %v1085 = vld [vmem:[%s1 + $0xc5c] sm:$0xf]
    %v1086 = vld [vmem:[%s1 + $0xc60] sm:$0xf]
    %v1087 = vld [vmem:[%s1 + $0xc64] sm:$0xf]
    %v1088 = vld [vmem:[%s1 + $0xc68] sm:$0xf]
    %v1089 = vld [vmem:[%s1 + $0xc6c] sm:$0xf]
    %v1090 = vld [vmem:[%s1 + $0xc70] sm:$0xf]
    %v1091 = vld [vmem:[%s1 + $0xc74] sm:$0xf]
    %v1092 = vld [vmem:[%s1 + $0xc78] sm:$0xf]
    %v1093 = vld [vmem:[%s1 + $0xc7c] sm:$0xf]
    %v1094 = vld [vmem:[%s1 + $0xc80] sm:$0xf]
    %v1095 = vld [vmem:[%s1 + $0xc84] sm:$0xf]
    %v1096 = vld [vmem:[%s1 + $0xc88] sm:$0xf]
    %v1097 = vld [vmem:[%s1 + $0xc8c] sm:$0xf]
    %v1098 = vld [vmem:[%s1 + $0xc90] sm:$0xf]
    %v1099 = vld [vmem:[%s1 + $0xc94] sm:$0xf]
    %v1100 = vld [vmem:[%s1 + $0xc98] sm:$0xf]
    %v1101 = vld [vmem:[%s1 + $0xc9c] sm:$0xf]
    %v1102 = vld [vmem:[%s1 + $0xca0] sm:$0xf]
    %v1103 = vld [vmem:[%s1 + $0xca4] sm:$0xf]
    %v1104 = vld [vmem:[%s1 + $0xca8] sm:$0xf]
    %v1105 = vld [vmem:[%s1 + $0xcac] sm:$0xf]
    %v1106 = vld [vmem:[%s1 + $0xcb0] sm:$0xf]
    %v1107 = vld [vmem:[%s1 + $0xcb4] sm:$0xf]
    %v1108 = vld [vmem:[%s1 + $0xcb8] sm:$0xf]
    %v1109 = vld [vmem:[%s1 + $0xcbc] sm:$0xf]
    %v1110 = vld [vmem:[%s1 + $0xcc0] sm:$0xf]
    %v1111 = vld [vmem:[%s1 + $0xcc4] sm:$0xf]
    %v1112 = vld [vmem:[%s1 + $0xcc8] sm:$0xf]
    %v1113 = vld [vmem:[%s1 + $0xccc] sm:$0xf]
    %v1114 = vld [vmem:[%s1 + $0xcd0] sm:$0xf]
    %v1115 = vld [vmem:[%s1 + $0xcd4] sm:$0xf]
    %v1116 = vld [vmem:[%s1 + $0xcd8] sm:$0xf]
    %v1117 = vld [vmem:[%s1 + $0xcdc] sm:$0xf]
    %v1118 = vld [vmem:[%s1 + $0xce0] sm:$0xf]
    %v1119 = vld [vmem:[%s1 + $0xce4] sm:$0xf]
    %v1120 = vld [vmem:[%s1 + $0xce8] sm:$0xf]
    %v1121 = vld [vmem:[%s1 + $0xcec] sm:$0xf]
    %v1122 = vld [vmem:[%s1 + $0xcf0] sm:$0xf]
    %v1123 = vld [vmem:[%s1 + $0xcf4] sm:$0xf]
    %v1124 = vld [vmem:[%s1 + $0xcf8] sm:$0xf]
    %v1125 = vld [vmem:[%s1 + $0xcfc] sm:$0xf]
    %v1126 = vld [vmem:[%s1 + $0xd00] sm:$0xf]
    %v1127 = vld [vmem:[%s1 + $0xd04] sm:$0xf]
    %v1128 = vld [vmem:[%s1 + $0xd08] sm:$0xf]
    %v1129 = vld [vmem:[%s1 + $0xd0c] sm:$0xf]
    %v1130 = vld [vmem:[%s1 + $0xd10] sm:$0xf]
    %v1131 = vld [vmem:[%s1 + $0xd14] sm:$0xf]
    %v1132 = vld [vmem:[%s1 + $0xd18] sm:$0xf]
    %v1133 = vld [vmem:[%s1 + $0xd1c] sm:$0xf]
    %v1134 = vld [vmem:[%s1 + $0xd20] sm:$0xf]
    %v1135 = vld [vmem:[%s1 + $0xd24] sm:$0xf]
    %v1136 = vld [vmem:[%s1 + $0xd28] sm:$0xf]
    %v1137 = vld [vmem:[%s1 + $0xd2c] sm:$0xf]
    %v1138 = vld [vmem:[%s1 + $0xd30] sm:$0xf]
    %v1139 = vld [vmem:[%s1 + $0xd34] sm:$0xf]
    %v1140 = vld [vmem:[%s1 + $0xd38] sm:$0xf]
    %v1141 = vld [vmem:[%s1 + $0xd3c] sm:$0xf]
    %v1142 = vld [vmem:[%s1 + $0xd40] sm:$0xf]
    %v1143 = vld [vmem:[%s1 + $0xd44] sm:$0xf]
    %v1144 = vld [vmem:[%s1 + $0xd48] sm:$0xf]
    %v1145 = vld [vmem:[%s1 + $0xd4c] sm:$0xf]
    %v1146 = vld [vmem:[%s1 + $0xd50] sm:$0xf]
    %v1147 = vld [vmem:[%s1 + $0xd54] sm:$0xf]
    %v1148 = vld [vmem:[%s1 + $0xd58] sm:$0xf]
    %v1149 = vld [vmem:[%s1 + $0xd5c] sm:$0xf]
    %v1150 = vld [vmem:[%s1 + $0xd60] sm:$0xf]
    %v1151 = vld [vmem:[%s1 + $0xd64] sm:$0xf]
    %v1152 = vld [vmem:[%s1 + $0xd68] sm:$0xf]
    %v1153 = vld [vmem:[%s1 + $0xd6c] sm:$0xf]
    %v1154 = vld [vmem:[%s1 + $0xd70] sm:$0xf]
    %v1155 = vld [vmem:[%s1 + $0xd74] sm:$0xf]
    %v1156 = vld [vmem:[%s1 + $0xd78] sm:$0xf]
    %v1157 = vld [vmem:[%s1 + $0xd7c] sm:$0xf]
    %v1158 = vld [vmem:[%s1 + $0xd80] sm:$0xf]
    %v1159 = vld [vmem:[%s1 + $0xd84] sm:$0xf]
    %v1160 = vld [vmem:[%s1 + $0xd88] sm:$0xf]
    %v1161 = vld [vmem:[%s1 + $0xd8c] sm:$0xf]
    %v1162 = vld [vmem:[%s1 + $0xd90] sm:$0xf]
    %v1163 = vld [vmem:[%s1 + $0xd94] sm:$0xf]
    %v1164 = vld [vmem:[%s1 + $0xd98] sm:$0xf]
    %v1165 = vld [vmem:[%s1 + $0xd9c] sm:$0xf]
    %v1166 = vld [vmem:[%s1 + $0xda0] sm:$0xf]
    %v1167 = vld [vmem:[%s1 + $0xda4] sm:$0xf]
    %v1168 = vld [vmem:[%s1 + $0xda8] sm:$0xf]
    %v1169 = vld [vmem:[%s1 + $0xdac] sm:$0xf]
    %v1170 = vld [vmem:[%s1 + $0xdb0] sm:$0xf]
    %v1171 = vld [vmem:[%s1 + $0xdb4] sm:$0xf]
    %v1172 = vld [vmem:[%s1 + $0xdb8] sm:$0xf]
    %v1173 = vld [vmem:[%s1 + $0xdbc] sm:$0xf]
    %v1174 = vld [vmem:[%s1 + $0xdc0] sm:$0xf]
    %v1175 = vld [vmem:[%s1 + $0xdc4] sm:$0xf]
    %v1176 = vld [vmem:[%s1 + $0xdc8] sm:$0xf]
    %v1177 = vld [vmem:[%s1 + $0xdcc] sm:$0xf]
    %v1178 = vld [vmem:[%s1 + $0xdd0] sm:$0xf]
    %v1179 = vld [vmem:[%s1 + $0xdd4] sm:$0xf]
    %v1180 = vld [vmem:[%s1 + $0xdd8] sm:$0xf]
    %v1181 = vld [vmem:[%s1 + $0xddc] sm:$0xf]
    %v1182 = vld [vmem:[%s1 + $0xde0] sm:$0xf]
    %v1183 = vld [vmem:[%s1 + $0xde4] sm:$0xf]
    %v1184 = vld [vmem:[%s1 + $0xde8] sm:$0xf]
    %v1185 = vld [vmem:[%s1 + $0xdec] sm:$0xf]
    %v1186 = vld [vmem:[%s1 + $0xdf0] sm:$0xf]
    %v1187 = vld [vmem:[%s1 + $0xdf4] sm:$0xf]
    %v1188 = vld [vmem:[%s1 + $0xdf8] sm:$0xf]
    %v1189 = vld [vmem:[%s1 + $0xdfc] sm:$0xf]
    %v1190 = vld [vmem:[%s1 + $0xe00] sm:$0xf]
    %v1191 = vld [vmem:[%s1 + $0xe04] sm:$0xf]
    %v1192 = vld [vmem:[%s1 + $0xe08] sm:$0xf]
    %v1193 = vld [vmem:[%s1 + $0xe0c] sm:$0xf]
    %v1194 = vld [vmem:[%s1 + $0xe10] sm:$0xf]
    %v1195 = vld [vmem:[%s1 + $0xe14] sm:$0xf]
    %v1196 = vld [vmem:[%s1 + $0xe18] sm:$0xf]
    %v1197 = vld [vmem:[%s1 + $0xe1c] sm:$0xf]
    %v1198 = vld [vmem:[%s1 + $0xe20] sm:$0xf]
    %v1199 = vld [vmem:[%s1 + $0xe24] sm:$0xf]
    %v1200 = vld [vmem:[%s1 + $0xe28] sm:$0xf]
    %v1201 = vld [vmem:[%s1 + $0xe2c] sm:$0xf]
    %v1202 = vld [vmem:[%s1 + $0xe30] sm:$0xf]
    %v1203 = vld [vmem:[%s1 + $0xe34] sm:$0xf]
    %v1204 = vld [vmem:[%s1 + $0xe38] sm:$0xf]
    %v1205 = vld [vmem:[%s1 + $0xe3c] sm:$0xf]
    %v1206 = vld [vmem:[%s1 + $0xe40] sm:$0xf]
    %v1207 = vld [vmem:[%s1 + $0xe44] sm:$0xf]
    %v1208 = vld [vmem:[%s1 + $0xe48] sm:$0xf]
    %v1209 = vld [vmem:[%s1 + $0xe4c] sm:$0xf]
    %v1210 = vld [vmem:[%s1 + $0xe50] sm:$0xf]
    %v1211 = vld [vmem:[%s1 + $0xe54] sm:$0xf]
    %v1212 = vld [vmem:[%s1 + $0xe58] sm:$0xf]
    %v1213 = vld [vmem:[%s1 + $0xe5c] sm:$0xf]
    %v1214 = vld [vmem:[%s1 + $0xe60] sm:$0xf]
    %v1215 = vld [vmem:[%s1 + $0xe64] sm:$0xf]
    %v1216 = vld [vmem:[%s1 + $0xe68] sm:$0xf]
    %v1217 = vld [vmem:[%s1 + $0xe6c] sm:$0xf]
    %v1218 = vld [vmem:[%s1 + $0xe70] sm:$0xf]
    %v1219 = vld [vmem:[%s1 + $0xe74] sm:$0xf]
    %v1220 = vld [vmem:[%s1 + $0xe78] sm:$0xf]
    %v1221 = vld [vmem:[%s1 + $0xe7c] sm:$0xf]
    %v1222 = vld [vmem:[%s1 + $0xe80] sm:$0xf]
    %v1223 = vld [vmem:[%s1 + $0xe84] sm:$0xf]
    %v1224 = vld [vmem:[%s1 + $0xe88] sm:$0xf]
    %v1225 = vld [vmem:[%s1 + $0xe8c] sm:$0xf]
    %v1226 = vld [vmem:[%s1 + $0xe90] sm:$0xf]
    %v1227 = vld [vmem:[%s1 + $0xe94] sm:$0xf]
    %v1228 = vld [vmem:[%s1 + $0xe98] sm:$0xf]
    %v1229 = vld [vmem:[%s1 + $0xe9c] sm:$0xf]
    %v1230 = vld [vmem:[%s1 + $0xea0] sm:$0xf]
    %v1231 = vld [vmem:[%s1 + $0xea4] sm:$0xf]
    %v1232 = vld [vmem:[%s1 + $0xea8] sm:$0xf]
    %v1233 = vld [vmem:[%s1 + $0xeac] sm:$0xf]
    %v1234 = vld [vmem:[%s1 + $0xeb0] sm:$0xf]
    %v1235 = vld [vmem:[%s1 + $0xeb4] sm:$0xf]
    %v1236 = vld [vmem:[%s1 + $0xeb8] sm:$0xf]
    %v1237 = vld [vmem:[%s1 + $0xebc] sm:$0xf]
    %v1238 = vld [vmem:[%s1 + $0xec0] sm:$0xf]
    %v1239 = vld [vmem:[%s1 + $0xec4] sm:$0xf]
    %v1240 = vld [vmem:[%s1 + $0xec8] sm:$0xf]
    %v1241 = vld [vmem:[%s1 + $0xecc] sm:$0xf]
    %v1242 = vld [vmem:[%s1 + $0xed0] sm:$0xf]
    %v1243 = vld [vmem:[%s1 + $0xed4] sm:$0xf]
    %v1244 = vld [vmem:[%s1 + $0xed8] sm:$0xf]
    %v1245 = vld [vmem:[%s1 + $0xedc] sm:$0xf]
    %v1246 = vld [vmem:[%s1 + $0xee0] sm:$0xf]
    %v1247 = vld [vmem:[%s1 + $0xee4] sm:$0xf]
    %v1248 = vld [vmem:[%s1 + $0xee8] sm:$0xf]
    %v1249 = vld [vmem:[%s1 + $0xeec] sm:$0xf]
    %v1250 = vld [vmem:[%s1 + $0xef0] sm:$0xf]
    %v1251 = vld [vmem:[%s1 + $0xef4] sm:$0xf]
    %v1252 = vld [vmem:[%s1 + $0xef8] sm:$0xf]
    %v1253 = vld [vmem:[%s1 + $0xefc] sm:$0xf]
    %v1254 = vld [vmem:[%s1 + $0xf00] sm:$0xf]
    %v1255 = vld [vmem:[%s1 + $0xf04] sm:$0xf]
    %v1256 = vld [vmem:[%s1 + $0xf08] sm:$0xf]
    %v1257 = vld [vmem:[%s1 + $0xf0c] sm:$0xf]
    %v1258 = vld [vmem:[%s1 + $0xf10] sm:$0xf]
    %v1259 = vld [vmem:[%s1 + $0xf14] sm:$0xf]
    %v1260 = vld [vmem:[%s1 + $0xf18] sm:$0xf]
    %v1261 = vld [vmem:[%s1 + $0xf1c] sm:$0xf]
    %v1262 = vld [vmem:[%s1 + $0xf20] sm:$0xf]
    %v1263 = vld [vmem:[%s1 + $0xf24] sm:$0xf]
    %v1264 = vld [vmem:[%s1 + $0xf28] sm:$0xf]
    %v1265 = vld [vmem:[%s1 + $0xf2c] sm:$0xf]
    %v1266 = vld [vmem:[%s1 + $0xf30] sm:$0xf]
    %v1267 = vld [vmem:[%s1 + $0xf34] sm:$0xf]
    %v1268 = vld [vmem:[%s1 + $0xf38] sm:$0xf]
    %v1269 = vld [vmem:[%s1 + $0xf3c] sm:$0xf]
    %v1270 = vld [vmem:[%s1 + $0xf40] sm:$0xf]
    %v1271 = vld [vmem:[%s1 + $0xf44] sm:$0xf]
    %v1272 = vld [vmem:[%s1 + $0xf48] sm:$0xf]
    %v1273 = vld [vmem:[%s1 + $0xf4c] sm:$0xf]
    %v1274 = vld [vmem:[%s1 + $0xf50] sm:$0xf]
    %v1275 = vld [vmem:[%s1 + $0xf54] sm:$0xf]
    %v1276 = vld [vmem:[%s1 + $0xf58] sm:$0xf]
    %v1277 = vld [vmem:[%s1 + $0xf5c] sm:$0xf]
    %v1278 = vld [vmem:[%s1 + $0xf60] sm:$0xf]
    %v1279 = vld [vmem:[%s1 + $0xf64] sm:$0xf]
    %v1280 = vld [vmem:[%s1 + $0xf68] sm:$0xf]
    %v1281 = vld [vmem:[%s1 + $0xf6c] sm:$0xf]
    %v1282 = vld [vmem:[%s1 + $0xf70] sm:$0xf]
    %v1283 = vld [vmem:[%s1 + $0xf74] sm:$0xf]
    %v1284 = vld [vmem:[%s1 + $0xf78] sm:$0xf]
    %v1285 = vld [vmem:[%s1 + $0xf7c] sm:$0xf]
    %v1286 = vld [vmem:[%s1 + $0xf80] sm:$0xf]
    %v1287 = vld [vmem:[%s1 + $0xf84] sm:$0xf]
    %v1288 = vld [vmem:[%s1 + $0xf88] sm:$0xf]
    %v1289 = vld [vmem:[%s1 + $0xf8c] sm:$0xf]
    %v1290 = vld [vmem:[%s1 + $0xf90] sm:$0xf]
    %v1291 = vld [vmem:[%s1 + $0xf94] sm:$0xf]
    %v1292 = vld [vmem:[%s1 + $0xf98] sm:$0xf]
    %v1293 = vld [vmem:[%s1 + $0xf9c] sm:$0xf]
    %v1294 = vld [vmem:[%s1 + $0xfa0] sm:$0xf]
    %v1295 = vld [vmem:[%s1 + $0xfa4] sm:$0xf]
    %v1296 = vld [vmem:[%s1 + $0xfa8] sm:$0xf]
    %v1297 = vld [vmem:[%s1 + $0xfac] sm:$0xf]
    %v1298 = vld [vmem:[%s1 + $0xfb0] sm:$0xf]
    %v1299 = vld [vmem:[%s1 + $0xfb4] sm:$0xf]
    %v1300 = vld [vmem:[%s1 + $0xfb8] sm:$0xf]
    %v1301 = vld [vmem:[%s1 + $0xfbc] sm:$0xf]
    %v1302 = vld [vmem:[%s1 + $0xfc0] sm:$0xf]
    %v1303 = vld [vmem:[%s1 + $0xfc4] sm:$0xf]
    %v1304 = vld [vmem:[%s1 + $0xfc8] sm:$0xf]
    %v1305 = vld [vmem:[%s1 + $0xfcc] sm:$0xf]
    %v1306 = vld [vmem:[%s1 + $0xfd0] sm:$0xf]
    %v1307 = vld [vmem:[%s1 + $0xfd4] sm:$0xf]
    %v1308 = vld [vmem:[%s1 + $0xfd8] sm:$0xf]
    %v1309 = vld [vmem:[%s1 + $0xfdc] sm:$0xf]
    %v1310 = vld [vmem:[%s1 + $0xfe0] sm:$0xf]
    %v1311 = vld [vmem:[%s1 + $0xfe4] sm:$0xf]
    %v1312 = vld [vmem:[%s1 + $0xfe8] sm:$0xf]
    %v1313 = vld [vmem:[%s1 + $0xfec] sm:$0xf]
    %v1314 = vld [vmem:[%s1 + $0xff0] sm:$0xf]
    %v1315 = vld [vmem:[%s1 + $0xff4] sm:$0xf]
    %v1316 = vld [vmem:[%s1 + $0xff8] sm:$0xf]
    %v1317 = vld [vmem:[%s1 + $0xffc] sm:$0xf]
    %v2342 = vunpack.c.l.b16 %v294
    %v2343 = vunpack.c.l.b16 %v295
    %v2344 = vunpack.c.l.b16 %v296
    %v2345 = vunpack.c.l.b16 %v297
    %v2346 = vunpack.c.l.b16 %v298
    %v2347 = vunpack.c.l.b16 %v299
    %v2348 = vunpack.c.l.b16 %v300
    %v2349 = vunpack.c.l.b16 %v301
    %v2350 = vunpack.c.l.b16 %v302
    %v2351 = vunpack.c.l.b16 %v303
    %v2352 = vunpack.c.l.b16 %v304
    %v2353 = vunpack.c.l.b16 %v305
    %v2354 = vunpack.c.l.b16 %v306
    %v2355 = vunpack.c.l.b16 %v307
    %v2356 = vunpack.c.l.b16 %v308
    %v2357 = vunpack.c.l.b16 %v309
    %v2358 = vunpack.c.l.b16 %v310
    %v2359 = vunpack.c.l.b16 %v311
    %v2360 = vunpack.c.l.b16 %v312
    %v2361 = vunpack.c.l.b16 %v313
    %v2362 = vunpack.c.l.b16 %v314
    %v2363 = vunpack.c.l.b16 %v315
    %v2364 = vunpack.c.l.b16 %v316
    %v2365 = vunpack.c.l.b16 %v317
    %v2366 = vunpack.c.l.b16 %v318
    %v2367 = vunpack.c.l.b16 %v319
    %v2368 = vunpack.c.l.b16 %v320
    %v2369 = vunpack.c.l.b16 %v321
    %v2370 = vunpack.c.l.b16 %v322
    %v2371 = vunpack.c.l.b16 %v323
    %v2372 = vunpack.c.l.b16 %v324
    %v2373 = vunpack.c.l.b16 %v325
    %v2374 = vunpack.c.l.b16 %v326
    %v2375 = vunpack.c.l.b16 %v327
    %v2376 = vunpack.c.l.b16 %v328
    %v2377 = vunpack.c.l.b16 %v329
    %v2378 = vunpack.c.l.b16 %v330
    %v2379 = vunpack.c.l.b16 %v331
    %v2380 = vunpack.c.l.b16 %v332
    %v2381 = vunpack.c.l.b16 %v333
    %v2382 = vunpack.c.l.b16 %v334
    %v2383 = vunpack.c.l.b16 %v335
    %v2384 = vunpack.c.l.b16 %v336
    %v2385 = vunpack.c.l.b16 %v337
    %v2386 = vunpack.c.l.b16 %v338
    %v2387 = vunpack.c.l.b16 %v339
    %v2388 = vunpack.c.l.b16 %v340
    %v2389 = vunpack.c.l.b16 %v341
    %v2390 = vunpack.c.l.b16 %v342
    %v2391 = vunpack.c.l.b16 %v343
    %v2392 = vunpack.c.l.b16 %v344
    %v2393 = vunpack.c.l.b16 %v345
    %v2394 = vunpack.c.l.b16 %v346
    %v2395 = vunpack.c.l.b16 %v347
    %v2396 = vunpack.c.l.b16 %v348
    %v2397 = vunpack.c.l.b16 %v349
    %v2398 = vunpack.c.l.b16 %v350
    %v2399 = vunpack.c.l.b16 %v351
    %v2400 = vunpack.c.l.b16 %v352
    %v2401 = vunpack.c.l.b16 %v353
    %v2402 = vunpack.c.l.b16 %v354
    %v2403 = vunpack.c.l.b16 %v355
    %v2404 = vunpack.c.l.b16 %v356
    %v2405 = vunpack.c.l.b16 %v357
    %v2406 = vunpack.c.l.b16 %v358
    %v2407 = vunpack.c.l.b16 %v359
    %v2408 = vunpack.c.l.b16 %v360
    %v2409 = vunpack.c.l.b16 %v361
    %v2410 = vunpack.c.l.b16 %v362
    %v2411 = vunpack.c.l.b16 %v363
    %v2412 = vunpack.c.l.b16 %v364
    %v2413 = vunpack.c.l.b16 %v365
    %v2414 = vunpack.c.l.b16 %v366
    %v2415 = vunpack.c.l.b16 %v367
    %v2416 = vunpack.c.l.b16 %v368
    %v2417 = vunpack.c.l.b16 %v369
    %v2418 = vunpack.c.l.b16 %v370
    %v2419 = vunpack.c.l.b16 %v371
    %v2420 = vunpack.c.l.b16 %v372
    %v2421 = vunpack.c.l.b16 %v373
    %v2422 = vunpack.c.l.b16 %v374
    %v2423 = vunpack.c.l.b16 %v375
    %v2424 = vunpack.c.l.b16 %v376
    %v2425 = vunpack.c.l.b16 %v377
    %v2426 = vunpack.c.l.b16 %v378
    %v2427 = vunpack.c.l.b16 %v379
    %v2428 = vunpack.c.l.b16 %v380
    %v2429 = vunpack.c.l.b16 %v381
    %v2430 = vunpack.c.l.b16 %v382
    %v2431 = vunpack.c.l.b16 %v383
    %v2432 = vunpack.c.l.b16 %v384
    %v2433 = vunpack.c.l.b16 %v385
    %v2434 = vunpack.c.l.b16 %v386
    %v2435 = vunpack.c.l.b16 %v387
    %v2436 = vunpack.c.l.b16 %v388
    %v2437 = vunpack.c.l.b16 %v389
    %v2438 = vunpack.c.l.b16 %v390
    %v2439 = vunpack.c.l.b16 %v391
    %v2440 = vunpack.c.l.b16 %v392
    %v2441 = vunpack.c.l.b16 %v393
    %v2442 = vunpack.c.l.b16 %v394
    %v2443 = vunpack.c.l.b16 %v395
    %v2444 = vunpack.c.l.b16 %v396
    %v2445 = vunpack.c.l.b16 %v397
    %v2446 = vunpack.c.l.b16 %v398
    %v2447 = vunpack.c.l.b16 %v399
    %v2448 = vunpack.c.l.b16 %v400
    %v2449 = vunpack.c.l.b16 %v401
    %v2450 = vunpack.c.l.b16 %v402
    %v2451 = vunpack.c.l.b16 %v403
    %v2452 = vunpack.c.l.b16 %v404
    %v2453 = vunpack.c.l.b16 %v405
    %v2454 = vunpack.c.l.b16 %v406
    %v2455 = vunpack.c.l.b16 %v407
    %v2456 = vunpack.c.l.b16 %v408
    %v2457 = vunpack.c.l.b16 %v409
    %v2458 = vunpack.c.l.b16 %v410
    %v2459 = vunpack.c.l.b16 %v411
    %v2460 = vunpack.c.l.b16 %v412
    %v2461 = vunpack.c.l.b16 %v413
    %v2462 = vunpack.c.l.b16 %v414
    %v2463 = vunpack.c.l.b16 %v415
    %v2464 = vunpack.c.l.b16 %v416
    %v2465 = vunpack.c.l.b16 %v417
    %v2466 = vunpack.c.l.b16 %v418
    %v2467 = vunpack.c.l.b16 %v419
    %v2468 = vunpack.c.l.b16 %v420
    %v2469 = vunpack.c.l.b16 %v421
    %v2470 = vunpack.c.l.b16 %v422
    %v2471 = vunpack.c.l.b16 %v423
    %v2472 = vunpack.c.l.b16 %v424
    %v2473 = vunpack.c.l.b16 %v425
    %v2474 = vunpack.c.l.b16 %v426
    %v2475 = vunpack.c.l.b16 %v427
    %v2476 = vunpack.c.l.b16 %v428
    %v2477 = vunpack.c.l.b16 %v429
    %v2478 = vunpack.c.l.b16 %v430
    %v2479 = vunpack.c.l.b16 %v431
    %v2480 = vunpack.c.l.b16 %v432
    %v2481 = vunpack.c.l.b16 %v433
    %v2482 = vunpack.c.l.b16 %v434
    %v2483 = vunpack.c.l.b16 %v435
    %v2484 = vunpack.c.l.b16 %v436
    %v2485 = vunpack.c.l.b16 %v437
    %v2486 = vunpack.c.l.b16 %v438
    %v2487 = vunpack.c.l.b16 %v439
    %v2488 = vunpack.c.l.b16 %v440
    %v2489 = vunpack.c.l.b16 %v441
    %v2490 = vunpack.c.l.b16 %v442
    %v2491 = vunpack.c.l.b16 %v443
    %v2492 = vunpack.c.l.b16 %v444
    %v2493 = vunpack.c.l.b16 %v445
    %v2494 = vunpack.c.l.b16 %v446
    %v2495 = vunpack.c.l.b16 %v447
    %v2496 = vunpack.c.l.b16 %v448
    %v2497 = vunpack.c.l.b16 %v449
    %v2498 = vunpack.c.l.b16 %v450
    %v2499 = vunpack.c.l.b16 %v451
    %v2500 = vunpack.c.l.b16 %v452
    %v2501 = vunpack.c.l.b16 %v453
    %v2502 = vunpack.c.l.b16 %v454
    %v2503 = vunpack.c.l.b16 %v455
    %v2504 = vunpack.c.l.b16 %v456
    %v2505 = vunpack.c.l.b16 %v457
    %v2506 = vunpack.c.l.b16 %v458
    %v2507 = vunpack.c.l.b16 %v459
    %v2508 = vunpack.c.l.b16 %v460
    %v2509 = vunpack.c.l.b16 %v461
    %v2510 = vunpack.c.l.b16 %v462
    %v2511 = vunpack.c.l.b16 %v463
    %v2512 = vunpack.c.l.b16 %v464
    %v2513 = vunpack.c.l.b16 %v465
    %v2514 = vunpack.c.l.b16 %v466
    %v2515 = vunpack.c.l.b16 %v467
    %v2516 = vunpack.c.l.b16 %v468
    %v2517 = vunpack.c.l.b16 %v469
    %v2518 = vunpack.c.l.b16 %v470
    %v2519 = vunpack.c.l.b16 %v471
    %v2520 = vunpack.c.l.b16 %v472
    %v2521 = vunpack.c.l.b16 %v473
    %v2522 = vunpack.c.l.b16 %v474
    %v2523 = vunpack.c.l.b16 %v475
    %v2524 = vunpack.c.l.b16 %v476
    %v2525 = vunpack.c.l.b16 %v477
    %v2526 = vunpack.c.l.b16 %v478
    %v2527 = vunpack.c.l.b16 %v479
    %v2528 = vunpack.c.l.b16 %v480
    %v2529 = vunpack.c.l.b16 %v481
    %v2530 = vunpack.c.l.b16 %v482
    %v2531 = vunpack.c.l.b16 %v483
    %v2532 = vunpack.c.l.b16 %v484
    %v2533 = vunpack.c.l.b16 %v485
    %v2534 = vunpack.c.l.b16 %v486
    %v2535 = vunpack.c.l.b16 %v487
    %v2536 = vunpack.c.l.b16 %v488
    %v2537 = vunpack.c.l.b16 %v489
    %v2538 = vunpack.c.l.b16 %v490
    %v2539 = vunpack.c.l.b16 %v491
    %v2540 = vunpack.c.l.b16 %v492
    %v2541 = vunpack.c.l.b16 %v493
    %v2542 = vunpack.c.l.b16 %v494
    %v2543 = vunpack.c.l.b16 %v495
    %v2544 = vunpack.c.l.b16 %v496
    %v2545 = vunpack.c.l.b16 %v497
    %v2546 = vunpack.c.l.b16 %v498
    %v2547 = vunpack.c.l.b16 %v499
    %v2548 = vunpack.c.l.b16 %v500
    %v2549 = vunpack.c.l.b16 %v501
    %v2550 = vunpack.c.l.b16 %v502
    %v2551 = vunpack.c.l.b16 %v503
    %v2552 = vunpack.c.l.b16 %v504
    %v2553 = vunpack.c.l.b16 %v505
    %v2554 = vunpack.c.l.b16 %v506
    %v2555 = vunpack.c.l.b16 %v507
    %v2556 = vunpack.c.l.b16 %v508
    %v2557 = vunpack.c.l.b16 %v509
    %v2558 = vunpack.c.l.b16 %v510
    %v2559 = vunpack.c.l.b16 %v511
    %v2560 = vunpack.c.l.b16 %v512
    %v2561 = vunpack.c.l.b16 %v513
    %v2562 = vunpack.c.l.b16 %v514
    %v2563 = vunpack.c.l.b16 %v515
    %v2564 = vunpack.c.l.b16 %v516
    %v2565 = vunpack.c.l.b16 %v517
    %v2566 = vunpack.c.l.b16 %v518
    %v2567 = vunpack.c.l.b16 %v519
    %v2568 = vunpack.c.l.b16 %v520
    %v2569 = vunpack.c.l.b16 %v521
    %v2570 = vunpack.c.l.b16 %v522
    %v2571 = vunpack.c.l.b16 %v523
    %v2572 = vunpack.c.l.b16 %v524
    %v2573 = vunpack.c.l.b16 %v525
    %v2574 = vunpack.c.l.b16 %v526
    %v2575 = vunpack.c.l.b16 %v527
    %v2576 = vunpack.c.l.b16 %v528
    %v2577 = vunpack.c.l.b16 %v529
    %v2578 = vunpack.c.l.b16 %v530
    %v2579 = vunpack.c.l.b16 %v531
    %v2580 = vunpack.c.l.b16 %v532
    %v2581 = vunpack.c.l.b16 %v533
    %v2582 = vunpack.c.l.b16 %v534
    %v2583 = vunpack.c.l.b16 %v535
    %v2584 = vunpack.c.l.b16 %v536
    %v2585 = vunpack.c.l.b16 %v537
    %v2586 = vunpack.c.l.b16 %v538
    %v2587 = vunpack.c.l.b16 %v539
    %v2588 = vunpack.c.l.b16 %v540
    %v2589 = vunpack.c.l.b16 %v541
    %v2590 = vunpack.c.l.b16 %v542
    %v2591 = vunpack.c.l.b16 %v543
    %v2592 = vunpack.c.l.b16 %v544
    %v2593 = vunpack.c.l.b16 %v545
    %v2594 = vunpack.c.l.b16 %v546
    %v2595 = vunpack.c.l.b16 %v547
    %v2596 = vunpack.c.l.b16 %v548
    %v2597 = vunpack.c.l.b16 %v549
    %v2598 = vunpack.c.l.b16 %v550
    %v2599 = vunpack.c.l.b16 %v551
    %v2600 = vunpack.c.l.b16 %v552
    %v2601 = vunpack.c.l.b16 %v553
    %v2602 = vunpack.c.l.b16 %v554
    %v2603 = vunpack.c.l.b16 %v555
    %v2604 = vunpack.c.l.b16 %v556
    %v2605 = vunpack.c.l.b16 %v557
    %v2606 = vunpack.c.l.b16 %v558
    %v2607 = vunpack.c.l.b16 %v559
    %v2608 = vunpack.c.l.b16 %v560
    %v2609 = vunpack.c.l.b16 %v561
    %v2610 = vunpack.c.l.b16 %v562
    %v2611 = vunpack.c.l.b16 %v563
    %v2612 = vunpack.c.l.b16 %v564
    %v2613 = vunpack.c.l.b16 %v565
    %v2614 = vunpack.c.l.b16 %v566
    %v2615 = vunpack.c.l.b16 %v567
    %v2616 = vunpack.c.l.b16 %v568
    %v2617 = vunpack.c.l.b16 %v569
    %v2618 = vunpack.c.l.b16 %v570
    %v2619 = vunpack.c.l.b16 %v571
    %v2620 = vunpack.c.l.b16 %v572
    %v2621 = vunpack.c.l.b16 %v573
    %v2622 = vunpack.c.l.b16 %v574
    %v2623 = vunpack.c.l.b16 %v575
    %v2624 = vunpack.c.l.b16 %v576
    %v2625 = vunpack.c.l.b16 %v577
    %v2626 = vunpack.c.l.b16 %v578
    %v2627 = vunpack.c.l.b16 %v579
    %v2628 = vunpack.c.l.b16 %v580
    %v2629 = vunpack.c.l.b16 %v581
    %v2630 = vunpack.c.l.b16 %v582
    %v2631 = vunpack.c.l.b16 %v583
    %v2632 = vunpack.c.l.b16 %v584
    %v2633 = vunpack.c.l.b16 %v585
    %v2634 = vunpack.c.l.b16 %v586
    %v2635 = vunpack.c.l.b16 %v587
    %v2636 = vunpack.c.l.b16 %v588
    %v2637 = vunpack.c.l.b16 %v589
    %v2638 = vunpack.c.l.b16 %v590
    %v2639 = vunpack.c.l.b16 %v591
    %v2640 = vunpack.c.l.b16 %v592
    %v2641 = vunpack.c.l.b16 %v593
    %v2642 = vunpack.c.l.b16 %v594
    %v2643 = vunpack.c.l.b16 %v595
    %v2644 = vunpack.c.l.b16 %v596
    %v2645 = vunpack.c.l.b16 %v597
    %v2646 = vunpack.c.l.b16 %v598
    %v2647 = vunpack.c.l.b16 %v599
    %v2648 = vunpack.c.l.b16 %v600
    %v2649 = vunpack.c.l.b16 %v601
    %v2650 = vunpack.c.l.b16 %v602
    %v2651 = vunpack.c.l.b16 %v603
    %v2652 = vunpack.c.l.b16 %v604
    %v2653 = vunpack.c.l.b16 %v605
    %v2654 = vunpack.c.l.b16 %v606
    %v2655 = vunpack.c.l.b16 %v607
    %v2656 = vunpack.c.l.b16 %v608
    %v2657 = vunpack.c.l.b16 %v609
    %v2658 = vunpack.c.l.b16 %v610
    %v2659 = vunpack.c.l.b16 %v611
    %v2660 = vunpack.c.l.b16 %v612
    %v2661 = vunpack.c.l.b16 %v613
    %v2662 = vunpack.c.l.b16 %v614
    %v2663 = vunpack.c.l.b16 %v615
    %v2664 = vunpack.c.l.b16 %v616
    %v2665 = vunpack.c.l.b16 %v617
    %v2666 = vunpack.c.l.b16 %v618
    %v2667 = vunpack.c.l.b16 %v619
    %v2668 = vunpack.c.l.b16 %v620
    %v2669 = vunpack.c.l.b16 %v621
    %v2670 = vunpack.c.l.b16 %v622
    %v2671 = vunpack.c.l.b16 %v623
    %v2672 = vunpack.c.l.b16 %v624
    %v2673 = vunpack.c.l.b16 %v625
    %v2674 = vunpack.c.l.b16 %v626
    %v2675 = vunpack.c.l.b16 %v627
    %v2676 = vunpack.c.l.b16 %v628
    %v2677 = vunpack.c.l.b16 %v629
    %v2678 = vunpack.c.l.b16 %v630
    %v2679 = vunpack.c.l.b16 %v631
    %v2680 = vunpack.c.l.b16 %v632
    %v2681 = vunpack.c.l.b16 %v633
    %v2682 = vunpack.c.l.b16 %v634
    %v2683 = vunpack.c.l.b16 %v635
    %v2684 = vunpack.c.l.b16 %v636
    %v2685 = vunpack.c.l.b16 %v637
    %v2686 = vunpack.c.l.b16 %v638
    %v2687 = vunpack.c.l.b16 %v639
    %v2688 = vunpack.c.l.b16 %v640
    %v2689 = vunpack.c.l.b16 %v641
    %v2690 = vunpack.c.l.b16 %v642
    %v2691 = vunpack.c.l.b16 %v643
    %v2692 = vunpack.c.l.b16 %v644
    %v2693 = vunpack.c.l.b16 %v645
    %v2694 = vunpack.c.l.b16 %v646
    %v2695 = vunpack.c.l.b16 %v647
    %v2696 = vunpack.c.l.b16 %v648
    %v2697 = vunpack.c.l.b16 %v649
    %v2698 = vunpack.c.l.b16 %v650
    %v2699 = vunpack.c.l.b16 %v651
    %v2700 = vunpack.c.l.b16 %v652
    %v2701 = vunpack.c.l.b16 %v653
    %v2702 = vunpack.c.l.b16 %v654
    %v2703 = vunpack.c.l.b16 %v655
    %v2704 = vunpack.c.l.b16 %v656
    %v2705 = vunpack.c.l.b16 %v657
    %v2706 = vunpack.c.l.b16 %v658
    %v2707 = vunpack.c.l.b16 %v659
    %v2708 = vunpack.c.l.b16 %v660
    %v2709 = vunpack.c.l.b16 %v661
    %v2710 = vunpack.c.l.b16 %v662
    %v2711 = vunpack.c.l.b16 %v663
    %v2712 = vunpack.c.l.b16 %v664
    %v2713 = vunpack.c.l.b16 %v665
    %v2714 = vunpack.c.l.b16 %v666
    %v2715 = vunpack.c.l.b16 %v667
    %v2716 = vunpack.c.l.b16 %v668
    %v2717 = vunpack.c.l.b16 %v669
    %v2718 = vunpack.c.l.b16 %v670
    %v2719 = vunpack.c.l.b16 %v671
    %v2720 = vunpack.c.l.b16 %v672
    %v2721 = vunpack.c.l.b16 %v673
    %v2722 = vunpack.c.l.b16 %v674
    %v2723 = vunpack.c.l.b16 %v675
    %v2724 = vunpack.c.l.b16 %v676
    %v2725 = vunpack.c.l.b16 %v677
    %v2726 = vunpack.c.l.b16 %v678
    %v2727 = vunpack.c.l.b16 %v679
    %v2728 = vunpack.c.l.b16 %v680
    %v2729 = vunpack.c.l.b16 %v681
    %v2730 = vunpack.c.l.b16 %v682
    %v2731 = vunpack.c.l.b16 %v683
    %v2732 = vunpack.c.l.b16 %v684
    %v2733 = vunpack.c.l.b16 %v685
    %v2734 = vunpack.c.l.b16 %v686
    %v2735 = vunpack.c.l.b16 %v687
    %v2736 = vunpack.c.l.b16 %v688
    %v2737 = vunpack.c.l.b16 %v689
    %v2738 = vunpack.c.l.b16 %v690
    %v2739 = vunpack.c.l.b16 %v691
    %v2740 = vunpack.c.l.b16 %v692
    %v2741 = vunpack.c.l.b16 %v693
    %v2742 = vunpack.c.l.b16 %v694
    %v2743 = vunpack.c.l.b16 %v695
    %v2744 = vunpack.c.l.b16 %v696
    %v2745 = vunpack.c.l.b16 %v697
    %v2746 = vunpack.c.l.b16 %v698
    %v2747 = vunpack.c.l.b16 %v699
    %v2748 = vunpack.c.l.b16 %v700
    %v2749 = vunpack.c.l.b16 %v701
    %v2750 = vunpack.c.l.b16 %v702
    %v2751 = vunpack.c.l.b16 %v703
    %v2752 = vunpack.c.l.b16 %v704
    %v2753 = vunpack.c.l.b16 %v705
    %v2754 = vunpack.c.l.b16 %v706
    %v2755 = vunpack.c.l.b16 %v707
    %v2756 = vunpack.c.l.b16 %v708
    %v2757 = vunpack.c.l.b16 %v709
    %v2758 = vunpack.c.l.b16 %v710
    %v2759 = vunpack.c.l.b16 %v711
    %v2760 = vunpack.c.l.b16 %v712
    %v2761 = vunpack.c.l.b16 %v713
    %v2762 = vunpack.c.l.b16 %v714
    %v2763 = vunpack.c.l.b16 %v715
    %v2764 = vunpack.c.l.b16 %v716
    %v2765 = vunpack.c.l.b16 %v717
    %v2766 = vunpack.c.l.b16 %v718
    %v2767 = vunpack.c.l.b16 %v719
    %v2768 = vunpack.c.l.b16 %v720
    %v2769 = vunpack.c.l.b16 %v721
    %v2770 = vunpack.c.l.b16 %v722
    %v2771 = vunpack.c.l.b16 %v723
    %v2772 = vunpack.c.l.b16 %v724
    %v2773 = vunpack.c.l.b16 %v725
    %v2774 = vunpack.c.l.b16 %v726
    %v2775 = vunpack.c.l.b16 %v727
    %v2776 = vunpack.c.l.b16 %v728
    %v2777 = vunpack.c.l.b16 %v729
    %v2778 = vunpack.c.l.b16 %v730
    %v2779 = vunpack.c.l.b16 %v731
    %v2780 = vunpack.c.l.b16 %v732
    %v2781 = vunpack.c.l.b16 %v733
    %v2782 = vunpack.c.l.b16 %v734
    %v2783 = vunpack.c.l.b16 %v735
    %v2784 = vunpack.c.l.b16 %v736
    %v2785 = vunpack.c.l.b16 %v737
    %v2786 = vunpack.c.l.b16 %v738
    %v2787 = vunpack.c.l.b16 %v739
    %v2788 = vunpack.c.l.b16 %v740
    %v2789 = vunpack.c.l.b16 %v741
    %v2790 = vunpack.c.l.b16 %v742
    %v2791 = vunpack.c.l.b16 %v743
    %v2792 = vunpack.c.l.b16 %v744
    %v2793 = vunpack.c.l.b16 %v745
    %v2794 = vunpack.c.l.b16 %v746
    %v2795 = vunpack.c.l.b16 %v747
    %v2796 = vunpack.c.l.b16 %v748
    %v2797 = vunpack.c.l.b16 %v749
    %v2798 = vunpack.c.l.b16 %v750
    %v2799 = vunpack.c.l.b16 %v751
    %v2800 = vunpack.c.l.b16 %v752
    %v2801 = vunpack.c.l.b16 %v753
    %v2802 = vunpack.c.l.b16 %v754
    %v2803 = vunpack.c.l.b16 %v755
    %v2804 = vunpack.c.l.b16 %v756
    %v2805 = vunpack.c.l.b16 %v757
    %v2806 = vunpack.c.l.b16 %v758
    %v2807 = vunpack.c.l.b16 %v759
    %v2808 = vunpack.c.l.b16 %v760
    %v2809 = vunpack.c.l.b16 %v761
    %v2810 = vunpack.c.l.b16 %v762
    %v2811 = vunpack.c.l.b16 %v763
    %v2812 = vunpack.c.l.b16 %v764
    %v2813 = vunpack.c.l.b16 %v765
    %v2814 = vunpack.c.l.b16 %v766
    %v2815 = vunpack.c.l.b16 %v767
    %v2816 = vunpack.c.l.b16 %v768
    %v2817 = vunpack.c.l.b16 %v769
    %v2818 = vunpack.c.l.b16 %v770
    %v2819 = vunpack.c.l.b16 %v771
    %v2820 = vunpack.c.l.b16 %v772
    %v2821 = vunpack.c.l.b16 %v773
    %v2822 = vunpack.c.l.b16 %v774
    %v2823 = vunpack.c.l.b16 %v775
    %v2824 = vunpack.c.l.b16 %v776
    %v2825 = vunpack.c.l.b16 %v777
    %v2826 = vunpack.c.l.b16 %v778
    %v2827 = vunpack.c.l.b16 %v779
    %v2828 = vunpack.c.l.b16 %v780
    %v2829 = vunpack.c.l.b16 %v781
    %v2830 = vunpack.c.l.b16 %v782
    %v2831 = vunpack.c.l.b16 %v783
    %v2832 = vunpack.c.l.b16 %v784
    %v2833 = vunpack.c.l.b16 %v785
    %v2834 = vunpack.c.l.b16 %v786
    %v2835 = vunpack.c.l.b16 %v787
    %v2836 = vunpack.c.l.b16 %v788
    %v2837 = vunpack.c.l.b16 %v789
    %v2838 = vunpack.c.l.b16 %v790
    %v2839 = vunpack.c.l.b16 %v791
    %v2840 = vunpack.c.l.b16 %v792
    %v2841 = vunpack.c.l.b16 %v793
    %v2842 = vunpack.c.l.b16 %v794
    %v2843 = vunpack.c.l.b16 %v795
    %v2844 = vunpack.c.l.b16 %v796
    %v2845 = vunpack.c.l.b16 %v797
    %v2846 = vunpack.c.l.b16 %v798
    %v2847 = vunpack.c.l.b16 %v799
    %v2848 = vunpack.c.l.b16 %v800
    %v2849 = vunpack.c.l.b16 %v801
    %v2850 = vunpack.c.l.b16 %v802
    %v2851 = vunpack.c.l.b16 %v803
    %v2852 = vunpack.c.l.b16 %v804
    %v2853 = vunpack.c.l.b16 %v805
    %v2854 = vunpack.c.l.b16 %v806
    %v2855 = vunpack.c.l.b16 %v807
    %v2856 = vunpack.c.l.b16 %v808
    %v2857 = vunpack.c.l.b16 %v809
    %v2858 = vunpack.c.l.b16 %v810
    %v2859 = vunpack.c.l.b16 %v811
    %v2860 = vunpack.c.l.b16 %v812
    %v2861 = vunpack.c.l.b16 %v813
    %v2862 = vunpack.c.l.b16 %v814
    %v2863 = vunpack.c.l.b16 %v815
    %v2864 = vunpack.c.l.b16 %v816
    %v2865 = vunpack.c.l.b16 %v817
    %v2866 = vunpack.c.l.b16 %v818
    %v2867 = vunpack.c.l.b16 %v819
    %v2868 = vunpack.c.l.b16 %v820
    %v2869 = vunpack.c.l.b16 %v821
    %v2870 = vunpack.c.l.b16 %v822
    %v2871 = vunpack.c.l.b16 %v823
    %v2872 = vunpack.c.l.b16 %v824
    %v2873 = vunpack.c.l.b16 %v825
    %v2874 = vunpack.c.l.b16 %v826
    %v2875 = vunpack.c.l.b16 %v827
    %v2876 = vunpack.c.l.b16 %v828
    %v2877 = vunpack.c.l.b16 %v829
    %v2878 = vunpack.c.l.b16 %v830
    %v2879 = vunpack.c.l.b16 %v831
    %v2880 = vunpack.c.l.b16 %v832
    %v2881 = vunpack.c.l.b16 %v833
    %v2882 = vunpack.c.l.b16 %v834
    %v2883 = vunpack.c.l.b16 %v835
    %v2884 = vunpack.c.l.b16 %v836
    %v2885 = vunpack.c.l.b16 %v837
    %v2886 = vunpack.c.l.b16 %v838
    %v2887 = vunpack.c.l.b16 %v839
    %v2888 = vunpack.c.l.b16 %v840
    %v2889 = vunpack.c.l.b16 %v841
    %v2890 = vunpack.c.l.b16 %v842
    %v2891 = vunpack.c.l.b16 %v843
    %v2892 = vunpack.c.l.b16 %v844
    %v2893 = vunpack.c.l.b16 %v845
    %v2894 = vunpack.c.l.b16 %v846
    %v2895 = vunpack.c.l.b16 %v847
    %v2896 = vunpack.c.l.b16 %v848
    %v2897 = vunpack.c.l.b16 %v849
    %v2898 = vunpack.c.l.b16 %v850
    %v2899 = vunpack.c.l.b16 %v851
    %v2900 = vunpack.c.l.b16 %v852
    %v2901 = vunpack.c.l.b16 %v853
    %v2902 = vunpack.c.l.b16 %v854
    %v2903 = vunpack.c.l.b16 %v855
    %v2904 = vunpack.c.l.b16 %v856
    %v2905 = vunpack.c.l.b16 %v857
    %v2906 = vunpack.c.l.b16 %v858
    %v2907 = vunpack.c.l.b16 %v859
    %v2908 = vunpack.c.l.b16 %v860
    %v2909 = vunpack.c.l.b16 %v861
    %v2910 = vunpack.c.l.b16 %v862
    %v2911 = vunpack.c.l.b16 %v863
    %v2912 = vunpack.c.l.b16 %v864
    %v2913 = vunpack.c.l.b16 %v865
    %v2914 = vunpack.c.l.b16 %v866
    %v2915 = vunpack.c.l.b16 %v867
    %v2916 = vunpack.c.l.b16 %v868
    %v2917 = vunpack.c.l.b16 %v869
    %v2918 = vunpack.c.l.b16 %v870
    %v2919 = vunpack.c.l.b16 %v871
    %v2920 = vunpack.c.l.b16 %v872
    %v2921 = vunpack.c.l.b16 %v873
    %v2922 = vunpack.c.l.b16 %v874
    %v2923 = vunpack.c.l.b16 %v875
    %v2924 = vunpack.c.l.b16 %v876
    %v2925 = vunpack.c.l.b16 %v877
    %v2926 = vunpack.c.l.b16 %v878
    %v2927 = vunpack.c.l.b16 %v879
    %v2928 = vunpack.c.l.b16 %v880
    %v2929 = vunpack.c.l.b16 %v881
    %v2930 = vunpack.c.l.b16 %v882
    %v2931 = vunpack.c.l.b16 %v883
    %v2932 = vunpack.c.l.b16 %v884
    %v2933 = vunpack.c.l.b16 %v885
    %v2934 = vunpack.c.l.b16 %v886
    %v2935 = vunpack.c.l.b16 %v887
    %v2936 = vunpack.c.l.b16 %v888
    %v2937 = vunpack.c.l.b16 %v889
    %v2938 = vunpack.c.l.b16 %v890
    %v2939 = vunpack.c.l.b16 %v891
    %v2940 = vunpack.c.l.b16 %v892
    %v2941 = vunpack.c.l.b16 %v893
    %v2942 = vunpack.c.l.b16 %v894
    %v2943 = vunpack.c.l.b16 %v895
    %v2944 = vunpack.c.l.b16 %v896
    %v2945 = vunpack.c.l.b16 %v897
    %v2946 = vunpack.c.l.b16 %v898
    %v2947 = vunpack.c.l.b16 %v899
    %v2948 = vunpack.c.l.b16 %v900
    %v2949 = vunpack.c.l.b16 %v901
    %v2950 = vunpack.c.l.b16 %v902
    %v2951 = vunpack.c.l.b16 %v903
    %v2952 = vunpack.c.l.b16 %v904
    %v2953 = vunpack.c.l.b16 %v905
    %v2954 = vunpack.c.l.b16 %v906
    %v2955 = vunpack.c.l.b16 %v907
    %v2956 = vunpack.c.l.b16 %v908
    %v2957 = vunpack.c.l.b16 %v909
    %v2958 = vunpack.c.l.b16 %v910
    %v2959 = vunpack.c.l.b16 %v911
    %v2960 = vunpack.c.l.b16 %v912
    %v2961 = vunpack.c.l.b16 %v913
    %v2962 = vunpack.c.l.b16 %v914
    %v2963 = vunpack.c.l.b16 %v915
    %v2964 = vunpack.c.l.b16 %v916
    %v2965 = vunpack.c.l.b16 %v917
    %v2966 = vunpack.c.l.b16 %v918
    %v2967 = vunpack.c.l.b16 %v919
    %v2968 = vunpack.c.l.b16 %v920
    %v2969 = vunpack.c.l.b16 %v921
    %v2970 = vunpack.c.l.b16 %v922
    %v2971 = vunpack.c.l.b16 %v923
    %v2972 = vunpack.c.l.b16 %v924
    %v2973 = vunpack.c.l.b16 %v925
    %v2974 = vunpack.c.l.b16 %v926
    %v2975 = vunpack.c.l.b16 %v927
    %v2976 = vunpack.c.l.b16 %v928
    %v2977 = vunpack.c.l.b16 %v929
    %v2978 = vunpack.c.l.b16 %v930
    %v2979 = vunpack.c.l.b16 %v931
    %v2980 = vunpack.c.l.b16 %v932
    %v2981 = vunpack.c.l.b16 %v933
    %v2982 = vunpack.c.l.b16 %v934
    %v2983 = vunpack.c.l.b16 %v935
    %v2984 = vunpack.c.l.b16 %v936
    %v2985 = vunpack.c.l.b16 %v937
    %v2986 = vunpack.c.l.b16 %v938
    %v2987 = vunpack.c.l.b16 %v939
    %v2988 = vunpack.c.l.b16 %v940
    %v2989 = vunpack.c.l.b16 %v941
    %v2990 = vunpack.c.l.b16 %v942
    %v2991 = vunpack.c.l.b16 %v943
    %v2992 = vunpack.c.l.b16 %v944
    %v2993 = vunpack.c.l.b16 %v945
    %v2994 = vunpack.c.l.b16 %v946
    %v2995 = vunpack.c.l.b16 %v947
    %v2996 = vunpack.c.l.b16 %v948
    %v2997 = vunpack.c.l.b16 %v949
    %v2998 = vunpack.c.l.b16 %v950
    %v2999 = vunpack.c.l.b16 %v951
    %v3000 = vunpack.c.l.b16 %v952
    %v3001 = vunpack.c.l.b16 %v953
    %v3002 = vunpack.c.l.b16 %v954
    %v3003 = vunpack.c.l.b16 %v955
    %v3004 = vunpack.c.l.b16 %v956
    %v3005 = vunpack.c.l.b16 %v957
    %v3006 = vunpack.c.l.b16 %v958
    %v3007 = vunpack.c.l.b16 %v959
    %v3008 = vunpack.c.l.b16 %v960
    %v3009 = vunpack.c.l.b16 %v961
    %v3010 = vunpack.c.l.b16 %v962
    %v3011 = vunpack.c.l.b16 %v963
    %v3012 = vunpack.c.l.b16 %v964
    %v3013 = vunpack.c.l.b16 %v965
    %v3014 = vunpack.c.l.b16 %v966
    %v3015 = vunpack.c.l.b16 %v967
    %v3016 = vunpack.c.l.b16 %v968
    %v3017 = vunpack.c.l.b16 %v969
    %v3018 = vunpack.c.l.b16 %v970
    %v3019 = vunpack.c.l.b16 %v971
    %v3020 = vunpack.c.l.b16 %v972
    %v3021 = vunpack.c.l.b16 %v973
    %v3022 = vunpack.c.l.b16 %v974
    %v3023 = vunpack.c.l.b16 %v975
    %v3024 = vunpack.c.l.b16 %v976
    %v3025 = vunpack.c.l.b16 %v977
    %v3026 = vunpack.c.l.b16 %v978
    %v3027 = vunpack.c.l.b16 %v979
    %v3028 = vunpack.c.l.b16 %v980
    %v3029 = vunpack.c.l.b16 %v981
    %v3030 = vunpack.c.l.b16 %v982
    %v3031 = vunpack.c.l.b16 %v983
    %v3032 = vunpack.c.l.b16 %v984
    %v3033 = vunpack.c.l.b16 %v985
    %v3034 = vunpack.c.l.b16 %v986
    %v3035 = vunpack.c.l.b16 %v987
    %v3036 = vunpack.c.l.b16 %v988
    %v3037 = vunpack.c.l.b16 %v989
    %v3038 = vunpack.c.l.b16 %v990
    %v3039 = vunpack.c.l.b16 %v991
    %v3040 = vunpack.c.l.b16 %v992
    %v3041 = vunpack.c.l.b16 %v993
    %v3042 = vunpack.c.l.b16 %v994
    %v3043 = vunpack.c.l.b16 %v995
    %v3044 = vunpack.c.l.b16 %v996
    %v3045 = vunpack.c.l.b16 %v997
    %v3046 = vunpack.c.l.b16 %v998
    %v3047 = vunpack.c.l.b16 %v999
    %v3048 = vunpack.c.l.b16 %v1000
    %v3049 = vunpack.c.l.b16 %v1001
    %v3050 = vunpack.c.l.b16 %v1002
    %v3051 = vunpack.c.l.b16 %v1003
    %v3052 = vunpack.c.l.b16 %v1004
    %v3053 = vunpack.c.l.b16 %v1005
    %v3054 = vunpack.c.l.b16 %v1006
    %v3055 = vunpack.c.l.b16 %v1007
    %v3056 = vunpack.c.l.b16 %v1008
    %v3057 = vunpack.c.l.b16 %v1009
    %v3058 = vunpack.c.l.b16 %v1010
    %v3059 = vunpack.c.l.b16 %v1011
    %v3060 = vunpack.c.l.b16 %v1012
    %v3061 = vunpack.c.l.b16 %v1013
    %v3062 = vunpack.c.l.b16 %v1014
    %v3063 = vunpack.c.l.b16 %v1015
    %v3064 = vunpack.c.l.b16 %v1016
    %v3065 = vunpack.c.l.b16 %v1017
    %v3066 = vunpack.c.l.b16 %v1018
    %v3067 = vunpack.c.l.b16 %v1019
    %v3068 = vunpack.c.l.b16 %v1020
    %v3069 = vunpack.c.l.b16 %v1021
    %v3070 = vunpack.c.l.b16 %v1022
    %v3071 = vunpack.c.l.b16 %v1023
    %v3072 = vunpack.c.l.b16 %v1024
    %v3073 = vunpack.c.l.b16 %v1025
    %v3074 = vunpack.c.l.b16 %v1026
    %v3075 = vunpack.c.l.b16 %v1027
    %v3076 = vunpack.c.l.b16 %v1028
    %v3077 = vunpack.c.l.b16 %v1029
    %v3078 = vunpack.c.l.b16 %v1030
    %v3079 = vunpack.c.l.b16 %v1031
    %v3080 = vunpack.c.l.b16 %v1032
    %v3081 = vunpack.c.l.b16 %v1033
    %v3082 = vunpack.c.l.b16 %v1034
    %v3083 = vunpack.c.l.b16 %v1035
    %v3084 = vunpack.c.l.b16 %v1036
    %v3085 = vunpack.c.l.b16 %v1037
    %v3086 = vunpack.c.l.b16 %v1038
    %v3087 = vunpack.c.l.b16 %v1039
    %v3088 = vunpack.c.l.b16 %v1040
    %v3089 = vunpack.c.l.b16 %v1041
    %v3090 = vunpack.c.l.b16 %v1042
    %v3091 = vunpack.c.l.b16 %v1043
    %v3092 = vunpack.c.l.b16 %v1044
    %v3093 = vunpack.c.l.b16 %v1045
    %v3094 = vunpack.c.l.b16 %v1046
    %v3095 = vunpack.c.l.b16 %v1047
    %v3096 = vunpack.c.l.b16 %v1048
    %v3097 = vunpack.c.l.b16 %v1049
    %v3098 = vunpack.c.l.b16 %v1050
    %v3099 = vunpack.c.l.b16 %v1051
    %v3100 = vunpack.c.l.b16 %v1052
    %v3101 = vunpack.c.l.b16 %v1053
    %v3102 = vunpack.c.l.b16 %v1054
    %v3103 = vunpack.c.l.b16 %v1055
    %v3104 = vunpack.c.l.b16 %v1056
    %v3105 = vunpack.c.l.b16 %v1057
    %v3106 = vunpack.c.l.b16 %v1058
    %v3107 = vunpack.c.l.b16 %v1059
    %v3108 = vunpack.c.l.b16 %v1060
    %v3109 = vunpack.c.l.b16 %v1061
    %v3110 = vunpack.c.l.b16 %v1062
    %v3111 = vunpack.c.l.b16 %v1063
    %v3112 = vunpack.c.l.b16 %v1064
    %v3113 = vunpack.c.l.b16 %v1065
    %v3114 = vunpack.c.l.b16 %v1066
    %v3115 = vunpack.c.l.b16 %v1067
    %v3116 = vunpack.c.l.b16 %v1068
    %v3117 = vunpack.c.l.b16 %v1069
    %v3118 = vunpack.c.l.b16 %v1070
    %v3119 = vunpack.c.l.b16 %v1071
    %v3120 = vunpack.c.l.b16 %v1072
    %v3121 = vunpack.c.l.b16 %v1073
    %v3122 = vunpack.c.l.b16 %v1074
    %v3123 = vunpack.c.l.b16 %v1075
    %v3124 = vunpack.c.l.b16 %v1076
    %v3125 = vunpack.c.l.b16 %v1077
    %v3126 = vunpack.c.l.b16 %v1078
    %v3127 = vunpack.c.l.b16 %v1079
    %v3128 = vunpack.c.l.b16 %v1080
    %v3129 = vunpack.c.l.b16 %v1081
    %v3130 = vunpack.c.l.b16 %v1082
    %v3131 = vunpack.c.l.b16 %v1083
    %v3132 = vunpack.c.l.b16 %v1084
    %v3133 = vunpack.c.l.b16 %v1085
    %v3134 = vunpack.c.l.b16 %v1086
    %v3135 = vunpack.c.l.b16 %v1087
    %v3136 = vunpack.c.l.b16 %v1088
    %v3137 = vunpack.c.l.b16 %v1089
    %v3138 = vunpack.c.l.b16 %v1090
    %v3139 = vunpack.c.l.b16 %v1091
    %v3140 = vunpack.c.l.b16 %v1092
    %v3141 = vunpack.c.l.b16 %v1093
    %v3142 = vunpack.c.l.b16 %v1094
    %v3143 = vunpack.c.l.b16 %v1095
    %v3144 = vunpack.c.l.b16 %v1096
    %v3145 = vunpack.c.l.b16 %v1097
    %v3146 = vunpack.c.l.b16 %v1098
    %v3147 = vunpack.c.l.b16 %v1099
    %v3148 = vunpack.c.l.b16 %v1100
    %v3149 = vunpack.c.l.b16 %v1101
    %v3150 = vunpack.c.l.b16 %v1102
    %v3151 = vunpack.c.l.b16 %v1103
    %v3152 = vunpack.c.l.b16 %v1104
    %v3153 = vunpack.c.l.b16 %v1105
    %v3154 = vunpack.c.l.b16 %v1106
    %v3155 = vunpack.c.l.b16 %v1107
    %v3156 = vunpack.c.l.b16 %v1108
    %v3157 = vunpack.c.l.b16 %v1109
    %v3158 = vunpack.c.l.b16 %v1110
    %v3159 = vunpack.c.l.b16 %v1111
    %v3160 = vunpack.c.l.b16 %v1112
    %v3161 = vunpack.c.l.b16 %v1113
    %v3162 = vunpack.c.l.b16 %v1114
    %v3163 = vunpack.c.l.b16 %v1115
    %v3164 = vunpack.c.l.b16 %v1116
    %v3165 = vunpack.c.l.b16 %v1117
    %v3166 = vunpack.c.l.b16 %v1118
    %v3167 = vunpack.c.l.b16 %v1119
    %v3168 = vunpack.c.l.b16 %v1120
    %v3169 = vunpack.c.l.b16 %v1121
    %v3170 = vunpack.c.l.b16 %v1122
    %v3171 = vunpack.c.l.b16 %v1123
    %v3172 = vunpack.c.l.b16 %v1124
    %v3173 = vunpack.c.l.b16 %v1125
    %v3174 = vunpack.c.l.b16 %v1126
    %v3175 = vunpack.c.l.b16 %v1127
    %v3176 = vunpack.c.l.b16 %v1128
    %v3177 = vunpack.c.l.b16 %v1129
    %v3178 = vunpack.c.l.b16 %v1130
    %v3179 = vunpack.c.l.b16 %v1131
    %v3180 = vunpack.c.l.b16 %v1132
    %v3181 = vunpack.c.l.b16 %v1133
    %v3182 = vunpack.c.l.b16 %v1134
    %v3183 = vunpack.c.l.b16 %v1135
    %v3184 = vunpack.c.l.b16 %v1136
    %v3185 = vunpack.c.l.b16 %v1137
    %v3186 = vunpack.c.l.b16 %v1138
    %v3187 = vunpack.c.l.b16 %v1139
    %v3188 = vunpack.c.l.b16 %v1140
    %v3189 = vunpack.c.l.b16 %v1141
    %v3190 = vunpack.c.l.b16 %v1142
    %v3191 = vunpack.c.l.b16 %v1143
    %v3192 = vunpack.c.l.b16 %v1144
    %v3193 = vunpack.c.l.b16 %v1145
    %v3194 = vunpack.c.l.b16 %v1146
    %v3195 = vunpack.c.l.b16 %v1147
    %v3196 = vunpack.c.l.b16 %v1148
    %v3197 = vunpack.c.l.b16 %v1149
    %v3198 = vunpack.c.l.b16 %v1150
    %v3199 = vunpack.c.l.b16 %v1151
    %v3200 = vunpack.c.l.b16 %v1152
    %v3201 = vunpack.c.l.b16 %v1153
    %v3202 = vunpack.c.l.b16 %v1154
    %v3203 = vunpack.c.l.b16 %v1155
    %v3204 = vunpack.c.l.b16 %v1156
    %v3205 = vunpack.c.l.b16 %v1157
    %v3206 = vunpack.c.l.b16 %v1158
    %v3207 = vunpack.c.l.b16 %v1159
    %v3208 = vunpack.c.l.b16 %v1160
    %v3209 = vunpack.c.l.b16 %v1161
    %v3210 = vunpack.c.l.b16 %v1162
    %v3211 = vunpack.c.l.b16 %v1163
    %v3212 = vunpack.c.l.b16 %v1164
    %v3213 = vunpack.c.l.b16 %v1165
    %v3214 = vunpack.c.l.b16 %v1166
    %v3215 = vunpack.c.l.b16 %v1167
    %v3216 = vunpack.c.l.b16 %v1168
    %v3217 = vunpack.c.l.b16 %v1169
    %v3218 = vunpack.c.l.b16 %v1170
    %v3219 = vunpack.c.l.b16 %v1171
    %v3220 = vunpack.c.l.b16 %v1172
    %v3221 = vunpack.c.l.b16 %v1173
    %v3222 = vunpack.c.l.b16 %v1174
    %v3223 = vunpack.c.l.b16 %v1175
    %v3224 = vunpack.c.l.b16 %v1176
    %v3225 = vunpack.c.l.b16 %v1177
    %v3226 = vunpack.c.l.b16 %v1178
    %v3227 = vunpack.c.l.b16 %v1179
    %v3228 = vunpack.c.l.b16 %v1180
    %v3229 = vunpack.c.l.b16 %v1181
    %v3230 = vunpack.c.l.b16 %v1182
    %v3231 = vunpack.c.l.b16 %v1183
    %v3232 = vunpack.c.l.b16 %v1184
    %v3233 = vunpack.c.l.b16 %v1185
    %v3234 = vunpack.c.l.b16 %v1186
    %v3235 = vunpack.c.l.b16 %v1187
    %v3236 = vunpack.c.l.b16 %v1188
    %v3237 = vunpack.c.l.b16 %v1189
    %v3238 = vunpack.c.l.b16 %v1190
    %v3239 = vunpack.c.l.b16 %v1191
    %v3240 = vunpack.c.l.b16 %v1192
    %v3241 = vunpack.c.l.b16 %v1193
    %v3242 = vunpack.c.l.b16 %v1194
    %v3243 = vunpack.c.l.b16 %v1195
    %v3244 = vunpack.c.l.b16 %v1196
    %v3245 = vunpack.c.l.b16 %v1197
    %v3246 = vunpack.c.l.b16 %v1198
    %v3247 = vunpack.c.l.b16 %v1199
    %v3248 = vunpack.c.l.b16 %v1200
    %v3249 = vunpack.c.l.b16 %v1201
    %v3250 = vunpack.c.l.b16 %v1202
    %v3251 = vunpack.c.l.b16 %v1203
    %v3252 = vunpack.c.l.b16 %v1204
    %v3253 = vunpack.c.l.b16 %v1205
    %v3254 = vunpack.c.l.b16 %v1206
    %v3255 = vunpack.c.l.b16 %v1207
    %v3256 = vunpack.c.l.b16 %v1208
    %v3257 = vunpack.c.l.b16 %v1209
    %v3258 = vunpack.c.l.b16 %v1210
    %v3259 = vunpack.c.l.b16 %v1211
    %v3260 = vunpack.c.l.b16 %v1212
    %v3261 = vunpack.c.l.b16 %v1213
    %v3262 = vunpack.c.l.b16 %v1214
    %v3263 = vunpack.c.l.b16 %v1215
    %v3264 = vunpack.c.l.b16 %v1216
    %v3265 = vunpack.c.l.b16 %v1217
    %v3266 = vunpack.c.l.b16 %v1218
    %v3267 = vunpack.c.l.b16 %v1219
    %v3268 = vunpack.c.l.b16 %v1220
    %v3269 = vunpack.c.l.b16 %v1221
    %v3270 = vunpack.c.l.b16 %v1222
    %v3271 = vunpack.c.l.b16 %v1223
    %v3272 = vunpack.c.l.b16 %v1224
    %v3273 = vunpack.c.l.b16 %v1225
    %v3274 = vunpack.c.l.b16 %v1226
    %v3275 = vunpack.c.l.b16 %v1227
    %v3276 = vunpack.c.l.b16 %v1228
    %v3277 = vunpack.c.l.b16 %v1229
    %v3278 = vunpack.c.l.b16 %v1230
    %v3279 = vunpack.c.l.b16 %v1231
    %v3280 = vunpack.c.l.b16 %v1232
    %v3281 = vunpack.c.l.b16 %v1233
    %v3282 = vunpack.c.l.b16 %v1234
    %v3283 = vunpack.c.l.b16 %v1235
    %v3284 = vunpack.c.l.b16 %v1236
    %v3285 = vunpack.c.l.b16 %v1237
    %v3286 = vunpack.c.l.b16 %v1238
    %v3287 = vunpack.c.l.b16 %v1239
    %v3288 = vunpack.c.l.b16 %v1240
    %v3289 = vunpack.c.l.b16 %v1241
    %v3290 = vunpack.c.l.b16 %v1242
    %v3291 = vunpack.c.l.b16 %v1243
    %v3292 = vunpack.c.l.b16 %v1244
    %v3293 = vunpack.c.l.b16 %v1245
    %v3294 = vunpack.c.l.b16 %v1246
    %v3295 = vunpack.c.l.b16 %v1247
    %v3296 = vunpack.c.l.b16 %v1248
    %v3297 = vunpack.c.l.b16 %v1249
    %v3298 = vunpack.c.l.b16 %v1250
    %v3299 = vunpack.c.l.b16 %v1251
    %v3300 = vunpack.c.l.b16 %v1252
    %v3301 = vunpack.c.l.b16 %v1253
    %v3302 = vunpack.c.l.b16 %v1254
    %v3303 = vunpack.c.l.b16 %v1255
    %v3304 = vunpack.c.l.b16 %v1256
    %v3305 = vunpack.c.l.b16 %v1257
    %v3306 = vunpack.c.l.b16 %v1258
    %v3307 = vunpack.c.l.b16 %v1259
    %v3308 = vunpack.c.l.b16 %v1260
    %v3309 = vunpack.c.l.b16 %v1261
    %v3310 = vunpack.c.l.b16 %v1262
    %v3311 = vunpack.c.l.b16 %v1263
    %v3312 = vunpack.c.l.b16 %v1264
    %v3313 = vunpack.c.l.b16 %v1265
    %v3314 = vunpack.c.l.b16 %v1266
    %v3315 = vunpack.c.l.b16 %v1267
    %v3316 = vunpack.c.l.b16 %v1268
    %v3317 = vunpack.c.l.b16 %v1269
    %v3318 = vunpack.c.l.b16 %v1270
    %v3319 = vunpack.c.l.b16 %v1271
    %v3320 = vunpack.c.l.b16 %v1272
    %v3321 = vunpack.c.l.b16 %v1273
    %v3322 = vunpack.c.l.b16 %v1274
    %v3323 = vunpack.c.l.b16 %v1275
    %v3324 = vunpack.c.l.b16 %v1276
    %v3325 = vunpack.c.l.b16 %v1277
    %v3326 = vunpack.c.l.b16 %v1278
    %v3327 = vunpack.c.l.b16 %v1279
    %v3328 = vunpack.c.l.b16 %v1280
    %v3329 = vunpack.c.l.b16 %v1281
    %v3330 = vunpack.c.l.b16 %v1282
    %v3331 = vunpack.c.l.b16 %v1283
    %v3332 = vunpack.c.l.b16 %v1284
    %v3333 = vunpack.c.l.b16 %v1285
    %v3334 = vunpack.c.l.b16 %v1286
    %v3335 = vunpack.c.l.b16 %v1287
    %v3336 = vunpack.c.l.b16 %v1288
    %v3337 = vunpack.c.l.b16 %v1289
    %v3338 = vunpack.c.l.b16 %v1290
    %v3339 = vunpack.c.l.b16 %v1291
    %v3340 = vunpack.c.l.b16 %v1292
    %v3341 = vunpack.c.l.b16 %v1293
    %v3342 = vunpack.c.l.b16 %v1294
    %v3343 = vunpack.c.l.b16 %v1295
    %v3344 = vunpack.c.l.b16 %v1296
    %v3345 = vunpack.c.l.b16 %v1297
    %v3346 = vunpack.c.l.b16 %v1298
    %v3347 = vunpack.c.l.b16 %v1299
    %v3348 = vunpack.c.l.b16 %v1300
    %v3349 = vunpack.c.l.b16 %v1301
    %v3350 = vunpack.c.l.b16 %v1302
    %v3351 = vunpack.c.l.b16 %v1303
    %v3352 = vunpack.c.l.b16 %v1304
    %v3353 = vunpack.c.l.b16 %v1305
    %v3354 = vunpack.c.l.b16 %v1306
    %v3355 = vunpack.c.l.b16 %v1307
    %v3356 = vunpack.c.l.b16 %v1308
    %v3357 = vunpack.c.l.b16 %v1309
    %v3358 = vunpack.c.l.b16 %v1310
    %v3359 = vunpack.c.l.b16 %v1311
    %v3360 = vunpack.c.l.b16 %v1312
    %v3361 = vunpack.c.l.b16 %v1313
    %v3362 = vunpack.c.l.b16 %v1314
    %v3363 = vunpack.c.l.b16 %v1315
    %v3364 = vunpack.c.l.b16 %v1316
    %v3365 = vunpack.c.l.b16 %v1317
    %v3366 = vpack.c.b16 %v2343, %v2342
    %v3367 = vpack.c.b16 %v2345, %v2344
    %v3368 = vpack.c.b16 %v2347, %v2346
    %v3369 = vpack.c.b16 %v2349, %v2348
    %v3370 = vpack.c.b16 %v2351, %v2350
    %v3371 = vpack.c.b16 %v2353, %v2352
    %v3372 = vpack.c.b16 %v2355, %v2354
    %v3373 = vpack.c.b16 %v2357, %v2356
    %v3374 = vpack.c.b16 %v2359, %v2358
    %v3375 = vpack.c.b16 %v2361, %v2360
    %v3376 = vpack.c.b16 %v2363, %v2362
    %v3377 = vpack.c.b16 %v2365, %v2364
    %v3378 = vpack.c.b16 %v2367, %v2366
    %v3379 = vpack.c.b16 %v2369, %v2368
    %v3380 = vpack.c.b16 %v2371, %v2370
    %v3381 = vpack.c.b16 %v2373, %v2372
    %v3382 = vpack.c.b16 %v2375, %v2374
    %v3383 = vpack.c.b16 %v2377, %v2376
    %v3384 = vpack.c.b16 %v2379, %v2378
    %v3385 = vpack.c.b16 %v2381, %v2380
    %v3386 = vpack.c.b16 %v2383, %v2382
    %v3387 = vpack.c.b16 %v2385, %v2384
    %v3388 = vpack.c.b16 %v2387, %v2386
    %v3389 = vpack.c.b16 %v2389, %v2388
    %v3390 = vpack.c.b16 %v2391, %v2390
    %v3391 = vpack.c.b16 %v2393, %v2392
    %v3392 = vpack.c.b16 %v2395, %v2394
    %v3393 = vpack.c.b16 %v2397, %v2396
    %v3394 = vpack.c.b16 %v2399, %v2398
    %v3395 = vpack.c.b16 %v2401, %v2400
    %v3396 = vpack.c.b16 %v2403, %v2402
    %v3397 = vpack.c.b16 %v2405, %v2404
    %v3398 = vpack.c.b16 %v2407, %v2406
    %v3399 = vpack.c.b16 %v2409, %v2408
    %v3400 = vpack.c.b16 %v2411, %v2410
    %v3401 = vpack.c.b16 %v2413, %v2412
    %v3402 = vpack.c.b16 %v2415, %v2414
    %v3403 = vpack.c.b16 %v2417, %v2416
    %v3404 = vpack.c.b16 %v2419, %v2418
    %v3405 = vpack.c.b16 %v2421, %v2420
    %v3406 = vpack.c.b16 %v2423, %v2422
    %v3407 = vpack.c.b16 %v2425, %v2424
    %v3408 = vpack.c.b16 %v2427, %v2426
    %v3409 = vpack.c.b16 %v2429, %v2428
    %v3410 = vpack.c.b16 %v2431, %v2430
    %v3411 = vpack.c.b16 %v2433, %v2432
    %v3412 = vpack.c.b16 %v2435, %v2434
    %v3413 = vpack.c.b16 %v2437, %v2436
    %v3414 = vpack.c.b16 %v2439, %v2438
    %v3415 = vpack.c.b16 %v2441, %v2440
    %v3416 = vpack.c.b16 %v2443, %v2442
    %v3417 = vpack.c.b16 %v2445, %v2444
    %v3418 = vpack.c.b16 %v2447, %v2446
    %v3419 = vpack.c.b16 %v2449, %v2448
    %v3420 = vpack.c.b16 %v2451, %v2450
    %v3421 = vpack.c.b16 %v2453, %v2452
    %v3422 = vpack.c.b16 %v2455, %v2454
    %v3423 = vpack.c.b16 %v2457, %v2456
    %v3424 = vpack.c.b16 %v2459, %v2458
    %v3425 = vpack.c.b16 %v2461, %v2460
    %v3426 = vpack.c.b16 %v2463, %v2462
    %v3427 = vpack.c.b16 %v2465, %v2464
    %v3428 = vpack.c.b16 %v2467, %v2466
    %v3429 = vpack.c.b16 %v2469, %v2468
    %v3430 = vpack.c.b16 %v2471, %v2470
    %v3431 = vpack.c.b16 %v2473, %v2472
    %v3432 = vpack.c.b16 %v2475, %v2474
    %v3433 = vpack.c.b16 %v2477, %v2476
    %v3434 = vpack.c.b16 %v2479, %v2478
    %v3435 = vpack.c.b16 %v2481, %v2480
    %v3436 = vpack.c.b16 %v2483, %v2482
    %v3437 = vpack.c.b16 %v2485, %v2484
    %v3438 = vpack.c.b16 %v2487, %v2486
    %v3439 = vpack.c.b16 %v2489, %v2488
    %v3440 = vpack.c.b16 %v2491, %v2490
    %v3441 = vpack.c.b16 %v2493, %v2492
    %v3442 = vpack.c.b16 %v2495, %v2494
    %v3443 = vpack.c.b16 %v2497, %v2496
    %v3444 = vpack.c.b16 %v2499, %v2498
    %v3445 = vpack.c.b16 %v2501, %v2500
    %v3446 = vpack.c.b16 %v2503, %v2502
    %v3447 = vpack.c.b16 %v2505, %v2504
    %v3448 = vpack.c.b16 %v2507, %v2506
    %v3449 = vpack.c.b16 %v2509, %v2508
    %v3450 = vpack.c.b16 %v2511, %v2510
    %v3451 = vpack.c.b16 %v2513, %v2512
    %v3452 = vpack.c.b16 %v2515, %v2514
    %v3453 = vpack.c.b16 %v2517, %v2516
    %v3454 = vpack.c.b16 %v2519, %v2518
    %v3455 = vpack.c.b16 %v2521, %v2520
    %v3456 = vpack.c.b16 %v2523, %v2522
    %v3457 = vpack.c.b16 %v2525, %v2524
    %v3458 = vpack.c.b16 %v2527, %v2526
    %v3459 = vpack.c.b16 %v2529, %v2528
    %v3460 = vpack.c.b16 %v2531, %v2530
    %v3461 = vpack.c.b16 %v2533, %v2532
    %v3462 = vpack.c.b16 %v2535, %v2534
    %v3463 = vpack.c.b16 %v2537, %v2536
    %v3464 = vpack.c.b16 %v2539, %v2538
    %v3465 = vpack.c.b16 %v2541, %v2540
    %v3466 = vpack.c.b16 %v2543, %v2542
    %v3467 = vpack.c.b16 %v2545, %v2544
    %v3468 = vpack.c.b16 %v2547, %v2546
    %v3469 = vpack.c.b16 %v2549, %v2548
    %v3470 = vpack.c.b16 %v2551, %v2550
    %v3471 = vpack.c.b16 %v2553, %v2552
    %v3472 = vpack.c.b16 %v2555, %v2554
    %v3473 = vpack.c.b16 %v2557, %v2556
    %v3474 = vpack.c.b16 %v2559, %v2558
    %v3475 = vpack.c.b16 %v2561, %v2560
    %v3476 = vpack.c.b16 %v2563, %v2562
    %v3477 = vpack.c.b16 %v2565, %v2564
    %v3478 = vpack.c.b16 %v2567, %v2566
    %v3479 = vpack.c.b16 %v2569, %v2568
    %v3480 = vpack.c.b16 %v2571, %v2570
    %v3481 = vpack.c.b16 %v2573, %v2572
    %v3482 = vpack.c.b16 %v2575, %v2574
    %v3483 = vpack.c.b16 %v2577, %v2576
    %v3484 = vpack.c.b16 %v2579, %v2578
    %v3485 = vpack.c.b16 %v2581, %v2580
    %v3486 = vpack.c.b16 %v2583, %v2582
    %v3487 = vpack.c.b16 %v2585, %v2584
    %v3488 = vpack.c.b16 %v2587, %v2586
    %v3489 = vpack.c.b16 %v2589, %v2588
    %v3490 = vpack.c.b16 %v2591, %v2590
    %v3491 = vpack.c.b16 %v2593, %v2592
    %v3492 = vpack.c.b16 %v2595, %v2594
    %v3493 = vpack.c.b16 %v2597, %v2596
    %v3494 = vpack.c.b16 %v2599, %v2598
    %v3495 = vpack.c.b16 %v2601, %v2600
    %v3496 = vpack.c.b16 %v2603, %v2602
    %v3497 = vpack.c.b16 %v2605, %v2604
    %v3498 = vpack.c.b16 %v2607, %v2606
    %v3499 = vpack.c.b16 %v2609, %v2608
    %v3500 = vpack.c.b16 %v2611, %v2610
    %v3501 = vpack.c.b16 %v2613, %v2612
    %v3502 = vpack.c.b16 %v2615, %v2614
    %v3503 = vpack.c.b16 %v2617, %v2616
    %v3504 = vpack.c.b16 %v2619, %v2618
    %v3505 = vpack.c.b16 %v2621, %v2620
    %v3506 = vpack.c.b16 %v2623, %v2622
    %v3507 = vpack.c.b16 %v2625, %v2624
    %v3508 = vpack.c.b16 %v2627, %v2626
    %v3509 = vpack.c.b16 %v2629, %v2628
    %v3510 = vpack.c.b16 %v2631, %v2630
    %v3511 = vpack.c.b16 %v2633, %v2632
    %v3512 = vpack.c.b16 %v2635, %v2634
    %v3513 = vpack.c.b16 %v2637, %v2636
    %v3514 = vpack.c.b16 %v2639, %v2638
    %v3515 = vpack.c.b16 %v2641, %v2640
    %v3516 = vpack.c.b16 %v2643, %v2642
    %v3517 = vpack.c.b16 %v2645, %v2644
    %v3518 = vpack.c.b16 %v2647, %v2646
    %v3519 = vpack.c.b16 %v2649, %v2648
    %v3520 = vpack.c.b16 %v2651, %v2650
    %v3521 = vpack.c.b16 %v2653, %v2652
    %v3522 = vpack.c.b16 %v2655, %v2654
    %v3523 = vpack.c.b16 %v2657, %v2656
    %v3524 = vpack.c.b16 %v2659, %v2658
    %v3525 = vpack.c.b16 %v2661, %v2660
    %v3526 = vpack.c.b16 %v2663, %v2662
    %v3527 = vpack.c.b16 %v2665, %v2664
    %v3528 = vpack.c.b16 %v2667, %v2666
    %v3529 = vpack.c.b16 %v2669, %v2668
    %v3530 = vpack.c.b16 %v2671, %v2670
    %v3531 = vpack.c.b16 %v2673, %v2672
    %v3532 = vpack.c.b16 %v2675, %v2674
    %v3533 = vpack.c.b16 %v2677, %v2676
    %v3534 = vpack.c.b16 %v2679, %v2678
    %v3535 = vpack.c.b16 %v2681, %v2680
    %v3536 = vpack.c.b16 %v2683, %v2682
    %v3537 = vpack.c.b16 %v2685, %v2684
    %v3538 = vpack.c.b16 %v2687, %v2686
    %v3539 = vpack.c.b16 %v2689, %v2688
    %v3540 = vpack.c.b16 %v2691, %v2690
    %v3541 = vpack.c.b16 %v2693, %v2692
    %v3542 = vpack.c.b16 %v2695, %v2694
    %v3543 = vpack.c.b16 %v2697, %v2696
    %v3544 = vpack.c.b16 %v2699, %v2698
    %v3545 = vpack.c.b16 %v2701, %v2700
    %v3546 = vpack.c.b16 %v2703, %v2702
    %v3547 = vpack.c.b16 %v2705, %v2704
    %v3548 = vpack.c.b16 %v2707, %v2706
    %v3549 = vpack.c.b16 %v2709, %v2708
    %v3550 = vpack.c.b16 %v2711, %v2710
    %v3551 = vpack.c.b16 %v2713, %v2712
    %v3552 = vpack.c.b16 %v2715, %v2714
    %v3553 = vpack.c.b16 %v2717, %v2716
    %v3554 = vpack.c.b16 %v2719, %v2718
    %v3555 = vpack.c.b16 %v2721, %v2720
    %v3556 = vpack.c.b16 %v2723, %v2722
    %v3557 = vpack.c.b16 %v2725, %v2724
    %v3558 = vpack.c.b16 %v2727, %v2726
    %v3559 = vpack.c.b16 %v2729, %v2728
    %v3560 = vpack.c.b16 %v2731, %v2730
    %v3561 = vpack.c.b16 %v2733, %v2732
    %v3562 = vpack.c.b16 %v2735, %v2734
    %v3563 = vpack.c.b16 %v2737, %v2736
    %v3564 = vpack.c.b16 %v2739, %v2738
    %v3565 = vpack.c.b16 %v2741, %v2740
    %v3566 = vpack.c.b16 %v2743, %v2742
    %v3567 = vpack.c.b16 %v2745, %v2744
    %v3568 = vpack.c.b16 %v2747, %v2746
    %v3569 = vpack.c.b16 %v2749, %v2748
    %v3570 = vpack.c.b16 %v2751, %v2750
    %v3571 = vpack.c.b16 %v2753, %v2752
    %v3572 = vpack.c.b16 %v2755, %v2754
    %v3573 = vpack.c.b16 %v2757, %v2756
    %v3574 = vpack.c.b16 %v2759, %v2758
    %v3575 = vpack.c.b16 %v2761, %v2760
    %v3576 = vpack.c.b16 %v2763, %v2762
    %v3577 = vpack.c.b16 %v2765, %v2764
    %v3578 = vpack.c.b16 %v2767, %v2766
    %v3579 = vpack.c.b16 %v2769, %v2768
    %v3580 = vpack.c.b16 %v2771, %v2770
    %v3581 = vpack.c.b16 %v2773, %v2772
    %v3582 = vpack.c.b16 %v2775, %v2774
    %v3583 = vpack.c.b16 %v2777, %v2776
    %v3584 = vpack.c.b16 %v2779, %v2778
    %v3585 = vpack.c.b16 %v2781, %v2780
    %v3586 = vpack.c.b16 %v2783, %v2782
    %v3587 = vpack.c.b16 %v2785, %v2784
    %v3588 = vpack.c.b16 %v2787, %v2786
    %v3589 = vpack.c.b16 %v2789, %v2788
    %v3590 = vpack.c.b16 %v2791, %v2790
    %v3591 = vpack.c.b16 %v2793, %v2792
    %v3592 = vpack.c.b16 %v2795, %v2794
    %v3593 = vpack.c.b16 %v2797, %v2796
    %v3594 = vpack.c.b16 %v2799, %v2798
    %v3595 = vpack.c.b16 %v2801, %v2800
    %v3596 = vpack.c.b16 %v2803, %v2802
    %v3597 = vpack.c.b16 %v2805, %v2804
    %v3598 = vpack.c.b16 %v2807, %v2806
    %v3599 = vpack.c.b16 %v2809, %v2808
    %v3600 = vpack.c.b16 %v2811, %v2810
    %v3601 = vpack.c.b16 %v2813, %v2812
    %v3602 = vpack.c.b16 %v2815, %v2814
    %v3603 = vpack.c.b16 %v2817, %v2816
    %v3604 = vpack.c.b16 %v2819, %v2818
    %v3605 = vpack.c.b16 %v2821, %v2820
    %v3606 = vpack.c.b16 %v2823, %v2822
    %v3607 = vpack.c.b16 %v2825, %v2824
    %v3608 = vpack.c.b16 %v2827, %v2826
    %v3609 = vpack.c.b16 %v2829, %v2828
    %v3610 = vpack.c.b16 %v2831, %v2830
    %v3611 = vpack.c.b16 %v2833, %v2832
    %v3612 = vpack.c.b16 %v2835, %v2834
    %v3613 = vpack.c.b16 %v2837, %v2836
    %v3614 = vpack.c.b16 %v2839, %v2838
    %v3615 = vpack.c.b16 %v2841, %v2840
    %v3616 = vpack.c.b16 %v2843, %v2842
    %v3617 = vpack.c.b16 %v2845, %v2844
    %v3618 = vpack.c.b16 %v2847, %v2846
    %v3619 = vpack.c.b16 %v2849, %v2848
    %v3620 = vpack.c.b16 %v2851, %v2850
    %v3621 = vpack.c.b16 %v2853, %v2852
    %v3622 = vpack.c.b16 %v2855, %v2854
    %v3623 = vpack.c.b16 %v2857, %v2856
    %v3624 = vpack.c.b16 %v2859, %v2858
    %v3625 = vpack.c.b16 %v2861, %v2860
    %v3626 = vpack.c.b16 %v2863, %v2862
    %v3627 = vpack.c.b16 %v2865, %v2864
    %v3628 = vpack.c.b16 %v2867, %v2866
    %v3629 = vpack.c.b16 %v2869, %v2868
    %v3630 = vpack.c.b16 %v2871, %v2870
    %v3631 = vpack.c.b16 %v2873, %v2872
    %v3632 = vpack.c.b16 %v2875, %v2874
    %v3633 = vpack.c.b16 %v2877, %v2876
    %v3634 = vpack.c.b16 %v2879, %v2878
    %v3635 = vpack.c.b16 %v2881, %v2880
    %v3636 = vpack.c.b16 %v2883, %v2882
    %v3637 = vpack.c.b16 %v2885, %v2884
    %v3638 = vpack.c.b16 %v2887, %v2886
    %v3639 = vpack.c.b16 %v2889, %v2888
    %v3640 = vpack.c.b16 %v2891, %v2890
    %v3641 = vpack.c.b16 %v2893, %v2892
    %v3642 = vpack.c.b16 %v2895, %v2894
    %v3643 = vpack.c.b16 %v2897, %v2896
    %v3644 = vpack.c.b16 %v2899, %v2898
    %v3645 = vpack.c.b16 %v2901, %v2900
    %v3646 = vpack.c.b16 %v2903, %v2902
    %v3647 = vpack.c.b16 %v2905, %v2904
    %v3648 = vpack.c.b16 %v2907, %v2906
    %v3649 = vpack.c.b16 %v2909, %v2908
    %v3650 = vpack.c.b16 %v2911, %v2910
    %v3651 = vpack.c.b16 %v2913, %v2912
    %v3652 = vpack.c.b16 %v2915, %v2914
    %v3653 = vpack.c.b16 %v2917, %v2916
    %v3654 = vpack.c.b16 %v2919, %v2918
    %v3655 = vpack.c.b16 %v2921, %v2920
    %v3656 = vpack.c.b16 %v2923, %v2922
    %v3657 = vpack.c.b16 %v2925, %v2924
    %v3658 = vpack.c.b16 %v2927, %v2926
    %v3659 = vpack.c.b16 %v2929, %v2928
    %v3660 = vpack.c.b16 %v2931, %v2930
    %v3661 = vpack.c.b16 %v2933, %v2932
    %v3662 = vpack.c.b16 %v2935, %v2934
    %v3663 = vpack.c.b16 %v2937, %v2936
    %v3664 = vpack.c.b16 %v2939, %v2938
    %v3665 = vpack.c.b16 %v2941, %v2940
    %v3666 = vpack.c.b16 %v2943, %v2942
    %v3667 = vpack.c.b16 %v2945, %v2944
    %v3668 = vpack.c.b16 %v2947, %v2946
    %v3669 = vpack.c.b16 %v2949, %v2948
    %v3670 = vpack.c.b16 %v2951, %v2950
    %v3671 = vpack.c.b16 %v2953, %v2952
    %v3672 = vpack.c.b16 %v2955, %v2954
    %v3673 = vpack.c.b16 %v2957, %v2956
    %v3674 = vpack.c.b16 %v2959, %v2958
    %v3675 = vpack.c.b16 %v2961, %v2960
    %v3676 = vpack.c.b16 %v2963, %v2962
    %v3677 = vpack.c.b16 %v2965, %v2964
    %v3678 = vpack.c.b16 %v2967, %v2966
    %v3679 = vpack.c.b16 %v2969, %v2968
    %v3680 = vpack.c.b16 %v2971, %v2970
    %v3681 = vpack.c.b16 %v2973, %v2972
    %v3682 = vpack.c.b16 %v2975, %v2974
    %v3683 = vpack.c.b16 %v2977, %v2976
    %v3684 = vpack.c.b16 %v2979, %v2978
    %v3685 = vpack.c.b16 %v2981, %v2980
    %v3686 = vpack.c.b16 %v2983, %v2982
    %v3687 = vpack.c.b16 %v2985, %v2984
    %v3688 = vpack.c.b16 %v2987, %v2986
    %v3689 = vpack.c.b16 %v2989, %v2988
    %v3690 = vpack.c.b16 %v2991, %v2990
    %v3691 = vpack.c.b16 %v2993, %v2992
    %v3692 = vpack.c.b16 %v2995, %v2994
    %v3693 = vpack.c.b16 %v2997, %v2996
    %v3694 = vpack.c.b16 %v2999, %v2998
    %v3695 = vpack.c.b16 %v3001, %v3000
    %v3696 = vpack.c.b16 %v3003, %v3002
    %v3697 = vpack.c.b16 %v3005, %v3004
    %v3698 = vpack.c.b16 %v3007, %v3006
    %v3699 = vpack.c.b16 %v3009, %v3008
    %v3700 = vpack.c.b16 %v3011, %v3010
    %v3701 = vpack.c.b16 %v3013, %v3012
    %v3702 = vpack.c.b16 %v3015, %v3014
    %v3703 = vpack.c.b16 %v3017, %v3016
    %v3704 = vpack.c.b16 %v3019, %v3018
    %v3705 = vpack.c.b16 %v3021, %v3020
    %v3706 = vpack.c.b16 %v3023, %v3022
    %v3707 = vpack.c.b16 %v3025, %v3024
    %v3708 = vpack.c.b16 %v3027, %v3026
    %v3709 = vpack.c.b16 %v3029, %v3028
    %v3710 = vpack.c.b16 %v3031, %v3030
    %v3711 = vpack.c.b16 %v3033, %v3032
    %v3712 = vpack.c.b16 %v3035, %v3034
    %v3713 = vpack.c.b16 %v3037, %v3036
    %v3714 = vpack.c.b16 %v3039, %v3038
    %v3715 = vpack.c.b16 %v3041, %v3040
    %v3716 = vpack.c.b16 %v3043, %v3042
    %v3717 = vpack.c.b16 %v3045, %v3044
    %v3718 = vpack.c.b16 %v3047, %v3046
    %v3719 = vpack.c.b16 %v3049, %v3048
    %v3720 = vpack.c.b16 %v3051, %v3050
    %v3721 = vpack.c.b16 %v3053, %v3052
    %v3722 = vpack.c.b16 %v3055, %v3054
    %v3723 = vpack.c.b16 %v3057, %v3056
    %v3724 = vpack.c.b16 %v3059, %v3058
    %v3725 = vpack.c.b16 %v3061, %v3060
    %v3726 = vpack.c.b16 %v3063, %v3062
    %v3727 = vpack.c.b16 %v3065, %v3064
    %v3728 = vpack.c.b16 %v3067, %v3066
    %v3729 = vpack.c.b16 %v3069, %v3068
    %v3730 = vpack.c.b16 %v3071, %v3070
    %v3731 = vpack.c.b16 %v3073, %v3072
    %v3732 = vpack.c.b16 %v3075, %v3074
    %v3733 = vpack.c.b16 %v3077, %v3076
    %v3734 = vpack.c.b16 %v3079, %v3078
    %v3735 = vpack.c.b16 %v3081, %v3080
    %v3736 = vpack.c.b16 %v3083, %v3082
    %v3737 = vpack.c.b16 %v3085, %v3084
    %v3738 = vpack.c.b16 %v3087, %v3086
    %v3739 = vpack.c.b16 %v3089, %v3088
    %v3740 = vpack.c.b16 %v3091, %v3090
    %v3741 = vpack.c.b16 %v3093, %v3092
    %v3742 = vpack.c.b16 %v3095, %v3094
    %v3743 = vpack.c.b16 %v3097, %v3096
    %v3744 = vpack.c.b16 %v3099, %v3098
    %v3745 = vpack.c.b16 %v3101, %v3100
    %v3746 = vpack.c.b16 %v3103, %v3102
    %v3747 = vpack.c.b16 %v3105, %v3104
    %v3748 = vpack.c.b16 %v3107, %v3106
    %v3749 = vpack.c.b16 %v3109, %v3108
    %v3750 = vpack.c.b16 %v3111, %v3110
    %v3751 = vpack.c.b16 %v3113, %v3112
    %v3752 = vpack.c.b16 %v3115, %v3114
    %v3753 = vpack.c.b16 %v3117, %v3116
    %v3754 = vpack.c.b16 %v3119, %v3118
    %v3755 = vpack.c.b16 %v3121, %v3120
    %v3756 = vpack.c.b16 %v3123, %v3122
    %v3757 = vpack.c.b16 %v3125, %v3124
    %v3758 = vpack.c.b16 %v3127, %v3126
    %v3759 = vpack.c.b16 %v3129, %v3128
    %v3760 = vpack.c.b16 %v3131, %v3130
    %v3761 = vpack.c.b16 %v3133, %v3132
    %v3762 = vpack.c.b16 %v3135, %v3134
    %v3763 = vpack.c.b16 %v3137, %v3136
    %v3764 = vpack.c.b16 %v3139, %v3138
    %v3765 = vpack.c.b16 %v3141, %v3140
    %v3766 = vpack.c.b16 %v3143, %v3142
    %v3767 = vpack.c.b16 %v3145, %v3144
    %v3768 = vpack.c.b16 %v3147, %v3146
    %v3769 = vpack.c.b16 %v3149, %v3148
    %v3770 = vpack.c.b16 %v3151, %v3150
    %v3771 = vpack.c.b16 %v3153, %v3152
    %v3772 = vpack.c.b16 %v3155, %v3154
    %v3773 = vpack.c.b16 %v3157, %v3156
    %v3774 = vpack.c.b16 %v3159, %v3158
    %v3775 = vpack.c.b16 %v3161, %v3160
    %v3776 = vpack.c.b16 %v3163, %v3162
    %v3777 = vpack.c.b16 %v3165, %v3164
    %v3778 = vpack.c.b16 %v3167, %v3166
    %v3779 = vpack.c.b16 %v3169, %v3168
    %v3780 = vpack.c.b16 %v3171, %v3170
    %v3781 = vpack.c.b16 %v3173, %v3172
    %v3782 = vpack.c.b16 %v3175, %v3174
    %v3783 = vpack.c.b16 %v3177, %v3176
    %v3784 = vpack.c.b16 %v3179, %v3178
    %v3785 = vpack.c.b16 %v3181, %v3180
    %v3786 = vpack.c.b16 %v3183, %v3182
    %v3787 = vpack.c.b16 %v3185, %v3184
    %v3788 = vpack.c.b16 %v3187, %v3186
    %v3789 = vpack.c.b16 %v3189, %v3188
    %v3790 = vpack.c.b16 %v3191, %v3190
    %v3791 = vpack.c.b16 %v3193, %v3192
    %v3792 = vpack.c.b16 %v3195, %v3194
    %v3793 = vpack.c.b16 %v3197, %v3196
    %v3794 = vpack.c.b16 %v3199, %v3198
    %v3795 = vpack.c.b16 %v3201, %v3200
    %v3796 = vpack.c.b16 %v3203, %v3202
    %v3797 = vpack.c.b16 %v3205, %v3204
    %v3798 = vpack.c.b16 %v3207, %v3206
    %v3799 = vpack.c.b16 %v3209, %v3208
    %v3800 = vpack.c.b16 %v3211, %v3210
    %v3801 = vpack.c.b16 %v3213, %v3212
    %v3802 = vpack.c.b16 %v3215, %v3214
    %v3803 = vpack.c.b16 %v3217, %v3216
    %v3804 = vpack.c.b16 %v3219, %v3218
    %v3805 = vpack.c.b16 %v3221, %v3220
    %v3806 = vpack.c.b16 %v3223, %v3222
    %v3807 = vpack.c.b16 %v3225, %v3224
    %v3808 = vpack.c.b16 %v3227, %v3226
    %v3809 = vpack.c.b16 %v3229, %v3228
    %v3810 = vpack.c.b16 %v3231, %v3230
    %v3811 = vpack.c.b16 %v3233, %v3232
    %v3812 = vpack.c.b16 %v3235, %v3234
    %v3813 = vpack.c.b16 %v3237, %v3236
    %v3814 = vpack.c.b16 %v3239, %v3238
    %v3815 = vpack.c.b16 %v3241, %v3240
    %v3816 = vpack.c.b16 %v3243, %v3242
    %v3817 = vpack.c.b16 %v3245, %v3244
    %v3818 = vpack.c.b16 %v3247, %v3246
    %v3819 = vpack.c.b16 %v3249, %v3248
    %v3820 = vpack.c.b16 %v3251, %v3250
    %v3821 = vpack.c.b16 %v3253, %v3252
    %v3822 = vpack.c.b16 %v3255, %v3254
    %v3823 = vpack.c.b16 %v3257, %v3256
    %v3824 = vpack.c.b16 %v3259, %v3258
    %v3825 = vpack.c.b16 %v3261, %v3260
    %v3826 = vpack.c.b16 %v3263, %v3262
    %v3827 = vpack.c.b16 %v3265, %v3264
    %v3828 = vpack.c.b16 %v3267, %v3266
    %v3829 = vpack.c.b16 %v3269, %v3268
    %v3830 = vpack.c.b16 %v3271, %v3270
    %v3831 = vpack.c.b16 %v3273, %v3272
    %v3832 = vpack.c.b16 %v3275, %v3274
    %v3833 = vpack.c.b16 %v3277, %v3276
    %v3834 = vpack.c.b16 %v3279, %v3278
    %v3835 = vpack.c.b16 %v3281, %v3280
    %v3836 = vpack.c.b16 %v3283, %v3282
    %v3837 = vpack.c.b16 %v3285, %v3284
    %v3838 = vpack.c.b16 %v3287, %v3286
    %v3839 = vpack.c.b16 %v3289, %v3288
    %v3840 = vpack.c.b16 %v3291, %v3290
    %v3841 = vpack.c.b16 %v3293, %v3292
    %v3842 = vpack.c.b16 %v3295, %v3294
    %v3843 = vpack.c.b16 %v3297, %v3296
    %v3844 = vpack.c.b16 %v3299, %v3298
    %v3845 = vpack.c.b16 %v3301, %v3300
    %v3846 = vpack.c.b16 %v3303, %v3302
    %v3847 = vpack.c.b16 %v3305, %v3304
    %v3848 = vpack.c.b16 %v3307, %v3306
    %v3849 = vpack.c.b16 %v3309, %v3308
    %v3850 = vpack.c.b16 %v3311, %v3310
    %v3851 = vpack.c.b16 %v3313, %v3312
    %v3852 = vpack.c.b16 %v3315, %v3314
    %v3853 = vpack.c.b16 %v3317, %v3316
    %v3854 = vpack.c.b16 %v3319, %v3318
    %v3855 = vpack.c.b16 %v3321, %v3320
    %v3856 = vpack.c.b16 %v3323, %v3322
    %v3857 = vpack.c.b16 %v3325, %v3324
    %v3858 = vpack.c.b16 %v3327, %v3326
    %v3859 = vpack.c.b16 %v3329, %v3328
    %v3860 = vpack.c.b16 %v3331, %v3330
    %v3861 = vpack.c.b16 %v3333, %v3332
    %v3862 = vpack.c.b16 %v3335, %v3334
    %v3863 = vpack.c.b16 %v3337, %v3336
    %v3864 = vpack.c.b16 %v3339, %v3338
    %v3865 = vpack.c.b16 %v3341, %v3340
    %v3866 = vpack.c.b16 %v3343, %v3342
    %v3867 = vpack.c.b16 %v3345, %v3344
    %v3868 = vpack.c.b16 %v3347, %v3346
    %v3869 = vpack.c.b16 %v3349, %v3348
    %v3870 = vpack.c.b16 %v3351, %v3350
    %v3871 = vpack.c.b16 %v3353, %v3352
    %v3872 = vpack.c.b16 %v3355, %v3354
    %v3873 = vpack.c.b16 %v3357, %v3356
    %v3874 = vpack.c.b16 %v3359, %v3358
    %v3875 = vpack.c.b16 %v3361, %v3360
    %v3876 = vpack.c.b16 %v3363, %v3362
    %v3877 = vpack.c.b16 %v3365, %v3364
    %4390 = vmatprep.subr.bf16.mxu0 0
    %4391 = vmatpush1.bf16.msra.mxu0 %v3366
    %4392 = vmatprep.subr.bf16.mxu0 0
    %4393 = vmatpush1.bf16.msra.mxu0 %v3367
    %4394 = vmatprep.subr.bf16.mxu0 0
    %4395 = vmatpush1.bf16.msra.mxu0 %v3368
    %4396 = vmatprep.subr.bf16.mxu0 0
    %4397 = vmatpush1.bf16.msra.mxu0 %v3369
    %4398 = vmatprep.subr.bf16.mxu0 0
    %4399 = vmatpush1.bf16.msra.mxu0 %v3370
    %4400 = vmatprep.subr.bf16.mxu0 0
    %4401 = vmatpush1.bf16.msra.mxu0 %v3371
    %4402 = vmatprep.subr.bf16.mxu0 0
    %4403 = vmatpush1.bf16.msra.mxu0 %v3372
    %4404 = vmatprep.subr.bf16.mxu0 0
    %4405 = vmatpush1.bf16.msra.mxu0 %v3373
    %4406 = vmatprep.subr.bf16.mxu0 0
    %4407 = vmatpush1.bf16.msra.mxu0 %v3374
    %4408 = vmatprep.subr.bf16.mxu0 0
    %4409 = vmatpush1.bf16.msra.mxu0 %v3375
    %4410 = vmatprep.subr.bf16.mxu0 0
    %4411 = vmatpush1.bf16.msra.mxu0 %v3376
    %4412 = vmatprep.subr.bf16.mxu0 0
    %4413 = vmatpush1.bf16.msra.mxu0 %v3377
    %4414 = vmatprep.subr.bf16.mxu0 0
    %4415 = vmatpush1.bf16.msra.mxu0 %v3378
    %4416 = vmatprep.subr.bf16.mxu0 0
    %4417 = vmatpush1.bf16.msra.mxu0 %v3379
    %4418 = vmatprep.subr.bf16.mxu0 0
    %4419 = vmatpush1.bf16.msra.mxu0 %v3380
    %4420 = vmatprep.subr.bf16.mxu0 0
    %4421 = vmatpush1.bf16.msra.mxu0 %v3381
    %4422 = vmatprep.mubr.bf16.mxu0 %v103
    %4423 = vmatmul.mubr.bf16.gmra.mrb[0].mxu0 %v102
    %v4424 = vpop.f32.mrb[0].mxu0
    %v4425 = vadd.f32 0.0, %v4424
    %v4426 = vpop.f32.mrb[0].mxu0
    %v4427 = vpop.f32.mrb[0].mxu0
    %v4428 = vadd.f32 0.0, %v4427
    %v4429 = vpop.f32.mrb[0].mxu0
    %4430 = vdwg.mxu0
    %4431 = vmatprep.subr.bf16.mxu0 0
    %4432 = vmatpush1.bf16.msra.mxu0 %v3382
    %4433 = vmatprep.subr.bf16.mxu0 0
    %4434 = vmatpush1.bf16.msra.mxu0 %v3383
    %4435 = vmatprep.subr.bf16.mxu0 0
    %4436 = vmatpush1.bf16.msra.mxu0 %v3384
    %4437 = vmatprep.subr.bf16.mxu0 0
    %4438 = vmatpush1.bf16.msra.mxu0 %v3385
    %4439 = vmatprep.subr.bf16.mxu0 0
    %4440 = vmatpush1.bf16.msra.mxu0 %v3386
    %4441 = vmatprep.subr.bf16.mxu0 0
    %4442 = vmatpush1.bf16.msra.mxu0 %v3387
    %4443 = vmatprep.subr.bf16.mxu0 0
    %4444 = vmatpush1.bf16.msra.mxu0 %v3388
    %4445 = vmatprep.subr.bf16.mxu0 0
    %4446 = vmatpush1.bf16.msra.mxu0 %v3389
    %4447 = vmatprep.subr.bf16.mxu0 0
    %4448 = vmatpush1.bf16.msra.mxu0 %v3390
    %4449 = vmatprep.subr.bf16.mxu0 0
    %4450 = vmatpush1.bf16.msra.mxu0 %v3391
    %4451 = vmatprep.subr.bf16.mxu0 0
    %4452 = vmatpush1.bf16.msra.mxu0 %v3392
    %4453 = vmatprep.subr.bf16.mxu0 0
    %4454 = vmatpush1.bf16.msra.mxu0 %v3393
    %4455 = vmatprep.subr.bf16.mxu0 0
    %4456 = vmatpush1.bf16.msra.mxu0 %v3394
    %4457 = vmatprep.subr.bf16.mxu0 0
    %4458 = vmatpush1.bf16.msra.mxu0 %v3395
    %4459 = vmatprep.subr.bf16.mxu0 0
    %4460 = vmatpush1.bf16.msra.mxu0 %v3396
    %4461 = vmatprep.subr.bf16.mxu0 0
    %4462 = vmatpush1.bf16.msra.mxu0 %v3397
    %4463 = vmatprep.mubr.bf16.mxu0 %v105
    %4464 = vmatmul.mubr.bf16.gmra.mrb[0].mxu0 %v104
    %v4465 = vpop.f32.mrb[0].mxu0
    %v4466 = vadd.f32 %v4425, %v4465
    %v4467 = vpop.f32.mrb[0].mxu0
    %v4468 = vpop.f32.mrb[0].mxu0
    %v4469 = vadd.f32 %v4428, %v4468
    %v4470 = vpop.f32.mrb[0].mxu0
    %4471 = vdwg.mxu0
    %4472 = vmatprep.subr.bf16.mxu0 0
    %4473 = vmatpush1.bf16.msra.mxu0 %v3398
    %4474 = vmatprep.subr.bf16.mxu0 0
    %4475 = vmatpush1.bf16.msra.mxu0 %v3399
    %4476 = vmatprep.subr.bf16.mxu0 0
    %4477 = vmatpush1.bf16.msra.mxu0 %v3400
    %4478 = vmatprep.subr.bf16.mxu0 0
    %4479 = vmatpush1.bf16.msra.mxu0 %v3401
    %4480 = vmatprep.subr.bf16.mxu0 0
    %4481 = vmatpush1.bf16.msra.mxu0 %v3402
    %4482 = vmatprep.subr.bf16.mxu0 0
    %4483 = vmatpush1.bf16.msra.mxu0 %v3403
    %4484 = vmatprep.subr.bf16.mxu0 0
    %4485 = vmatpush1.bf16.msra.mxu0 %v3404
    %4486 = vmatprep.subr.bf16.mxu0 0
    %4487 = vmatpush1.bf16.msra.mxu0 %v3405
    %4488 = vmatprep.subr.bf16.mxu0 0
    %4489 = vmatpush1.bf16.msra.mxu0 %v3406
    %4490 = vmatprep.subr.bf16.mxu0 0
    %4491 = vmatpush1.bf16.msra.mxu0 %v3407
    %4492 = vmatprep.subr.bf16.mxu0 0
    %4493 = vmatpush1.bf16.msra.mxu0 %v3408
    %4494 = vmatprep.subr.bf16.mxu0 0
    %4495 = vmatpush1.bf16.msra.mxu0 %v3409
    %4496 = vmatprep.subr.bf16.mxu0 0
    %4497 = vmatpush1.bf16.msra.mxu0 %v3410
    %4498 = vmatprep.subr.bf16.mxu0 0
    %4499 = vmatpush1.bf16.msra.mxu0 %v3411
    %4500 = vmatprep.subr.bf16.mxu0 0
    %4501 = vmatpush1.bf16.msra.mxu0 %v3412
    %4502 = vmatprep.subr.bf16.mxu0 0
    %4503 = vmatpush1.bf16.msra.mxu0 %v3413
    %4504 = vmatprep.mubr.bf16.mxu0 %v107
    %4505 = vmatmul.mubr.bf16.gmra.mrb[0].mxu0 %v106
    %v4506 = vpop.f32.mrb[0].mxu0
    %v4507 = vadd.f32 %v4466, %v4506
    %v4508 = vpop.f32.mrb[0].mxu0
    %v4509 = vpop.f32.mrb[0].mxu0
    %v4510 = vadd.f32 %v4469, %v4509
    %v4511 = vpop.f32.mrb[0].mxu0
    %4512 = vdwg.mxu0
    %4513 = vmatprep.subr.bf16.mxu0 0
    %4514 = vmatpush1.bf16.msra.mxu0 %v3414
    %4515 = vmatprep.subr.bf16.mxu0 0
    %4516 = vmatpush1.bf16.msra.mxu0 %v3415
    %4517 = vmatprep.subr.bf16.mxu0 0
    %4518 = vmatpush1.bf16.msra.mxu0 %v3416
    %4519 = vmatprep.subr.bf16.mxu0 0
    %4520 = vmatpush1.bf16.msra.mxu0 %v3417
    %4521 = vmatprep.subr.bf16.mxu0 0
    %4522 = vmatpush1.bf16.msra.mxu0 %v3418
    %4523 = vmatprep.subr.bf16.mxu0 0
    %4524 = vmatpush1.bf16.msra.mxu0 %v3419
    %4525 = vmatprep.subr.bf16.mxu0 0
    %4526 = vmatpush1.bf16.msra.mxu0 %v3420
    %4527 = vmatprep.subr.bf16.mxu0 0
    %4528 = vmatpush1.bf16.msra.mxu0 %v3421
    %4529 = vmatprep.subr.bf16.mxu0 0
    %4530 = vmatpush1.bf16.msra.mxu0 %v3422
    %4531 = vmatprep.subr.bf16.mxu0 0
    %4532 = vmatpush1.bf16.msra.mxu0 %v3423
    %4533 = vmatprep.subr.bf16.mxu0 0
    %4534 = vmatpush1.bf16.msra.mxu0 %v3424
    %4535 = vmatprep.subr.bf16.mxu0 0
    %4536 = vmatpush1.bf16.msra.mxu0 %v3425
    %4537 = vmatprep.subr.bf16.mxu0 0
    %4538 = vmatpush1.bf16.msra.mxu0 %v3426
    %4539 = vmatprep.subr.bf16.mxu0 0
    %4540 = vmatpush1.bf16.msra.mxu0 %v3427
    %4541 = vmatprep.subr.bf16.mxu0 0
    %4542 = vmatpush1.bf16.msra.mxu0 %v3428
    %4543 = vmatprep.subr.bf16.mxu0 0
    %4544 = vmatpush1.bf16.msra.mxu0 %v3429
    %4545 = vmatprep.mubr.bf16.mxu0 %v109
    %4546 = vmatmul.mubr.bf16.gmra.mrb[0].mxu0 %v108
    %v4547 = vpop.f32.mrb[0].mxu0
    %v4548 = vadd.f32 %v4507, %v4547
    %v4549 = vpop.f32.mrb[0].mxu0
    %v4550 = vpop.f32.mrb[0].mxu0
    %v4551 = vadd.f32 %v4510, %v4550
    %v4552 = vpop.f32.mrb[0].mxu0
    %4553 = vdwg.mxu0
    %4554 = vmatprep.subr.bf16.mxu0 0
    %4555 = vmatpush1.bf16.msra.mxu0 %v3430
    %4556 = vmatprep.subr.bf16.mxu0 0
    %4557 = vmatpush1.bf16.msra.mxu0 %v3431
    %4558 = vmatprep.subr.bf16.mxu0 0
    %4559 = vmatpush1.bf16.msra.mxu0 %v3432
    %4560 = vmatprep.subr.bf16.mxu0 0
    %4561 = vmatpush1.bf16.msra.mxu0 %v3433
    %4562 = vmatprep.subr.bf16.mxu0 0
    %4563 = vmatpush1.bf16.msra.mxu0 %v3434
    %4564 = vmatprep.subr.bf16.mxu0 0
    %4565 = vmatpush1.bf16.msra.mxu0 %v3435
    %4566 = vmatprep.subr.bf16.mxu0 0
    %4567 = vmatpush1.bf16.msra.mxu0 %v3436
    %4568 = vmatprep.subr.bf16.mxu0 0
    %4569 = vmatpush1.bf16.msra.mxu0 %v3437
    %4570 = vmatprep.subr.bf16.mxu0 0
    %4571 = vmatpush1.bf16.msra.mxu0 %v3438
    %4572 = vmatprep.subr.bf16.mxu0 0
    %4573 = vmatpush1.bf16.msra.mxu0 %v3439
    %4574 = vmatprep.subr.bf16.mxu0 0
    %4575 = vmatpush1.bf16.msra.mxu0 %v3440
    %4576 = vmatprep.subr.bf16.mxu0 0
    %4577 = vmatpush1.bf16.msra.mxu0 %v3441
    %4578 = vmatprep.subr.bf16.mxu0 0
    %4579 = vmatpush1.bf16.msra.mxu0 %v3442
    %4580 = vmatprep.subr.bf16.mxu0 0
    %4581 = vmatpush1.bf16.msra.mxu0 %v3443
    %4582 = vmatprep.subr.bf16.mxu0 0
    %4583 = vmatpush1.bf16.msra.mxu0 %v3444
    %4584 = vmatprep.subr.bf16.mxu0 0
    %4585 = vmatpush1.bf16.msra.mxu0 %v3445
    %4586 = vmatprep.mubr.bf16.mxu0 %v111
    %4587 = vmatmul.mubr.bf16.gmra.mrb[0].mxu0 %v110
    %v4588 = vpop.f32.mrb[0].mxu0
    %v4589 = vadd.f32 %v4548, %v4588
    %v4590 = vpop.f32.mrb[0].mxu0
    %v4591 = vpop.f32.mrb[0].mxu0
    %v4592 = vadd.f32 %v4551, %v4591
    %v4593 = vpop.f32.mrb[0].mxu0
    %4594 = vdwg.mxu0
    %4595 = vmatprep.subr.bf16.mxu0 0
    %4596 = vmatpush1.bf16.msra.mxu0 %v3446
    %4597 = vmatprep.subr.bf16.mxu0 0
    %4598 = vmatpush1.bf16.msra.mxu0 %v3447
    %4599 = vmatprep.subr.bf16.mxu0 0
    %4600 = vmatpush1.bf16.msra.mxu0 %v3448
    %4601 = vmatprep.subr.bf16.mxu0 0
    %4602 = vmatpush1.bf16.msra.mxu0 %v3449
    %4603 = vmatprep.subr.bf16.mxu0 0
    %4604 = vmatpush1.bf16.msra.mxu0 %v3450
    %4605 = vmatprep.subr.bf16.mxu0 0
    %4606 = vmatpush1.bf16.msra.mxu0 %v3451
    %4607 = vmatprep.subr.bf16.mxu0 0
    %4608 = vmatpush1.bf16.msra.mxu0 %v3452
    %4609 = vmatprep.subr.bf16.mxu0 0
    %4610 = vmatpush1.bf16.msra.mxu0 %v3453
    %4611 = vmatprep.subr.bf16.mxu0 0
    %4612 = vmatpush1.bf16.msra.mxu0 %v3454
    %4613 = vmatprep.subr.bf16.mxu0 0
    %4614 = vmatpush1.bf16.msra.mxu0 %v3455
    %4615 = vmatprep.subr.bf16.mxu0 0
    %4616 = vmatpush1.bf16.msra.mxu0 %v3456
    %4617 = vmatprep.subr.bf16.mxu0 0
    %4618 = vmatpush1.bf16.msra.mxu0 %v3457
    %4619 = vmatprep.subr.bf16.mxu0 0
    %4620 = vmatpush1.bf16.msra.mxu0 %v3458
    %4621 = vmatprep.subr.bf16.mxu0 0
    %4622 = vmatpush1.bf16.msra.mxu0 %v3459
    %4623 = vmatprep.subr.bf16.mxu0 0
    %4624 = vmatpush1.bf16.msra.mxu0 %v3460
    %4625 = vmatprep.subr.bf16.mxu0 0
    %4626 = vmatpush1.bf16.msra.mxu0 %v3461
    %4627 = vmatprep.mubr.bf16.mxu0 %v113
    %4628 = vmatmul.mubr.bf16.gmra.mrb[0].mxu0 %v112
    %v4629 = vpop.f32.mrb[0].mxu0
    %v4630 = vadd.f32 %v4589, %v4629
    %v4631 = vpop.f32.mrb[0].mxu0
    %v4632 = vpop.f32.mrb[0].mxu0
    %v4633 = vadd.f32 %v4592, %v4632
    %v4634 = vpop.f32.mrb[0].mxu0
    %4635 = vdwg.mxu0
    %4636 = vmatprep.subr.bf16.mxu0 0
    %4637 = vmatpush1.bf16.msra.mxu0 %v3462
    %4638 = vmatprep.subr.bf16.mxu0 0
    %4639 = vmatpush1.bf16.msra.mxu0 %v3463
    %4640 = vmatprep.subr.bf16.mxu0 0
    %4641 = vmatpush1.bf16.msra.mxu0 %v3464
    %4642 = vmatprep.subr.bf16.mxu0 0
    %4643 = vmatpush1.bf16.msra.mxu0 %v3465
    %4644 = vmatprep.subr.bf16.mxu0 0
    %4645 = vmatpush1.bf16.msra.mxu0 %v3466
    %4646 = vmatprep.subr.bf16.mxu0 0
    %4647 = vmatpush1.bf16.msra.mxu0 %v3467
    %4648 = vmatprep.subr.bf16.mxu0 0
    %4649 = vmatpush1.bf16.msra.mxu0 %v3468
    %4650 = vmatprep.subr.bf16.mxu0 0
    %4651 = vmatpush1.bf16.msra.mxu0 %v3469
    %4652 = vmatprep.subr.bf16.mxu0 0
    %4653 = vmatpush1.bf16.msra.mxu0 %v3470
    %4654 = vmatprep.subr.bf16.mxu0 0
    %4655 = vmatpush1.bf16.msra.mxu0 %v3471
    %4656 = vmatprep.subr.bf16.mxu0 0
    %4657 = vmatpush1.bf16.msra.mxu0 %v3472
    %4658 = vmatprep.subr.bf16.mxu0 0
    %4659 = vmatpush1.bf16.msra.mxu0 %v3473
    %4660 = vmatprep.subr.bf16.mxu0 0
    %4661 = vmatpush1.bf16.msra.mxu0 %v3474
    %4662 = vmatprep.subr.bf16.mxu0 0
    %4663 = vmatpush1.bf16.msra.mxu0 %v3475
    %4664 = vmatprep.subr.bf16.mxu0 0
    %4665 = vmatpush1.bf16.msra.mxu0 %v3476
    %4666 = vmatprep.subr.bf16.mxu0 0
    %4667 = vmatpush1.bf16.msra.mxu0 %v3477
    %4668 = vmatprep.mubr.bf16.mxu0 %v115
    %4669 = vmatmul.mubr.bf16.gmra.mrb[0].mxu0 %v114
    %v4670 = vpop.f32.mrb[0].mxu0
    %v4671 = vadd.f32 %v4630, %v4670
    %v4672 = vpop.f32.mrb[0].mxu0
    %v4673 = vpop.f32.mrb[0].mxu0
    %v4674 = vadd.f32 %v4633, %v4673
    %v4675 = vpop.f32.mrb[0].mxu0
    %4676 = vdwg.mxu0
    %4677 = vmatprep.subr.bf16.mxu0 0
    %4678 = vmatpush1.bf16.msra.mxu0 %v3478
    %4679 = vmatprep.subr.bf16.mxu0 0
    %4680 = vmatpush1.bf16.msra.mxu0 %v3479
    %4681 = vmatprep.subr.bf16.mxu0 0
    %4682 = vmatpush1.bf16.msra.mxu0 %v3480
    %4683 = vmatprep.subr.bf16.mxu0 0
    %4684 = vmatpush1.bf16.msra.mxu0 %v3481
    %4685 = vmatprep.subr.bf16.mxu0 0
    %4686 = vmatpush1.bf16.msra.mxu0 %v3482
    %4687 = vmatprep.subr.bf16.mxu0 0
    %4688 = vmatpush1.bf16.msra.mxu0 %v3483
    %4689 = vmatprep.subr.bf16.mxu0 0
    %4690 = vmatpush1.bf16.msra.mxu0 %v3484
    %4691 = vmatprep.subr.bf16.mxu0 0
    %4692 = vmatpush1.bf16.msra.mxu0 %v3485
    %4693 = vmatprep.subr.bf16.mxu0 0
    %4694 = vmatpush1.bf16.msra.mxu0 %v3486
    %4695 = vmatprep.subr.bf16.mxu0 0
    %4696 = vmatpush1.bf16.msra.mxu0 %v3487
    %4697 = vmatprep.subr.bf16.mxu0 0
    %4698 = vmatpush1.bf16.msra.mxu0 %v3488
    %4699 = vmatprep.subr.bf16.mxu0 0
    %4700 = vmatpush1.bf16.msra.mxu0 %v3489
    %4701 = vmatprep.subr.bf16.mxu0 0
    %4702 = vmatpush1.bf16.msra.mxu0 %v3490
    %4703 = vmatprep.subr.bf16.mxu0 0
    %4704 = vmatpush1.bf16.msra.mxu0 %v3491
    %4705 = vmatprep.subr.bf16.mxu0 0
    %4706 = vmatpush1.bf16.msra.mxu0 %v3492
    %4707 = vmatprep.subr.bf16.mxu0 0
    %4708 = vmatpush1.bf16.msra.mxu0 %v3493
    %4709 = vmatprep.mubr.bf16.mxu0 %v117
    %4710 = vmatmul.mubr.bf16.gmra.mrb[0].mxu0 %v116
    %v4711 = vpop.f32.mrb[0].mxu0
    %v4712 = vadd.f32 %v4671, %v4711
    %v4713 = vpop.f32.mrb[0].mxu0
    %v4714 = vpop.f32.mrb[0].mxu0
    %v4715 = vadd.f32 %v4674, %v4714
    %v4716 = vpop.f32.mrb[0].mxu0
    %4717 = vdwg.mxu0
    %4718 = vmatprep.subr.bf16.mxu0 0
    %4719 = vmatpush1.bf16.msra.mxu0 %v3494
    %4720 = vmatprep.subr.bf16.mxu0 0
    %4721 = vmatpush1.bf16.msra.mxu0 %v3495
    %4722 = vmatprep.subr.bf16.mxu0 0
    %4723 = vmatpush1.bf16.msra.mxu0 %v3496
    %4724 = vmatprep.subr.bf16.mxu0 0
    %4725 = vmatpush1.bf16.msra.mxu0 %v3497
    %4726 = vmatprep.subr.bf16.mxu0 0
    %4727 = vmatpush1.bf16.msra.mxu0 %v3498
    %4728 = vmatprep.subr.bf16.mxu0 0
    %4729 = vmatpush1.bf16.msra.mxu0 %v3499
    %4730 = vmatprep.subr.bf16.mxu0 0
    %4731 = vmatpush1.bf16.msra.mxu0 %v3500
    %4732 = vmatprep.subr.bf16.mxu0 0
    %4733 = vmatpush1.bf16.msra.mxu0 %v3501
    %4734 = vmatprep.subr.bf16.mxu0 0
    %4735 = vmatpush1.bf16.msra.mxu0 %v3502
    %4736 = vmatprep.subr.bf16.mxu0 0
    %4737 = vmatpush1.bf16.msra.mxu0 %v3503
    %4738 = vmatprep.subr.bf16.mxu0 0
    %4739 = vmatpush1.bf16.msra.mxu0 %v3504
    %4740 = vmatprep.subr.bf16.mxu0 0
    %4741 = vmatpush1.bf16.msra.mxu0 %v3505
    %4742 = vmatprep.subr.bf16.mxu0 0
    %4743 = vmatpush1.bf16.msra.mxu0 %v3506
    %4744 = vmatprep.subr.bf16.mxu0 0
    %4745 = vmatpush1.bf16.msra.mxu0 %v3507
    %4746 = vmatprep.subr.bf16.mxu0 0
    %4747 = vmatpush1.bf16.msra.mxu0 %v3508
    %4748 = vmatprep.subr.bf16.mxu0 0
    %4749 = vmatpush1.bf16.msra.mxu0 %v3509
    %4750 = vmatprep.mubr.bf16.mxu0 %v119
    %4751 = vmatmul.mubr.bf16.gmra.mrb[0].mxu0 %v118
    %v4752 = vpop.f32.mrb[0].mxu0
    %v4753 = vadd.f32 %v4712, %v4752
    %v4754 = vpop.f32.mrb[0].mxu0
    %v4755 = vpop.f32.mrb[0].mxu0
    %v4756 = vadd.f32 %v4715, %v4755
    %v4757 = vpop.f32.mrb[0].mxu0
    %4758 = vdwg.mxu0
    %4759 = vmatprep.subr.bf16.mxu0 0
    %4760 = vmatpush1.bf16.msra.mxu0 %v3510
    %4761 = vmatprep.subr.bf16.mxu0 0
    %4762 = vmatpush1.bf16.msra.mxu0 %v3511
    %4763 = vmatprep.subr.bf16.mxu0 0
    %4764 = vmatpush1.bf16.msra.mxu0 %v3512
    %4765 = vmatprep.subr.bf16.mxu0 0
    %4766 = vmatpush1.bf16.msra.mxu0 %v3513
    %4767 = vmatprep.subr.bf16.mxu0 0
    %4768 = vmatpush1.bf16.msra.mxu0 %v3514
    %4769 = vmatprep.subr.bf16.mxu0 0
    %4770 = vmatpush1.bf16.msra.mxu0 %v3515
    %4771 = vmatprep.subr.bf16.mxu0 0
    %4772 = vmatpush1.bf16.msra.mxu0 %v3516
    %4773 = vmatprep.subr.bf16.mxu0 0
    %4774 = vmatpush1.bf16.msra.mxu0 %v3517
    %4775 = vmatprep.subr.bf16.mxu0 0
    %4776 = vmatpush1.bf16.msra.mxu0 %v3518
    %4777 = vmatprep.subr.bf16.mxu0 0
    %4778 = vmatpush1.bf16.msra.mxu0 %v3519
    %4779 = vmatprep.subr.bf16.mxu0 0
    %4780 = vmatpush1.bf16.msra.mxu0 %v3520
    %4781 = vmatprep.subr.bf16.mxu0 0
    %4782 = vmatpush1.bf16.msra.mxu0 %v3521
    %4783 = vmatprep.subr.bf16.mxu0 0
    %4784 = vmatpush1.bf16.msra.mxu0 %v3522
    %4785 = vmatprep.subr.bf16.mxu0 0
    %4786 = vmatpush1.bf16.msra.mxu0 %v3523
    %4787 = vmatprep.subr.bf16.mxu0 0
    %4788 = vmatpush1.bf16.msra.mxu0 %v3524
    %4789 = vmatprep.subr.bf16.mxu0 0
    %4790 = vmatpush1.bf16.msra.mxu0 %v3525
    %4791 = vmatprep.mubr.bf16.mxu0 %v121
    %4792 = vmatmul.mubr.bf16.gmra.mrb[0].mxu0 %v120
    %v4793 = vpop.f32.mrb[0].mxu0
    %v4794 = vadd.f32 %v4753, %v4793
    %v4795 = vpop.f32.mrb[0].mxu0
    %v4796 = vpop.f32.mrb[0].mxu0
    %v4797 = vadd.f32 %v4756, %v4796
    %v4798 = vpop.f32.mrb[0].mxu0
    %4799 = vdwg.mxu0
    %4800 = vmatprep.subr.bf16.mxu0 0
    %4801 = vmatpush1.bf16.msra.mxu0 %v3526
    %4802 = vmatprep.subr.bf16.mxu0 0
    %4803 = vmatpush1.bf16.msra.mxu0 %v3527
    %4804 = vmatprep.subr.bf16.mxu0 0
    %4805 = vmatpush1.bf16.msra.mxu0 %v3528
    %4806 = vmatprep.subr.bf16.mxu0 0
    %4807 = vmatpush1.bf16.msra.mxu0 %v3529
    %4808 = vmatprep.subr.bf16.mxu0 0
    %4809 = vmatpush1.bf16.msra.mxu0 %v3530
    %4810 = vmatprep.subr.bf16.mxu0 0
    %4811 = vmatpush1.bf16.msra.mxu0 %v3531
    %4812 = vmatprep.subr.bf16.mxu0 0
    %4813 = vmatpush1.bf16.msra.mxu0 %v3532
    %4814 = vmatprep.subr.bf16.mxu0 0
    %4815 = vmatpush1.bf16.msra.mxu0 %v3533
    %4816 = vmatprep.subr.bf16.mxu0 0
    %4817 = vmatpush1.bf16.msra.mxu0 %v3534
    %4818 = vmatprep.subr.bf16.mxu0 0
    %4819 = vmatpush1.bf16.msra.mxu0 %v3535
    %4820 = vmatprep.subr.bf16.mxu0 0
    %4821 = vmatpush1.bf16.msra.mxu0 %v3536
    %4822 = vmatprep.subr.bf16.mxu0 0
    %4823 = vmatpush1.bf16.msra.mxu0 %v3537
    %4824 = vmatprep.subr.bf16.mxu0 0
    %4825 = vmatpush1.bf16.msra.mxu0 %v3538
    %4826 = vmatprep.subr.bf16.mxu0 0
    %4827 = vmatpush1.bf16.msra.mxu0 %v3539
    %4828 = vmatprep.subr.bf16.mxu0 0
    %4829 = vmatpush1.bf16.msra.mxu0 %v3540
    %4830 = vmatprep.subr.bf16.mxu0 0
    %4831 = vmatpush1.bf16.msra.mxu0 %v3541
    %4832 = vmatprep.mubr.bf16.mxu0 %v123
    %4833 = vmatmul.mubr.bf16.gmra.mrb[0].mxu0 %v122
    %v4834 = vpop.f32.mrb[0].mxu0
    %v4835 = vadd.f32 %v4794, %v4834
    %v4836 = vpop.f32.mrb[0].mxu0
    %v4837 = vpop.f32.mrb[0].mxu0
    %v4838 = vadd.f32 %v4797, %v4837
    %v4839 = vpop.f32.mrb[0].mxu0
    %4840 = vdwg.mxu0
    %4841 = vmatprep.subr.bf16.mxu0 0
    %4842 = vmatpush1.bf16.msra.mxu0 %v3542
    %4843 = vmatprep.subr.bf16.mxu0 0
    %4844 = vmatpush1.bf16.msra.mxu0 %v3543
    %4845 = vmatprep.subr.bf16.mxu0 0
    %4846 = vmatpush1.bf16.msra.mxu0 %v3544
    %4847 = vmatprep.subr.bf16.mxu0 0
    %4848 = vmatpush1.bf16.msra.mxu0 %v3545
    %4849 = vmatprep.subr.bf16.mxu0 0
    %4850 = vmatpush1.bf16.msra.mxu0 %v3546
    %4851 = vmatprep.subr.bf16.mxu0 0
    %4852 = vmatpush1.bf16.msra.mxu0 %v3547
    %4853 = vmatprep.subr.bf16.mxu0 0
    %4854 = vmatpush1.bf16.msra.mxu0 %v3548
    %4855 = vmatprep.subr.bf16.mxu0 0
    %4856 = vmatpush1.bf16.msra.mxu0 %v3549
    %4857 = vmatprep.subr.bf16.mxu0 0
    %4858 = vmatpush1.bf16.msra.mxu0 %v3550
    %4859 = vmatprep.subr.bf16.mxu0 0
    %4860 = vmatpush1.bf16.msra.mxu0 %v3551
    %4861 = vmatprep.subr.bf16.mxu0 0
    %4862 = vmatpush1.bf16.msra.mxu0 %v3552
    %4863 = vmatprep.subr.bf16.mxu0 0
    %4864 = vmatpush1.bf16.msra.mxu0 %v3553
    %4865 = vmatprep.subr.bf16.mxu0 0
    %4866 = vmatpush1.bf16.msra.mxu0 %v3554
    %4867 = vmatprep.subr.bf16.mxu0 0
    %4868 = vmatpush1.bf16.msra.mxu0 %v3555
    %4869 = vmatprep.subr.bf16.mxu0 0
    %4870 = vmatpush1.bf16.msra.mxu0 %v3556
    %4871 = vmatprep.subr.bf16.mxu0 0
    %4872 = vmatpush1.bf16.msra.mxu0 %v3557
    %4873 = vmatprep.mubr.bf16.mxu0 %v125
    %4874 = vmatmul.mubr.bf16.gmra.mrb[0].mxu0 %v124
    %v4875 = vpop.f32.mrb[0].mxu0
    %v4876 = vadd.f32 %v4835, %v4875
    %v4877 = vpop.f32.mrb[0].mxu0
    %v4878 = vpop.f32.mrb[0].mxu0
    %v4879 = vadd.f32 %v4838, %v4878
    %v4880 = vpop.f32.mrb[0].mxu0
    %4881 = vdwg.mxu0
    %4882 = vmatprep.subr.bf16.mxu0 0
    %4883 = vmatpush1.bf16.msra.mxu0 %v3558
    %4884 = vmatprep.subr.bf16.mxu0 0
    %4885 = vmatpush1.bf16.msra.mxu0 %v3559
    %4886 = vmatprep.subr.bf16.mxu0 0
    %4887 = vmatpush1.bf16.msra.mxu0 %v3560
    %4888 = vmatprep.subr.bf16.mxu0 0
    %4889 = vmatpush1.bf16.msra.mxu0 %v3561
    %4890 = vmatprep.subr.bf16.mxu0 0
    %4891 = vmatpush1.bf16.msra.mxu0 %v3562
    %4892 = vmatprep.subr.bf16.mxu0 0
    %4893 = vmatpush1.bf16.msra.mxu0 %v3563
    %4894 = vmatprep.subr.bf16.mxu0 0
    %4895 = vmatpush1.bf16.msra.mxu0 %v3564
    %4896 = vmatprep.subr.bf16.mxu0 0
    %4897 = vmatpush1.bf16.msra.mxu0 %v3565
    %4898 = vmatprep.subr.bf16.mxu0 0
    %4899 = vmatpush1.bf16.msra.mxu0 %v3566
    %4900 = vmatprep.subr.bf16.mxu0 0
    %4901 = vmatpush1.bf16.msra.mxu0 %v3567
    %4902 = vmatprep.subr.bf16.mxu0 0
    %4903 = vmatpush1.bf16.msra.mxu0 %v3568
    %4904 = vmatprep.subr.bf16.mxu0 0
    %4905 = vmatpush1.bf16.msra.mxu0 %v3569
    %4906 = vmatprep.subr.bf16.mxu0 0
    %4907 = vmatpush1.bf16.msra.mxu0 %v3570
    %4908 = vmatprep.subr.bf16.mxu0 0
    %4909 = vmatpush1.bf16.msra.mxu0 %v3571
    %4910 = vmatprep.subr.bf16.mxu0 0
    %4911 = vmatpush1.bf16.msra.mxu0 %v3572
    %4912 = vmatprep.subr.bf16.mxu0 0
    %4913 = vmatpush1.bf16.msra.mxu0 %v3573
    %4914 = vmatprep.mubr.bf16.mxu0 %v127
    %4915 = vmatmul.mubr.bf16.gmra.mrb[0].mxu0 %v126
    %v4916 = vpop.f32.mrb[0].mxu0
    %v4917 = vadd.f32 %v4876, %v4916
    %v4918 = vpop.f32.mrb[0].mxu0
    %v4919 = vpop.f32.mrb[0].mxu0
    %v4920 = vadd.f32 %v4879, %v4919
    %v4921 = vpop.f32.mrb[0].mxu0
    %4922 = vdwg.mxu0
    %4923 = vmatprep.subr.bf16.mxu0 0
    %4924 = vmatpush1.bf16.msra.mxu0 %v3574
    %4925 = vmatprep.subr.bf16.mxu0 0
    %4926 = vmatpush1.bf16.msra.mxu0 %v3575
    %4927 = vmatprep.subr.bf16.mxu0 0
    %4928 = vmatpush1.bf16.msra.mxu0 %v3576
    %4929 = vmatprep.subr.bf16.mxu0 0
    %4930 = vmatpush1.bf16.msra.mxu0 %v3577
    %4931 = vmatprep.subr.bf16.mxu0 0
    %4932 = vmatpush1.bf16.msra.mxu0 %v3578
    %4933 = vmatprep.subr.bf16.mxu0 0
    %4934 = vmatpush1.bf16.msra.mxu0 %v3579
    %4935 = vmatprep.subr.bf16.mxu0 0
    %4936 = vmatpush1.bf16.msra.mxu0 %v3580
    %4937 = vmatprep.subr.bf16.mxu0 0
    %4938 = vmatpush1.bf16.msra.mxu0 %v3581
    %4939 = vmatprep.subr.bf16.mxu0 0
    %4940 = vmatpush1.bf16.msra.mxu0 %v3582
    %4941 = vmatprep.subr.bf16.mxu0 0
    %4942 = vmatpush1.bf16.msra.mxu0 %v3583
    %4943 = vmatprep.subr.bf16.mxu0 0
    %4944 = vmatpush1.bf16.msra.mxu0 %v3584
    %4945 = vmatprep.subr.bf16.mxu0 0
    %4946 = vmatpush1.bf16.msra.mxu0 %v3585
    %4947 = vmatprep.subr.bf16.mxu0 0
    %4948 = vmatpush1.bf16.msra.mxu0 %v3586
    %4949 = vmatprep.subr.bf16.mxu0 0
    %4950 = vmatpush1.bf16.msra.mxu0 %v3587
    %4951 = vmatprep.subr.bf16.mxu0 0
    %4952 = vmatpush1.bf16.msra.mxu0 %v3588
    %4953 = vmatprep.subr.bf16.mxu0 0
    %4954 = vmatpush1.bf16.msra.mxu0 %v3589
    %4955 = vmatprep.mubr.bf16.mxu0 %v129
    %4956 = vmatmul.mubr.bf16.gmra.mrb[0].mxu0 %v128
    %v4957 = vpop.f32.mrb[0].mxu0
    %v4958 = vadd.f32 %v4917, %v4957
    %v4959 = vpop.f32.mrb[0].mxu0
    %v4960 = vpop.f32.mrb[0].mxu0
    %v4961 = vadd.f32 %v4920, %v4960
    %v4962 = vpop.f32.mrb[0].mxu0
    %4963 = vdwg.mxu0
    %4964 = vmatprep.subr.bf16.mxu0 0
    %4965 = vmatpush1.bf16.msra.mxu0 %v3590
    %4966 = vmatprep.subr.bf16.mxu0 0
    %4967 = vmatpush1.bf16.msra.mxu0 %v3591
    %4968 = vmatprep.subr.bf16.mxu0 0
    %4969 = vmatpush1.bf16.msra.mxu0 %v3592
    %4970 = vmatprep.subr.bf16.mxu0 0
    %4971 = vmatpush1.bf16.msra.mxu0 %v3593
    %4972 = vmatprep.subr.bf16.mxu0 0
    %4973 = vmatpush1.bf16.msra.mxu0 %v3594
    %4974 = vmatprep.subr.bf16.mxu0 0
    %4975 = vmatpush1.bf16.msra.mxu0 %v3595
    %4976 = vmatprep.subr.bf16.mxu0 0
    %4977 = vmatpush1.bf16.msra.mxu0 %v3596
    %4978 = vmatprep.subr.bf16.mxu0 0
    %4979 = vmatpush1.bf16.msra.mxu0 %v3597
    %4980 = vmatprep.subr.bf16.mxu0 0
    %4981 = vmatpush1.bf16.msra.mxu0 %v3598
    %4982 = vmatprep.subr.bf16.mxu0 0
    %4983 = vmatpush1.bf16.msra.mxu0 %v3599
    %4984 = vmatprep.subr.bf16.mxu0 0
    %4985 = vmatpush1.bf16.msra.mxu0 %v3600
    %4986 = vmatprep.subr.bf16.mxu0 0
    %4987 = vmatpush1.bf16.msra.mxu0 %v3601
    %4988 = vmatprep.subr.bf16.mxu0 0
    %4989 = vmatpush1.bf16.msra.mxu0 %v3602
    %4990 = vmatprep.subr.bf16.mxu0 0
    %4991 = vmatpush1.bf16.msra.mxu0 %v3603
    %4992 = vmatprep.subr.bf16.mxu0 0
    %4993 = vmatpush1.bf16.msra.mxu0 %v3604
    %4994 = vmatprep.subr.bf16.mxu0 0
    %4995 = vmatpush1.bf16.msra.mxu0 %v3605
    %4996 = vmatprep.mubr.bf16.mxu0 %v131
    %4997 = vmatmul.mubr.bf16.gmra.mrb[0].mxu0 %v130
    %v4998 = vpop.f32.mrb[0].mxu0
    %v4999 = vadd.f32 %v4958, %v4998
    %v5000 = vpop.f32.mrb[0].mxu0
    %v5001 = vpop.f32.mrb[0].mxu0
    %v5002 = vadd.f32 %v4961, %v5001
    %v5003 = vpop.f32.mrb[0].mxu0
    %5004 = vdwg.mxu0
    %5005 = vmatprep.subr.bf16.mxu0 0
    %5006 = vmatpush1.bf16.msra.mxu0 %v3606
    %5007 = vmatprep.subr.bf16.mxu0 0
    %5008 = vmatpush1.bf16.msra.mxu0 %v3607
    %5009 = vmatprep.subr.bf16.mxu0 0
    %5010 = vmatpush1.bf16.msra.mxu0 %v3608
    %5011 = vmatprep.subr.bf16.mxu0 0
    %5012 = vmatpush1.bf16.msra.mxu0 %v3609
    %5013 = vmatprep.subr.bf16.mxu0 0
    %5014 = vmatpush1.bf16.msra.mxu0 %v3610
    %5015 = vmatprep.subr.bf16.mxu0 0
    %5016 = vmatpush1.bf16.msra.mxu0 %v3611
    %5017 = vmatprep.subr.bf16.mxu0 0
    %5018 = vmatpush1.bf16.msra.mxu0 %v3612
    %5019 = vmatprep.subr.bf16.mxu0 0
    %5020 = vmatpush1.bf16.msra.mxu0 %v3613
    %5021 = vmatprep.subr.bf16.mxu0 0
    %5022 = vmatpush1.bf16.msra.mxu0 %v3614
    %5023 = vmatprep.subr.bf16.mxu0 0
    %5024 = vmatpush1.bf16.msra.mxu0 %v3615
    %5025 = vmatprep.subr.bf16.mxu0 0
    %5026 = vmatpush1.bf16.msra.mxu0 %v3616
    %5027 = vmatprep.subr.bf16.mxu0 0
    %5028 = vmatpush1.bf16.msra.mxu0 %v3617
    %5029 = vmatprep.subr.bf16.mxu0 0
    %5030 = vmatpush1.bf16.msra.mxu0 %v3618
    %5031 = vmatprep.subr.bf16.mxu0 0
    %5032 = vmatpush1.bf16.msra.mxu0 %v3619
    %5033 = vmatprep.subr.bf16.mxu0 0
    %5034 = vmatpush1.bf16.msra.mxu0 %v3620
    %5035 = vmatprep.subr.bf16.mxu0 0
    %5036 = vmatpush1.bf16.msra.mxu0 %v3621
    %5037 = vmatprep.mubr.bf16.mxu0 %v133
    %5038 = vmatmul.mubr.bf16.gmra.mrb[0].mxu0 %v132
    %v5039 = vpop.f32.mrb[0].mxu0
    %v5040 = vadd.f32 %v4999, %v5039
    %v5041 = vpop.f32.mrb[0].mxu0
    %v5042 = vpop.f32.mrb[0].mxu0
    %v5043 = vadd.f32 %v5002, %v5042
    %v5044 = vpop.f32.mrb[0].mxu0
    %5045 = vdwg.mxu0
    %5046 = vmatprep.subr.bf16.mxu0 0
    %5047 = vmatpush1.bf16.msra.mxu0 %v3622
    %5048 = vmatprep.subr.bf16.mxu0 0
    %5049 = vmatpush1.bf16.msra.mxu0 %v3623
    %5050 = vmatprep.subr.bf16.mxu0 0
    %5051 = vmatpush1.bf16.msra.mxu0 %v3624
    %5052 = vmatprep.subr.bf16.mxu0 0
    %5053 = vmatpush1.bf16.msra.mxu0 %v3625
    %5054 = vmatprep.subr.bf16.mxu0 0
    %5055 = vmatpush1.bf16.msra.mxu0 %v3626
    %5056 = vmatprep.subr.bf16.mxu0 0
    %5057 = vmatpush1.bf16.msra.mxu0 %v3627
    %5058 = vmatprep.subr.bf16.mxu0 0
    %5059 = vmatpush1.bf16.msra.mxu0 %v3628
    %5060 = vmatprep.subr.bf16.mxu0 0
    %5061 = vmatpush1.bf16.msra.mxu0 %v3629
    %5062 = vmatprep.subr.bf16.mxu0 0
    %5063 = vmatpush1.bf16.msra.mxu0 %v3630
    %5064 = vmatprep.subr.bf16.mxu0 0
    %5065 = vmatpush1.bf16.msra.mxu0 %v3631
    %5066 = vmatprep.subr.bf16.mxu0 0
    %5067 = vmatpush1.bf16.msra.mxu0 %v3632
    %5068 = vmatprep.subr.bf16.mxu0 0
    %5069 = vmatpush1.bf16.msra.mxu0 %v3633
    %5070 = vmatprep.subr.bf16.mxu0 0
    %5071 = vmatpush1.bf16.msra.mxu0 %v3634
    %5072 = vmatprep.subr.bf16.mxu0 0
    %5073 = vmatpush1.bf16.msra.mxu0 %v3635
    %5074 = vmatprep.subr.bf16.mxu0 0
    %5075 = vmatpush1.bf16.msra.mxu0 %v3636
    %5076 = vmatprep.subr.bf16.mxu0 0
    %5077 = vmatpush1.bf16.msra.mxu0 %v3637
    %5078 = vmatprep.mubr.bf16.mxu0 %v263
    %5079 = vmatmul.mubr.bf16.gmra.mrb[0].mxu0 %v262
    %v5080 = vpop.f32.mrb[0].mxu0
    %v5081 = vadd.f32 %v5040, %v5080
    %v5082 = vpop.f32.mrb[0].mxu0
    %v5083 = vpop.f32.mrb[0].mxu0
    %v5084 = vadd.f32 %v5043, %v5083
    %v5085 = vpop.f32.mrb[0].mxu0
    %5086 = vdwg.mxu0
    %5087 = vmatprep.subr.bf16.mxu0 0
    %5088 = vmatpush1.bf16.msra.mxu0 %v3638
    %5089 = vmatprep.subr.bf16.mxu0 0
    %5090 = vmatpush1.bf16.msra.mxu0 %v3639
    %5091 = vmatprep.subr.bf16.mxu0 0
    %5092 = vmatpush1.bf16.msra.mxu0 %v3640
    %5093 = vmatprep.subr.bf16.mxu0 0
    %5094 = vmatpush1.bf16.msra.mxu0 %v3641
    %5095 = vmatprep.subr.bf16.mxu0 0
    %5096 = vmatpush1.bf16.msra.mxu0 %v3642
    %5097 = vmatprep.subr.bf16.mxu0 0
    %5098 = vmatpush1.bf16.msra.mxu0 %v3643
    %5099 = vmatprep.subr.bf16.mxu0 0
    %5100 = vmatpush1.bf16.msra.mxu0 %v3644
    %5101 = vmatprep.subr.bf16.mxu0 0
    %5102 = vmatpush1.bf16.msra.mxu0 %v3645
    %5103 = vmatprep.subr.bf16.mxu0 0
    %5104 = vmatpush1.bf16.msra.mxu0 %v3646
    %5105 = vmatprep.subr.bf16.mxu0 0
    %5106 = vmatpush1.bf16.msra.mxu0 %v3647
    %5107 = vmatprep.subr.bf16.mxu0 0
    %5108 = vmatpush1.bf16.msra.mxu0 %v3648
    %5109 = vmatprep.subr.bf16.mxu0 0
    %5110 = vmatpush1.bf16.msra.mxu0 %v3649
    %5111 = vmatprep.subr.bf16.mxu0 0
    %5112 = vmatpush1.bf16.msra.mxu0 %v3650
    %5113 = vmatprep.subr.bf16.mxu0 0
    %5114 = vmatpush1.bf16.msra.mxu0 %v3651
    %5115 = vmatprep.subr.bf16.mxu0 0
    %5116 = vmatpush1.bf16.msra.mxu0 %v3652
    %5117 = vmatprep.subr.bf16.mxu0 0
    %5118 = vmatpush1.bf16.msra.mxu0 %v3653
    %5119 = vmatprep.mubr.bf16.mxu0 %v265
    %5120 = vmatmul.mubr.bf16.gmra.mrb[0].mxu0 %v264
    %v5121 = vpop.f32.mrb[0].mxu0
    %v5122 = vadd.f32 %v5081, %v5121
    %v5123 = vpop.f32.mrb[0].mxu0
    %v5124 = vpop.f32.mrb[0].mxu0
    %v5125 = vadd.f32 %v5084, %v5124
    %v5126 = vpop.f32.mrb[0].mxu0
    %5127 = vdwg.mxu0
    %5128 = vmatprep.subr.bf16.mxu0 0
    %5129 = vmatpush1.bf16.msra.mxu0 %v3654
    %5130 = vmatprep.subr.bf16.mxu0 0
    %5131 = vmatpush1.bf16.msra.mxu0 %v3655
    %5132 = vmatprep.subr.bf16.mxu0 0
    %5133 = vmatpush1.bf16.msra.mxu0 %v3656
    %5134 = vmatprep.subr.bf16.mxu0 0
    %5135 = vmatpush1.bf16.msra.mxu0 %v3657
    %5136 = vmatprep.subr.bf16.mxu0 0
    %5137 = vmatpush1.bf16.msra.mxu0 %v3658
    %5138 = vmatprep.subr.bf16.mxu0 0
    %5139 = vmatpush1.bf16.msra.mxu0 %v3659
    %5140 = vmatprep.subr.bf16.mxu0 0
    %5141 = vmatpush1.bf16.msra.mxu0 %v3660
    %5142 = vmatprep.subr.bf16.mxu0 0
    %5143 = vmatpush1.bf16.msra.mxu0 %v3661
    %5144 = vmatprep.subr.bf16.mxu0 0
    %5145 = vmatpush1.bf16.msra.mxu0 %v3662
    %5146 = vmatprep.subr.bf16.mxu0 0
    %5147 = vmatpush1.bf16.msra.mxu0 %v3663
    %5148 = vmatprep.subr.bf16.mxu0 0
    %5149 = vmatpush1.bf16.msra.mxu0 %v3664
    %5150 = vmatprep.subr.bf16.mxu0 0
    %5151 = vmatpush1.bf16.msra.mxu0 %v3665
    %5152 = vmatprep.subr.bf16.mxu0 0
    %5153 = vmatpush1.bf16.msra.mxu0 %v3666
    %5154 = vmatprep.subr.bf16.mxu0 0
    %5155 = vmatpush1.bf16.msra.mxu0 %v3667
    %5156 = vmatprep.subr.bf16.mxu0 0
    %5157 = vmatpush1.bf16.msra.mxu0 %v3668
    %5158 = vmatprep.subr.bf16.mxu0 0
    %5159 = vmatpush1.bf16.msra.mxu0 %v3669
    %5160 = vmatprep.mubr.bf16.mxu0 %v267
    %5161 = vmatmul.mubr.bf16.gmra.mrb[0].mxu0 %v266
    %v5162 = vpop.f32.mrb[0].mxu0
    %v5163 = vadd.f32 %v5122, %v5162
    %v5164 = vpop.f32.mrb[0].mxu0
    %v5165 = vpop.f32.mrb[0].mxu0
    %v5166 = vadd.f32 %v5125, %v5165
    %v5167 = vpop.f32.mrb[0].mxu0
    %5168 = vdwg.mxu0
    %5169 = vmatprep.subr.bf16.mxu0 0
    %5170 = vmatpush1.bf16.msra.mxu0 %v3670
    %5171 = vmatprep.subr.bf16.mxu0 0
    %5172 = vmatpush1.bf16.msra.mxu0 %v3671
    %5173 = vmatprep.subr.bf16.mxu0 0
    %5174 = vmatpush1.bf16.msra.mxu0 %v3672
    %5175 = vmatprep.subr.bf16.mxu0 0
    %5176 = vmatpush1.bf16.msra.mxu0 %v3673
    %5177 = vmatprep.subr.bf16.mxu0 0
    %5178 = vmatpush1.bf16.msra.mxu0 %v3674
    %5179 = vmatprep.subr.bf16.mxu0 0
    %5180 = vmatpush1.bf16.msra.mxu0 %v3675
    %5181 = vmatprep.subr.bf16.mxu0 0
    %5182 = vmatpush1.bf16.msra.mxu0 %v3676
    %5183 = vmatprep.subr.bf16.mxu0 0
    %5184 = vmatpush1.bf16.msra.mxu0 %v3677
    %5185 = vmatprep.subr.bf16.mxu0 0
    %5186 = vmatpush1.bf16.msra.mxu0 %v3678
    %5187 = vmatprep.subr.bf16.mxu0 0
    %5188 = vmatpush1.bf16.msra.mxu0 %v3679
    %5189 = vmatprep.subr.bf16.mxu0 0
    %5190 = vmatpush1.bf16.msra.mxu0 %v3680
    %5191 = vmatprep.subr.bf16.mxu0 0
    %5192 = vmatpush1.bf16.msra.mxu0 %v3681
    %5193 = vmatprep.subr.bf16.mxu0 0
    %5194 = vmatpush1.bf16.msra.mxu0 %v3682
    %5195 = vmatprep.subr.bf16.mxu0 0
    %5196 = vmatpush1.bf16.msra.mxu0 %v3683
    %5197 = vmatprep.subr.bf16.mxu0 0
    %5198 = vmatpush1.bf16.msra.mxu0 %v3684
    %5199 = vmatprep.subr.bf16.mxu0 0
    %5200 = vmatpush1.bf16.msra.mxu0 %v3685
    %5201 = vmatprep.mubr.bf16.mxu0 %v269
    %5202 = vmatmul.mubr.bf16.gmra.mrb[0].mxu0 %v268
    %v5203 = vpop.f32.mrb[0].mxu0
    %v5204 = vadd.f32 %v5163, %v5203
    %v5205 = vpop.f32.mrb[0].mxu0
    %v5206 = vpop.f32.mrb[0].mxu0
    %v5207 = vadd.f32 %v5166, %v5206
    %v5208 = vpop.f32.mrb[0].mxu0
    %5209 = vdwg.mxu0
    %5210 = vmatprep.subr.bf16.mxu0 0
    %5211 = vmatpush1.bf16.msra.mxu0 %v3686
    %5212 = vmatprep.subr.bf16.mxu0 0
    %5213 = vmatpush1.bf16.msra.mxu0 %v3687
    %5214 = vmatprep.subr.bf16.mxu0 0
    %5215 = vmatpush1.bf16.msra.mxu0 %v3688
    %5216 = vmatprep.subr.bf16.mxu0 0
    %5217 = vmatpush1.bf16.msra.mxu0 %v3689
    %5218 = vmatprep.subr.bf16.mxu0 0
    %5219 = vmatpush1.bf16.msra.mxu0 %v3690
    %5220 = vmatprep.subr.bf16.mxu0 0
    %5221 = vmatpush1.bf16.msra.mxu0 %v3691
    %5222 = vmatprep.subr.bf16.mxu0 0
    %5223 = vmatpush1.bf16.msra.mxu0 %v3692
    %5224 = vmatprep.subr.bf16.mxu0 0
    %5225 = vmatpush1.bf16.msra.mxu0 %v3693
    %5226 = vmatprep.subr.bf16.mxu0 0
    %5227 = vmatpush1.bf16.msra.mxu0 %v3694
    %5228 = vmatprep.subr.bf16.mxu0 0
    %5229 = vmatpush1.bf16.msra.mxu0 %v3695
    %5230 = vmatprep.subr.bf16.mxu0 0
    %5231 = vmatpush1.bf16.msra.mxu0 %v3696
    %5232 = vmatprep.subr.bf16.mxu0 0
    %5233 = vmatpush1.bf16.msra.mxu0 %v3697
    %5234 = vmatprep.subr.bf16.mxu0 0
    %5235 = vmatpush1.bf16.msra.mxu0 %v3698
    %5236 = vmatprep.subr.bf16.mxu0 0
    %5237 = vmatpush1.bf16.msra.mxu0 %v3699
    %5238 = vmatprep.subr.bf16.mxu0 0
    %5239 = vmatpush1.bf16.msra.mxu0 %v3700
    %5240 = vmatprep.subr.bf16.mxu0 0
    %5241 = vmatpush1.bf16.msra.mxu0 %v3701
    %5242 = vmatprep.mubr.bf16.mxu0 %v271
    %5243 = vmatmul.mubr.bf16.gmra.mrb[0].mxu0 %v270
    %v5244 = vpop.f32.mrb[0].mxu0
    %v5245 = vadd.f32 %v5204, %v5244
    %v5246 = vpop.f32.mrb[0].mxu0
    %v5247 = vpop.f32.mrb[0].mxu0
    %v5248 = vadd.f32 %v5207, %v5247
    %v5249 = vpop.f32.mrb[0].mxu0
    %5250 = vdwg.mxu0
    %5251 = vmatprep.subr.bf16.mxu0 0
    %5252 = vmatpush1.bf16.msra.mxu0 %v3702
    %5253 = vmatprep.subr.bf16.mxu0 0
    %5254 = vmatpush1.bf16.msra.mxu0 %v3703
    %5255 = vmatprep.subr.bf16.mxu0 0
    %5256 = vmatpush1.bf16.msra.mxu0 %v3704
    %5257 = vmatprep.subr.bf16.mxu0 0
    %5258 = vmatpush1.bf16.msra.mxu0 %v3705
    %5259 = vmatprep.subr.bf16.mxu0 0
    %5260 = vmatpush1.bf16.msra.mxu0 %v3706
    %5261 = vmatprep.subr.bf16.mxu0 0
    %5262 = vmatpush1.bf16.msra.mxu0 %v3707
    %5263 = vmatprep.subr.bf16.mxu0 0
    %5264 = vmatpush1.bf16.msra.mxu0 %v3708
    %5265 = vmatprep.subr.bf16.mxu0 0
    %5266 = vmatpush1.bf16.msra.mxu0 %v3709
    %5267 = vmatprep.subr.bf16.mxu0 0
    %5268 = vmatpush1.bf16.msra.mxu0 %v3710
    %5269 = vmatprep.subr.bf16.mxu0 0
    %5270 = vmatpush1.bf16.msra.mxu0 %v3711
    %5271 = vmatprep.subr.bf16.mxu0 0
    %5272 = vmatpush1.bf16.msra.mxu0 %v3712
    %5273 = vmatprep.subr.bf16.mxu0 0
    %5274 = vmatpush1.bf16.msra.mxu0 %v3713
    %5275 = vmatprep.subr.bf16.mxu0 0
    %5276 = vmatpush1.bf16.msra.mxu0 %v3714
    %5277 = vmatprep.subr.bf16.mxu0 0
    %5278 = vmatpush1.bf16.msra.mxu0 %v3715
    %5279 = vmatprep.subr.bf16.mxu0 0
    %5280 = vmatpush1.bf16.msra.mxu0 %v3716
    %5281 = vmatprep.subr.bf16.mxu0 0
    %5282 = vmatpush1.bf16.msra.mxu0 %v3717
    %5283 = vmatprep.mubr.bf16.mxu0 %v273
    %5284 = vmatmul.mubr.bf16.gmra.mrb[0].mxu0 %v272
    %v5285 = vpop.f32.mrb[0].mxu0
    %v5286 = vadd.f32 %v5245, %v5285
    %v5287 = vpop.f32.mrb[0].mxu0
    %v5288 = vpop.f32.mrb[0].mxu0
    %v5289 = vadd.f32 %v5248, %v5288
    %v5290 = vpop.f32.mrb[0].mxu0
    %5291 = vdwg.mxu0
    %5292 = vmatprep.subr.bf16.mxu0 0
    %5293 = vmatpush1.bf16.msra.mxu0 %v3718
    %5294 = vmatprep.subr.bf16.mxu0 0
    %5295 = vmatpush1.bf16.msra.mxu0 %v3719
    %5296 = vmatprep.subr.bf16.mxu0 0
    %5297 = vmatpush1.bf16.msra.mxu0 %v3720
    %5298 = vmatprep.subr.bf16.mxu0 0
    %5299 = vmatpush1.bf16.msra.mxu0 %v3721
    %5300 = vmatprep.subr.bf16.mxu0 0
    %5301 = vmatpush1.bf16.msra.mxu0 %v3722
    %5302 = vmatprep.subr.bf16.mxu0 0
    %5303 = vmatpush1.bf16.msra.mxu0 %v3723
    %5304 = vmatprep.subr.bf16.mxu0 0
    %5305 = vmatpush1.bf16.msra.mxu0 %v3724
    %5306 = vmatprep.subr.bf16.mxu0 0
    %5307 = vmatpush1.bf16.msra.mxu0 %v3725
    %5308 = vmatprep.subr.bf16.mxu0 0
    %5309 = vmatpush1.bf16.msra.mxu0 %v3726
    %5310 = vmatprep.subr.bf16.mxu0 0
    %5311 = vmatpush1.bf16.msra.mxu0 %v3727
    %5312 = vmatprep.subr.bf16.mxu0 0
    %5313 = vmatpush1.bf16.msra.mxu0 %v3728
    %5314 = vmatprep.subr.bf16.mxu0 0
    %5315 = vmatpush1.bf16.msra.mxu0 %v3729
    %5316 = vmatprep.subr.bf16.mxu0 0
    %5317 = vmatpush1.bf16.msra.mxu0 %v3730
    %5318 = vmatprep.subr.bf16.mxu0 0
    %5319 = vmatpush1.bf16.msra.mxu0 %v3731
    %5320 = vmatprep.subr.bf16.mxu0 0
    %5321 = vmatpush1.bf16.msra.mxu0 %v3732
    %5322 = vmatprep.subr.bf16.mxu0 0
    %5323 = vmatpush1.bf16.msra.mxu0 %v3733
    %5324 = vmatprep.mubr.bf16.mxu0 %v275
    %5325 = vmatmul.mubr.bf16.gmra.mrb[0].mxu0 %v274
    %v5326 = vpop.f32.mrb[0].mxu0
    %v5327 = vadd.f32 %v5286, %v5326
    %v5328 = vpop.f32.mrb[0].mxu0
    %v5329 = vpop.f32.mrb[0].mxu0
    %v5330 = vadd.f32 %v5289, %v5329
    %v5331 = vpop.f32.mrb[0].mxu0
    %5332 = vdwg.mxu0
    %5333 = vmatprep.subr.bf16.mxu0 0
    %5334 = vmatpush1.bf16.msra.mxu0 %v3734
    %5335 = vmatprep.subr.bf16.mxu0 0
    %5336 = vmatpush1.bf16.msra.mxu0 %v3735
    %5337 = vmatprep.subr.bf16.mxu0 0
    %5338 = vmatpush1.bf16.msra.mxu0 %v3736
    %5339 = vmatprep.subr.bf16.mxu0 0
    %5340 = vmatpush1.bf16.msra.mxu0 %v3737
    %5341 = vmatprep.subr.bf16.mxu0 0
    %5342 = vmatpush1.bf16.msra.mxu0 %v3738
    %5343 = vmatprep.subr.bf16.mxu0 0
    %5344 = vmatpush1.bf16.msra.mxu0 %v3739
    %5345 = vmatprep.subr.bf16.mxu0 0
    %5346 = vmatpush1.bf16.msra.mxu0 %v3740
    %5347 = vmatprep.subr.bf16.mxu0 0
    %5348 = vmatpush1.bf16.msra.mxu0 %v3741
    %5349 = vmatprep.subr.bf16.mxu0 0
    %5350 = vmatpush1.bf16.msra.mxu0 %v3742
    %5351 = vmatprep.subr.bf16.mxu0 0
    %5352 = vmatpush1.bf16.msra.mxu0 %v3743
    %5353 = vmatprep.subr.bf16.mxu0 0
    %5354 = vmatpush1.bf16.msra.mxu0 %v3744
    %5355 = vmatprep.subr.bf16.mxu0 0
    %5356 = vmatpush1.bf16.msra.mxu0 %v3745
    %5357 = vmatprep.subr.bf16.mxu0 0
    %5358 = vmatpush1.bf16.msra.mxu0 %v3746
    %5359 = vmatprep.subr.bf16.mxu0 0
    %5360 = vmatpush1.bf16.msra.mxu0 %v3747
    %5361 = vmatprep.subr.bf16.mxu0 0
    %5362 = vmatpush1.bf16.msra.mxu0 %v3748
    %5363 = vmatprep.subr.bf16.mxu0 0
    %5364 = vmatpush1.bf16.msra.mxu0 %v3749
    %5365 = vmatprep.mubr.bf16.mxu0 %v277
    %5366 = vmatmul.mubr.bf16.gmra.mrb[0].mxu0 %v276
    %v5367 = vpop.f32.mrb[0].mxu0
    %v5368 = vadd.f32 %v5327, %v5367
    %v5369 = vpop.f32.mrb[0].mxu0
    %v5370 = vpop.f32.mrb[0].mxu0
    %v5371 = vadd.f32 %v5330, %v5370
    %v5372 = vpop.f32.mrb[0].mxu0
    %5373 = vdwg.mxu0
    %5374 = vmatprep.subr.bf16.mxu0 0
    %5375 = vmatpush1.bf16.msra.mxu0 %v3750
    %5376 = vmatprep.subr.bf16.mxu0 0
    %5377 = vmatpush1.bf16.msra.mxu0 %v3751
    %5378 = vmatprep.subr.bf16.mxu0 0
    %5379 = vmatpush1.bf16.msra.mxu0 %v3752
    %5380 = vmatprep.subr.bf16.mxu0 0
    %5381 = vmatpush1.bf16.msra.mxu0 %v3753
    %5382 = vmatprep.subr.bf16.mxu0 0
    %5383 = vmatpush1.bf16.msra.mxu0 %v3754
    %5384 = vmatprep.subr.bf16.mxu0 0
    %5385 = vmatpush1.bf16.msra.mxu0 %v3755
    %5386 = vmatprep.subr.bf16.mxu0 0
    %5387 = vmatpush1.bf16.msra.mxu0 %v3756
    %5388 = vmatprep.subr.bf16.mxu0 0
    %5389 = vmatpush1.bf16.msra.mxu0 %v3757
    %5390 = vmatprep.subr.bf16.mxu0 0
    %5391 = vmatpush1.bf16.msra.mxu0 %v3758
    %5392 = vmatprep.subr.bf16.mxu0 0
    %5393 = vmatpush1.bf16.msra.mxu0 %v3759
    %5394 = vmatprep.subr.bf16.mxu0 0
    %5395 = vmatpush1.bf16.msra.mxu0 %v3760
    %5396 = vmatprep.subr.bf16.mxu0 0
    %5397 = vmatpush1.bf16.msra.mxu0 %v3761
    %5398 = vmatprep.subr.bf16.mxu0 0
    %5399 = vmatpush1.bf16.msra.mxu0 %v3762
    %5400 = vmatprep.subr.bf16.mxu0 0
    %5401 = vmatpush1.bf16.msra.mxu0 %v3763
    %5402 = vmatprep.subr.bf16.mxu0 0
    %5403 = vmatpush1.bf16.msra.mxu0 %v3764
    %5404 = vmatprep.subr.bf16.mxu0 0
    %5405 = vmatpush1.bf16.msra.mxu0 %v3765
    %5406 = vmatprep.mubr.bf16.mxu0 %v279
    %5407 = vmatmul.mubr.bf16.gmra.mrb[0].mxu0 %v278
    %v5408 = vpop.f32.mrb[0].mxu0
    %v5409 = vadd.f32 %v5368, %v5408
    %v5410 = vpop.f32.mrb[0].mxu0
    %v5411 = vpop.f32.mrb[0].mxu0
    %v5412 = vadd.f32 %v5371, %v5411
    %v5413 = vpop.f32.mrb[0].mxu0
    %5414 = vdwg.mxu0
    %5415 = vmatprep.subr.bf16.mxu0 0
    %5416 = vmatpush1.bf16.msra.mxu0 %v3766
    %5417 = vmatprep.subr.bf16.mxu0 0
    %5418 = vmatpush1.bf16.msra.mxu0 %v3767
    %5419 = vmatprep.subr.bf16.mxu0 0
    %5420 = vmatpush1.bf16.msra.mxu0 %v3768
    %5421 = vmatprep.subr.bf16.mxu0 0
    %5422 = vmatpush1.bf16.msra.mxu0 %v3769
    %5423 = vmatprep.subr.bf16.mxu0 0
    %5424 = vmatpush1.bf16.msra.mxu0 %v3770
    %5425 = vmatprep.subr.bf16.mxu0 0
    %5426 = vmatpush1.bf16.msra.mxu0 %v3771
    %5427 = vmatprep.subr.bf16.mxu0 0
    %5428 = vmatpush1.bf16.msra.mxu0 %v3772
    %5429 = vmatprep.subr.bf16.mxu0 0
    %5430 = vmatpush1.bf16.msra.mxu0 %v3773
    %5431 = vmatprep.subr.bf16.mxu0 0
    %5432 = vmatpush1.bf16.msra.mxu0 %v3774
    %5433 = vmatprep.subr.bf16.mxu0 0
    %5434 = vmatpush1.bf16.msra.mxu0 %v3775
    %5435 = vmatprep.subr.bf16.mxu0 0
    %5436 = vmatpush1.bf16.msra.mxu0 %v3776
    %5437 = vmatprep.subr.bf16.mxu0 0
    %5438 = vmatpush1.bf16.msra.mxu0 %v3777
    %5439 = vmatprep.subr.bf16.mxu0 0
    %5440 = vmatpush1.bf16.msra.mxu0 %v3778
    %5441 = vmatprep.subr.bf16.mxu0 0
    %5442 = vmatpush1.bf16.msra.mxu0 %v3779
    %5443 = vmatprep.subr.bf16.mxu0 0
    %5444 = vmatpush1.bf16.msra.mxu0 %v3780
    %5445 = vmatprep.subr.bf16.mxu0 0
    %5446 = vmatpush1.bf16.msra.mxu0 %v3781
    %5447 = vmatprep.mubr.bf16.mxu0 %v281
    %5448 = vmatmul.mubr.bf16.gmra.mrb[0].mxu0 %v280
    %v5449 = vpop.f32.mrb[0].mxu0
    %v5450 = vadd.f32 %v5409, %v5449
    %v5451 = vpop.f32.mrb[0].mxu0
    %v5452 = vpop.f32.mrb[0].mxu0
    %v5453 = vadd.f32 %v5412, %v5452
    %v5454 = vpop.f32.mrb[0].mxu0
    %5455 = vdwg.mxu0
    %5456 = vmatprep.subr.bf16.mxu0 0
    %5457 = vmatpush1.bf16.msra.mxu0 %v3782
    %5458 = vmatprep.subr.bf16.mxu0 0
    %5459 = vmatpush1.bf16.msra.mxu0 %v3783
    %5460 = vmatprep.subr.bf16.mxu0 0
    %5461 = vmatpush1.bf16.msra.mxu0 %v3784
    %5462 = vmatprep.subr.bf16.mxu0 0
    %5463 = vmatpush1.bf16.msra.mxu0 %v3785
    %5464 = vmatprep.subr.bf16.mxu0 0
    %5465 = vmatpush1.bf16.msra.mxu0 %v3786
    %5466 = vmatprep.subr.bf16.mxu0 0
    %5467 = vmatpush1.bf16.msra.mxu0 %v3787
    %5468 = vmatprep.subr.bf16.mxu0 0
    %5469 = vmatpush1.bf16.msra.mxu0 %v3788
    %5470 = vmatprep.subr.bf16.mxu0 0
    %5471 = vmatpush1.bf16.msra.mxu0 %v3789
    %5472 = vmatprep.subr.bf16.mxu0 0
    %5473 = vmatpush1.bf16.msra.mxu0 %v3790
    %5474 = vmatprep.subr.bf16.mxu0 0
    %5475 = vmatpush1.bf16.msra.mxu0 %v3791
    %5476 = vmatprep.subr.bf16.mxu0 0
    %5477 = vmatpush1.bf16.msra.mxu0 %v3792
    %5478 = vmatprep.subr.bf16.mxu0 0
    %5479 = vmatpush1.bf16.msra.mxu0 %v3793
    %5480 = vmatprep.subr.bf16.mxu0 0
    %5481 = vmatpush1.bf16.msra.mxu0 %v3794
    %5482 = vmatprep.subr.bf16.mxu0 0
    %5483 = vmatpush1.bf16.msra.mxu0 %v3795
    %5484 = vmatprep.subr.bf16.mxu0 0
    %5485 = vmatpush1.bf16.msra.mxu0 %v3796
    %5486 = vmatprep.subr.bf16.mxu0 0
    %5487 = vmatpush1.bf16.msra.mxu0 %v3797
    %5488 = vmatprep.mubr.bf16.mxu0 %v283
    %5489 = vmatmul.mubr.bf16.gmra.mrb[0].mxu0 %v282
    %v5490 = vpop.f32.mrb[0].mxu0
    %v5491 = vadd.f32 %v5450, %v5490
    %v5492 = vpop.f32.mrb[0].mxu0
    %v5493 = vpop.f32.mrb[0].mxu0
    %v5494 = vadd.f32 %v5453, %v5493
    %v5495 = vpop.f32.mrb[0].mxu0
    %5496 = vdwg.mxu0
    %5497 = vmatprep.subr.bf16.mxu0 0
    %5498 = vmatpush1.bf16.msra.mxu0 %v3798
    %5499 = vmatprep.subr.bf16.mxu0 0
    %5500 = vmatpush1.bf16.msra.mxu0 %v3799
    %5501 = vmatprep.subr.bf16.mxu0 0
    %5502 = vmatpush1.bf16.msra.mxu0 %v3800
    %5503 = vmatprep.subr.bf16.mxu0 0
    %5504 = vmatpush1.bf16.msra.mxu0 %v3801
    %5505 = vmatprep.subr.bf16.mxu0 0
    %5506 = vmatpush1.bf16.msra.mxu0 %v3802
    %5507 = vmatprep.subr.bf16.mxu0 0
    %5508 = vmatpush1.bf16.msra.mxu0 %v3803
    %5509 = vmatprep.subr.bf16.mxu0 0
    %5510 = vmatpush1.bf16.msra.mxu0 %v3804
    %5511 = vmatprep.subr.bf16.mxu0 0
    %5512 = vmatpush1.bf16.msra.mxu0 %v3805
    %5513 = vmatprep.subr.bf16.mxu0 0
    %5514 = vmatpush1.bf16.msra.mxu0 %v3806
    %5515 = vmatprep.subr.bf16.mxu0 0
    %5516 = vmatpush1.bf16.msra.mxu0 %v3807
    %5517 = vmatprep.subr.bf16.mxu0 0
    %5518 = vmatpush1.bf16.msra.mxu0 %v3808
    %5519 = vmatprep.subr.bf16.mxu0 0
    %5520 = vmatpush1.bf16.msra.mxu0 %v3809
    %5521 = vmatprep.subr.bf16.mxu0 0
    %5522 = vmatpush1.bf16.msra.mxu0 %v3810
    %5523 = vmatprep.subr.bf16.mxu0 0
    %5524 = vmatpush1.bf16.msra.mxu0 %v3811
    %5525 = vmatprep.subr.bf16.mxu0 0
    %5526 = vmatpush1.bf16.msra.mxu0 %v3812
    %5527 = vmatprep.subr.bf16.mxu0 0
    %5528 = vmatpush1.bf16.msra.mxu0 %v3813
    %5529 = vmatprep.mubr.bf16.mxu0 %v285
    %5530 = vmatmul.mubr.bf16.gmra.mrb[0].mxu0 %v284
    %v5531 = vpop.f32.mrb[0].mxu0
    %v5532 = vadd.f32 %v5491, %v5531
    %v5533 = vpop.f32.mrb[0].mxu0
    %v5534 = vpop.f32.mrb[0].mxu0
    %v5535 = vadd.f32 %v5494, %v5534
    %v5536 = vpop.f32.mrb[0].mxu0
    %5537 = vdwg.mxu0
    %5538 = vmatprep.subr.bf16.mxu0 0
    %5539 = vmatpush1.bf16.msra.mxu0 %v3814
    %5540 = vmatprep.subr.bf16.mxu0 0
    %5541 = vmatpush1.bf16.msra.mxu0 %v3815
    %5542 = vmatprep.subr.bf16.mxu0 0
    %5543 = vmatpush1.bf16.msra.mxu0 %v3816
    %5544 = vmatprep.subr.bf16.mxu0 0
    %5545 = vmatpush1.bf16.msra.mxu0 %v3817
    %5546 = vmatprep.subr.bf16.mxu0 0
    %5547 = vmatpush1.bf16.msra.mxu0 %v3818
    %5548 = vmatprep.subr.bf16.mxu0 0
    %5549 = vmatpush1.bf16.msra.mxu0 %v3819
    %5550 = vmatprep.subr.bf16.mxu0 0
    %5551 = vmatpush1.bf16.msra.mxu0 %v3820
    %5552 = vmatprep.subr.bf16.mxu0 0
    %5553 = vmatpush1.bf16.msra.mxu0 %v3821
    %5554 = vmatprep.subr.bf16.mxu0 0
    %5555 = vmatpush1.bf16.msra.mxu0 %v3822
    %5556 = vmatprep.subr.bf16.mxu0 0
    %5557 = vmatpush1.bf16.msra.mxu0 %v3823
    %5558 = vmatprep.subr.bf16.mxu0 0
    %5559 = vmatpush1.bf16.msra.mxu0 %v3824
    %5560 = vmatprep.subr.bf16.mxu0 0
    %5561 = vmatpush1.bf16.msra.mxu0 %v3825
    %5562 = vmatprep.subr.bf16.mxu0 0
    %5563 = vmatpush1.bf16.msra.mxu0 %v3826
    %5564 = vmatprep.subr.bf16.mxu0 0
    %5565 = vmatpush1.bf16.msra.mxu0 %v3827
    %5566 = vmatprep.subr.bf16.mxu0 0
    %5567 = vmatpush1.bf16.msra.mxu0 %v3828
    %5568 = vmatprep.subr.bf16.mxu0 0
    %5569 = vmatpush1.bf16.msra.mxu0 %v3829
    %5570 = vmatprep.mubr.bf16.mxu0 %v287
    %5571 = vmatmul.mubr.bf16.gmra.mrb[0].mxu0 %v286
    %v5572 = vpop.f32.mrb[0].mxu0
    %v5573 = vadd.f32 %v5532, %v5572
    %v5574 = vpop.f32.mrb[0].mxu0
    %v5575 = vpop.f32.mrb[0].mxu0
    %v5576 = vadd.f32 %v5535, %v5575
    %v5577 = vpop.f32.mrb[0].mxu0
    %5578 = vdwg.mxu0
    %5579 = vmatprep.subr.bf16.mxu0 0
    %5580 = vmatpush1.bf16.msra.mxu0 %v3830
    %5581 = vmatprep.subr.bf16.mxu0 0
    %5582 = vmatpush1.bf16.msra.mxu0 %v3831
    %5583 = vmatprep.subr.bf16.mxu0 0
    %5584 = vmatpush1.bf16.msra.mxu0 %v3832
    %5585 = vmatprep.subr.bf16.mxu0 0
    %5586 = vmatpush1.bf16.msra.mxu0 %v3833
    %5587 = vmatprep.subr.bf16.mxu0 0
    %5588 = vmatpush1.bf16.msra.mxu0 %v3834
    %5589 = vmatprep.subr.bf16.mxu0 0
    %5590 = vmatpush1.bf16.msra.mxu0 %v3835
    %5591 = vmatprep.subr.bf16.mxu0 0
    %5592 = vmatpush1.bf16.msra.mxu0 %v3836
    %5593 = vmatprep.subr.bf16.mxu0 0
    %5594 = vmatpush1.bf16.msra.mxu0 %v3837
    %5595 = vmatprep.subr.bf16.mxu0 0
    %5596 = vmatpush1.bf16.msra.mxu0 %v3838
    %5597 = vmatprep.subr.bf16.mxu0 0
    %5598 = vmatpush1.bf16.msra.mxu0 %v3839
    %5599 = vmatprep.subr.bf16.mxu0 0
    %5600 = vmatpush1.bf16.msra.mxu0 %v3840
    %5601 = vmatprep.subr.bf16.mxu0 0
    %5602 = vmatpush1.bf16.msra.mxu0 %v3841
    %5603 = vmatprep.subr.bf16.mxu0 0
    %5604 = vmatpush1.bf16.msra.mxu0 %v3842
    %5605 = vmatprep.subr.bf16.mxu0 0
    %5606 = vmatpush1.bf16.msra.mxu0 %v3843
    %5607 = vmatprep.subr.bf16.mxu0 0
    %5608 = vmatpush1.bf16.msra.mxu0 %v3844
    %5609 = vmatprep.subr.bf16.mxu0 0
    %5610 = vmatpush1.bf16.msra.mxu0 %v3845
    %5611 = vmatprep.mubr.bf16.mxu0 %v289
    %5612 = vmatmul.mubr.bf16.gmra.mrb[0].mxu0 %v288
    %v5613 = vpop.f32.mrb[0].mxu0
    %v5614 = vadd.f32 %v5573, %v5613
    %v5615 = vpop.f32.mrb[0].mxu0
    %v5616 = vpop.f32.mrb[0].mxu0
    %v5617 = vadd.f32 %v5576, %v5616
    %v5618 = vpop.f32.mrb[0].mxu0
    %5619 = vdwg.mxu0
    %5620 = vmatprep.subr.bf16.mxu0 0
    %5621 = vmatpush1.bf16.msra.mxu0 %v3846
    %5622 = vmatprep.subr.bf16.mxu0 0
    %5623 = vmatpush1.bf16.msra.mxu0 %v3847
    %5624 = vmatprep.subr.bf16.mxu0 0
    %5625 = vmatpush1.bf16.msra.mxu0 %v3848
    %5626 = vmatprep.subr.bf16.mxu0 0
    %5627 = vmatpush1.bf16.msra.mxu0 %v3849
    %5628 = vmatprep.subr.bf16.mxu0 0
    %5629 = vmatpush1.bf16.msra.mxu0 %v3850
    %5630 = vmatprep.subr.bf16.mxu0 0
    %5631 = vmatpush1.bf16.msra.mxu0 %v3851
    %5632 = vmatprep.subr.bf16.mxu0 0
    %5633 = vmatpush1.bf16.msra.mxu0 %v3852
    %5634 = vmatprep.subr.bf16.mxu0 0
    %5635 = vmatpush1.bf16.msra.mxu0 %v3853
    %5636 = vmatprep.subr.bf16.mxu0 0
    %5637 = vmatpush1.bf16.msra.mxu0 %v3854
    %5638 = vmatprep.subr.bf16.mxu0 0
    %5639 = vmatpush1.bf16.msra.mxu0 %v3855
    %5640 = vmatprep.subr.bf16.mxu0 0
    %5641 = vmatpush1.bf16.msra.mxu0 %v3856
    %5642 = vmatprep.subr.bf16.mxu0 0
    %5643 = vmatpush1.bf16.msra.mxu0 %v3857
    %5644 = vmatprep.subr.bf16.mxu0 0
    %5645 = vmatpush1.bf16.msra.mxu0 %v3858
    %5646 = vmatprep.subr.bf16.mxu0 0
    %5647 = vmatpush1.bf16.msra.mxu0 %v3859
    %5648 = vmatprep.subr.bf16.mxu0 0
    %5649 = vmatpush1.bf16.msra.mxu0 %v3860
    %5650 = vmatprep.subr.bf16.mxu0 0
    %5651 = vmatpush1.bf16.msra.mxu0 %v3861
    %5652 = vmatprep.mubr.bf16.mxu0 %v291
    %5653 = vmatmul.mubr.bf16.gmra.mrb[0].mxu0 %v290
    %v5654 = vpop.f32.mrb[0].mxu0
    %v5655 = vadd.f32 %v5614, %v5654
    %v5656 = vpop.f32.mrb[0].mxu0
    %v5657 = vpop.f32.mrb[0].mxu0
    %v5658 = vadd.f32 %v5617, %v5657
    %v5659 = vpop.f32.mrb[0].mxu0
    %5660 = vdwg.mxu0
    %5661 = vmatprep.subr.bf16.mxu0 0
    %5662 = vmatpush1.bf16.msra.mxu0 %v3862
    %5663 = vmatprep.subr.bf16.mxu0 0
    %5664 = vmatpush1.bf16.msra.mxu0 %v3863
    %5665 = vmatprep.subr.bf16.mxu0 0
    %5666 = vmatpush1.bf16.msra.mxu0 %v3864
    %5667 = vmatprep.subr.bf16.mxu0 0
    %5668 = vmatpush1.bf16.msra.mxu0 %v3865
    %5669 = vmatprep.subr.bf16.mxu0 0
    %5670 = vmatpush1.bf16.msra.mxu0 %v3866
    %5671 = vmatprep.subr.bf16.mxu0 0
    %5672 = vmatpush1.bf16.msra.mxu0 %v3867
    %5673 = vmatprep.subr.bf16.mxu0 0
    %5674 = vmatpush1.bf16.msra.mxu0 %v3868
    %5675 = vmatprep.subr.bf16.mxu0 0
    %5676 = vmatpush1.bf16.msra.mxu0 %v3869
    %5677 = vmatprep.subr.bf16.mxu0 0
    %5678 = vmatpush1.bf16.msra.mxu0 %v3870
    %5679 = vmatprep.subr.bf16.mxu0 0
    %5680 = vmatpush1.bf16.msra.mxu0 %v3871
    %5681 = vmatprep.subr.bf16.mxu0 0
    %5682 = vmatpush1.bf16.msra.mxu0 %v3872
    %5683 = vmatprep.subr.bf16.mxu0 0
    %5684 = vmatpush1.bf16.msra.mxu0 %v3873
    %5685 = vmatprep.subr.bf16.mxu0 0
    %5686 = vmatpush1.bf16.msra.mxu0 %v3874
    %5687 = vmatprep.subr.bf16.mxu0 0
    %5688 = vmatpush1.bf16.msra.mxu0 %v3875
    %5689 = vmatprep.subr.bf16.mxu0 0
    %5690 = vmatpush1.bf16.msra.mxu0 %v3876
    %5691 = vmatprep.subr.bf16.mxu0 0
    %5692 = vmatpush1.bf16.msra.mxu0 %v3877
    %5693 = vmatprep.mubr.bf16.mxu0 %v293
    %5694 = vmatmul.mubr.bf16.gmra.mrb[0].mxu0 %v292
    %v5695 = vpop.f32.mrb[0].mxu0
    %v5696 = vadd.f32 %v5655, %v5695
    %v5697 = vpop.f32.mrb[0].mxu0
    %v5698 = vpop.f32.mrb[0].mxu0
    %v5699 = vadd.f32 %v5658, %v5698
    %v5700 = vpop.f32.mrb[0].mxu0
    %5701 = vdwg.mxu0
    %v5702 = vmul.f32 %v5696, 0.015625
    %v5703 = vmul.f32 %v5699, 0.015625
    %5706 = vrot.lane.b32.xlu0 %v5702, 1
    %v5707 = vpop.permute.xlu0 %5706
    %5708 = vrot.lane.b32.xlu0 %v5703, 1
    %v5709 = vpop.permute.xlu0 %5708
    %vm5712 = vcmask 7168
    %v5713 = vsel %vm5712, 0.0, %v5707
    %v5714 = vsel %vm5712, 0.0, %v5709
    %vm5715 = vcmask 531456
    %v5716 = vsel %vm5715, %v5713, 0.0
    %v5717 = vsel %vm5715, %v5714, 0.0
    %5720 = vrot.lane.b32.xlu0 %v5716, 127
    %v5721 = vpop.permute.xlu0 %5720
    %5722 = vrot.lane.b32.xlu0 %v5717, 127
    %v5723 = vpop.permute.xlu0 %5722
    %5726 = vrot.lane.b32.xlu0 %v5716, 126
    %v5727 = vpop.permute.xlu0 %5726
    %5728 = vrot.lane.b32.xlu0 %v5717, 126
    %v5729 = vpop.permute.xlu0 %5728
    %v5732 = vld [vmem:[%s3] sm:$0xff]
    %vm5733 = vcmask 195584
    %v5735 = vsel %vm5733, %v5732, 0
    %5737 = vmatprep.subr.mxu0 0.0
    %v5738 = vand.u32 %v5716, 4294901760
    %5739 = vmatpush1.msra.mxu0 %v5738
    %5740 = vmatprep.subr.mxu0 0.0
    %v5741 = vand.u32 %v5721, 4294901760
    %5742 = vmatpush1.msra.mxu0 %v5741
    %5743 = vmatprep.subr.mxu0 0.0
    %v5744 = vand.u32 %v5727, 4294901760
    %5745 = vmatpush1.msra.mxu0 %v5744
    %5746 = vmatprep.subr.mxu0 0.0
    %5747 = vmatpush1.msra.mxu0 0.0
    %5748 = vmatprep.subr.mxu0 0.0
    %5749 = vmatpush1.msra.mxu0 0.0
    %5750 = vmatprep.subr.mxu0 0.0
    %5751 = vmatpush1.msra.mxu0 0.0
    %5752 = vmatprep.subr.mxu0 0.0
    %5753 = vmatpush1.msra.mxu0 0.0
    %5754 = vmatprep.subr.mxu0 0.0
    %5755 = vmatpush1.msra.mxu0 0.0
    %5756 = vmatprep.subr.mxu0 0.0
    %5757 = vmatpush1.msra.mxu0 0.0
    %5758 = vmatprep.subr.mxu0 0.0
    %5759 = vmatpush1.msra.mxu0 0.0
    %5760 = vmatprep.subr.mxu0 0.0
    %5761 = vmatpush1.msra.mxu0 0.0
    %5762 = vmatprep.subr.mxu0 0.0
    %5763 = vmatpush1.msra.mxu0 0.0
    %5764 = vmatprep.subr.mxu0 0.0
    %5765 = vmatpush1.msra.mxu0 0.0
    %5766 = vmatprep.subr.mxu0 0.0
    %5767 = vmatpush1.msra.mxu0 0.0
    %5768 = vmatprep.subr.mxu0 0.0
    %5769 = vmatpush1.msra.mxu0 0.0
    %5770 = vmatprep.subr.mxu0 0.0
    %5771 = vmatpush1.msra.mxu0 0.0
    %5772 = vmatprep.subr.mxu0 0.0
    %5773 = vmatpush1.msra.mxu0 0.0
    %5774 = vmatprep.subr.mxu0 0.0
    %5775 = vmatpush1.msra.mxu0 0.0
    %5776 = vmatprep.subr.mxu0 0.0
    %5777 = vmatpush1.msra.mxu0 0.0
    %5778 = vmatprep.subr.mxu0 0.0
    %5779 = vmatpush1.msra.mxu0 0.0
    %5780 = vmatprep.subr.mxu0 0.0
    %5781 = vmatpush1.msra.mxu0 0.0
    %5782 = vmatprep.subr.mxu0 0.0
    %5783 = vmatpush1.msra.mxu0 0.0
    %5784 = vmatprep.subr.mxu0 0.0
    %5785 = vmatpush1.msra.mxu0 0.0
    %5786 = vmatprep.subr.mxu0 0.0
    %5787 = vmatpush1.msra.mxu0 0.0
    %5788 = vmatprep.subr.mxu0 0.0
    %5789 = vmatpush1.msra.mxu0 0.0
    %5790 = vmatprep.subr.mxu0 0.0
    %5791 = vmatpush1.msra.mxu0 0.0
    %5792 = vmatprep.subr.mxu0 0.0
    %5793 = vmatpush1.msra.mxu0 0.0
    %5794 = vmatprep.subr.mxu0 0.0
    %5795 = vmatpush1.msra.mxu0 0.0
    %5796 = vmatprep.subr.mxu0 0.0
    %5797 = vmatpush1.msra.mxu0 0.0
    %5798 = vmatprep.subr.mxu0 0.0
    %5799 = vmatpush1.msra.mxu0 0.0
    %5800 = vmatprep.subr.mxu0 0.0
    %5801 = vmatpush1.msra.mxu0 0.0
    %5802 = vmatprep.subr.mxu0 0.0
    %5803 = vmatpush1.msra.mxu0 0.0
    %5804 = vmatprep.mubr.f32.mxu0 0.0
    %v5805 = vand.u32 %v5735, 4294901760
    %v5806 = vsub.f32 %v5735, %v5805
    %v5807 = vand.u32 %v5806, 4294901760
    %v5808 = vsub.f32 %v5806, %v5807
    %v5809 = vand.u32 %v5808, 4294901760
    %5810 = vmatmul.mubr.f32.gmra.mrb[0].mxu0 %v5809
    %v5811 = vpop.f32.mrb[0].mxu0
    %v5812 = vadd.f32 0.0, %v5811
    %v5813 = vpop.f32.mrb[0].mxu0
    %5814 = vdwg.mxu0
    %5815 = vmatprep.subr.mxu0 0.0
    %v5816 = vand.u32 %v5716, 4294901760
    %v5817 = vsub.f32 %v5716, %v5816
    %v5818 = vand.u32 %v5817, 4294901760
    %v5819 = vsub.f32 %v5817, %v5818
    %v5820 = vand.u32 %v5819, 4294901760
    %5821 = vmatpush1.msra.mxu0 %v5820
    %5822 = vmatprep.subr.mxu0 0.0
    %v5823 = vand.u32 %v5721, 4294901760
    %v5824 = vsub.f32 %v5721, %v5823
    %v5825 = vand.u32 %v5824, 4294901760
    %v5826 = vsub.f32 %v5824, %v5825
    %v5827 = vand.u32 %v5826, 4294901760
    %5828 = vmatpush1.msra.mxu0 %v5827
    %5829 = vmatprep.subr.mxu0 0.0
    %v5830 = vand.u32 %v5727, 4294901760
    %v5831 = vsub.f32 %v5727, %v5830
    %v5832 = vand.u32 %v5831, 4294901760
    %v5833 = vsub.f32 %v5831, %v5832
    %v5834 = vand.u32 %v5833, 4294901760
    %5835 = vmatpush1.msra.mxu0 %v5834
    %5836 = vmatprep.subr.mxu0 0.0
    %5837 = vmatpush1.msra.mxu0 0.0
    %5838 = vmatprep.subr.mxu0 0.0
    %5839 = vmatpush1.msra.mxu0 0.0
    %5840 = vmatprep.subr.mxu0 0.0
    %5841 = vmatpush1.msra.mxu0 0.0
    %5842 = vmatprep.subr.mxu0 0.0
    %5843 = vmatpush1.msra.mxu0 0.0
    %5844 = vmatprep.subr.mxu0 0.0
    %5845 = vmatpush1.msra.mxu0 0.0
    %5846 = vmatprep.subr.mxu0 0.0
    %5847 = vmatpush1.msra.mxu0 0.0
    %5848 = vmatprep.subr.mxu0 0.0
    %5849 = vmatpush1.msra.mxu0 0.0
    %5850 = vmatprep.subr.mxu0 0.0
    %5851 = vmatpush1.msra.mxu0 0.0
    %5852 = vmatprep.subr.mxu0 0.0
    %5853 = vmatpush1.msra.mxu0 0.0
    %5854 = vmatprep.subr.mxu0 0.0
    %5855 = vmatpush1.msra.mxu0 0.0
    %5856 = vmatprep.subr.mxu0 0.0
    %5857 = vmatpush1.msra.mxu0 0.0
    %5858 = vmatprep.subr.mxu0 0.0
    %5859 = vmatpush1.msra.mxu0 0.0
    %5860 = vmatprep.subr.mxu0 0.0
    %5861 = vmatpush1.msra.mxu0 0.0
    %5862 = vmatprep.subr.mxu0 0.0
    %5863 = vmatpush1.msra.mxu0 0.0
    %5864 = vmatprep.subr.mxu0 0.0
    %5865 = vmatpush1.msra.mxu0 0.0
    %5866 = vmatprep.subr.mxu0 0.0
    %5867 = vmatpush1.msra.mxu0 0.0
    %5868 = vmatprep.subr.mxu0 0.0
    %5869 = vmatpush1.msra.mxu0 0.0
    %5870 = vmatprep.subr.mxu0 0.0
    %5871 = vmatpush1.msra.mxu0 0.0
    %5872 = vmatprep.subr.mxu0 0.0
    %5873 = vmatpush1.msra.mxu0 0.0
    %5874 = vmatprep.subr.mxu0 0.0
    %5875 = vmatpush1.msra.mxu0 0.0
    %5876 = vmatprep.subr.mxu0 0.0
    %5877 = vmatpush1.msra.mxu0 0.0
    %5878 = vmatprep.subr.mxu0 0.0
    %5879 = vmatpush1.msra.mxu0 0.0
    %5880 = vmatprep.subr.mxu0 0.0
    %5881 = vmatpush1.msra.mxu0 0.0
    %5882 = vmatprep.subr.mxu0 0.0
    %5883 = vmatpush1.msra.mxu0 0.0
    %5884 = vmatprep.subr.mxu0 0.0
    %5885 = vmatpush1.msra.mxu0 0.0
    %5886 = vmatprep.subr.mxu0 0.0
    %5887 = vmatpush1.msra.mxu0 0.0
    %5888 = vmatprep.subr.mxu0 0.0
    %5889 = vmatpush1.msra.mxu0 0.0
    %5890 = vmatprep.subr.mxu0 0.0
    %5891 = vmatpush1.msra.mxu0 0.0
    %5892 = vmatprep.subr.mxu0 0.0
    %5893 = vmatpush1.msra.mxu0 0.0
    %5894 = vmatprep.mubr.f32.mxu0 0.0
    %v5895 = vand.u32 %v5735, 4294901760
    %5896 = vmatmul.mubr.f32.gmra.mrb[0].mxu0 %v5895
    %v5897 = vpop.f32.mrb[0].mxu0
    %v5898 = vadd.f32 %v5812, %v5897
    %v5899 = vpop.f32.mrb[0].mxu0
    %5900 = vdwg.mxu0
    %5901 = vmatprep.subr.mxu0 0.0
    %v5902 = vand.u32 %v5716, 4294901760
    %v5903 = vsub.f32 %v5716, %v5902
    %5904 = vmatpush1.msra.mxu0 %v5903
    %5905 = vmatprep.subr.mxu0 0.0
    %v5906 = vand.u32 %v5721, 4294901760
    %v5907 = vsub.f32 %v5721, %v5906
    %5908 = vmatpush1.msra.mxu0 %v5907
    %5909 = vmatprep.subr.mxu0 0.0
    %v5910 = vand.u32 %v5727, 4294901760
    %v5911 = vsub.f32 %v5727, %v5910
    %5912 = vmatpush1.msra.mxu0 %v5911
    %5913 = vmatprep.subr.mxu0 0.0
    %5914 = vmatpush1.msra.mxu0 0.0
    %5915 = vmatprep.subr.mxu0 0.0
    %5916 = vmatpush1.msra.mxu0 0.0
    %5917 = vmatprep.subr.mxu0 0.0
    %5918 = vmatpush1.msra.mxu0 0.0
    %5919 = vmatprep.subr.mxu0 0.0
    %5920 = vmatpush1.msra.mxu0 0.0
    %5921 = vmatprep.subr.mxu0 0.0
    %5922 = vmatpush1.msra.mxu0 0.0
    %5923 = vmatprep.subr.mxu0 0.0
    %5924 = vmatpush1.msra.mxu0 0.0
    %5925 = vmatprep.subr.mxu0 0.0
    %5926 = vmatpush1.msra.mxu0 0.0
    %5927 = vmatprep.subr.mxu0 0.0
    %5928 = vmatpush1.msra.mxu0 0.0
    %5929 = vmatprep.subr.mxu0 0.0
    %5930 = vmatpush1.msra.mxu0 0.0
    %5931 = vmatprep.subr.mxu0 0.0
    %5932 = vmatpush1.msra.mxu0 0.0
    %5933 = vmatprep.subr.mxu0 0.0
    %5934 = vmatpush1.msra.mxu0 0.0
    %5935 = vmatprep.subr.mxu0 0.0
    %5936 = vmatpush1.msra.mxu0 0.0
    %5937 = vmatprep.subr.mxu0 0.0
    %5938 = vmatpush1.msra.mxu0 0.0
    %5939 = vmatprep.subr.mxu0 0.0
    %5940 = vmatpush1.msra.mxu0 0.0
    %5941 = vmatprep.subr.mxu0 0.0
    %5942 = vmatpush1.msra.mxu0 0.0
    %5943 = vmatprep.subr.mxu0 0.0
    %5944 = vmatpush1.msra.mxu0 0.0
    %5945 = vmatprep.subr.mxu0 0.0
    %5946 = vmatpush1.msra.mxu0 0.0
    %5947 = vmatprep.subr.mxu0 0.0
    %5948 = vmatpush1.msra.mxu0 0.0
    %5949 = vmatprep.subr.mxu0 0.0
    %5950 = vmatpush1.msra.mxu0 0.0
    %5951 = vmatprep.subr.mxu0 0.0
    %5952 = vmatpush1.msra.mxu0 0.0
    %5953 = vmatprep.subr.mxu0 0.0
    %5954 = vmatpush1.msra.mxu0 0.0
    %5955 = vmatprep.subr.mxu0 0.0
    %5956 = vmatpush1.msra.mxu0 0.0
    %5957 = vmatprep.subr.mxu0 0.0
    %5958 = vmatpush1.msra.mxu0 0.0
    %5959 = vmatprep.subr.mxu0 0.0
    %5960 = vmatpush1.msra.mxu0 0.0
    %5961 = vmatprep.subr.mxu0 0.0
    %5962 = vmatpush1.msra.mxu0 0.0
    %5963 = vmatprep.subr.mxu0 0.0
    %5964 = vmatpush1.msra.mxu0 0.0
    %5965 = vmatprep.subr.mxu0 0.0
    %5966 = vmatpush1.msra.mxu0 0.0
    %5967 = vmatprep.subr.mxu0 0.0
    %5968 = vmatpush1.msra.mxu0 0.0
    %5969 = vmatprep.subr.mxu0 0.0
    %5970 = vmatpush1.msra.mxu0 0.0
    %5971 = vmatprep.mubr.f32.mxu0 0.0
    %v5972 = vand.u32 %v5735, 4294901760
    %v5973 = vsub.f32 %v5735, %v5972
    %5974 = vmatmul.mubr.f32.gmra.mrb[0].mxu0 %v5973
    %v5975 = vpop.f32.mrb[0].mxu0
    %v5976 = vadd.f32 %v5898, %v5975
    %v5977 = vpop.f32.mrb[0].mxu0
    %5978 = vdwg.mxu0
    %5979 = vmatprep.subr.mxu0 0.0
    %v5980 = vand.u32 %v5716, 4294901760
    %5981 = vmatpush1.msra.mxu0 %v5980
    %5982 = vmatprep.subr.mxu0 0.0
    %v5983 = vand.u32 %v5721, 4294901760
    %5984 = vmatpush1.msra.mxu0 %v5983
    %5985 = vmatprep.subr.mxu0 0.0
    %v5986 = vand.u32 %v5727, 4294901760
    %5987 = vmatpush1.msra.mxu0 %v5986
    %5988 = vmatprep.subr.mxu0 0.0
    %5989 = vmatpush1.msra.mxu0 0.0
    %5990 = vmatprep.subr.mxu0 0.0
    %5991 = vmatpush1.msra.mxu0 0.0
    %5992 = vmatprep.subr.mxu0 0.0
    %5993 = vmatpush1.msra.mxu0 0.0
    %5994 = vmatprep.subr.mxu0 0.0
    %5995 = vmatpush1.msra.mxu0 0.0
    %5996 = vmatprep.subr.mxu0 0.0
    %5997 = vmatpush1.msra.mxu0 0.0
    %5998 = vmatprep.subr.mxu0 0.0
    %5999 = vmatpush1.msra.mxu0 0.0
    %6000 = vmatprep.subr.mxu0 0.0
    %6001 = vmatpush1.msra.mxu0 0.0
    %6002 = vmatprep.subr.mxu0 0.0
    %6003 = vmatpush1.msra.mxu0 0.0
    %6004 = vmatprep.subr.mxu0 0.0
    %6005 = vmatpush1.msra.mxu0 0.0
    %6006 = vmatprep.subr.mxu0 0.0
    %6007 = vmatpush1.msra.mxu0 0.0
    %6008 = vmatprep.subr.mxu0 0.0
    %6009 = vmatpush1.msra.mxu0 0.0
    %6010 = vmatprep.subr.mxu0 0.0
    %6011 = vmatpush1.msra.mxu0 0.0
    %6012 = vmatprep.subr.mxu0 0.0
    %6013 = vmatpush1.msra.mxu0 0.0
    %6014 = vmatprep.subr.mxu0 0.0
    %6015 = vmatpush1.msra.mxu0 0.0
    %6016 = vmatprep.subr.mxu0 0.0
    %6017 = vmatpush1.msra.mxu0 0.0
    %6018 = vmatprep.subr.mxu0 0.0
    %6019 = vmatpush1.msra.mxu0 0.0
    %6020 = vmatprep.subr.mxu0 0.0
    %6021 = vmatpush1.msra.mxu0 0.0
    %6022 = vmatprep.subr.mxu0 0.0
    %6023 = vmatpush1.msra.mxu0 0.0
    %6024 = vmatprep.subr.mxu0 0.0
    %6025 = vmatpush1.msra.mxu0 0.0
    %6026 = vmatprep.subr.mxu0 0.0
    %6027 = vmatpush1.msra.mxu0 0.0
    %6028 = vmatprep.subr.mxu0 0.0
    %6029 = vmatpush1.msra.mxu0 0.0
    %6030 = vmatprep.subr.mxu0 0.0
    %6031 = vmatpush1.msra.mxu0 0.0
    %6032 = vmatprep.subr.mxu0 0.0
    %6033 = vmatpush1.msra.mxu0 0.0
    %6034 = vmatprep.subr.mxu0 0.0
    %6035 = vmatpush1.msra.mxu0 0.0
    %6036 = vmatprep.subr.mxu0 0.0
    %6037 = vmatpush1.msra.mxu0 0.0
    %6038 = vmatprep.subr.mxu0 0.0
    %6039 = vmatpush1.msra.mxu0 0.0
    %6040 = vmatprep.subr.mxu0 0.0
    %6041 = vmatpush1.msra.mxu0 0.0
    %6042 = vmatprep.subr.mxu0 0.0
    %6043 = vmatpush1.msra.mxu0 0.0
    %6044 = vmatprep.subr.mxu0 0.0
    %6045 = vmatpush1.msra.mxu0 0.0
    %6046 = vmatprep.mubr.f32.mxu0 0.0
    %v6047 = vand.u32 %v5735, 4294901760
    %v6048 = vsub.f32 %v5735, %v6047
    %v6049 = vand.u32 %v6048, 4294901760
    %6050 = vmatmul.mubr.f32.gmra.mrb[0].mxu0 %v6049
    %v6051 = vpop.f32.mrb[0].mxu0
    %v6052 = vadd.f32 %v5976, %v6051
    %v6053 = vpop.f32.mrb[0].mxu0
    %6054 = vdwg.mxu0
    %6055 = vmatprep.subr.mxu0 0.0
    %v6056 = vand.u32 %v5716, 4294901760
    %v6057 = vsub.f32 %v5716, %v6056
    %v6058 = vand.u32 %v6057, 4294901760
    %6059 = vmatpush1.msra.mxu0 %v6058
    %6060 = vmatprep.subr.mxu0 0.0
    %v6061 = vand.u32 %v5721, 4294901760
    %v6062 = vsub.f32 %v5721, %v6061
    %v6063 = vand.u32 %v6062, 4294901760
    %6064 = vmatpush1.msra.mxu0 %v6063
    %6065 = vmatprep.subr.mxu0 0.0
    %v6066 = vand.u32 %v5727, 4294901760
    %v6067 = vsub.f32 %v5727, %v6066
    %v6068 = vand.u32 %v6067, 4294901760
    %6069 = vmatpush1.msra.mxu0 %v6068
    %6070 = vmatprep.subr.mxu0 0.0
    %6071 = vmatpush1.msra.mxu0 0.0
    %6072 = vmatprep.subr.mxu0 0.0
    %6073 = vmatpush1.msra.mxu0 0.0
    %6074 = vmatprep.subr.mxu0 0.0
    %6075 = vmatpush1.msra.mxu0 0.0
    %6076 = vmatprep.subr.mxu0 0.0
    %6077 = vmatpush1.msra.mxu0 0.0
    %6078 = vmatprep.subr.mxu0 0.0
    %6079 = vmatpush1.msra.mxu0 0.0
    %6080 = vmatprep.subr.mxu0 0.0
    %6081 = vmatpush1.msra.mxu0 0.0
    %6082 = vmatprep.subr.mxu0 0.0
    %6083 = vmatpush1.msra.mxu0 0.0
    %6084 = vmatprep.subr.mxu0 0.0
    %6085 = vmatpush1.msra.mxu0 0.0
    %6086 = vmatprep.subr.mxu0 0.0
    %6087 = vmatpush1.msra.mxu0 0.0
    %6088 = vmatprep.subr.mxu0 0.0
    %6089 = vmatpush1.msra.mxu0 0.0
    %6090 = vmatprep.subr.mxu0 0.0
    %6091 = vmatpush1.msra.mxu0 0.0
    %6092 = vmatprep.subr.mxu0 0.0
    %6093 = vmatpush1.msra.mxu0 0.0
    %6094 = vmatprep.subr.mxu0 0.0
    %6095 = vmatpush1.msra.mxu0 0.0
    %6096 = vmatprep.subr.mxu0 0.0
    %6097 = vmatpush1.msra.mxu0 0.0
    %6098 = vmatprep.subr.mxu0 0.0
    %6099 = vmatpush1.msra.mxu0 0.0
    %6100 = vmatprep.subr.mxu0 0.0
    %6101 = vmatpush1.msra.mxu0 0.0
    %6102 = vmatprep.subr.mxu0 0.0
    %6103 = vmatpush1.msra.mxu0 0.0
    %6104 = vmatprep.subr.mxu0 0.0
    %6105 = vmatpush1.msra.mxu0 0.0
    %6106 = vmatprep.subr.mxu0 0.0
    %6107 = vmatpush1.msra.mxu0 0.0
    %6108 = vmatprep.subr.mxu0 0.0
    %6109 = vmatpush1.msra.mxu0 0.0
    %6110 = vmatprep.subr.mxu0 0.0
    %6111 = vmatpush1.msra.mxu0 0.0
    %6112 = vmatprep.subr.mxu0 0.0
    %6113 = vmatpush1.msra.mxu0 0.0
    %6114 = vmatprep.subr.mxu0 0.0
    %6115 = vmatpush1.msra.mxu0 0.0
    %6116 = vmatprep.subr.mxu0 0.0
    %6117 = vmatpush1.msra.mxu0 0.0
    %6118 = vmatprep.subr.mxu0 0.0
    %6119 = vmatpush1.msra.mxu0 0.0
    %6120 = vmatprep.subr.mxu0 0.0
    %6121 = vmatpush1.msra.mxu0 0.0
    %6122 = vmatprep.subr.mxu0 0.0
    %6123 = vmatpush1.msra.mxu0 0.0
    %6124 = vmatprep.subr.mxu0 0.0
    %6125 = vmatpush1.msra.mxu0 0.0
    %6126 = vmatprep.subr.mxu0 0.0
    %6127 = vmatpush1.msra.mxu0 0.0
    %6128 = vmatprep.mubr.f32.mxu0 0.0
    %v6129 = vand.u32 %v5735, 4294901760
    %6130 = vmatmul.mubr.f32.gmra.mrb[0].mxu0 %v6129
    %v6131 = vpop.f32.mrb[0].mxu0
    %v6132 = vadd.f32 %v6052, %v6131
    %v6133 = vpop.f32.mrb[0].mxu0
    %6134 = vdwg.mxu0
    %6135 = vmatprep.subr.mxu0 0.0
    %v6136 = vand.u32 %v5716, 4294901760
    %6137 = vmatpush1.msra.mxu0 %v6136
    %6138 = vmatprep.subr.mxu0 0.0
    %v6139 = vand.u32 %v5721, 4294901760
    %6140 = vmatpush1.msra.mxu0 %v6139
    %6141 = vmatprep.subr.mxu0 0.0
    %v6142 = vand.u32 %v5727, 4294901760
    %6143 = vmatpush1.msra.mxu0 %v6142
    %6144 = vmatprep.subr.mxu0 0.0
    %6145 = vmatpush1.msra.mxu0 0.0
    %6146 = vmatprep.subr.mxu0 0.0
    %6147 = vmatpush1.msra.mxu0 0.0
    %6148 = vmatprep.subr.mxu0 0.0
    %6149 = vmatpush1.msra.mxu0 0.0
    %6150 = vmatprep.subr.mxu0 0.0
    %6151 = vmatpush1.msra.mxu0 0.0
    %6152 = vmatprep.subr.mxu0 0.0
    %6153 = vmatpush1.msra.mxu0 0.0
    %6154 = vmatprep.subr.mxu0 0.0
    %6155 = vmatpush1.msra.mxu0 0.0
    %6156 = vmatprep.subr.mxu0 0.0
    %6157 = vmatpush1.msra.mxu0 0.0
    %6158 = vmatprep.subr.mxu0 0.0
    %6159 = vmatpush1.msra.mxu0 0.0
    %6160 = vmatprep.subr.mxu0 0.0
    %6161 = vmatpush1.msra.mxu0 0.0
    %6162 = vmatprep.subr.mxu0 0.0
    %6163 = vmatpush1.msra.mxu0 0.0
    %6164 = vmatprep.subr.mxu0 0.0
    %6165 = vmatpush1.msra.mxu0 0.0
    %6166 = vmatprep.subr.mxu0 0.0
    %6167 = vmatpush1.msra.mxu0 0.0
    %6168 = vmatprep.subr.mxu0 0.0
    %6169 = vmatpush1.msra.mxu0 0.0
    %6170 = vmatprep.subr.mxu0 0.0
    %6171 = vmatpush1.msra.mxu0 0.0
    %6172 = vmatprep.subr.mxu0 0.0
    %6173 = vmatpush1.msra.mxu0 0.0
    %6174 = vmatprep.subr.mxu0 0.0
    %6175 = vmatpush1.msra.mxu0 0.0
    %6176 = vmatprep.subr.mxu0 0.0
    %6177 = vmatpush1.msra.mxu0 0.0
    %6178 = vmatprep.subr.mxu0 0.0
    %6179 = vmatpush1.msra.mxu0 0.0
    %6180 = vmatprep.subr.mxu0 0.0
    %6181 = vmatpush1.msra.mxu0 0.0
    %6182 = vmatprep.subr.mxu0 0.0
    %6183 = vmatpush1.msra.mxu0 0.0
    %6184 = vmatprep.subr.mxu0 0.0
    %6185 = vmatpush1.msra.mxu0 0.0
    %6186 = vmatprep.subr.mxu0 0.0
    %6187 = vmatpush1.msra.mxu0 0.0
    %6188 = vmatprep.subr.mxu0 0.0
    %6189 = vmatpush1.msra.mxu0 0.0
    %6190 = vmatprep.subr.mxu0 0.0
    %6191 = vmatpush1.msra.mxu0 0.0
    %6192 = vmatprep.subr.mxu0 0.0
    %6193 = vmatpush1.msra.mxu0 0.0
    %6194 = vmatprep.subr.mxu0 0.0
    %6195 = vmatpush1.msra.mxu0 0.0
    %6196 = vmatprep.subr.mxu0 0.0
    %6197 = vmatpush1.msra.mxu0 0.0
    %6198 = vmatprep.subr.mxu0 0.0
    %6199 = vmatpush1.msra.mxu0 0.0
    %6200 = vmatprep.subr.mxu0 0.0
    %6201 = vmatpush1.msra.mxu0 0.0
    %6202 = vmatprep.mubr.f32.mxu0 0.0
    %v6203 = vand.u32 %v5735, 4294901760
    %6204 = vmatmul.mubr.f32.gmra.mrb[0].mxu0 %v6203
    %v6205 = vpop.f32.mrb[0].mxu0
    %v6206 = vadd.f32 %v6132, %v6205
    %v6207 = vpop.f32.mrb[0].mxu0
    %6208 = vdwg.mxu0
    %6209 = vmatprep.subr.mxu0 0.0
    %v6210 = vand.u32 %v5717, 4294901760
    %6211 = vmatpush1.msra.mxu0 %v6210
    %6212 = vmatprep.subr.mxu0 0.0
    %v6213 = vand.u32 %v5723, 4294901760
    %6214 = vmatpush1.msra.mxu0 %v6213
    %6215 = vmatprep.subr.mxu0 0.0
    %v6216 = vand.u32 %v5729, 4294901760
    %6217 = vmatpush1.msra.mxu0 %v6216
    %6218 = vmatprep.subr.mxu0 0.0
    %6219 = vmatpush1.msra.mxu0 0.0
    %6220 = vmatprep.subr.mxu0 0.0
    %6221 = vmatpush1.msra.mxu0 0.0
    %6222 = vmatprep.subr.mxu0 0.0
    %6223 = vmatpush1.msra.mxu0 0.0
    %6224 = vmatprep.subr.mxu0 0.0
    %6225 = vmatpush1.msra.mxu0 0.0
    %6226 = vmatprep.subr.mxu0 0.0
    %6227 = vmatpush1.msra.mxu0 0.0
    %6228 = vmatprep.subr.mxu0 0.0
    %6229 = vmatpush1.msra.mxu0 0.0
    %6230 = vmatprep.subr.mxu0 0.0
    %6231 = vmatpush1.msra.mxu0 0.0
    %6232 = vmatprep.subr.mxu0 0.0
    %6233 = vmatpush1.msra.mxu0 0.0
    %6234 = vmatprep.subr.mxu0 0.0
    %6235 = vmatpush1.msra.mxu0 0.0
    %6236 = vmatprep.subr.mxu0 0.0
    %6237 = vmatpush1.msra.mxu0 0.0
    %6238 = vmatprep.subr.mxu0 0.0
    %6239 = vmatpush1.msra.mxu0 0.0
    %6240 = vmatprep.subr.mxu0 0.0
    %6241 = vmatpush1.msra.mxu0 0.0
    %6242 = vmatprep.subr.mxu0 0.0
    %6243 = vmatpush1.msra.mxu0 0.0
    %6244 = vmatprep.subr.mxu0 0.0
    %6245 = vmatpush1.msra.mxu0 0.0
    %6246 = vmatprep.subr.mxu0 0.0
    %6247 = vmatpush1.msra.mxu0 0.0
    %6248 = vmatprep.subr.mxu0 0.0
    %6249 = vmatpush1.msra.mxu0 0.0
    %6250 = vmatprep.subr.mxu0 0.0
    %6251 = vmatpush1.msra.mxu0 0.0
    %6252 = vmatprep.subr.mxu0 0.0
    %6253 = vmatpush1.msra.mxu0 0.0
    %6254 = vmatprep.subr.mxu0 0.0
    %6255 = vmatpush1.msra.mxu0 0.0
    %6256 = vmatprep.subr.mxu0 0.0
    %6257 = vmatpush1.msra.mxu0 0.0
    %6258 = vmatprep.subr.mxu0 0.0
    %6259 = vmatpush1.msra.mxu0 0.0
    %6260 = vmatprep.subr.mxu0 0.0
    %6261 = vmatpush1.msra.mxu0 0.0
    %6262 = vmatprep.subr.mxu0 0.0
    %6263 = vmatpush1.msra.mxu0 0.0
    %6264 = vmatprep.subr.mxu0 0.0
    %6265 = vmatpush1.msra.mxu0 0.0
    %6266 = vmatprep.subr.mxu0 0.0
    %6267 = vmatpush1.msra.mxu0 0.0
    %6268 = vmatprep.subr.mxu0 0.0
    %6269 = vmatpush1.msra.mxu0 0.0
    %6270 = vmatprep.subr.mxu0 0.0
    %6271 = vmatpush1.msra.mxu0 0.0
    %6272 = vmatprep.subr.mxu0 0.0
    %6273 = vmatpush1.msra.mxu0 0.0
    %6274 = vmatprep.subr.mxu0 0.0
    %6275 = vmatpush1.msra.mxu0 0.0
    %6276 = vmatprep.mubr.f32.mxu0 0.0
    %v6277 = vand.u32 %v5735, 4294901760
    %v6278 = vsub.f32 %v5735, %v6277
    %v6279 = vand.u32 %v6278, 4294901760
    %v6280 = vsub.f32 %v6278, %v6279
    %v6281 = vand.u32 %v6280, 4294901760
    %6282 = vmatmul.mubr.f32.gmra.mrb[0].mxu0 %v6281
    %v6283 = vpop.f32.mrb[0].mxu0
    %v6284 = vadd.f32 0.0, %v6283
    %v6285 = vpop.f32.mrb[0].mxu0
    %6286 = vdwg.mxu0
    %6287 = vmatprep.subr.mxu0 0.0
    %v6288 = vand.u32 %v5717, 4294901760
    %v6289 = vsub.f32 %v5717, %v6288
    %v6290 = vand.u32 %v6289, 4294901760
    %v6291 = vsub.f32 %v6289, %v6290
    %v6292 = vand.u32 %v6291, 4294901760
    %6293 = vmatpush1.msra.mxu0 %v6292
    %6294 = vmatprep.subr.mxu0 0.0
    %v6295 = vand.u32 %v5723, 4294901760
    %v6296 = vsub.f32 %v5723, %v6295
    %v6297 = vand.u32 %v6296, 4294901760
    %v6298 = vsub.f32 %v6296, %v6297
    %v6299 = vand.u32 %v6298, 4294901760
    %6300 = vmatpush1.msra.mxu0 %v6299
    %6301 = vmatprep.subr.mxu0 0.0
    %v6302 = vand.u32 %v5729, 4294901760
    %v6303 = vsub.f32 %v5729, %v6302
    %v6304 = vand.u32 %v6303, 4294901760
    %v6305 = vsub.f32 %v6303, %v6304
    %v6306 = vand.u32 %v6305, 4294901760
    %6307 = vmatpush1.msra.mxu0 %v6306
    %6308 = vmatprep.subr.mxu0 0.0
    %6309 = vmatpush1.msra.mxu0 0.0
    %6310 = vmatprep.subr.mxu0 0.0
    %6311 = vmatpush1.msra.mxu0 0.0
    %6312 = vmatprep.subr.mxu0 0.0
    %6313 = vmatpush1.msra.mxu0 0.0
    %6314 = vmatprep.subr.mxu0 0.0
    %6315 = vmatpush1.msra.mxu0 0.0
    %6316 = vmatprep.subr.mxu0 0.0
    %6317 = vmatpush1.msra.mxu0 0.0
    %6318 = vmatprep.subr.mxu0 0.0
    %6319 = vmatpush1.msra.mxu0 0.0
    %6320 = vmatprep.subr.mxu0 0.0
    %6321 = vmatpush1.msra.mxu0 0.0
    %6322 = vmatprep.subr.mxu0 0.0
    %6323 = vmatpush1.msra.mxu0 0.0
    %6324 = vmatprep.subr.mxu0 0.0
    %6325 = vmatpush1.msra.mxu0 0.0
    %6326 = vmatprep.subr.mxu0 0.0
    %6327 = vmatpush1.msra.mxu0 0.0
    %6328 = vmatprep.subr.mxu0 0.0
    %6329 = vmatpush1.msra.mxu0 0.0
    %6330 = vmatprep.subr.mxu0 0.0
    %6331 = vmatpush1.msra.mxu0 0.0
    %6332 = vmatprep.subr.mxu0 0.0
    %6333 = vmatpush1.msra.mxu0 0.0
    %6334 = vmatprep.subr.mxu0 0.0
    %6335 = vmatpush1.msra.mxu0 0.0
    %6336 = vmatprep.subr.mxu0 0.0
    %6337 = vmatpush1.msra.mxu0 0.0
    %6338 = vmatprep.subr.mxu0 0.0
    %6339 = vmatpush1.msra.mxu0 0.0
    %6340 = vmatprep.subr.mxu0 0.0
    %6341 = vmatpush1.msra.mxu0 0.0
    %6342 = vmatprep.subr.mxu0 0.0
    %6343 = vmatpush1.msra.mxu0 0.0
    %6344 = vmatprep.subr.mxu0 0.0
    %6345 = vmatpush1.msra.mxu0 0.0
    %6346 = vmatprep.subr.mxu0 0.0
    %6347 = vmatpush1.msra.mxu0 0.0
    %6348 = vmatprep.subr.mxu0 0.0
    %6349 = vmatpush1.msra.mxu0 0.0
    %6350 = vmatprep.subr.mxu0 0.0
    %6351 = vmatpush1.msra.mxu0 0.0
    %6352 = vmatprep.subr.mxu0 0.0
    %6353 = vmatpush1.msra.mxu0 0.0
    %6354 = vmatprep.subr.mxu0 0.0
    %6355 = vmatpush1.msra.mxu0 0.0
    %6356 = vmatprep.subr.mxu0 0.0
    %6357 = vmatpush1.msra.mxu0 0.0
    %6358 = vmatprep.subr.mxu0 0.0
    %6359 = vmatpush1.msra.mxu0 0.0
    %6360 = vmatprep.subr.mxu0 0.0
    %6361 = vmatpush1.msra.mxu0 0.0
    %6362 = vmatprep.subr.mxu0 0.0
    %6363 = vmatpush1.msra.mxu0 0.0
    %6364 = vmatprep.subr.mxu0 0.0
    %6365 = vmatpush1.msra.mxu0 0.0
    %6366 = vmatprep.mubr.f32.mxu0 0.0
    %v6367 = vand.u32 %v5735, 4294901760
    %6368 = vmatmul.mubr.f32.gmra.mrb[0].mxu0 %v6367
    %v6369 = vpop.f32.mrb[0].mxu0
    %v6370 = vadd.f32 %v6284, %v6369
    %v6371 = vpop.f32.mrb[0].mxu0
    %6372 = vdwg.mxu0
    %6373 = vmatprep.subr.mxu0 0.0
    %v6374 = vand.u32 %v5717, 4294901760
    %v6375 = vsub.f32 %v5717, %v6374
    %6376 = vmatpush1.msra.mxu0 %v6375
    %6377 = vmatprep.subr.mxu0 0.0
    %v6378 = vand.u32 %v5723, 4294901760
    %v6379 = vsub.f32 %v5723, %v6378
    %6380 = vmatpush1.msra.mxu0 %v6379
    %6381 = vmatprep.subr.mxu0 0.0
    %v6382 = vand.u32 %v5729, 4294901760
    %v6383 = vsub.f32 %v5729, %v6382
    %6384 = vmatpush1.msra.mxu0 %v6383
    %6385 = vmatprep.subr.mxu0 0.0
    %6386 = vmatpush1.msra.mxu0 0.0
    %6387 = vmatprep.subr.mxu0 0.0
    %6388 = vmatpush1.msra.mxu0 0.0
    %6389 = vmatprep.subr.mxu0 0.0
    %6390 = vmatpush1.msra.mxu0 0.0
    %6391 = vmatprep.subr.mxu0 0.0
    %6392 = vmatpush1.msra.mxu0 0.0
    %6393 = vmatprep.subr.mxu0 0.0
    %6394 = vmatpush1.msra.mxu0 0.0
    %6395 = vmatprep.subr.mxu0 0.0
    %6396 = vmatpush1.msra.mxu0 0.0
    %6397 = vmatprep.subr.mxu0 0.0
    %6398 = vmatpush1.msra.mxu0 0.0
    %6399 = vmatprep.subr.mxu0 0.0
    %6400 = vmatpush1.msra.mxu0 0.0
    %6401 = vmatprep.subr.mxu0 0.0
    %6402 = vmatpush1.msra.mxu0 0.0
    %6403 = vmatprep.subr.mxu0 0.0
    %6404 = vmatpush1.msra.mxu0 0.0
    %6405 = vmatprep.subr.mxu0 0.0
    %6406 = vmatpush1.msra.mxu0 0.0
    %6407 = vmatprep.subr.mxu0 0.0
    %6408 = vmatpush1.msra.mxu0 0.0
    %6409 = vmatprep.subr.mxu0 0.0
    %6410 = vmatpush1.msra.mxu0 0.0
    %6411 = vmatprep.subr.mxu0 0.0
    %6412 = vmatpush1.msra.mxu0 0.0
    %6413 = vmatprep.subr.mxu0 0.0
    %6414 = vmatpush1.msra.mxu0 0.0
    %6415 = vmatprep.subr.mxu0 0.0
    %6416 = vmatpush1.msra.mxu0 0.0
    %6417 = vmatprep.subr.mxu0 0.0
    %6418 = vmatpush1.msra.mxu0 0.0
    %6419 = vmatprep.subr.mxu0 0.0
    %6420 = vmatpush1.msra.mxu0 0.0
    %6421 = vmatprep.subr.mxu0 0.0
    %6422 = vmatpush1.msra.mxu0 0.0
    %6423 = vmatprep.subr.mxu0 0.0
    %6424 = vmatpush1.msra.mxu0 0.0
    %6425 = vmatprep.subr.mxu0 0.0
    %6426 = vmatpush1.msra.mxu0 0.0
    %6427 = vmatprep.subr.mxu0 0.0
    %6428 = vmatpush1.msra.mxu0 0.0
    %6429 = vmatprep.subr.mxu0 0.0
    %6430 = vmatpush1.msra.mxu0 0.0
    %6431 = vmatprep.subr.mxu0 0.0
    %6432 = vmatpush1.msra.mxu0 0.0
    %6433 = vmatprep.subr.mxu0 0.0
    %6434 = vmatpush1.msra.mxu0 0.0
    %6435 = vmatprep.subr.mxu0 0.0
    %6436 = vmatpush1.msra.mxu0 0.0
    %6437 = vmatprep.subr.mxu0 0.0
    %6438 = vmatpush1.msra.mxu0 0.0
    %6439 = vmatprep.subr.mxu0 0.0
    %6440 = vmatpush1.msra.mxu0 0.0
    %6441 = vmatprep.subr.mxu0 0.0
    %6442 = vmatpush1.msra.mxu0 0.0
    %6443 = vmatprep.mubr.f32.mxu0 0.0
    %v6444 = vand.u32 %v5735, 4294901760
    %v6445 = vsub.f32 %v5735, %v6444
    %6446 = vmatmul.mubr.f32.gmra.mrb[0].mxu0 %v6445
    %v6447 = vpop.f32.mrb[0].mxu0
    %v6448 = vadd.f32 %v6370, %v6447
    %v6449 = vpop.f32.mrb[0].mxu0
    %6450 = vdwg.mxu0
    %6451 = vmatprep.subr.mxu0 0.0
    %v6452 = vand.u32 %v5717, 4294901760
    %6453 = vmatpush1.msra.mxu0 %v6452
    %6454 = vmatprep.subr.mxu0 0.0
    %v6455 = vand.u32 %v5723, 4294901760
    %6456 = vmatpush1.msra.mxu0 %v6455
    %6457 = vmatprep.subr.mxu0 0.0
    %v6458 = vand.u32 %v5729, 4294901760
    %6459 = vmatpush1.msra.mxu0 %v6458
    %6460 = vmatprep.subr.mxu0 0.0
    %6461 = vmatpush1.msra.mxu0 0.0
    %6462 = vmatprep.subr.mxu0 0.0
    %6463 = vmatpush1.msra.mxu0 0.0
    %6464 = vmatprep.subr.mxu0 0.0
    %6465 = vmatpush1.msra.mxu0 0.0
    %6466 = vmatprep.subr.mxu0 0.0
    %6467 = vmatpush1.msra.mxu0 0.0
    %6468 = vmatprep.subr.mxu0 0.0
    %6469 = vmatpush1.msra.mxu0 0.0
    %6470 = vmatprep.subr.mxu0 0.0
    %6471 = vmatpush1.msra.mxu0 0.0
    %6472 = vmatprep.subr.mxu0 0.0
    %6473 = vmatpush1.msra.mxu0 0.0
    %6474 = vmatprep.subr.mxu0 0.0
    %6475 = vmatpush1.msra.mxu0 0.0
    %6476 = vmatprep.subr.mxu0 0.0
    %6477 = vmatpush1.msra.mxu0 0.0
    %6478 = vmatprep.subr.mxu0 0.0
    %6479 = vmatpush1.msra.mxu0 0.0
    %6480 = vmatprep.subr.mxu0 0.0
    %6481 = vmatpush1.msra.mxu0 0.0
    %6482 = vmatprep.subr.mxu0 0.0
    %6483 = vmatpush1.msra.mxu0 0.0
    %6484 = vmatprep.subr.mxu0 0.0
    %6485 = vmatpush1.msra.mxu0 0.0
    %6486 = vmatprep.subr.mxu0 0.0
    %6487 = vmatpush1.msra.mxu0 0.0
    %6488 = vmatprep.subr.mxu0 0.0
    %6489 = vmatpush1.msra.mxu0 0.0
    %6490 = vmatprep.subr.mxu0 0.0
    %6491 = vmatpush1.msra.mxu0 0.0
    %6492 = vmatprep.subr.mxu0 0.0
    %6493 = vmatpush1.msra.mxu0 0.0
    %6494 = vmatprep.subr.mxu0 0.0
    %6495 = vmatpush1.msra.mxu0 0.0
    %6496 = vmatprep.subr.mxu0 0.0
    %6497 = vmatpush1.msra.mxu0 0.0
    %6498 = vmatprep.subr.mxu0 0.0
    %6499 = vmatpush1.msra.mxu0 0.0
    %6500 = vmatprep.subr.mxu0 0.0
    %6501 = vmatpush1.msra.mxu0 0.0
    %6502 = vmatprep.subr.mxu0 0.0
    %6503 = vmatpush1.msra.mxu0 0.0
    %6504 = vmatprep.subr.mxu0 0.0
    %6505 = vmatpush1.msra.mxu0 0.0
    %6506 = vmatprep.subr.mxu0 0.0
    %6507 = vmatpush1.msra.mxu0 0.0
    %6508 = vmatprep.subr.mxu0 0.0
    %6509 = vmatpush1.msra.mxu0 0.0
    %6510 = vmatprep.subr.mxu0 0.0
    %6511 = vmatpush1.msra.mxu0 0.0
    %6512 = vmatprep.subr.mxu0 0.0
    %6513 = vmatpush1.msra.mxu0 0.0
    %6514 = vmatprep.subr.mxu0 0.0
    %6515 = vmatpush1.msra.mxu0 0.0
    %6516 = vmatprep.subr.mxu0 0.0
    %6517 = vmatpush1.msra.mxu0 0.0
    %6518 = vmatprep.mubr.f32.mxu0 0.0
    %v6519 = vand.u32 %v5735, 4294901760
    %v6520 = vsub.f32 %v5735, %v6519
    %v6521 = vand.u32 %v6520, 4294901760
    %6522 = vmatmul.mubr.f32.gmra.mrb[0].mxu0 %v6521
    %v6523 = vpop.f32.mrb[0].mxu0
    %v6524 = vadd.f32 %v6448, %v6523
    %v6525 = vpop.f32.mrb[0].mxu0
    %6526 = vdwg.mxu0
    %6527 = vmatprep.subr.mxu0 0.0
    %v6528 = vand.u32 %v5717, 4294901760
    %v6529 = vsub.f32 %v5717, %v6528
    %v6530 = vand.u32 %v6529, 4294901760
    %6531 = vmatpush1.msra.mxu0 %v6530
    %6532 = vmatprep.subr.mxu0 0.0
    %v6533 = vand.u32 %v5723, 4294901760
    %v6534 = vsub.f32 %v5723, %v6533
    %v6535 = vand.u32 %v6534, 4294901760
    %6536 = vmatpush1.msra.mxu0 %v6535
    %6537 = vmatprep.subr.mxu0 0.0
    %v6538 = vand.u32 %v5729, 4294901760
    %v6539 = vsub.f32 %v5729, %v6538
    %v6540 = vand.u32 %v6539, 4294901760
    %6541 = vmatpush1.msra.mxu0 %v6540
    %6542 = vmatprep.subr.mxu0 0.0
    %6543 = vmatpush1.msra.mxu0 0.0
    %6544 = vmatprep.subr.mxu0 0.0
    %6545 = vmatpush1.msra.mxu0 0.0
    %6546 = vmatprep.subr.mxu0 0.0
    %6547 = vmatpush1.msra.mxu0 0.0
    %6548 = vmatprep.subr.mxu0 0.0
    %6549 = vmatpush1.msra.mxu0 0.0
    %6550 = vmatprep.subr.mxu0 0.0
    %6551 = vmatpush1.msra.mxu0 0.0
    %6552 = vmatprep.subr.mxu0 0.0
    %6553 = vmatpush1.msra.mxu0 0.0
    %6554 = vmatprep.subr.mxu0 0.0
    %6555 = vmatpush1.msra.mxu0 0.0
    %6556 = vmatprep.subr.mxu0 0.0
    %6557 = vmatpush1.msra.mxu0 0.0
    %6558 = vmatprep.subr.mxu0 0.0
    %6559 = vmatpush1.msra.mxu0 0.0
    %6560 = vmatprep.subr.mxu0 0.0
    %6561 = vmatpush1.msra.mxu0 0.0
    %6562 = vmatprep.subr.mxu0 0.0
    %6563 = vmatpush1.msra.mxu0 0.0
    %6564 = vmatprep.subr.mxu0 0.0
    %6565 = vmatpush1.msra.mxu0 0.0
    %6566 = vmatprep.subr.mxu0 0.0
    %6567 = vmatpush1.msra.mxu0 0.0
    %6568 = vmatprep.subr.mxu0 0.0
    %6569 = vmatpush1.msra.mxu0 0.0
    %6570 = vmatprep.subr.mxu0 0.0
    %6571 = vmatpush1.msra.mxu0 0.0
    %6572 = vmatprep.subr.mxu0 0.0
    %6573 = vmatpush1.msra.mxu0 0.0
    %6574 = vmatprep.subr.mxu0 0.0
    %6575 = vmatpush1.msra.mxu0 0.0
    %6576 = vmatprep.subr.mxu0 0.0
    %6577 = vmatpush1.msra.mxu0 0.0
    %6578 = vmatprep.subr.mxu0 0.0
    %6579 = vmatpush1.msra.mxu0 0.0
    %6580 = vmatprep.subr.mxu0 0.0
    %6581 = vmatpush1.msra.mxu0 0.0
    %6582 = vmatprep.subr.mxu0 0.0
    %6583 = vmatpush1.msra.mxu0 0.0
    %6584 = vmatprep.subr.mxu0 0.0
    %6585 = vmatpush1.msra.mxu0 0.0
    %6586 = vmatprep.subr.mxu0 0.0
    %6587 = vmatpush1.msra.mxu0 0.0
    %6588 = vmatprep.subr.mxu0 0.0
    %6589 = vmatpush1.msra.mxu0 0.0
    %6590 = vmatprep.subr.mxu0 0.0
    %6591 = vmatpush1.msra.mxu0 0.0
    %6592 = vmatprep.subr.mxu0 0.0
    %6593 = vmatpush1.msra.mxu0 0.0
    %6594 = vmatprep.subr.mxu0 0.0
    %6595 = vmatpush1.msra.mxu0 0.0
    %6596 = vmatprep.subr.mxu0 0.0
    %6597 = vmatpush1.msra.mxu0 0.0
    %6598 = vmatprep.subr.mxu0 0.0
    %6599 = vmatpush1.msra.mxu0 0.0
    %6600 = vmatprep.mubr.f32.mxu0 0.0
    %v6601 = vand.u32 %v5735, 4294901760
    %6602 = vmatmul.mubr.f32.gmra.mrb[0].mxu0 %v6601
    %v6603 = vpop.f32.mrb[0].mxu0
    %v6604 = vadd.f32 %v6524, %v6603
    %v6605 = vpop.f32.mrb[0].mxu0
    %6606 = vdwg.mxu0
    %6607 = vmatprep.subr.mxu0 0.0
    %v6608 = vand.u32 %v5717, 4294901760
    %6609 = vmatpush1.msra.mxu0 %v6608
    %6610 = vmatprep.subr.mxu0 0.0
    %v6611 = vand.u32 %v5723, 4294901760
    %6612 = vmatpush1.msra.mxu0 %v6611
    %6613 = vmatprep.subr.mxu0 0.0
    %v6614 = vand.u32 %v5729, 4294901760
    %6615 = vmatpush1.msra.mxu0 %v6614
    %6616 = vmatprep.subr.mxu0 0.0
    %6617 = vmatpush1.msra.mxu0 0.0
    %6618 = vmatprep.subr.mxu0 0.0
    %6619 = vmatpush1.msra.mxu0 0.0
    %6620 = vmatprep.subr.mxu0 0.0
    %6621 = vmatpush1.msra.mxu0 0.0
    %6622 = vmatprep.subr.mxu0 0.0
    %6623 = vmatpush1.msra.mxu0 0.0
    %6624 = vmatprep.subr.mxu0 0.0
    %6625 = vmatpush1.msra.mxu0 0.0
    %6626 = vmatprep.subr.mxu0 0.0
    %6627 = vmatpush1.msra.mxu0 0.0
    %6628 = vmatprep.subr.mxu0 0.0
    %6629 = vmatpush1.msra.mxu0 0.0
    %6630 = vmatprep.subr.mxu0 0.0
    %6631 = vmatpush1.msra.mxu0 0.0
    %6632 = vmatprep.subr.mxu0 0.0
    %6633 = vmatpush1.msra.mxu0 0.0
    %6634 = vmatprep.subr.mxu0 0.0
    %6635 = vmatpush1.msra.mxu0 0.0
    %6636 = vmatprep.subr.mxu0 0.0
    %6637 = vmatpush1.msra.mxu0 0.0
    %6638 = vmatprep.subr.mxu0 0.0
    %6639 = vmatpush1.msra.mxu0 0.0
    %6640 = vmatprep.subr.mxu0 0.0
    %6641 = vmatpush1.msra.mxu0 0.0
    %6642 = vmatprep.subr.mxu0 0.0
    %6643 = vmatpush1.msra.mxu0 0.0
    %6644 = vmatprep.subr.mxu0 0.0
    %6645 = vmatpush1.msra.mxu0 0.0
    %6646 = vmatprep.subr.mxu0 0.0
    %6647 = vmatpush1.msra.mxu0 0.0
    %6648 = vmatprep.subr.mxu0 0.0
    %6649 = vmatpush1.msra.mxu0 0.0
    %6650 = vmatprep.subr.mxu0 0.0
    %6651 = vmatpush1.msra.mxu0 0.0
    %6652 = vmatprep.subr.mxu0 0.0
    %6653 = vmatpush1.msra.mxu0 0.0
    %6654 = vmatprep.subr.mxu0 0.0
    %6655 = vmatpush1.msra.mxu0 0.0
    %6656 = vmatprep.subr.mxu0 0.0
    %6657 = vmatpush1.msra.mxu0 0.0
    %6658 = vmatprep.subr.mxu0 0.0
    %6659 = vmatpush1.msra.mxu0 0.0
    %6660 = vmatprep.subr.mxu0 0.0
    %6661 = vmatpush1.msra.mxu0 0.0
    %6662 = vmatprep.subr.mxu0 0.0
    %6663 = vmatpush1.msra.mxu0 0.0
    %6664 = vmatprep.subr.mxu0 0.0
    %6665 = vmatpush1.msra.mxu0 0.0
    %6666 = vmatprep.subr.mxu0 0.0
    %6667 = vmatpush1.msra.mxu0 0.0
    %6668 = vmatprep.subr.mxu0 0.0
    %6669 = vmatpush1.msra.mxu0 0.0
    %6670 = vmatprep.subr.mxu0 0.0
    %6671 = vmatpush1.msra.mxu0 0.0
    %6672 = vmatprep.subr.mxu0 0.0
    %6673 = vmatpush1.msra.mxu0 0.0
    %6674 = vmatprep.mubr.f32.mxu0 0.0
    %v6675 = vand.u32 %v5735, 4294901760
    %6676 = vmatmul.mubr.f32.gmra.mrb[0].mxu0 %v6675
    %v6677 = vpop.f32.mrb[0].mxu0
    %v6678 = vadd.f32 %v6604, %v6677
    %v6679 = vpop.f32.mrb[0].mxu0
    %6680 = vdwg.mxu0
    %v6681 = vrot.slane %v5702, 6
    %v6682 = vrot.slane %v5703, 6
    %vm6685 = vcmask 1041408
    %v6686 = vsel %vm6685, 0.0, %v6681
    %v6687 = vsel %vm6685, 0.0, %v6682
    %v6688 = vsel %vm6685, %v6681, 0.0
    %v6689 = vsel %vm6685, %v6682, 0.0
    %vm6694 = vcmask 1046528
    %v6695 = vrot.slane %v6686, 1
    %v6696 = vrot.slane %v6688, 1
    %v6697 = vsel %vm6694, %v6695, %v6696
    %v6698 = vrot.slane %v6687, 1
    %v6699 = vrot.slane %v6689, 1
    %v6700 = vsel %vm6694, %v6698, %v6699
    %6701 = vrot.lane.b32.xlu0 %v6697, 64
    %v6702 = vpop.permute.xlu0 %6701
    %6703 = vrot.lane.b32.xlu0 %v6700, 64
    %v6704 = vpop.permute.xlu0 %6703
    %vm6707 = vcmask 1045504
    %v6708 = vrot.slane %v6686, 2
    %v6709 = vrot.slane %v6688, 2
    %v6710 = vsel %vm6707, %v6708, %v6709
    %v6711 = vrot.slane %v6687, 2
    %v6712 = vrot.slane %v6689, 2
    %v6713 = vsel %vm6707, %v6711, %v6712
    %vm6716 = vcmask 1044480
    %v6717 = vrot.slane %v6686, 3
    %v6718 = vrot.slane %v6688, 3
    %v6719 = vsel %vm6716, %v6717, %v6718
    %v6720 = vrot.slane %v6687, 3
    %v6721 = vrot.slane %v6689, 3
    %v6722 = vsel %vm6716, %v6720, %v6721
    %6723 = vrot.lane.b32.xlu0 %v6719, 64
    %v6724 = vpop.permute.xlu0 %6723
    %6725 = vrot.lane.b32.xlu0 %v6722, 64
    %v6726 = vpop.permute.xlu0 %6725
    %vm6729 = vcmask 1043456
    %v6730 = vrot.slane %v6686, 4
    %v6731 = vrot.slane %v6688, 4
    %v6732 = vsel %vm6729, %v6730, %v6731
    %v6733 = vrot.slane %v6687, 4
    %v6734 = vrot.slane %v6689, 4
    %v6735 = vsel %vm6729, %v6733, %v6734
    %vm6738 = vcmask 1042432
    %v6739 = vrot.slane %v6686, 5
    %v6740 = vrot.slane %v6688, 5
    %v6741 = vsel %vm6738, %v6739, %v6740
    %v6742 = vrot.slane %v6687, 5
    %v6743 = vrot.slane %v6689, 5
    %v6744 = vsel %vm6738, %v6742, %v6743
    %6745 = vrot.lane.b32.xlu0 %v6741, 64
    %v6746 = vpop.permute.xlu0 %6745
    %6747 = vrot.lane.b32.xlu0 %v6744, 64
    %v6748 = vpop.permute.xlu0 %6747
    %vm6751 = vcmask 523264
    %v6752 = vsel %vm6751, %v6686, %v6702
    %v6753 = vsel %vm6751, %v6687, %v6704
    %v6754 = vsel %vm6751, %v6710, %v6724
    %v6755 = vsel %vm6751, %v6713, %v6726
    %v6756 = vsel %vm6751, %v6732, %v6746
    %v6757 = vsel %vm6751, %v6735, %v6748
    %v6758 = vpack.c.bf16 %v6753, %v6752
    %v6759 = vpack.c.bf16 %v6755, %v6754
    %v6760 = vpack.c.bf16 %v6757, %v6756
    %v6761 = vunpack.c.l.bf16 %v6758
    %v6762 = vunpack.c.l.bf16 %v6759
    %v6763 = vunpack.c.l.bf16 %v6760
    %v6764 = vunpack.c.h.bf16 %v6758
    %v6765 = vunpack.c.h.bf16 %v6759
    %v6766 = vunpack.c.h.bf16 %v6760
    %v6767 = vsub.f32 %v6752, %v6761
    %v6768 = vsub.f32 %v6754, %v6762
    %v6769 = vsub.f32 %v6756, %v6763
    %v6770 = vsub.f32 %v6753, %v6764
    %v6771 = vsub.f32 %v6755, %v6765
    %v6772 = vsub.f32 %v6757, %v6766
    %v6773 = vpack.c.bf16 %v6770, %v6767
    %v6774 = vpack.c.bf16 %v6771, %v6768
    %v6775 = vpack.c.bf16 %v6772, %v6769
    %v6776 = vld [vmem:[%s4] sm:$0xf]
    %v6777 = vld [vmem:[%s4 + $0x4] sm:$0xf]
    %v6778 = vld [vmem:[%s4 + $0x8] sm:$0xf]
    %v6779 = vld [vmem:[%s4 + $0xc] sm:$0xf]
    %v6780 = vld [vmem:[%s4 + $0x10] sm:$0xf]
    %v6781 = vld [vmem:[%s4 + $0x14] sm:$0xf]
    %v6782 = vld [vmem:[%s4 + $0x18] sm:$0xf]
    %v6783 = vld [vmem:[%s4 + $0x1c] sm:$0xf]
    %v6784 = vld [vmem:[%s4 + $0x20] sm:$0xf]
    %v6785 = vld [vmem:[%s4 + $0x24] sm:$0xf]
    %v6786 = vld [vmem:[%s4 + $0x28] sm:$0xf]
    %v6787 = vld [vmem:[%s4 + $0x2c] sm:$0xf]
    %v6788 = vld [vmem:[%s4 + $0x30] sm:$0xf]
    %v6789 = vld [vmem:[%s4 + $0x34] sm:$0xf]
    %v6790 = vld [vmem:[%s4 + $0x38] sm:$0xf]
    %v6791 = vld [vmem:[%s4 + $0x3c] sm:$0xf]
    %v6792 = vld [vmem:[%s4 + $0x40] sm:$0xf]
    %v6793 = vld [vmem:[%s4 + $0x44] sm:$0xf]
    %v6794 = vld [vmem:[%s4 + $0x48] sm:$0xf]
    %v6795 = vld [vmem:[%s4 + $0x4c] sm:$0xf]
    %v6796 = vld [vmem:[%s4 + $0x50] sm:$0xf]
    %v6797 = vld [vmem:[%s4 + $0x54] sm:$0xf]
    %v6798 = vld [vmem:[%s4 + $0x58] sm:$0xf]
    %v6799 = vld [vmem:[%s4 + $0x5c] sm:$0xf]
    %v6800 = vld [vmem:[%s4 + $0x60] sm:$0xf]
    %v6801 = vld [vmem:[%s4 + $0x64] sm:$0xf]
    %v6802 = vld [vmem:[%s4 + $0x68] sm:$0xf]
    %v6803 = vld [vmem:[%s4 + $0x6c] sm:$0xf]
    %v6804 = vld [vmem:[%s4 + $0x70] sm:$0xf]
    %v6805 = vld [vmem:[%s4 + $0x74] sm:$0xf]
    %v6806 = vld [vmem:[%s4 + $0x78] sm:$0xf]
    %v6807 = vld [vmem:[%s4 + $0x7c] sm:$0xf]
    %v6808 = vld [vmem:[%s4 + $0x80] sm:$0xf]
    %v6809 = vld [vmem:[%s4 + $0x84] sm:$0xf]
    %v6810 = vld [vmem:[%s4 + $0x88] sm:$0xf]
    %v6811 = vld [vmem:[%s4 + $0x8c] sm:$0xf]
    %v6812 = vld [vmem:[%s4 + $0x90] sm:$0xf]
    %v6813 = vld [vmem:[%s4 + $0x94] sm:$0xf]
    %v6814 = vld [vmem:[%s4 + $0x98] sm:$0xf]
    %v6815 = vld [vmem:[%s4 + $0x9c] sm:$0xf]
    %v6816 = vld [vmem:[%s4 + $0xa0] sm:$0xf]
    %v6817 = vld [vmem:[%s4 + $0xa4] sm:$0xf]
    %v6818 = vld [vmem:[%s4 + $0xa8] sm:$0xf]
    %v6819 = vld [vmem:[%s4 + $0xac] sm:$0xf]
    %v6820 = vld [vmem:[%s4 + $0xb0] sm:$0xf]
    %v6821 = vld [vmem:[%s4 + $0xb4] sm:$0xf]
    %v6822 = vld [vmem:[%s4 + $0xb8] sm:$0xf]
    %v6823 = vld [vmem:[%s4 + $0xbc] sm:$0xf]
    %v6824 = vld [vmem:[%s4 + $0xc0] sm:$0xf]
    %v6825 = vld [vmem:[%s4 + $0xc4] sm:$0xf]
    %v6826 = vld [vmem:[%s4 + $0xc8] sm:$0xf]
    %v6827 = vld [vmem:[%s4 + $0xcc] sm:$0xf]
    %v6828 = vld [vmem:[%s4 + $0xd0] sm:$0xf]
    %v6829 = vld [vmem:[%s4 + $0xd4] sm:$0xf]
    %v6830 = vld [vmem:[%s4 + $0xd8] sm:$0xf]
    %v6831 = vld [vmem:[%s4 + $0xdc] sm:$0xf]
    %v6832 = vld [vmem:[%s4 + $0xe0] sm:$0xf]
    %v6833 = vld [vmem:[%s4 + $0xe4] sm:$0xf]
    %v6834 = vld [vmem:[%s4 + $0xe8] sm:$0xf]
    %v6835 = vld [vmem:[%s4 + $0xec] sm:$0xf]
    %v6836 = vld [vmem:[%s4 + $0xf0] sm:$0xf]
    %v6837 = vld [vmem:[%s4 + $0xf4] sm:$0xf]
    %v6838 = vld [vmem:[%s4 + $0xf8] sm:$0xf]
    %v6839 = vld [vmem:[%s4 + $0xfc] sm:$0xf]
    %v6840 = vld [vmem:[%s4 + $0x100] sm:$0xf]
    %v6841 = vld [vmem:[%s4 + $0x104] sm:$0xf]
    %v6842 = vld [vmem:[%s4 + $0x108] sm:$0xf]
    %v6843 = vld [vmem:[%s4 + $0x10c] sm:$0xf]
    %v6844 = vld [vmem:[%s4 + $0x110] sm:$0xf]
    %v6845 = vld [vmem:[%s4 + $0x114] sm:$0xf]
    %v6846 = vld [vmem:[%s4 + $0x118] sm:$0xf]
    %v6847 = vld [vmem:[%s4 + $0x11c] sm:$0xf]
    %v6848 = vld [vmem:[%s4 + $0x120] sm:$0xf]
    %v6849 = vld [vmem:[%s4 + $0x124] sm:$0xf]
    %v6850 = vld [vmem:[%s4 + $0x128] sm:$0xf]
    %v6851 = vld [vmem:[%s4 + $0x12c] sm:$0xf]
    %v6852 = vld [vmem:[%s4 + $0x130] sm:$0xf]
    %v6853 = vld [vmem:[%s4 + $0x134] sm:$0xf]
    %v6854 = vld [vmem:[%s4 + $0x138] sm:$0xf]
    %v6855 = vld [vmem:[%s4 + $0x13c] sm:$0xf]
    %v6856 = vld [vmem:[%s4 + $0x140] sm:$0xf]
    %v6857 = vld [vmem:[%s4 + $0x144] sm:$0xf]
    %v6858 = vld [vmem:[%s4 + $0x148] sm:$0xf]
    %v6859 = vld [vmem:[%s4 + $0x14c] sm:$0xf]
    %v6860 = vld [vmem:[%s4 + $0x150] sm:$0xf]
    %v6861 = vld [vmem:[%s4 + $0x154] sm:$0xf]
    %v6862 = vld [vmem:[%s4 + $0x158] sm:$0xf]
    %v6863 = vld [vmem:[%s4 + $0x15c] sm:$0xf]
    %v6864 = vld [vmem:[%s4 + $0x160] sm:$0xf]
    %v6865 = vld [vmem:[%s4 + $0x164] sm:$0xf]
    %v6866 = vld [vmem:[%s4 + $0x168] sm:$0xf]
    %v6867 = vld [vmem:[%s4 + $0x16c] sm:$0xf]
    %v6868 = vld [vmem:[%s4 + $0x170] sm:$0xf]
    %v6869 = vld [vmem:[%s4 + $0x174] sm:$0xf]
    %v6870 = vld [vmem:[%s4 + $0x178] sm:$0xf]
    %v6871 = vld [vmem:[%s4 + $0x17c] sm:$0xf]
    %v6872 = vld [vmem:[%s4 + $0x180] sm:$0xf]
    %v6873 = vld [vmem:[%s4 + $0x184] sm:$0xf]
    %v6874 = vld [vmem:[%s4 + $0x188] sm:$0xf]
    %v6875 = vld [vmem:[%s4 + $0x18c] sm:$0xf]
    %v6876 = vld [vmem:[%s4 + $0x190] sm:$0xf]
    %v6877 = vld [vmem:[%s4 + $0x194] sm:$0xf]
    %v6878 = vld [vmem:[%s4 + $0x198] sm:$0xf]
    %v6879 = vld [vmem:[%s4 + $0x19c] sm:$0xf]
    %v6880 = vld [vmem:[%s4 + $0x1a0] sm:$0xf]
    %v6881 = vld [vmem:[%s4 + $0x1a4] sm:$0xf]
    %v6882 = vld [vmem:[%s4 + $0x1a8] sm:$0xf]
    %v6883 = vld [vmem:[%s4 + $0x1ac] sm:$0xf]
    %v6884 = vld [vmem:[%s4 + $0x1b0] sm:$0xf]
    %v6885 = vld [vmem:[%s4 + $0x1b4] sm:$0xf]
    %v6886 = vld [vmem:[%s4 + $0x1b8] sm:$0xf]
    %v6887 = vld [vmem:[%s4 + $0x1bc] sm:$0xf]
    %v6888 = vld [vmem:[%s4 + $0x1c0] sm:$0xf]
    %v6889 = vld [vmem:[%s4 + $0x1c4] sm:$0xf]
    %v6890 = vld [vmem:[%s4 + $0x1c8] sm:$0xf]
    %v6891 = vld [vmem:[%s4 + $0x1cc] sm:$0xf]
    %v6892 = vld [vmem:[%s4 + $0x1d0] sm:$0xf]
    %v6893 = vld [vmem:[%s4 + $0x1d4] sm:$0xf]
    %v6894 = vld [vmem:[%s4 + $0x1d8] sm:$0xf]
    %v6895 = vld [vmem:[%s4 + $0x1dc] sm:$0xf]
    %v6896 = vld [vmem:[%s4 + $0x1e0] sm:$0xf]
    %v6897 = vld [vmem:[%s4 + $0x1e4] sm:$0xf]
    %v6898 = vld [vmem:[%s4 + $0x1e8] sm:$0xf]
    %v6899 = vld [vmem:[%s4 + $0x1ec] sm:$0xf]
    %v6900 = vld [vmem:[%s4 + $0x1f0] sm:$0xf]
    %v6901 = vld [vmem:[%s4 + $0x1f4] sm:$0xf]
    %v6902 = vld [vmem:[%s4 + $0x1f8] sm:$0xf]
    %v6903 = vld [vmem:[%s4 + $0x1fc] sm:$0xf]
    %v6904 = vld [vmem:[%s4 + $0x200] sm:$0xf]
    %v6905 = vld [vmem:[%s4 + $0x204] sm:$0xf]
    %v6906 = vld [vmem:[%s4 + $0x208] sm:$0xf]
    %v6907 = vld [vmem:[%s4 + $0x20c] sm:$0xf]
    %v6908 = vld [vmem:[%s4 + $0x210] sm:$0xf]
    %v6909 = vld [vmem:[%s4 + $0x214] sm:$0xf]
    %v6910 = vld [vmem:[%s4 + $0x218] sm:$0xf]
    %v6911 = vld [vmem:[%s4 + $0x21c] sm:$0xf]
    %v6912 = vld [vmem:[%s4 + $0x220] sm:$0xf]
    %v6913 = vld [vmem:[%s4 + $0x224] sm:$0xf]
    %v6914 = vld [vmem:[%s4 + $0x228] sm:$0xf]
    %v6915 = vld [vmem:[%s4 + $0x22c] sm:$0xf]
    %v6916 = vld [vmem:[%s4 + $0x230] sm:$0xf]
    %v6917 = vld [vmem:[%s4 + $0x234] sm:$0xf]
    %v6918 = vld [vmem:[%s4 + $0x238] sm:$0xf]
    %v6919 = vld [vmem:[%s4 + $0x23c] sm:$0xf]
    %v7064 = vunpack.c.l.b16 %v6776
    %v7065 = vunpack.c.l.b16 %v6777
    %v7066 = vunpack.c.l.b16 %v6778
    %v7067 = vunpack.c.l.b16 %v6779
    %v7068 = vunpack.c.l.b16 %v6780
    %v7069 = vunpack.c.l.b16 %v6781
    %v7070 = vunpack.c.l.b16 %v6782
    %v7071 = vunpack.c.l.b16 %v6783
    %v7072 = vunpack.c.l.b16 %v6784
    %v7073 = vunpack.c.l.b16 %v6785
    %v7074 = vunpack.c.l.b16 %v6786
    %v7075 = vunpack.c.l.b16 %v6787
    %v7076 = vunpack.c.l.b16 %v6788
    %v7077 = vunpack.c.l.b16 %v6789
    %v7078 = vunpack.c.l.b16 %v6790
    %v7079 = vunpack.c.l.b16 %v6791
    %v7080 = vunpack.c.l.b16 %v6792
    %v7081 = vunpack.c.l.b16 %v6793
    %v7082 = vunpack.c.l.b16 %v6794
    %v7083 = vunpack.c.l.b16 %v6795
    %v7084 = vunpack.c.l.b16 %v6796
    %v7085 = vunpack.c.l.b16 %v6797
    %v7086 = vunpack.c.l.b16 %v6798
    %v7087 = vunpack.c.l.b16 %v6799
    %v7088 = vunpack.c.l.b16 %v6800
    %v7089 = vunpack.c.l.b16 %v6801
    %v7090 = vunpack.c.l.b16 %v6802
    %v7091 = vunpack.c.l.b16 %v6803
    %v7092 = vunpack.c.l.b16 %v6804
    %v7093 = vunpack.c.l.b16 %v6805
    %v7094 = vunpack.c.l.b16 %v6806
    %v7095 = vunpack.c.l.b16 %v6807
    %v7096 = vunpack.c.l.b16 %v6808
    %v7097 = vunpack.c.l.b16 %v6809
    %v7098 = vunpack.c.l.b16 %v6810
    %v7099 = vunpack.c.l.b16 %v6811
    %v7100 = vunpack.c.l.b16 %v6812
    %v7101 = vunpack.c.l.b16 %v6813
    %v7102 = vunpack.c.l.b16 %v6814
    %v7103 = vunpack.c.l.b16 %v6815
    %v7104 = vunpack.c.l.b16 %v6816
    %v7105 = vunpack.c.l.b16 %v6817
    %v7106 = vunpack.c.l.b16 %v6818
    %v7107 = vunpack.c.l.b16 %v6819
    %v7108 = vunpack.c.l.b16 %v6820
    %v7109 = vunpack.c.l.b16 %v6821
    %v7110 = vunpack.c.l.b16 %v6822
    %v7111 = vunpack.c.l.b16 %v6823
    %v7112 = vunpack.c.l.b16 %v6824
    %v7113 = vunpack.c.l.b16 %v6825
    %v7114 = vunpack.c.l.b16 %v6826
    %v7115 = vunpack.c.l.b16 %v6827
    %v7116 = vunpack.c.l.b16 %v6828
    %v7117 = vunpack.c.l.b16 %v6829
    %v7118 = vunpack.c.l.b16 %v6830
    %v7119 = vunpack.c.l.b16 %v6831
    %v7120 = vunpack.c.l.b16 %v6832
    %v7121 = vunpack.c.l.b16 %v6833
    %v7122 = vunpack.c.l.b16 %v6834
    %v7123 = vunpack.c.l.b16 %v6835
    %v7124 = vunpack.c.l.b16 %v6836
    %v7125 = vunpack.c.l.b16 %v6837
    %v7126 = vunpack.c.l.b16 %v6838
    %v7127 = vunpack.c.l.b16 %v6839
    %v7128 = vunpack.c.l.b16 %v6840
    %v7129 = vunpack.c.l.b16 %v6841
    %v7130 = vunpack.c.l.b16 %v6842
    %v7131 = vunpack.c.l.b16 %v6843
    %v7132 = vunpack.c.l.b16 %v6844
    %v7133 = vunpack.c.l.b16 %v6845
    %v7134 = vunpack.c.l.b16 %v6846
    %v7135 = vunpack.c.l.b16 %v6847
    %v7136 = vunpack.c.l.b16 %v6848
    %v7137 = vunpack.c.l.b16 %v6849
    %v7138 = vunpack.c.l.b16 %v6850
    %v7139 = vunpack.c.l.b16 %v6851
    %v7140 = vunpack.c.l.b16 %v6852
    %v7141 = vunpack.c.l.b16 %v6853
    %v7142 = vunpack.c.l.b16 %v6854
    %v7143 = vunpack.c.l.b16 %v6855
    %v7144 = vunpack.c.l.b16 %v6856
    %v7145 = vunpack.c.l.b16 %v6857
    %v7146 = vunpack.c.l.b16 %v6858
    %v7147 = vunpack.c.l.b16 %v6859
    %v7148 = vunpack.c.l.b16 %v6860
    %v7149 = vunpack.c.l.b16 %v6861
    %v7150 = vunpack.c.l.b16 %v6862
    %v7151 = vunpack.c.l.b16 %v6863
    %v7152 = vunpack.c.l.b16 %v6864
    %v7153 = vunpack.c.l.b16 %v6865
    %v7154 = vunpack.c.l.b16 %v6866
    %v7155 = vunpack.c.l.b16 %v6867
    %v7156 = vunpack.c.l.b16 %v6868
    %v7157 = vunpack.c.l.b16 %v6869
    %v7158 = vunpack.c.l.b16 %v6870
    %v7159 = vunpack.c.l.b16 %v6871
    %v7160 = vunpack.c.l.b16 %v6872
    %v7161 = vunpack.c.l.b16 %v6873
    %v7162 = vunpack.c.l.b16 %v6874
    %v7163 = vunpack.c.l.b16 %v6875
    %v7164 = vunpack.c.l.b16 %v6876
    %v7165 = vunpack.c.l.b16 %v6877
    %v7166 = vunpack.c.l.b16 %v6878
    %v7167 = vunpack.c.l.b16 %v6879
    %v7168 = vunpack.c.l.b16 %v6880
    %v7169 = vunpack.c.l.b16 %v6881
    %v7170 = vunpack.c.l.b16 %v6882
    %v7171 = vunpack.c.l.b16 %v6883
    %v7172 = vunpack.c.l.b16 %v6884
    %v7173 = vunpack.c.l.b16 %v6885
    %v7174 = vunpack.c.l.b16 %v6886
    %v7175 = vunpack.c.l.b16 %v6887
    %v7176 = vunpack.c.l.b16 %v6888
    %v7177 = vunpack.c.l.b16 %v6889
    %v7178 = vunpack.c.l.b16 %v6890
    %v7179 = vunpack.c.l.b16 %v6891
    %v7180 = vunpack.c.l.b16 %v6892
    %v7181 = vunpack.c.l.b16 %v6893
    %v7182 = vunpack.c.l.b16 %v6894
    %v7183 = vunpack.c.l.b16 %v6895
    %v7184 = vunpack.c.l.b16 %v6896
    %v7185 = vunpack.c.l.b16 %v6897
    %v7186 = vunpack.c.l.b16 %v6898
    %v7187 = vunpack.c.l.b16 %v6899
    %v7188 = vunpack.c.l.b16 %v6900
    %v7189 = vunpack.c.l.b16 %v6901
    %v7190 = vunpack.c.l.b16 %v6902
    %v7191 = vunpack.c.l.b16 %v6903
    %v7192 = vunpack.c.l.b16 %v6904
    %v7193 = vunpack.c.l.b16 %v6905
    %v7194 = vunpack.c.l.b16 %v6906
    %v7195 = vunpack.c.l.b16 %v6907
    %v7196 = vunpack.c.l.b16 %v6908
    %v7197 = vunpack.c.l.b16 %v6909
    %v7198 = vunpack.c.l.b16 %v6910
    %v7199 = vunpack.c.l.b16 %v6911
    %v7200 = vunpack.c.l.b16 %v6912
    %v7201 = vunpack.c.l.b16 %v6913
    %v7202 = vunpack.c.l.b16 %v6914
    %v7203 = vunpack.c.l.b16 %v6915
    %v7204 = vunpack.c.l.b16 %v6916
    %v7205 = vunpack.c.l.b16 %v6917
    %v7206 = vunpack.c.l.b16 %v6918
    %v7207 = vunpack.c.l.b16 %v6919
    %v7208 = vpack.c.b16 %v7065, %v7064
    %v7209 = vpack.c.b16 %v7067, %v7066
    %v7210 = vpack.c.b16 %v7069, %v7068
    %v7211 = vpack.c.b16 %v7071, %v7070
    %v7212 = vpack.c.b16 %v7073, %v7072
    %v7213 = vpack.c.b16 %v7075, %v7074
    %v7214 = vpack.c.b16 %v7077, %v7076
    %v7215 = vpack.c.b16 %v7079, %v7078
    %v7216 = vpack.c.b16 %v7081, %v7080
    %v7217 = vpack.c.b16 %v7083, %v7082
    %v7218 = vpack.c.b16 %v7085, %v7084
    %v7219 = vpack.c.b16 %v7087, %v7086
    %v7220 = vpack.c.b16 %v7089, %v7088
    %v7221 = vpack.c.b16 %v7091, %v7090
    %v7222 = vpack.c.b16 %v7093, %v7092
    %v7223 = vpack.c.b16 %v7095, %v7094
    %v7224 = vpack.c.b16 %v7097, %v7096
    %v7225 = vpack.c.b16 %v7099, %v7098
    %v7226 = vpack.c.b16 %v7101, %v7100
    %v7227 = vpack.c.b16 %v7103, %v7102
    %v7228 = vpack.c.b16 %v7105, %v7104
    %v7229 = vpack.c.b16 %v7107, %v7106
    %v7230 = vpack.c.b16 %v7109, %v7108
    %v7231 = vpack.c.b16 %v7111, %v7110
    %v7232 = vpack.c.b16 %v7113, %v7112
    %v7233 = vpack.c.b16 %v7115, %v7114
    %v7234 = vpack.c.b16 %v7117, %v7116
    %v7235 = vpack.c.b16 %v7119, %v7118
    %v7236 = vpack.c.b16 %v7121, %v7120
    %v7237 = vpack.c.b16 %v7123, %v7122
    %v7238 = vpack.c.b16 %v7125, %v7124
    %v7239 = vpack.c.b16 %v7127, %v7126
    %v7240 = vpack.c.b16 %v7129, %v7128
    %v7241 = vpack.c.b16 %v7131, %v7130
    %v7242 = vpack.c.b16 %v7133, %v7132
    %v7243 = vpack.c.b16 %v7135, %v7134
    %v7244 = vpack.c.b16 %v7137, %v7136
    %v7245 = vpack.c.b16 %v7139, %v7138
    %v7246 = vpack.c.b16 %v7141, %v7140
    %v7247 = vpack.c.b16 %v7143, %v7142
    %v7248 = vpack.c.b16 %v7145, %v7144
    %v7249 = vpack.c.b16 %v7147, %v7146
    %v7250 = vpack.c.b16 %v7149, %v7148
    %v7251 = vpack.c.b16 %v7151, %v7150
    %v7252 = vpack.c.b16 %v7153, %v7152
    %v7253 = vpack.c.b16 %v7155, %v7154
    %v7254 = vpack.c.b16 %v7157, %v7156
    %v7255 = vpack.c.b16 %v7159, %v7158
    %v7256 = vpack.c.b16 %v7161, %v7160
    %v7257 = vpack.c.b16 %v7163, %v7162
    %v7258 = vpack.c.b16 %v7165, %v7164
    %v7259 = vpack.c.b16 %v7167, %v7166
    %v7260 = vpack.c.b16 %v7169, %v7168
    %v7261 = vpack.c.b16 %v7171, %v7170
    %v7262 = vpack.c.b16 %v7173, %v7172
    %v7263 = vpack.c.b16 %v7175, %v7174
    %v7264 = vpack.c.b16 %v7177, %v7176
    %v7265 = vpack.c.b16 %v7179, %v7178
    %v7266 = vpack.c.b16 %v7181, %v7180
    %v7267 = vpack.c.b16 %v7183, %v7182
    %v7268 = vpack.c.b16 %v7185, %v7184
    %v7269 = vpack.c.b16 %v7187, %v7186
    %v7270 = vpack.c.b16 %v7189, %v7188
    %v7271 = vpack.c.b16 %v7191, %v7190
    %v7272 = vpack.c.b16 %v7193, %v7192
    %v7273 = vpack.c.b16 %v7195, %v7194
    %v7274 = vpack.c.b16 %v7197, %v7196
    %v7275 = vpack.c.b16 %v7199, %v7198
    %v7276 = vpack.c.b16 %v7201, %v7200
    %v7277 = vpack.c.b16 %v7203, %v7202
    %v7278 = vpack.c.b16 %v7205, %v7204
    %v7279 = vpack.c.b16 %v7207, %v7206
    %7352 = vmatprep.subr.bf16.mxu0 0
    %7353 = vmatpush1.bf16.msra.mxu0 %v7208
    %7354 = vmatprep.subr.bf16.mxu0 0
    %7355 = vmatpush1.bf16.msra.mxu0 %v7209
    %7356 = vmatprep.subr.bf16.mxu0 0
    %7357 = vmatpush1.bf16.msra.mxu0 %v7210
    %7358 = vmatprep.subr.bf16.mxu0 0
    %7359 = vmatpush1.bf16.msra.mxu0 %v7211
    %7360 = vmatprep.subr.bf16.mxu0 0
    %7361 = vmatpush1.bf16.msra.mxu0 %v7212
    %7362 = vmatprep.subr.bf16.mxu0 0
    %7363 = vmatpush1.bf16.msra.mxu0 %v7213
    %7364 = vmatprep.subr.bf16.mxu0 0
    %7365 = vmatpush1.bf16.msra.mxu0 %v7214
    %7366 = vmatprep.subr.bf16.mxu0 0
    %7367 = vmatpush1.bf16.msra.mxu0 %v7215
    %7368 = vmatprep.subr.bf16.mxu0 0
    %7369 = vmatpush1.bf16.msra.mxu0 %v7216
    %7370 = vmatprep.subr.bf16.mxu0 0
    %7371 = vmatpush1.bf16.msra.mxu0 %v7217
    %7372 = vmatprep.subr.bf16.mxu0 0
    %7373 = vmatpush1.bf16.msra.mxu0 %v7218
    %7374 = vmatprep.subr.bf16.mxu0 0
    %7375 = vmatpush1.bf16.msra.mxu0 %v7219
    %7376 = vmatprep.subr.bf16.mxu0 0
    %7377 = vmatpush1.bf16.msra.mxu0 %v7220
    %7378 = vmatprep.subr.bf16.mxu0 0
    %7379 = vmatpush1.bf16.msra.mxu0 %v7221
    %7380 = vmatprep.subr.bf16.mxu0 0
    %7381 = vmatpush1.bf16.msra.mxu0 %v7222
    %7382 = vmatprep.subr.bf16.mxu0 0
    %7383 = vmatpush1.bf16.msra.mxu0 %v7223
    %7384 = vmatprep.mubr.bf16.mxu0 %v6759
    %7385 = vmatmul.mubr.bf16.gmra.mrb[0].mxu0 %v6758
    %v7386 = vpop.f32.mrb[0].mxu0
    %v7387 = vadd.f32 0.0, %v7386
    %v7388 = vpop.f32.mrb[0].mxu0
    %v7389 = vpop.f32.mrb[0].mxu0
    %v7390 = vadd.f32 0.0, %v7389
    %v7391 = vpop.f32.mrb[0].mxu0
    %7392 = vdwg.mxu0
    %7393 = vmatprep.subr.bf16.mxu0 0
    %7394 = vmatpush1.bf16.msra.mxu0 %v7224
    %7395 = vmatprep.subr.bf16.mxu0 0
    %7396 = vmatpush1.bf16.msra.mxu0 %v7225
    %7397 = vmatprep.subr.bf16.mxu0 0
    %7398 = vmatpush1.bf16.msra.mxu0 %v7226
    %7399 = vmatprep.subr.bf16.mxu0 0
    %7400 = vmatpush1.bf16.msra.mxu0 %v7227
    %7401 = vmatprep.subr.bf16.mxu0 0
    %7402 = vmatpush1.bf16.msra.mxu0 %v7228
    %7403 = vmatprep.subr.bf16.mxu0 0
    %7404 = vmatpush1.bf16.msra.mxu0 %v7229
    %7405 = vmatprep.subr.bf16.mxu0 0
    %7406 = vmatpush1.bf16.msra.mxu0 %v7230
    %7407 = vmatprep.subr.bf16.mxu0 0
    %7408 = vmatpush1.bf16.msra.mxu0 %v7231
    %7409 = vmatprep.subr.bf16.mxu0 0
    %7410 = vmatpush1.bf16.msra.mxu0 %v7232
    %7411 = vmatprep.subr.bf16.mxu0 0
    %7412 = vmatpush1.bf16.msra.mxu0 %v7233
    %7413 = vmatprep.subr.bf16.mxu0 0
    %7414 = vmatpush1.bf16.msra.mxu0 %v7234
    %7415 = vmatprep.subr.bf16.mxu0 0
    %7416 = vmatpush1.bf16.msra.mxu0 %v7235
    %7417 = vmatprep.subr.bf16.mxu0 0
    %7418 = vmatpush1.bf16.msra.mxu0 %v7236
    %7419 = vmatprep.subr.bf16.mxu0 0
    %7420 = vmatpush1.bf16.msra.mxu0 %v7237
    %7421 = vmatprep.subr.bf16.mxu0 0
    %7422 = vmatpush1.bf16.msra.mxu0 %v7238
    %7423 = vmatprep.subr.bf16.mxu0 0
    %7424 = vmatpush1.bf16.msra.mxu0 %v7239
    %7425 = vmatprep.mubr.bf16.mxu0 %v6773
    %7426 = vmatmul.mubr.bf16.gmra.mrb[0].mxu0 %v6760
    %v7427 = vpop.f32.mrb[0].mxu0
    %v7428 = vadd.f32 %v7387, %v7427
    %v7429 = vpop.f32.mrb[0].mxu0
    %v7430 = vpop.f32.mrb[0].mxu0
    %v7431 = vadd.f32 %v7390, %v7430
    %v7432 = vpop.f32.mrb[0].mxu0
    %7433 = vdwg.mxu0
    %7434 = vmatprep.subr.bf16.mxu0 0
    %7435 = vmatpush1.bf16.msra.mxu0 %v7240
    %7436 = vmatprep.subr.bf16.mxu0 0
    %7437 = vmatpush1.bf16.msra.mxu0 %v7241
    %7438 = vmatprep.subr.bf16.mxu0 0
    %7439 = vmatpush1.bf16.msra.mxu0 %v7242
    %7440 = vmatprep.subr.bf16.mxu0 0
    %7441 = vmatpush1.bf16.msra.mxu0 %v7243
    %7442 = vmatprep.subr.bf16.mxu0 0
    %7443 = vmatpush1.bf16.msra.mxu0 %v7244
    %7444 = vmatprep.subr.bf16.mxu0 0
    %7445 = vmatpush1.bf16.msra.mxu0 %v7245
    %7446 = vmatprep.subr.bf16.mxu0 0
    %7447 = vmatpush1.bf16.msra.mxu0 %v7246
    %7448 = vmatprep.subr.bf16.mxu0 0
    %7449 = vmatpush1.bf16.msra.mxu0 %v7247
    %7450 = vmatprep.subr.bf16.mxu0 0
    %7451 = vmatpush1.bf16.msra.mxu0 %v7248
    %7452 = vmatprep.subr.bf16.mxu0 0
    %7453 = vmatpush1.bf16.msra.mxu0 %v7249
    %7454 = vmatprep.subr.bf16.mxu0 0
    %7455 = vmatpush1.bf16.msra.mxu0 %v7250
    %7456 = vmatprep.subr.bf16.mxu0 0
    %7457 = vmatpush1.bf16.msra.mxu0 %v7251
    %7458 = vmatprep.subr.bf16.mxu0 0
    %7459 = vmatpush1.bf16.msra.mxu0 %v7252
    %7460 = vmatprep.subr.bf16.mxu0 0
    %7461 = vmatpush1.bf16.msra.mxu0 %v7253
    %7462 = vmatprep.subr.bf16.mxu0 0
    %7463 = vmatpush1.bf16.msra.mxu0 %v7254
    %7464 = vmatprep.subr.bf16.mxu0 0
    %7465 = vmatpush1.bf16.msra.mxu0 %v7255
    %7466 = vmatprep.mubr.bf16.mxu0 %v6775
    %7467 = vmatmul.mubr.bf16.gmra.mrb[0].mxu0 %v6774
    %v7468 = vpop.f32.mrb[0].mxu0
    %v7469 = vadd.f32 %v7428, %v7468
    %v7470 = vpop.f32.mrb[0].mxu0
    %v7471 = vpop.f32.mrb[0].mxu0
    %v7472 = vadd.f32 %v7431, %v7471
    %v7473 = vpop.f32.mrb[0].mxu0
    %7474 = vdwg.mxu0
    %7475 = vmatprep.subr.bf16.mxu0 0
    %7476 = vmatpush1.bf16.msra.mxu0 %v7256
    %7477 = vmatprep.subr.bf16.mxu0 0
    %7478 = vmatpush1.bf16.msra.mxu0 %v7257
    %7479 = vmatprep.subr.bf16.mxu0 0
    %7480 = vmatpush1.bf16.msra.mxu0 %v7258
    %7481 = vmatprep.subr.bf16.mxu0 0
    %7482 = vmatpush1.bf16.msra.mxu0 %v7259
    %7483 = vmatprep.subr.bf16.mxu0 0
    %7484 = vmatpush1.bf16.msra.mxu0 %v7260
    %7485 = vmatprep.subr.bf16.mxu0 0
    %7486 = vmatpush1.bf16.msra.mxu0 %v7261
    %7487 = vmatprep.subr.bf16.mxu0 0
    %7488 = vmatpush1.bf16.msra.mxu0 %v7262
    %7489 = vmatprep.subr.bf16.mxu0 0
    %7490 = vmatpush1.bf16.msra.mxu0 %v7263
    %7491 = vmatprep.subr.bf16.mxu0 0
    %7492 = vmatpush1.bf16.msra.mxu0 %v7264
    %7493 = vmatprep.subr.bf16.mxu0 0
    %7494 = vmatpush1.bf16.msra.mxu0 %v7265
    %7495 = vmatprep.subr.bf16.mxu0 0
    %7496 = vmatpush1.bf16.msra.mxu0 %v7266
    %7497 = vmatprep.subr.bf16.mxu0 0
    %7498 = vmatpush1.bf16.msra.mxu0 %v7267
    %7499 = vmatprep.subr.bf16.mxu0 0
    %7500 = vmatpush1.bf16.msra.mxu0 %v7268
    %7501 = vmatprep.subr.bf16.mxu0 0
    %7502 = vmatpush1.bf16.msra.mxu0 %v7269
    %7503 = vmatprep.subr.bf16.mxu0 0
    %7504 = vmatpush1.bf16.msra.mxu0 %v7270
    %7505 = vmatprep.subr.bf16.mxu0 0
    %7506 = vmatpush1.bf16.msra.mxu0 %v7271
    %7507 = vmatprep.mubr.bf16.mxu0 %v6759
    %7508 = vmatmul.mubr.bf16.gmra.mrb[0].mxu0 %v6758
    %v7509 = vpop.f32.mrb[0].mxu0
    %v7510 = vadd.f32 %v7469, %v7509
    %v7511 = vpop.f32.mrb[0].mxu0
    %v7512 = vpop.f32.mrb[0].mxu0
    %v7513 = vadd.f32 %v7472, %v7512
    %v7514 = vpop.f32.mrb[0].mxu0
    %7515 = vdwg.mxu0
    %7516 = vmatprep.subr.bf16.mxu0 0
    %7517 = vmatpush1.bf16.msra.mxu0 %v7272
    %7518 = vmatprep.subr.bf16.mxu0 0
    %7519 = vmatpush1.bf16.msra.mxu0 %v7273
    %7520 = vmatprep.subr.bf16.mxu0 0
    %7521 = vmatpush1.bf16.msra.mxu0 %v7274
    %7522 = vmatprep.subr.bf16.mxu0 0
    %7523 = vmatpush1.bf16.msra.mxu0 %v7275
    %7524 = vmatprep.subr.bf16.mxu0 0
    %7525 = vmatpush1.bf16.msra.mxu0 %v7276
    %7526 = vmatprep.subr.bf16.mxu0 0
    %7527 = vmatpush1.bf16.msra.mxu0 %v7277
    %7528 = vmatprep.subr.bf16.mxu0 0
    %7529 = vmatpush1.bf16.msra.mxu0 %v7278
    %7530 = vmatprep.subr.bf16.mxu0 0
    %7531 = vmatpush1.bf16.msra.mxu0 %v7279
    %7532 = vmatprep.subr.bf16.mxu0 0
    %7533 = vmatpush1.bf16.msra.mxu0 0
    %7534 = vmatprep.subr.bf16.mxu0 0
    %7535 = vmatpush1.bf16.msra.mxu0 0
    %7536 = vmatprep.subr.bf16.mxu0 0
    %7537 = vmatpush1.bf16.msra.mxu0 0
    %7538 = vmatprep.subr.bf16.mxu0 0
    %7539 = vmatpush1.bf16.msra.mxu0 0
    %7540 = vmatprep.subr.bf16.mxu0 0
    %7541 = vmatpush1.bf16.msra.mxu0 0
    %7542 = vmatprep.subr.bf16.mxu0 0
    %7543 = vmatpush1.bf16.msra.mxu0 0
    %7544 = vmatprep.subr.bf16.mxu0 0
    %7545 = vmatpush1.bf16.msra.mxu0 0
    %7546 = vmatprep.subr.bf16.mxu0 0
    %7547 = vmatpush1.bf16.msra.mxu0 0
    %7548 = vmatprep.mubr.bf16.mxu0 0
    %7549 = vmatmul.mubr.bf16.gmra.mrb[0].mxu0 %v6760
    %v7550 = vpop.f32.mrb[0].mxu0
    %v7551 = vadd.f32 %v7510, %v7550
    %v7552 = vpop.f32.mrb[0].mxu0
    %v7553 = vpop.f32.mrb[0].mxu0
    %v7554 = vadd.f32 %v7513, %v7553
    %v7555 = vpop.f32.mrb[0].mxu0
    %7556 = vdwg.mxu0
    %v7557 = vxor.u32 %v6206, 2147483648
    %v7558 = vxor.u32 %v6678, 2147483648
    %v7559 = vmul.f32 %v7557, 1.442695
    %v7560 = vpow.pop %v7559
    %v7561 = vmul.f32 %v7558, 1.442695
    %v7562 = vpow.pop %v7561
    %v7563 = vadd.f32 %v7560, 1.0
    %v7564 = vadd.f32 %v7562, 1.0
    %v7565 = vrcp.pop %v7563
    %v7566 = vmul.f32 1.0, %v7565
    %v7567 = vrcp.pop %v7564
    %v7568 = vmul.f32 1.0, %v7567
    %s7569 = sld [smem:[#allocation2]]
    %v7570 = vstv %s7569
    %v7571 = vmul.f32 %v7566, %v7570
    %v7572 = vmul.f32 %v7568, %v7570
    %v7573 = vxor.u32 %v7551, 2147483648
    %v7574 = vxor.u32 %v7554, 2147483648
    %v7575 = vmul.f32 %v7573, 1.442695
    %v7576 = vpow.pop %v7575
    %v7577 = vmul.f32 %v7574, 1.442695
    %v7578 = vpow.pop %v7577
    %v7579 = vadd.f32 %v7576, 1.0
    %v7580 = vadd.f32 %v7578, 1.0
    %v7581 = vrcp.pop %v7579
    %v7582 = vmul.f32 1.0, %v7581
    %v7583 = vrcp.pop %v7580
    %v7584 = vmul.f32 1.0, %v7583
    %s7585 = sld [smem:[#allocation2 + $0x1]]
    %v7586 = vstv %s7585
    %v7587 = vmul.f32 %v7582, %v7586
    %v7588 = vmul.f32 %v7584, %v7586
    %v7589 = vadd.f32 %v7571, %v7587
    %v7590 = vadd.f32 %v7572, %v7588
    %v7591 = vmul.f32 %v7571, %v7587
    %v7592 = vmul.f32 %v7572, %v7588
    %v7593 = vpack.c.bf16 %v7590, %v7589
    %v7594 = vunpack.c.l.bf16 %v7593
    %v7595 = vunpack.c.h.bf16 %v7593
    %v7596 = vsub.f32 %v7589, %v7594
    %v7597 = vsub.f32 %v7590, %v7595
    %v7598 = vpack.c.bf16 %v7597, %v7596
    %v7599 = vpack.c.bf16 %v7592, %v7591
    %v7600 = vunpack.c.l.bf16 %v7599
    %v7601 = vunpack.c.h.bf16 %v7599
    %v7602 = vsub.f32 %v7591, %v7600
    %v7603 = vsub.f32 %v7592, %v7601
    %v7604 = vpack.c.bf16 %v7603, %v7602
    %7606 = vrot.lane.b32.xlu0 %v7598, 64
    %v7607 = vpop.permute.xlu0 %7606
    %v7610 = vsel %vm6751, %v7593, %v7607
    %7613 = vrot.lane.b32.xlu0 %v7604, 64
    %v7614 = vpop.permute.xlu0 %7613
    %v7617 = vsel %vm6751, %v7599, %v7614
    %v7619 = vld [vmem:[%s2] sm:$0xff]
    %v7620 = vld [vmem:[%s2 + $0x8] sm:$0xff]
    %v7621 = vld [vmem:[%s2 + $0x10] sm:$0xff]
    %v7622 = vld [vmem:[%s2 + $0x18] sm:$0xff]
    %v7623 = vld [vmem:[%s2 + $0x20] sm:$0xff]
    %v7624 = vld [vmem:[%s2 + $0x28] sm:$0xff]
    %v7625 = vld [vmem:[%s2 + $0x30] sm:$0xff]
    %v7626 = vld [vmem:[%s2 + $0x38] sm:$0xff]
    %v7627 = vld [vmem:[%s2 + $0x80] sm:$0xff]
    %v7628 = vld [vmem:[%s2 + $0x88] sm:$0xff]
    %v7629 = vld [vmem:[%s2 + $0x90] sm:$0xff]
    %v7630 = vld [vmem:[%s2 + $0x98] sm:$0xff]
    %v7631 = vld [vmem:[%s2 + $0xa0] sm:$0xff]
    %v7632 = vld [vmem:[%s2 + $0xa8] sm:$0xff]
    %v7633 = vld [vmem:[%s2 + $0xb0] sm:$0xff]
    %v7634 = vld [vmem:[%s2 + $0xb8] sm:$0xff]
    %v7635 = vld [vmem:[%s2 + $0x100] sm:$0xff]
    %v7636 = vld [vmem:[%s2 + $0x108] sm:$0xff]
    %v7637 = vld [vmem:[%s2 + $0x110] sm:$0xff]
    %v7638 = vld [vmem:[%s2 + $0x118] sm:$0xff]
    %v7639 = vld [vmem:[%s2 + $0x120] sm:$0xff]
    %v7640 = vld [vmem:[%s2 + $0x128] sm:$0xff]
    %v7641 = vld [vmem:[%s2 + $0x130] sm:$0xff]
    %v7642 = vld [vmem:[%s2 + $0x138] sm:$0xff]
    %v7643 = vld [vmem:[%s2 + $0x180] sm:$0xff]
    %v7644 = vld [vmem:[%s2 + $0x188] sm:$0xff]
    %v7645 = vld [vmem:[%s2 + $0x190] sm:$0xff]
    %v7646 = vld [vmem:[%s2 + $0x198] sm:$0xff]
    %v7647 = vld [vmem:[%s2 + $0x1a0] sm:$0xff]
    %v7648 = vld [vmem:[%s2 + $0x1a8] sm:$0xff]
    %v7649 = vld [vmem:[%s2 + $0x1b0] sm:$0xff]
    %v7650 = vld [vmem:[%s2 + $0x1b8] sm:$0xff]
    %v7651 = vld [vmem:[%s2 + $0x200] sm:$0xff]
    %v7652 = vld [vmem:[%s2 + $0x208] sm:$0xff]
    %v7653 = vld [vmem:[%s2 + $0x210] sm:$0xff]
    %v7654 = vld [vmem:[%s2 + $0x218] sm:$0xff]
    %v7655 = vld [vmem:[%s2 + $0x220] sm:$0xff]
    %v7656 = vld [vmem:[%s2 + $0x228] sm:$0xff]
    %v7657 = vld [vmem:[%s2 + $0x230] sm:$0xff]
    %v7658 = vld [vmem:[%s2 + $0x238] sm:$0xff]
    %v7659 = vld [vmem:[%s2 + $0x280] sm:$0xff]
    %v7660 = vld [vmem:[%s2 + $0x288] sm:$0xff]
    %v7661 = vld [vmem:[%s2 + $0x290] sm:$0xff]
    %v7662 = vld [vmem:[%s2 + $0x298] sm:$0xff]
    %v7663 = vld [vmem:[%s2 + $0x2a0] sm:$0xff]
    %v7664 = vld [vmem:[%s2 + $0x2a8] sm:$0xff]
    %v7665 = vld [vmem:[%s2 + $0x2b0] sm:$0xff]
    %v7666 = vld [vmem:[%s2 + $0x2b8] sm:$0xff]
    %v7667 = vld [vmem:[%s2 + $0x300] sm:$0xff]
    %v7668 = vld [vmem:[%s2 + $0x308] sm:$0xff]
    %v7669 = vld [vmem:[%s2 + $0x310] sm:$0xff]
    %v7670 = vld [vmem:[%s2 + $0x318] sm:$0xff]
    %v7671 = vld [vmem:[%s2 + $0x320] sm:$0xff]
    %v7672 = vld [vmem:[%s2 + $0x328] sm:$0xff]
    %v7673 = vld [vmem:[%s2 + $0x330] sm:$0xff]
    %v7674 = vld [vmem:[%s2 + $0x338] sm:$0xff]
    %v7675 = vld [vmem:[%s2 + $0x380] sm:$0xff]
    %v7676 = vld [vmem:[%s2 + $0x388] sm:$0xff]
    %v7677 = vld [vmem:[%s2 + $0x390] sm:$0xff]
    %v7678 = vld [vmem:[%s2 + $0x398] sm:$0xff]
    %v7679 = vld [vmem:[%s2 + $0x3a0] sm:$0xff]
    %v7680 = vld [vmem:[%s2 + $0x3a8] sm:$0xff]
    %v7681 = vld [vmem:[%s2 + $0x3b0] sm:$0xff]
    %v7682 = vld [vmem:[%s2 + $0x3b8] sm:$0xff]
    %v7683 = vld [vmem:[%s2 + $0x400] sm:$0xff]
    %v7684 = vld [vmem:[%s2 + $0x408] sm:$0xff]
    %v7685 = vld [vmem:[%s2 + $0x410] sm:$0xff]
    %v7686 = vld [vmem:[%s2 + $0x418] sm:$0xff]
    %v7687 = vld [vmem:[%s2 + $0x420] sm:$0xff]
    %v7688 = vld [vmem:[%s2 + $0x428] sm:$0xff]
    %v7689 = vld [vmem:[%s2 + $0x430] sm:$0xff]
    %v7690 = vld [vmem:[%s2 + $0x438] sm:$0xff]
    %v7691 = vld [vmem:[%s2 + $0x480] sm:$0xff]
    %v7692 = vld [vmem:[%s2 + $0x488] sm:$0xff]
    %v7693 = vld [vmem:[%s2 + $0x490] sm:$0xff]
    %v7694 = vld [vmem:[%s2 + $0x498] sm:$0xff]
    %v7695 = vld [vmem:[%s2 + $0x4a0] sm:$0xff]
    %v7696 = vld [vmem:[%s2 + $0x4a8] sm:$0xff]
    %v7697 = vld [vmem:[%s2 + $0x4b0] sm:$0xff]
    %v7698 = vld [vmem:[%s2 + $0x4b8] sm:$0xff]
    %v7699 = vld [vmem:[%s2 + $0x500] sm:$0xff]
    %v7700 = vld [vmem:[%s2 + $0x508] sm:$0xff]
    %v7701 = vld [vmem:[%s2 + $0x510] sm:$0xff]
    %v7702 = vld [vmem:[%s2 + $0x518] sm:$0xff]
    %v7703 = vld [vmem:[%s2 + $0x520] sm:$0xff]
    %v7704 = vld [vmem:[%s2 + $0x528] sm:$0xff]
    %v7705 = vld [vmem:[%s2 + $0x530] sm:$0xff]
    %v7706 = vld [vmem:[%s2 + $0x538] sm:$0xff]
    %v7707 = vld [vmem:[%s2 + $0x580] sm:$0xff]
    %v7708 = vld [vmem:[%s2 + $0x588] sm:$0xff]
    %v7709 = vld [vmem:[%s2 + $0x590] sm:$0xff]
    %v7710 = vld [vmem:[%s2 + $0x598] sm:$0xff]
    %v7711 = vld [vmem:[%s2 + $0x5a0] sm:$0xff]
    %v7712 = vld [vmem:[%s2 + $0x5a8] sm:$0xff]
    %v7713 = vld [vmem:[%s2 + $0x5b0] sm:$0xff]
    %v7714 = vld [vmem:[%s2 + $0x5b8] sm:$0xff]
    %v7715 = vld [vmem:[%s2 + $0x600] sm:$0xff]
    %v7716 = vld [vmem:[%s2 + $0x608] sm:$0xff]
    %v7717 = vld [vmem:[%s2 + $0x610] sm:$0xff]
    %v7718 = vld [vmem:[%s2 + $0x618] sm:$0xff]
    %v7719 = vld [vmem:[%s2 + $0x620] sm:$0xff]
    %v7720 = vld [vmem:[%s2 + $0x628] sm:$0xff]
    %v7721 = vld [vmem:[%s2 + $0x630] sm:$0xff]
    %v7722 = vld [vmem:[%s2 + $0x638] sm:$0xff]
    %v7723 = vld [vmem:[%s2 + $0x680] sm:$0xff]
    %v7724 = vld [vmem:[%s2 + $0x688] sm:$0xff]
    %v7725 = vld [vmem:[%s2 + $0x690] sm:$0xff]
    %v7726 = vld [vmem:[%s2 + $0x698] sm:$0xff]
    %v7727 = vld [vmem:[%s2 + $0x6a0] sm:$0xff]
    %v7728 = vld [vmem:[%s2 + $0x6a8] sm:$0xff]
    %v7729 = vld [vmem:[%s2 + $0x6b0] sm:$0xff]
    %v7730 = vld [vmem:[%s2 + $0x6b8] sm:$0xff]
    %v7731 = vld [vmem:[%s2 + $0x700] sm:$0xff]
    %v7732 = vld [vmem:[%s2 + $0x708] sm:$0xff]
    %v7733 = vld [vmem:[%s2 + $0x710] sm:$0xff]
    %v7734 = vld [vmem:[%s2 + $0x718] sm:$0xff]
    %v7735 = vld [vmem:[%s2 + $0x720] sm:$0xff]
    %v7736 = vld [vmem:[%s2 + $0x728] sm:$0xff]
    %v7737 = vld [vmem:[%s2 + $0x730] sm:$0xff]
    %v7738 = vld [vmem:[%s2 + $0x738] sm:$0xff]
    %v7739 = vld [vmem:[%s2 + $0x780] sm:$0xff]
    %v7740 = vld [vmem:[%s2 + $0x788] sm:$0xff]
    %v7741 = vld [vmem:[%s2 + $0x790] sm:$0xff]
    %v7742 = vld [vmem:[%s2 + $0x798] sm:$0xff]
    %v7743 = vld [vmem:[%s2 + $0x7a0] sm:$0xff]
    %v7744 = vld [vmem:[%s2 + $0x7a8] sm:$0xff]
    %v7745 = vld [vmem:[%s2 + $0x7b0] sm:$0xff]
    %v7746 = vld [vmem:[%s2 + $0x7b8] sm:$0xff]
    %v7875 = vunpack.c.l.b16 %v7619
    %v7876 = vunpack.c.h.b16 %v7619
    %v7877 = vunpack.c.l.b16 %v7620
    %v7878 = vunpack.c.h.b16 %v7620
    %v7879 = vunpack.c.l.b16 %v7621
    %v7880 = vunpack.c.h.b16 %v7621
    %v7881 = vunpack.c.l.b16 %v7622
    %v7882 = vunpack.c.h.b16 %v7622
    %v7883 = vunpack.c.l.b16 %v7623
    %v7884 = vunpack.c.h.b16 %v7623
    %v7885 = vunpack.c.l.b16 %v7624
    %v7886 = vunpack.c.h.b16 %v7624
    %v7887 = vunpack.c.l.b16 %v7625
    %v7888 = vunpack.c.h.b16 %v7625
    %v7889 = vunpack.c.l.b16 %v7626
    %v7890 = vunpack.c.h.b16 %v7626
    %v7891 = vunpack.c.l.b16 %v7627
    %v7892 = vunpack.c.h.b16 %v7627
    %v7893 = vunpack.c.l.b16 %v7628
    %v7894 = vunpack.c.h.b16 %v7628
    %v7895 = vunpack.c.l.b16 %v7629
    %v7896 = vunpack.c.h.b16 %v7629
    %v7897 = vunpack.c.l.b16 %v7630
    %v7898 = vunpack.c.h.b16 %v7630
    %v7899 = vunpack.c.l.b16 %v7631
    %v7900 = vunpack.c.h.b16 %v7631
    %v7901 = vunpack.c.l.b16 %v7632
    %v7902 = vunpack.c.h.b16 %v7632
    %v7903 = vunpack.c.l.b16 %v7633
    %v7904 = vunpack.c.h.b16 %v7633
    %v7905 = vunpack.c.l.b16 %v7634
    %v7906 = vunpack.c.h.b16 %v7634
    %v7907 = vunpack.c.l.b16 %v7635
    %v7908 = vunpack.c.h.b16 %v7635
    %v7909 = vunpack.c.l.b16 %v7636
    %v7910 = vunpack.c.h.b16 %v7636
    %v7911 = vunpack.c.l.b16 %v7637
    %v7912 = vunpack.c.h.b16 %v7637
    %v7913 = vunpack.c.l.b16 %v7638
    %v7914 = vunpack.c.h.b16 %v7638
    %v7915 = vunpack.c.l.b16 %v7639
    %v7916 = vunpack.c.h.b16 %v7639
    %v7917 = vunpack.c.l.b16 %v7640
    %v7918 = vunpack.c.h.b16 %v7640
    %v7919 = vunpack.c.l.b16 %v7641
    %v7920 = vunpack.c.h.b16 %v7641
    %v7921 = vunpack.c.l.b16 %v7642
    %v7922 = vunpack.c.h.b16 %v7642
    %v7923 = vunpack.c.l.b16 %v7643
    %v7924 = vunpack.c.h.b16 %v7643
    %v7925 = vunpack.c.l.b16 %v7644
    %v7926 = vunpack.c.h.b16 %v7644
    %v7927 = vunpack.c.l.b16 %v7645
    %v7928 = vunpack.c.h.b16 %v7645
    %v7929 = vunpack.c.l.b16 %v7646
    %v7930 = vunpack.c.h.b16 %v7646
    %v7931 = vunpack.c.l.b16 %v7647
    %v7932 = vunpack.c.h.b16 %v7647
    %v7933 = vunpack.c.l.b16 %v7648
    %v7934 = vunpack.c.h.b16 %v7648
    %v7935 = vunpack.c.l.b16 %v7649
    %v7936 = vunpack.c.h.b16 %v7649
    %v7937 = vunpack.c.l.b16 %v7650
    %v7938 = vunpack.c.h.b16 %v7650
    %v7939 = vunpack.c.l.b16 %v7651
    %v7940 = vunpack.c.h.b16 %v7651
    %v7941 = vunpack.c.l.b16 %v7652
    %v7942 = vunpack.c.h.b16 %v7652
    %v7943 = vunpack.c.l.b16 %v7653
    %v7944 = vunpack.c.h.b16 %v7653
    %v7945 = vunpack.c.l.b16 %v7654
    %v7946 = vunpack.c.h.b16 %v7654
    %v7947 = vunpack.c.l.b16 %v7655
    %v7948 = vunpack.c.h.b16 %v7655
    %v7949 = vunpack.c.l.b16 %v7656
    %v7950 = vunpack.c.h.b16 %v7656
    %v7951 = vunpack.c.l.b16 %v7657
    %v7952 = vunpack.c.h.b16 %v7657
    %v7953 = vunpack.c.l.b16 %v7658
    %v7954 = vunpack.c.h.b16 %v7658
    %v7955 = vunpack.c.l.b16 %v7659
    %v7956 = vunpack.c.h.b16 %v7659
    %v7957 = vunpack.c.l.b16 %v7660
    %v7958 = vunpack.c.h.b16 %v7660
    %v7959 = vunpack.c.l.b16 %v7661
    %v7960 = vunpack.c.h.b16 %v7661
    %v7961 = vunpack.c.l.b16 %v7662
    %v7962 = vunpack.c.h.b16 %v7662
    %v7963 = vunpack.c.l.b16 %v7663
    %v7964 = vunpack.c.h.b16 %v7663
    %v7965 = vunpack.c.l.b16 %v7664
    %v7966 = vunpack.c.h.b16 %v7664
    %v7967 = vunpack.c.l.b16 %v7665
    %v7968 = vunpack.c.h.b16 %v7665
    %v7969 = vunpack.c.l.b16 %v7666
    %v7970 = vunpack.c.h.b16 %v7666
    %v7971 = vunpack.c.l.b16 %v7667
    %v7972 = vunpack.c.h.b16 %v7667
    %v7973 = vunpack.c.l.b16 %v7668
    %v7974 = vunpack.c.h.b16 %v7668
    %v7975 = vunpack.c.l.b16 %v7669
    %v7976 = vunpack.c.h.b16 %v7669
    %v7977 = vunpack.c.l.b16 %v7670
    %v7978 = vunpack.c.h.b16 %v7670
    %v7979 = vunpack.c.l.b16 %v7671
    %v7980 = vunpack.c.h.b16 %v7671
    %v7981 = vunpack.c.l.b16 %v7672
    %v7982 = vunpack.c.h.b16 %v7672
    %v7983 = vunpack.c.l.b16 %v7673
    %v7984 = vunpack.c.h.b16 %v7673
    %v7985 = vunpack.c.l.b16 %v7674
    %v7986 = vunpack.c.h.b16 %v7674
    %v7987 = vunpack.c.l.b16 %v7675
    %v7988 = vunpack.c.h.b16 %v7675
    %v7989 = vunpack.c.l.b16 %v7676
    %v7990 = vunpack.c.h.b16 %v7676
    %v7991 = vunpack.c.l.b16 %v7677
    %v7992 = vunpack.c.h.b16 %v7677
    %v7993 = vunpack.c.l.b16 %v7678
    %v7994 = vunpack.c.h.b16 %v7678
    %v7995 = vunpack.c.l.b16 %v7679
    %v7996 = vunpack.c.h.b16 %v7679
    %v7997 = vunpack.c.l.b16 %v7680
    %v7998 = vunpack.c.h.b16 %v7680
    %v7999 = vunpack.c.l.b16 %v7681
    %v8000 = vunpack.c.h.b16 %v7681
    %v8001 = vunpack.c.l.b16 %v7682
    %v8002 = vunpack.c.h.b16 %v7682
    %v8003 = vunpack.c.l.b16 %v7683
    %v8004 = vunpack.c.h.b16 %v7683
    %v8005 = vunpack.c.l.b16 %v7684
    %v8006 = vunpack.c.h.b16 %v7684
    %v8007 = vunpack.c.l.b16 %v7685
    %v8008 = vunpack.c.h.b16 %v7685
    %v8009 = vunpack.c.l.b16 %v7686
    %v8010 = vunpack.c.h.b16 %v7686
    %v8011 = vunpack.c.l.b16 %v7687
    %v8012 = vunpack.c.h.b16 %v7687
    %v8013 = vunpack.c.l.b16 %v7688
    %v8014 = vunpack.c.h.b16 %v7688
    %v8015 = vunpack.c.l.b16 %v7689
    %v8016 = vunpack.c.h.b16 %v7689
    %v8017 = vunpack.c.l.b16 %v7690
    %v8018 = vunpack.c.h.b16 %v7690
    %v8019 = vunpack.c.l.b16 %v7691
    %v8020 = vunpack.c.h.b16 %v7691
    %v8021 = vunpack.c.l.b16 %v7692
    %v8022 = vunpack.c.h.b16 %v7692
    %v8023 = vunpack.c.l.b16 %v7693
    %v8024 = vunpack.c.h.b16 %v7693
    %v8025 = vunpack.c.l.b16 %v7694
    %v8026 = vunpack.c.h.b16 %v7694
    %v8027 = vunpack.c.l.b16 %v7695
    %v8028 = vunpack.c.h.b16 %v7695
    %v8029 = vunpack.c.l.b16 %v7696
    %v8030 = vunpack.c.h.b16 %v7696
    %v8031 = vunpack.c.l.b16 %v7697
    %v8032 = vunpack.c.h.b16 %v7697
    %v8033 = vunpack.c.l.b16 %v7698
    %v8034 = vunpack.c.h.b16 %v7698
    %v8035 = vunpack.c.l.b16 %v7699
    %v8036 = vunpack.c.h.b16 %v7699
    %v8037 = vunpack.c.l.b16 %v7700
    %v8038 = vunpack.c.h.b16 %v7700
    %v8039 = vunpack.c.l.b16 %v7701
    %v8040 = vunpack.c.h.b16 %v7701
    %v8041 = vunpack.c.l.b16 %v7702
    %v8042 = vunpack.c.h.b16 %v7702
    %v8043 = vunpack.c.l.b16 %v7703
    %v8044 = vunpack.c.h.b16 %v7703
    %v8045 = vunpack.c.l.b16 %v7704
    %v8046 = vunpack.c.h.b16 %v7704
    %v8047 = vunpack.c.l.b16 %v7705
    %v8048 = vunpack.c.h.b16 %v7705
    %v8049 = vunpack.c.l.b16 %v7706
    %v8050 = vunpack.c.h.b16 %v7706
    %v8051 = vunpack.c.l.b16 %v7707
    %v8052 = vunpack.c.h.b16 %v7707
    %v8053 = vunpack.c.l.b16 %v7708
    %v8054 = vunpack.c.h.b16 %v7708
    %v8055 = vunpack.c.l.b16 %v7709
    %v8056 = vunpack.c.h.b16 %v7709
    %v8057 = vunpack.c.l.b16 %v7710
    %v8058 = vunpack.c.h.b16 %v7710
    %v8059 = vunpack.c.l.b16 %v7711
    %v8060 = vunpack.c.h.b16 %v7711
    %v8061 = vunpack.c.l.b16 %v7712
    %v8062 = vunpack.c.h.b16 %v7712
    %v8063 = vunpack.c.l.b16 %v7713
    %v8064 = vunpack.c.h.b16 %v7713
    %v8065 = vunpack.c.l.b16 %v7714
    %v8066 = vunpack.c.h.b16 %v7714
    %v8067 = vunpack.c.l.b16 %v7715
    %v8068 = vunpack.c.h.b16 %v7715
    %v8069 = vunpack.c.l.b16 %v7716
    %v8070 = vunpack.c.h.b16 %v7716
    %v8071 = vunpack.c.l.b16 %v7717
    %v8072 = vunpack.c.h.b16 %v7717
    %v8073 = vunpack.c.l.b16 %v7718
    %v8074 = vunpack.c.h.b16 %v7718
    %v8075 = vunpack.c.l.b16 %v7719
    %v8076 = vunpack.c.h.b16 %v7719
    %v8077 = vunpack.c.l.b16 %v7720
    %v8078 = vunpack.c.h.b16 %v7720
    %v8079 = vunpack.c.l.b16 %v7721
    %v8080 = vunpack.c.h.b16 %v7721
    %v8081 = vunpack.c.l.b16 %v7722
    %v8082 = vunpack.c.h.b16 %v7722
    %v8083 = vunpack.c.l.b16 %v7723
    %v8084 = vunpack.c.h.b16 %v7723
    %v8085 = vunpack.c.l.b16 %v7724
    %v8086 = vunpack.c.h.b16 %v7724
    %v8087 = vunpack.c.l.b16 %v7725
    %v8088 = vunpack.c.h.b16 %v7725
    %v8089 = vunpack.c.l.b16 %v7726
    %v8090 = vunpack.c.h.b16 %v7726
    %v8091 = vunpack.c.l.b16 %v7727
    %v8092 = vunpack.c.h.b16 %v7727
    %v8093 = vunpack.c.l.b16 %v7728
    %v8094 = vunpack.c.h.b16 %v7728
    %v8095 = vunpack.c.l.b16 %v7729
    %v8096 = vunpack.c.h.b16 %v7729
    %v8097 = vunpack.c.l.b16 %v7730
    %v8098 = vunpack.c.h.b16 %v7730
    %v8099 = vunpack.c.l.b16 %v7731
    %v8100 = vunpack.c.h.b16 %v7731
    %v8101 = vunpack.c.l.b16 %v7732
    %v8102 = vunpack.c.h.b16 %v7732
    %v8103 = vunpack.c.l.b16 %v7733
    %v8104 = vunpack.c.h.b16 %v7733
    %v8105 = vunpack.c.l.b16 %v7734
    %v8106 = vunpack.c.h.b16 %v7734
    %v8107 = vunpack.c.l.b16 %v7735
    %v8108 = vunpack.c.h.b16 %v7735
    %v8109 = vunpack.c.l.b16 %v7736
    %v8110 = vunpack.c.h.b16 %v7736
    %v8111 = vunpack.c.l.b16 %v7737
    %v8112 = vunpack.c.h.b16 %v7737
    %v8113 = vunpack.c.l.b16 %v7738
    %v8114 = vunpack.c.h.b16 %v7738
    %v8115 = vunpack.c.l.b16 %v7739
    %v8116 = vunpack.c.h.b16 %v7739
    %v8117 = vunpack.c.l.b16 %v7740
    %v8118 = vunpack.c.h.b16 %v7740
    %v8119 = vunpack.c.l.b16 %v7741
    %v8120 = vunpack.c.h.b16 %v7741
    %v8121 = vunpack.c.l.b16 %v7742
    %v8122 = vunpack.c.h.b16 %v7742
    %v8123 = vunpack.c.l.b16 %v7743
    %v8124 = vunpack.c.h.b16 %v7743
    %v8125 = vunpack.c.l.b16 %v7744
    %v8126 = vunpack.c.h.b16 %v7744
    %v8127 = vunpack.c.l.b16 %v7745
    %v8128 = vunpack.c.h.b16 %v7745
    %v8129 = vunpack.c.l.b16 %v7746
    %v8130 = vunpack.c.h.b16 %v7746
    %v8131 = vpack.c.b16 %v7891, %v7875
    %v8132 = vpack.c.b16 %v7892, %v7876
    %v8133 = vpack.c.b16 %v7893, %v7877
    %v8134 = vpack.c.b16 %v7894, %v7878
    %v8135 = vpack.c.b16 %v7895, %v7879
    %v8136 = vpack.c.b16 %v7896, %v7880
    %v8137 = vpack.c.b16 %v7897, %v7881
    %v8138 = vpack.c.b16 %v7898, %v7882
    %v8139 = vpack.c.b16 %v7899, %v7883
    %v8140 = vpack.c.b16 %v7900, %v7884
    %v8141 = vpack.c.b16 %v7901, %v7885
    %v8142 = vpack.c.b16 %v7902, %v7886
    %v8143 = vpack.c.b16 %v7903, %v7887
    %v8144 = vpack.c.b16 %v7904, %v7888
    %v8145 = vpack.c.b16 %v7905, %v7889
    %v8146 = vpack.c.b16 %v7906, %v7890
    %v8147 = vpack.c.b16 %v7923, %v7907
    %v8148 = vpack.c.b16 %v7924, %v7908
    %v8149 = vpack.c.b16 %v7925, %v7909
    %v8150 = vpack.c.b16 %v7926, %v7910
    %v8151 = vpack.c.b16 %v7927, %v7911
    %v8152 = vpack.c.b16 %v7928, %v7912
    %v8153 = vpack.c.b16 %v7929, %v7913
    %v8154 = vpack.c.b16 %v7930, %v7914
    %v8155 = vpack.c.b16 %v7931, %v7915
    %v8156 = vpack.c.b16 %v7932, %v7916
    %v8157 = vpack.c.b16 %v7933, %v7917
    %v8158 = vpack.c.b16 %v7934, %v7918
    %v8159 = vpack.c.b16 %v7935, %v7919
    %v8160 = vpack.c.b16 %v7936, %v7920
    %v8161 = vpack.c.b16 %v7937, %v7921
    %v8162 = vpack.c.b16 %v7938, %v7922
    %v8163 = vpack.c.b16 %v7955, %v7939
    %v8164 = vpack.c.b16 %v7956, %v7940
    %v8165 = vpack.c.b16 %v7957, %v7941
    %v8166 = vpack.c.b16 %v7958, %v7942
    %v8167 = vpack.c.b16 %v7959, %v7943
    %v8168 = vpack.c.b16 %v7960, %v7944
    %v8169 = vpack.c.b16 %v7961, %v7945
    %v8170 = vpack.c.b16 %v7962, %v7946
    %v8171 = vpack.c.b16 %v7963, %v7947
    %v8172 = vpack.c.b16 %v7964, %v7948
    %v8173 = vpack.c.b16 %v7965, %v7949
    %v8174 = vpack.c.b16 %v7966, %v7950
    %v8175 = vpack.c.b16 %v7967, %v7951
    %v8176 = vpack.c.b16 %v7968, %v7952
    %v8177 = vpack.c.b16 %v7969, %v7953
    %v8178 = vpack.c.b16 %v7970, %v7954
    %v8179 = vpack.c.b16 %v7987, %v7971
    %v8180 = vpack.c.b16 %v7988, %v7972
    %v8181 = vpack.c.b16 %v7989, %v7973
    %v8182 = vpack.c.b16 %v7990, %v7974
    %v8183 = vpack.c.b16 %v7991, %v7975
    %v8184 = vpack.c.b16 %v7992, %v7976
    %v8185 = vpack.c.b16 %v7993, %v7977
    %v8186 = vpack.c.b16 %v7994, %v7978
    %v8187 = vpack.c.b16 %v7995, %v7979
    %v8188 = vpack.c.b16 %v7996, %v7980
    %v8189 = vpack.c.b16 %v7997, %v7981
    %v8190 = vpack.c.b16 %v7998, %v7982
    %v8191 = vpack.c.b16 %v7999, %v7983
    %v8192 = vpack.c.b16 %v8000, %v7984
    %v8193 = vpack.c.b16 %v8001, %v7985
    %v8194 = vpack.c.b16 %v8002, %v7986
    %v8195 = vpack.c.b16 %v8019, %v8003
    %v8196 = vpack.c.b16 %v8020, %v8004
    %v8197 = vpack.c.b16 %v8021, %v8005
    %v8198 = vpack.c.b16 %v8022, %v8006
    %v8199 = vpack.c.b16 %v8023, %v8007
    %v8200 = vpack.c.b16 %v8024, %v8008
    %v8201 = vpack.c.b16 %v8025, %v8009
    %v8202 = vpack.c.b16 %v8026, %v8010
    %v8203 = vpack.c.b16 %v8027, %v8011
    %v8204 = vpack.c.b16 %v8028, %v8012
    %v8205 = vpack.c.b16 %v8029, %v8013
    %v8206 = vpack.c.b16 %v8030, %v8014
    %v8207 = vpack.c.b16 %v8031, %v8015
    %v8208 = vpack.c.b16 %v8032, %v8016
    %v8209 = vpack.c.b16 %v8033, %v8017
    %v8210 = vpack.c.b16 %v8034, %v8018
    %v8211 = vpack.c.b16 %v8051, %v8035
    %v8212 = vpack.c.b16 %v8052, %v8036
    %v8213 = vpack.c.b16 %v8053, %v8037
    %v8214 = vpack.c.b16 %v8054, %v8038
    %v8215 = vpack.c.b16 %v8055, %v8039
    %v8216 = vpack.c.b16 %v8056, %v8040
    %v8217 = vpack.c.b16 %v8057, %v8041
    %v8218 = vpack.c.b16 %v8058, %v8042
    %v8219 = vpack.c.b16 %v8059, %v8043
    %v8220 = vpack.c.b16 %v8060, %v8044
    %v8221 = vpack.c.b16 %v8061, %v8045
    %v8222 = vpack.c.b16 %v8062, %v8046
    %v8223 = vpack.c.b16 %v8063, %v8047
    %v8224 = vpack.c.b16 %v8064, %v8048
    %v8225 = vpack.c.b16 %v8065, %v8049
    %v8226 = vpack.c.b16 %v8066, %v8050
    %v8227 = vpack.c.b16 %v8083, %v8067
    %v8228 = vpack.c.b16 %v8084, %v8068
    %v8229 = vpack.c.b16 %v8085, %v8069
    %v8230 = vpack.c.b16 %v8086, %v8070
    %v8231 = vpack.c.b16 %v8087, %v8071
    %v8232 = vpack.c.b16 %v8088, %v8072
    %v8233 = vpack.c.b16 %v8089, %v8073
    %v8234 = vpack.c.b16 %v8090, %v8074
    %v8235 = vpack.c.b16 %v8091, %v8075
    %v8236 = vpack.c.b16 %v8092, %v8076
    %v8237 = vpack.c.b16 %v8093, %v8077
    %v8238 = vpack.c.b16 %v8094, %v8078
    %v8239 = vpack.c.b16 %v8095, %v8079
    %v8240 = vpack.c.b16 %v8096, %v8080
    %v8241 = vpack.c.b16 %v8097, %v8081
    %v8242 = vpack.c.b16 %v8098, %v8082
    %v8243 = vpack.c.b16 %v8115, %v8099
    %v8244 = vpack.c.b16 %v8116, %v8100
    %v8245 = vpack.c.b16 %v8117, %v8101
    %v8246 = vpack.c.b16 %v8118, %v8102
    %v8247 = vpack.c.b16 %v8119, %v8103
    %v8248 = vpack.c.b16 %v8120, %v8104
    %v8249 = vpack.c.b16 %v8121, %v8105
    %v8250 = vpack.c.b16 %v8122, %v8106
    %v8251 = vpack.c.b16 %v8123, %v8107
    %v8252 = vpack.c.b16 %v8124, %v8108
    %v8253 = vpack.c.b16 %v8125, %v8109
    %v8254 = vpack.c.b16 %v8126, %v8110
    %v8255 = vpack.c.b16 %v8127, %v8111
    %v8256 = vpack.c.b16 %v8128, %v8112
    %v8257 = vpack.c.b16 %v8129, %v8113
    %v8258 = vpack.c.b16 %v8130, %v8114
    %8387 = vmatprep.subr.bf16.mxu0 %v8132
    %8388 = vmatpush1.bf16.msra.mxu0 %v8131
    %8389 = vmatprep.subr.bf16.mxu0 %v8148
    %8390 = vmatpush1.bf16.msra.mxu0 %v8147
    %8391 = vmatprep.subr.bf16.mxu0 %v8164
    %8392 = vmatpush1.bf16.msra.mxu0 %v8163
    %8393 = vmatprep.subr.bf16.mxu0 %v8180
    %8394 = vmatpush1.bf16.msra.mxu0 %v8179
    %8395 = vmatprep.subr.bf16.mxu0 %v8196
    %8396 = vmatpush1.bf16.msra.mxu0 %v8195
    %8397 = vmatprep.subr.bf16.mxu0 %v8212
    %8398 = vmatpush1.bf16.msra.mxu0 %v8211
    %8399 = vmatprep.subr.bf16.mxu0 %v8228
    %8400 = vmatpush1.bf16.msra.mxu0 %v8227
    %8401 = vmatprep.subr.bf16.mxu0 %v8244
    %8402 = vmatpush1.bf16.msra.mxu0 %v8243
    %8403 = vmatprep.subr.bf16.mxu0 0
    %8404 = vmatpush1.bf16.msra.mxu0 0
    %8405 = vmatprep.subr.bf16.mxu0 0
    %8406 = vmatpush1.bf16.msra.mxu0 0
    %8407 = vmatprep.subr.bf16.mxu0 0
    %8408 = vmatpush1.bf16.msra.mxu0 0
    %8409 = vmatprep.subr.bf16.mxu0 0
    %8410 = vmatpush1.bf16.msra.mxu0 0
    %8411 = vmatprep.subr.bf16.mxu0 0
    %8412 = vmatpush1.bf16.msra.mxu0 0
    %8413 = vmatprep.subr.bf16.mxu0 0
    %8414 = vmatpush1.bf16.msra.mxu0 0
    %8415 = vmatprep.subr.bf16.mxu0 0
    %8416 = vmatpush1.bf16.msra.mxu0 0
    %8417 = vmatprep.subr.bf16.mxu0 0
    %8418 = vmatpush1.bf16.msra.mxu0 0
    %8419 = vmatprep.mubr.bf16.mxu0 0
    %8420 = vmatmul.mubr.bf16.gmra.mrb[0].mxu0 %v7610
    %v8421 = vpop.f32.mrb[0].mxu0
    %v8422 = vadd.f32 0.0, %v8421
    %v8423 = vpop.f32.mrb[0].mxu0
    %v8424 = vadd.f32 0.0, %v8423
    %v8425 = vpop.f32.mrb[0].mxu0
    %v8426 = vadd.f32 0.0, %v8425
    %v8427 = vpop.f32.mrb[0].mxu0
    %v8428 = vadd.f32 0.0, %v8427
    %8429 = vmatprep.mubr.bf16.mxu0 0
    %8430 = vmatmul.mubr.bf16.gmra.mrb[0].mxu0 %v7617
    %v8431 = vpop.f32.mrb[0].mxu0
    %v8432 = vadd.f32 0.0, %v8431
    %v8433 = vpop.f32.mrb[0].mxu0
    %v8434 = vadd.f32 0.0, %v8433
    %v8435 = vpop.f32.mrb[0].mxu0
    %v8436 = vadd.f32 0.0, %v8435
    %v8437 = vpop.f32.mrb[0].mxu0
    %v8438 = vadd.f32 0.0, %v8437
    %8439 = vdwg.mxu0
    %8440 = vmatprep.subr.bf16.mxu0 %v8134
    %8441 = vmatpush1.bf16.msra.mxu0 %v8133
    %8442 = vmatprep.subr.bf16.mxu0 %v8150
    %8443 = vmatpush1.bf16.msra.mxu0 %v8149
    %8444 = vmatprep.subr.bf16.mxu0 %v8166
    %8445 = vmatpush1.bf16.msra.mxu0 %v8165
    %8446 = vmatprep.subr.bf16.mxu0 %v8182
    %8447 = vmatpush1.bf16.msra.mxu0 %v8181
    %8448 = vmatprep.subr.bf16.mxu0 %v8198
    %8449 = vmatpush1.bf16.msra.mxu0 %v8197
    %8450 = vmatprep.subr.bf16.mxu0 %v8214
    %8451 = vmatpush1.bf16.msra.mxu0 %v8213
    %8452 = vmatprep.subr.bf16.mxu0 %v8230
    %8453 = vmatpush1.bf16.msra.mxu0 %v8229
    %8454 = vmatprep.subr.bf16.mxu0 %v8246
    %8455 = vmatpush1.bf16.msra.mxu0 %v8245
    %8456 = vmatprep.subr.bf16.mxu0 0
    %8457 = vmatpush1.bf16.msra.mxu0 0
    %8458 = vmatprep.subr.bf16.mxu0 0
    %8459 = vmatpush1.bf16.msra.mxu0 0
    %8460 = vmatprep.subr.bf16.mxu0 0
    %8461 = vmatpush1.bf16.msra.mxu0 0
    %8462 = vmatprep.subr.bf16.mxu0 0
    %8463 = vmatpush1.bf16.msra.mxu0 0
    %8464 = vmatprep.subr.bf16.mxu0 0
    %8465 = vmatpush1.bf16.msra.mxu0 0
    %8466 = vmatprep.subr.bf16.mxu0 0
    %8467 = vmatpush1.bf16.msra.mxu0 0
    %8468 = vmatprep.subr.bf16.mxu0 0
    %8469 = vmatpush1.bf16.msra.mxu0 0
    %8470 = vmatprep.subr.bf16.mxu0 0
    %8471 = vmatpush1.bf16.msra.mxu0 0
    %8472 = vmatprep.mubr.bf16.mxu0 0
    %8473 = vmatmul.mubr.bf16.gmra.mrb[0].mxu0 %v7610
    %v8474 = vpop.f32.mrb[0].mxu0
    %v8475 = vadd.f32 0.0, %v8474
    %v8476 = vpop.f32.mrb[0].mxu0
    %v8477 = vadd.f32 0.0, %v8476
    %v8478 = vpop.f32.mrb[0].mxu0
    %v8479 = vadd.f32 0.0, %v8478
    %v8480 = vpop.f32.mrb[0].mxu0
    %v8481 = vadd.f32 0.0, %v8480
    %8482 = vmatprep.mubr.bf16.mxu0 0
    %8483 = vmatmul.mubr.bf16.gmra.mrb[0].mxu0 %v7617
    %v8484 = vpop.f32.mrb[0].mxu0
    %v8485 = vadd.f32 0.0, %v8484
    %v8486 = vpop.f32.mrb[0].mxu0
    %v8487 = vadd.f32 0.0, %v8486
    %v8488 = vpop.f32.mrb[0].mxu0
    %v8489 = vadd.f32 0.0, %v8488
    %v8490 = vpop.f32.mrb[0].mxu0
    %v8491 = vadd.f32 0.0, %v8490
    %8492 = vdwg.mxu0
    %8493 = vmatprep.subr.bf16.mxu0 %v8136
    %8494 = vmatpush1.bf16.msra.mxu0 %v8135
    %8495 = vmatprep.subr.bf16.mxu0 %v8152
    %8496 = vmatpush1.bf16.msra.mxu0 %v8151
    %8497 = vmatprep.subr.bf16.mxu0 %v8168
    %8498 = vmatpush1.bf16.msra.mxu0 %v8167
    %8499 = vmatprep.subr.bf16.mxu0 %v8184
    %8500 = vmatpush1.bf16.msra.mxu0 %v8183
    %8501 = vmatprep.subr.bf16.mxu0 %v8200
    %8502 = vmatpush1.bf16.msra.mxu0 %v8199
    %8503 = vmatprep.subr.bf16.mxu0 %v8216
    %8504 = vmatpush1.bf16.msra.mxu0 %v8215
    %8505 = vmatprep.subr.bf16.mxu0 %v8232
    %8506 = vmatpush1.bf16.msra.mxu0 %v8231
    %8507 = vmatprep.subr.bf16.mxu0 %v8248
    %8508 = vmatpush1.bf16.msra.mxu0 %v8247
    %8509 = vmatprep.subr.bf16.mxu0 0
    %8510 = vmatpush1.bf16.msra.mxu0 0
    %8511 = vmatprep.subr.bf16.mxu0 0
    %8512 = vmatpush1.bf16.msra.mxu0 0
    %8513 = vmatprep.subr.bf16.mxu0 0
    %8514 = vmatpush1.bf16.msra.mxu0 0
    %8515 = vmatprep.subr.bf16.mxu0 0
    %8516 = vmatpush1.bf16.msra.mxu0 0
    %8517 = vmatprep.subr.bf16.mxu0 0
    %8518 = vmatpush1.bf16.msra.mxu0 0
    %8519 = vmatprep.subr.bf16.mxu0 0
    %8520 = vmatpush1.bf16.msra.mxu0 0
    %8521 = vmatprep.subr.bf16.mxu0 0
    %8522 = vmatpush1.bf16.msra.mxu0 0
    %8523 = vmatprep.subr.bf16.mxu0 0
    %8524 = vmatpush1.bf16.msra.mxu0 0
    %8525 = vmatprep.mubr.bf16.mxu0 0
    %8526 = vmatmul.mubr.bf16.gmra.mrb[0].mxu0 %v7610
    %v8527 = vpop.f32.mrb[0].mxu0
    %v8528 = vadd.f32 0.0, %v8527
    %v8529 = vpop.f32.mrb[0].mxu0
    %v8530 = vadd.f32 0.0, %v8529
    %v8531 = vpop.f32.mrb[0].mxu0
    %v8532 = vadd.f32 0.0, %v8531
    %v8533 = vpop.f32.mrb[0].mxu0
    %v8534 = vadd.f32 0.0, %v8533
    %8535 = vmatprep.mubr.bf16.mxu0 0
    %8536 = vmatmul.mubr.bf16.gmra.mrb[0].mxu0 %v7617
    %v8537 = vpop.f32.mrb[0].mxu0
    %v8538 = vadd.f32 0.0, %v8537
    %v8539 = vpop.f32.mrb[0].mxu0
    %v8540 = vadd.f32 0.0, %v8539
    %v8541 = vpop.f32.mrb[0].mxu0
    %v8542 = vadd.f32 0.0, %v8541
    %v8543 = vpop.f32.mrb[0].mxu0
    %v8544 = vadd.f32 0.0, %v8543
    %8545 = vdwg.mxu0
    %8546 = vmatprep.subr.bf16.mxu0 %v8138
    %8547 = vmatpush1.bf16.msra.mxu0 %v8137
    %8548 = vmatprep.subr.bf16.mxu0 %v8154
    %8549 = vmatpush1.bf16.msra.mxu0 %v8153
    %8550 = vmatprep.subr.bf16.mxu0 %v8170
    %8551 = vmatpush1.bf16.msra.mxu0 %v8169
    %8552 = vmatprep.subr.bf16.mxu0 %v8186
    %8553 = vmatpush1.bf16.msra.mxu0 %v8185
    %8554 = vmatprep.subr.bf16.mxu0 %v8202
    %8555 = vmatpush1.bf16.msra.mxu0 %v8201
    %8556 = vmatprep.subr.bf16.mxu0 %v8218
    %8557 = vmatpush1.bf16.msra.mxu0 %v8217
    %8558 = vmatprep.subr.bf16.mxu0 %v8234
    %8559 = vmatpush1.bf16.msra.mxu0 %v8233
    %8560 = vmatprep.subr.bf16.mxu0 %v8250
    %8561 = vmatpush1.bf16.msra.mxu0 %v8249
    %8562 = vmatprep.subr.bf16.mxu0 0
    %8563 = vmatpush1.bf16.msra.mxu0 0
    %8564 = vmatprep.subr.bf16.mxu0 0
    %8565 = vmatpush1.bf16.msra.mxu0 0
    %8566 = vmatprep.subr.bf16.mxu0 0
    %8567 = vmatpush1.bf16.msra.mxu0 0
    %8568 = vmatprep.subr.bf16.mxu0 0
    %8569 = vmatpush1.bf16.msra.mxu0 0
    %8570 = vmatprep.subr.bf16.mxu0 0
    %8571 = vmatpush1.bf16.msra.mxu0 0
    %8572 = vmatprep.subr.bf16.mxu0 0
    %8573 = vmatpush1.bf16.msra.mxu0 0
    %8574 = vmatprep.subr.bf16.mxu0 0
    %8575 = vmatpush1.bf16.msra.mxu0 0
    %8576 = vmatprep.subr.bf16.mxu0 0
    %8577 = vmatpush1.bf16.msra.mxu0 0
    %8578 = vmatprep.mubr.bf16.mxu0 0
    %8579 = vmatmul.mubr.bf16.gmra.mrb[0].mxu0 %v7610
    %v8580 = vpop.f32.mrb[0].mxu0
    %v8581 = vadd.f32 0.0, %v8580
    %v8582 = vpop.f32.mrb[0].mxu0
    %v8583 = vadd.f32 0.0, %v8582
    %v8584 = vpop.f32.mrb[0].mxu0
    %v8585 = vadd.f32 0.0, %v8584
    %v8586 = vpop.f32.mrb[0].mxu0
    %v8587 = vadd.f32 0.0, %v8586
    %8588 = vmatprep.mubr.bf16.mxu0 0
    %8589 = vmatmul.mubr.bf16.gmra.mrb[0].mxu0 %v7617
    %v8590 = vpop.f32.mrb[0].mxu0
    %v8591 = vadd.f32 0.0, %v8590
    %v8592 = vpop.f32.mrb[0].mxu0
    %v8593 = vadd.f32 0.0, %v8592
    %v8594 = vpop.f32.mrb[0].mxu0
    %v8595 = vadd.f32 0.0, %v8594
    %v8596 = vpop.f32.mrb[0].mxu0
    %v8597 = vadd.f32 0.0, %v8596
    %8598 = vdwg.mxu0
    %8599 = vmatprep.subr.bf16.mxu0 %v8140
    %8600 = vmatpush1.bf16.msra.mxu0 %v8139
    %8601 = vmatprep.subr.bf16.mxu0 %v8156
    %8602 = vmatpush1.bf16.msra.mxu0 %v8155
    %8603 = vmatprep.subr.bf16.mxu0 %v8172
    %8604 = vmatpush1.bf16.msra.mxu0 %v8171
    %8605 = vmatprep.subr.bf16.mxu0 %v8188
    %8606 = vmatpush1.bf16.msra.mxu0 %v8187
    %8607 = vmatprep.subr.bf16.mxu0 %v8204
    %8608 = vmatpush1.bf16.msra.mxu0 %v8203
    %8609 = vmatprep.subr.bf16.mxu0 %v8220
    %8610 = vmatpush1.bf16.msra.mxu0 %v8219
    %8611 = vmatprep.subr.bf16.mxu0 %v8236
    %8612 = vmatpush1.bf16.msra.mxu0 %v8235
    %8613 = vmatprep.subr.bf16.mxu0 %v8252
    %8614 = vmatpush1.bf16.msra.mxu0 %v8251
    %8615 = vmatprep.subr.bf16.mxu0 0
    %8616 = vmatpush1.bf16.msra.mxu0 0
    %8617 = vmatprep.subr.bf16.mxu0 0
    %8618 = vmatpush1.bf16.msra.mxu0 0
    %8619 = vmatprep.subr.bf16.mxu0 0
    %8620 = vmatpush1.bf16.msra.mxu0 0
    %8621 = vmatprep.subr.bf16.mxu0 0
    %8622 = vmatpush1.bf16.msra.mxu0 0
    %8623 = vmatprep.subr.bf16.mxu0 0
    %8624 = vmatpush1.bf16.msra.mxu0 0
    %8625 = vmatprep.subr.bf16.mxu0 0
    %8626 = vmatpush1.bf16.msra.mxu0 0
    %8627 = vmatprep.subr.bf16.mxu0 0
    %8628 = vmatpush1.bf16.msra.mxu0 0
    %8629 = vmatprep.subr.bf16.mxu0 0
    %8630 = vmatpush1.bf16.msra.mxu0 0
    %8631 = vmatprep.mubr.bf16.mxu0 0
    %8632 = vmatmul.mubr.bf16.gmra.mrb[0].mxu0 %v7610
    %v8633 = vpop.f32.mrb[0].mxu0
    %v8634 = vadd.f32 0.0, %v8633
    %v8635 = vpop.f32.mrb[0].mxu0
    %v8636 = vadd.f32 0.0, %v8635
    %v8637 = vpop.f32.mrb[0].mxu0
    %v8638 = vadd.f32 0.0, %v8637
    %v8639 = vpop.f32.mrb[0].mxu0
    %v8640 = vadd.f32 0.0, %v8639
    %8641 = vmatprep.mubr.bf16.mxu0 0
    %8642 = vmatmul.mubr.bf16.gmra.mrb[0].mxu0 %v7617
    %v8643 = vpop.f32.mrb[0].mxu0
    %v8644 = vadd.f32 0.0, %v8643
    %v8645 = vpop.f32.mrb[0].mxu0
    %v8646 = vadd.f32 0.0, %v8645
    %v8647 = vpop.f32.mrb[0].mxu0
    %v8648 = vadd.f32 0.0, %v8647
    %v8649 = vpop.f32.mrb[0].mxu0
    %v8650 = vadd.f32 0.0, %v8649
    %8651 = vdwg.mxu0
    %8652 = vmatprep.subr.bf16.mxu0 %v8142
    %8653 = vmatpush1.bf16.msra.mxu0 %v8141
    %8654 = vmatprep.subr.bf16.mxu0 %v8158
    %8655 = vmatpush1.bf16.msra.mxu0 %v8157
    %8656 = vmatprep.subr.bf16.mxu0 %v8174
    %8657 = vmatpush1.bf16.msra.mxu0 %v8173
    %8658 = vmatprep.subr.bf16.mxu0 %v8190
    %8659 = vmatpush1.bf16.msra.mxu0 %v8189
    %8660 = vmatprep.subr.bf16.mxu0 %v8206
    %8661 = vmatpush1.bf16.msra.mxu0 %v8205
    %8662 = vmatprep.subr.bf16.mxu0 %v8222
    %8663 = vmatpush1.bf16.msra.mxu0 %v8221
    %8664 = vmatprep.subr.bf16.mxu0 %v8238
    %8665 = vmatpush1.bf16.msra.mxu0 %v8237
    %8666 = vmatprep.subr.bf16.mxu0 %v8254
    %8667 = vmatpush1.bf16.msra.mxu0 %v8253
    %8668 = vmatprep.subr.bf16.mxu0 0
    %8669 = vmatpush1.bf16.msra.mxu0 0
    %8670 = vmatprep.subr.bf16.mxu0 0
    %8671 = vmatpush1.bf16.msra.mxu0 0
    %8672 = vmatprep.subr.bf16.mxu0 0
    %8673 = vmatpush1.bf16.msra.mxu0 0
    %8674 = vmatprep.subr.bf16.mxu0 0
    %8675 = vmatpush1.bf16.msra.mxu0 0
    %8676 = vmatprep.subr.bf16.mxu0 0
    %8677 = vmatpush1.bf16.msra.mxu0 0
    %8678 = vmatprep.subr.bf16.mxu0 0
    %8679 = vmatpush1.bf16.msra.mxu0 0
    %8680 = vmatprep.subr.bf16.mxu0 0
    %8681 = vmatpush1.bf16.msra.mxu0 0
    %8682 = vmatprep.subr.bf16.mxu0 0
    %8683 = vmatpush1.bf16.msra.mxu0 0
    %8684 = vmatprep.mubr.bf16.mxu0 0
    %8685 = vmatmul.mubr.bf16.gmra.mrb[0].mxu0 %v7610
    %v8686 = vpop.f32.mrb[0].mxu0
    %v8687 = vadd.f32 0.0, %v8686
    %v8688 = vpop.f32.mrb[0].mxu0
    %v8689 = vadd.f32 0.0, %v8688
    %v8690 = vpop.f32.mrb[0].mxu0
    %v8691 = vadd.f32 0.0, %v8690
    %v8692 = vpop.f32.mrb[0].mxu0
    %v8693 = vadd.f32 0.0, %v8692
    %8694 = vmatprep.mubr.bf16.mxu0 0
    %8695 = vmatmul.mubr.bf16.gmra.mrb[0].mxu0 %v7617
    %v8696 = vpop.f32.mrb[0].mxu0
    %v8697 = vadd.f32 0.0, %v8696
    %v8698 = vpop.f32.mrb[0].mxu0
    %v8699 = vadd.f32 0.0, %v8698
    %v8700 = vpop.f32.mrb[0].mxu0
    %v8701 = vadd.f32 0.0, %v8700
    %v8702 = vpop.f32.mrb[0].mxu0
    %v8703 = vadd.f32 0.0, %v8702
    %8704 = vdwg.mxu0
    %8705 = vmatprep.subr.bf16.mxu0 %v8144
    %8706 = vmatpush1.bf16.msra.mxu0 %v8143
    %8707 = vmatprep.subr.bf16.mxu0 %v8160
    %8708 = vmatpush1.bf16.msra.mxu0 %v8159
    %8709 = vmatprep.subr.bf16.mxu0 %v8176
    %8710 = vmatpush1.bf16.msra.mxu0 %v8175
    %8711 = vmatprep.subr.bf16.mxu0 %v8192
    %8712 = vmatpush1.bf16.msra.mxu0 %v8191
    %8713 = vmatprep.subr.bf16.mxu0 %v8208
    %8714 = vmatpush1.bf16.msra.mxu0 %v8207
    %8715 = vmatprep.subr.bf16.mxu0 %v8224
    %8716 = vmatpush1.bf16.msra.mxu0 %v8223
    %8717 = vmatprep.subr.bf16.mxu0 %v8240
    %8718 = vmatpush1.bf16.msra.mxu0 %v8239
    %8719 = vmatprep.subr.bf16.mxu0 %v8256
    %8720 = vmatpush1.bf16.msra.mxu0 %v8255
    %8721 = vmatprep.subr.bf16.mxu0 0
    %8722 = vmatpush1.bf16.msra.mxu0 0
    %8723 = vmatprep.subr.bf16.mxu0 0
    %8724 = vmatpush1.bf16.msra.mxu0 0
    %8725 = vmatprep.subr.bf16.mxu0 0
    %8726 = vmatpush1.bf16.msra.mxu0 0
    %8727 = vmatprep.subr.bf16.mxu0 0
    %8728 = vmatpush1.bf16.msra.mxu0 0
    %8729 = vmatprep.subr.bf16.mxu0 0
    %8730 = vmatpush1.bf16.msra.mxu0 0
    %8731 = vmatprep.subr.bf16.mxu0 0
    %8732 = vmatpush1.bf16.msra.mxu0 0
    %8733 = vmatprep.subr.bf16.mxu0 0
    %8734 = vmatpush1.bf16.msra.mxu0 0
    %8735 = vmatprep.subr.bf16.mxu0 0
    %8736 = vmatpush1.bf16.msra.mxu0 0
    %8737 = vmatprep.mubr.bf16.mxu0 0
    %8738 = vmatmul.mubr.bf16.gmra.mrb[0].mxu0 %v7610
    %v8739 = vpop.f32.mrb[0].mxu0
    %v8740 = vadd.f32 0.0, %v8739
    %v8741 = vpop.f32.mrb[0].mxu0
    %v8742 = vadd.f32 0.0, %v8741
    %v8743 = vpop.f32.mrb[0].mxu0
    %v8744 = vadd.f32 0.0, %v8743
    %v8745 = vpop.f32.mrb[0].mxu0
    %v8746 = vadd.f32 0.0, %v8745
    %8747 = vmatprep.mubr.bf16.mxu0 0
    %8748 = vmatmul.mubr.bf16.gmra.mrb[0].mxu0 %v7617
    %v8749 = vpop.f32.mrb[0].mxu0
    %v8750 = vadd.f32 0.0, %v8749
    %v8751 = vpop.f32.mrb[0].mxu0
    %v8752 = vadd.f32 0.0, %v8751
    %v8753 = vpop.f32.mrb[0].mxu0
    %v8754 = vadd.f32 0.0, %v8753
    %v8755 = vpop.f32.mrb[0].mxu0
    %v8756 = vadd.f32 0.0, %v8755
    %8757 = vdwg.mxu0
    %8758 = vmatprep.subr.bf16.mxu0 %v8146
    %8759 = vmatpush1.bf16.msra.mxu0 %v8145
    %8760 = vmatprep.subr.bf16.mxu0 %v8162
    %8761 = vmatpush1.bf16.msra.mxu0 %v8161
    %8762 = vmatprep.subr.bf16.mxu0 %v8178
    %8763 = vmatpush1.bf16.msra.mxu0 %v8177
    %8764 = vmatprep.subr.bf16.mxu0 %v8194
    %8765 = vmatpush1.bf16.msra.mxu0 %v8193
    %8766 = vmatprep.subr.bf16.mxu0 %v8210
    %8767 = vmatpush1.bf16.msra.mxu0 %v8209
    %8768 = vmatprep.subr.bf16.mxu0 %v8226
    %8769 = vmatpush1.bf16.msra.mxu0 %v8225
    %8770 = vmatprep.subr.bf16.mxu0 %v8242
    %8771 = vmatpush1.bf16.msra.mxu0 %v8241
    %8772 = vmatprep.subr.bf16.mxu0 %v8258
    %8773 = vmatpush1.bf16.msra.mxu0 %v8257
    %8774 = vmatprep.subr.bf16.mxu0 0
    %8775 = vmatpush1.bf16.msra.mxu0 0
    %8776 = vmatprep.subr.bf16.mxu0 0
    %8777 = vmatpush1.bf16.msra.mxu0 0
    %8778 = vmatprep.subr.bf16.mxu0 0
    %8779 = vmatpush1.bf16.msra.mxu0 0
    %8780 = vmatprep.subr.bf16.mxu0 0
    %8781 = vmatpush1.bf16.msra.mxu0 0
    %8782 = vmatprep.subr.bf16.mxu0 0
    %8783 = vmatpush1.bf16.msra.mxu0 0
    %8784 = vmatprep.subr.bf16.mxu0 0
    %8785 = vmatpush1.bf16.msra.mxu0 0
    %8786 = vmatprep.subr.bf16.mxu0 0
    %8787 = vmatpush1.bf16.msra.mxu0 0
    %8788 = vmatprep.subr.bf16.mxu0 0
    %8789 = vmatpush1.bf16.msra.mxu0 0
    %8790 = vmatprep.mubr.bf16.mxu0 0
    %8791 = vmatmul.mubr.bf16.gmra.mrb[0].mxu0 %v7610
    %v8792 = vpop.f32.mrb[0].mxu0
    %v8793 = vadd.f32 0.0, %v8792
    %v8794 = vpop.f32.mrb[0].mxu0
    %v8795 = vadd.f32 0.0, %v8794
    %v8796 = vpop.f32.mrb[0].mxu0
    %v8797 = vadd.f32 0.0, %v8796
    %v8798 = vpop.f32.mrb[0].mxu0
    %v8799 = vadd.f32 0.0, %v8798
    %8800 = vmatprep.mubr.bf16.mxu0 0
    %8801 = vmatmul.mubr.bf16.gmra.mrb[0].mxu0 %v7617
    %v8802 = vpop.f32.mrb[0].mxu0
    %v8803 = vadd.f32 0.0, %v8802
    %v8804 = vpop.f32.mrb[0].mxu0
    %v8805 = vadd.f32 0.0, %v8804
    %v8806 = vpop.f32.mrb[0].mxu0
    %v8807 = vadd.f32 0.0, %v8806
    %v8808 = vpop.f32.mrb[0].mxu0
    %v8809 = vadd.f32 0.0, %v8808
    %8810 = vdwg.mxu0
    %v8811 = vld [vmem:[%s0] sm:$0xff]
    %v8812 = vld [vmem:[%s0 + $0x8] sm:$0xff]
    %v8813 = vld [vmem:[%s0 + $0x10] sm:$0xff]
    %v8814 = vld [vmem:[%s0 + $0x18] sm:$0xff]
    %v8815 = vld [vmem:[%s0 + $0x20] sm:$0xff]
    %v8816 = vld [vmem:[%s0 + $0x28] sm:$0xff]
    %v8817 = vld [vmem:[%s0 + $0x30] sm:$0xff]
    %v8818 = vld [vmem:[%s0 + $0x38] sm:$0xff]
    %v8819 = vld [vmem:[%s0 + $0x40] sm:$0xff]
    %v8820 = vld [vmem:[%s0 + $0x48] sm:$0xff]
    %v8821 = vld [vmem:[%s0 + $0x50] sm:$0xff]
    %v8822 = vld [vmem:[%s0 + $0x58] sm:$0xff]
    %v8823 = vld [vmem:[%s0 + $0x60] sm:$0xff]
    %v8824 = vld [vmem:[%s0 + $0x68] sm:$0xff]
    %v8825 = vld [vmem:[%s0 + $0x70] sm:$0xff]
    %v8826 = vld [vmem:[%s0 + $0x78] sm:$0xff]
    %v8827 = vld [vmem:[%s0 + $0x100] sm:$0xff]
    %v8828 = vld [vmem:[%s0 + $0x108] sm:$0xff]
    %v8829 = vld [vmem:[%s0 + $0x110] sm:$0xff]
    %v8830 = vld [vmem:[%s0 + $0x118] sm:$0xff]
    %v8831 = vld [vmem:[%s0 + $0x120] sm:$0xff]
    %v8832 = vld [vmem:[%s0 + $0x128] sm:$0xff]
    %v8833 = vld [vmem:[%s0 + $0x130] sm:$0xff]
    %v8834 = vld [vmem:[%s0 + $0x138] sm:$0xff]
    %v8835 = vld [vmem:[%s0 + $0x140] sm:$0xff]
    %v8836 = vld [vmem:[%s0 + $0x148] sm:$0xff]
    %v8837 = vld [vmem:[%s0 + $0x150] sm:$0xff]
    %v8838 = vld [vmem:[%s0 + $0x158] sm:$0xff]
    %v8839 = vld [vmem:[%s0 + $0x160] sm:$0xff]
    %v8840 = vld [vmem:[%s0 + $0x168] sm:$0xff]
    %v8841 = vld [vmem:[%s0 + $0x170] sm:$0xff]
    %v8842 = vld [vmem:[%s0 + $0x178] sm:$0xff]
    %v8843 = vadd.f32 %v8811, %v8422
    %v8844 = vadd.f32 %v8812, %v8424
    %v8845 = vadd.f32 %v8813, %v8475
    %v8846 = vadd.f32 %v8814, %v8477
    %v8847 = vadd.f32 %v8815, %v8528
    %v8848 = vadd.f32 %v8816, %v8530
    %v8849 = vadd.f32 %v8817, %v8581
    %v8850 = vadd.f32 %v8818, %v8583
    %v8851 = vadd.f32 %v8819, %v8634
    %v8852 = vadd.f32 %v8820, %v8636
    %v8853 = vadd.f32 %v8821, %v8687
    %v8854 = vadd.f32 %v8822, %v8689
    %v8855 = vadd.f32 %v8823, %v8740
    %v8856 = vadd.f32 %v8824, %v8742
    %v8857 = vadd.f32 %v8825, %v8793
    %v8858 = vadd.f32 %v8826, %v8795
    %v8859 = vadd.f32 %v8827, %v8426
    %v8860 = vadd.f32 %v8828, %v8428
    %v8861 = vadd.f32 %v8829, %v8479
    %v8862 = vadd.f32 %v8830, %v8481
    %v8863 = vadd.f32 %v8831, %v8532
    %v8864 = vadd.f32 %v8832, %v8534
    %v8865 = vadd.f32 %v8833, %v8585
    %v8866 = vadd.f32 %v8834, %v8587
    %v8867 = vadd.f32 %v8835, %v8638
    %v8868 = vadd.f32 %v8836, %v8640
    %v8869 = vadd.f32 %v8837, %v8691
    %v8870 = vadd.f32 %v8838, %v8693
    %v8871 = vadd.f32 %v8839, %v8744
    %v8872 = vadd.f32 %v8840, %v8746
    %v8873 = vadd.f32 %v8841, %v8797
    %v8874 = vadd.f32 %v8842, %v8799
    %v8875 = vmul.f32 %v8811, %v8843
    %v8876 = vmul.f32 %v8812, %v8844
    %v8877 = vmul.f32 %v8813, %v8845
    %v8878 = vmul.f32 %v8814, %v8846
    %v8879 = vmul.f32 %v8815, %v8847
    %v8880 = vmul.f32 %v8816, %v8848
    %v8881 = vmul.f32 %v8817, %v8849
    %v8882 = vmul.f32 %v8818, %v8850
    %v8883 = vmul.f32 %v8819, %v8851
    %v8884 = vmul.f32 %v8820, %v8852
    %v8885 = vmul.f32 %v8821, %v8853
    %v8886 = vmul.f32 %v8822, %v8854
    %v8887 = vmul.f32 %v8823, %v8855
    %v8888 = vmul.f32 %v8824, %v8856
    %v8889 = vmul.f32 %v8825, %v8857
    %v8890 = vmul.f32 %v8826, %v8858
    %v8891 = vmul.f32 %v8827, %v8859
    %v8892 = vmul.f32 %v8828, %v8860
    %v8893 = vmul.f32 %v8829, %v8861
    %v8894 = vmul.f32 %v8830, %v8862
    %v8895 = vmul.f32 %v8831, %v8863
    %v8896 = vmul.f32 %v8832, %v8864
    %v8897 = vmul.f32 %v8833, %v8865
    %v8898 = vmul.f32 %v8834, %v8866
    %v8899 = vmul.f32 %v8835, %v8867
    %v8900 = vmul.f32 %v8836, %v8868
    %v8901 = vmul.f32 %v8837, %v8869
    %v8902 = vmul.f32 %v8838, %v8870
    %v8903 = vmul.f32 %v8839, %v8871
    %v8904 = vmul.f32 %v8840, %v8872
    %v8905 = vmul.f32 %v8841, %v8873
    %v8906 = vmul.f32 %v8842, %v8874
    %v8907 = vadd.f32 %v8875, %v8432
    %v8908 = vadd.f32 %v8876, %v8434
    %v8909 = vadd.f32 %v8877, %v8485
    %v8910 = vadd.f32 %v8878, %v8487
    %v8911 = vadd.f32 %v8879, %v8538
    %v8912 = vadd.f32 %v8880, %v8540
    %v8913 = vadd.f32 %v8881, %v8591
    %v8914 = vadd.f32 %v8882, %v8593
    %v8915 = vadd.f32 %v8883, %v8644
    %v8916 = vadd.f32 %v8884, %v8646
    %v8917 = vadd.f32 %v8885, %v8697
    %v8918 = vadd.f32 %v8886, %v8699
    %v8919 = vadd.f32 %v8887, %v8750
    %v8920 = vadd.f32 %v8888, %v8752
    %v8921 = vadd.f32 %v8889, %v8803
    %v8922 = vadd.f32 %v8890, %v8805
    %v8923 = vadd.f32 %v8891, %v8436
    %v8924 = vadd.f32 %v8892, %v8438
    %v8925 = vadd.f32 %v8893, %v8489
    %v8926 = vadd.f32 %v8894, %v8491
    %v8927 = vadd.f32 %v8895, %v8542
    %v8928 = vadd.f32 %v8896, %v8544
    %v8929 = vadd.f32 %v8897, %v8595
    %v8930 = vadd.f32 %v8898, %v8597
    %v8931 = vadd.f32 %v8899, %v8648
    %v8932 = vadd.f32 %v8900, %v8650
    %v8933 = vadd.f32 %v8901, %v8701
    %v8934 = vadd.f32 %v8902, %v8703
    %v8935 = vadd.f32 %v8903, %v8754
    %v8936 = vadd.f32 %v8904, %v8756
    %v8937 = vadd.f32 %v8905, %v8807
    %v8938 = vadd.f32 %v8906, %v8809
    %8939 = vst [vmem:[#allocation5] sm:$0xff] %v8907
    %8940 = vst [vmem:[#allocation5 + $0x8] sm:$0xff] %v8908
    %8941 = vst [vmem:[#allocation5 + $0x10] sm:$0xff] %v8909
    %8942 = vst [vmem:[#allocation5 + $0x18] sm:$0xff] %v8910
    %8943 = vst [vmem:[#allocation5 + $0x20] sm:$0xff] %v8911
    %8944 = vst [vmem:[#allocation5 + $0x28] sm:$0xff] %v8912
    %8945 = vst [vmem:[#allocation5 + $0x30] sm:$0xff] %v8913
    %8946 = vst [vmem:[#allocation5 + $0x38] sm:$0xff] %v8914
    %8947 = vst [vmem:[#allocation5 + $0x40] sm:$0xff] %v8915
    %8948 = vst [vmem:[#allocation5 + $0x48] sm:$0xff] %v8916
    %8949 = vst [vmem:[#allocation5 + $0x50] sm:$0xff] %v8917
    %8950 = vst [vmem:[#allocation5 + $0x58] sm:$0xff] %v8918
    %8951 = vst [vmem:[#allocation5 + $0x60] sm:$0xff] %v8919
    %8952 = vst [vmem:[#allocation5 + $0x68] sm:$0xff] %v8920
    %8953 = vst [vmem:[#allocation5 + $0x70] sm:$0xff] %v8921
    %8954 = vst [vmem:[#allocation5 + $0x78] sm:$0xff] %v8922
    %8955 = vst [vmem:[#allocation5 + $0x100] sm:$0xff] %v8923
    %8956 = vst [vmem:[#allocation5 + $0x108] sm:$0xff] %v8924
    %8957 = vst [vmem:[#allocation5 + $0x110] sm:$0xff] %v8925
    %8958 = vst [vmem:[#allocation5 + $0x118] sm:$0xff] %v8926
    %8959 = vst [vmem:[#allocation5 + $0x120] sm:$0xff] %v8927
    %8960 = vst [vmem:[#allocation5 + $0x128] sm:$0xff] %v8928
    %8961 = vst [vmem:[#allocation5 + $0x130] sm:$0xff] %v8929
    %8962 = vst [vmem:[#allocation5 + $0x138] sm:$0xff] %v8930
    %8963 = vst [vmem:[#allocation5 + $0x140] sm:$0xff] %v8931
    %8964 = vst [vmem:[#allocation5 + $0x148] sm:$0xff] %v8932
    %8965 = vst [vmem:[#allocation5 + $0x150] sm:$0xff] %v8933
    %8966 = vst [vmem:[#allocation5 + $0x158] sm:$0xff] %v8934
    %8967 = vst [vmem:[#allocation5 + $0x160] sm:$0xff] %v8935
    %8968 = vst [vmem:[#allocation5 + $0x168] sm:$0xff] %v8936
    %8969 = vst [vmem:[#allocation5 + $0x170] sm:$0xff] %v8937
    %8970 = vst [vmem:[#allocation5 + $0x178] sm:$0xff] %v8938
    %v8971 = vld [vmem:[%s2 + $0x40] sm:$0xff]
    %v8972 = vld [vmem:[%s2 + $0x48] sm:$0xff]
    %v8973 = vld [vmem:[%s2 + $0x50] sm:$0xff]
    %v8974 = vld [vmem:[%s2 + $0x58] sm:$0xff]
    %v8975 = vld [vmem:[%s2 + $0x60] sm:$0xff]
    %v8976 = vld [vmem:[%s2 + $0x68] sm:$0xff]
    %v8977 = vld [vmem:[%s2 + $0x70] sm:$0xff]
    %v8978 = vld [vmem:[%s2 + $0x78] sm:$0xff]
    %v8979 = vld [vmem:[%s2 + $0xc0] sm:$0xff]
    %v8980 = vld [vmem:[%s2 + $0xc8] sm:$0xff]
    %v8981 = vld [vmem:[%s2 + $0xd0] sm:$0xff]
    %v8982 = vld [vmem:[%s2 + $0xd8] sm:$0xff]
    %v8983 = vld [vmem:[%s2 + $0xe0] sm:$0xff]
    %v8984 = vld [vmem:[%s2 + $0xe8] sm:$0xff]
    %v8985 = vld [vmem:[%s2 + $0xf0] sm:$0xff]
    %v8986 = vld [vmem:[%s2 + $0xf8] sm:$0xff]
    %v8987 = vld [vmem:[%s2 + $0x140] sm:$0xff]
    %v8988 = vld [vmem:[%s2 + $0x148] sm:$0xff]
    %v8989 = vld [vmem:[%s2 + $0x150] sm:$0xff]
    %v8990 = vld [vmem:[%s2 + $0x158] sm:$0xff]
    %v8991 = vld [vmem:[%s2 + $0x160] sm:$0xff]
    %v8992 = vld [vmem:[%s2 + $0x168] sm:$0xff]
    %v8993 = vld [vmem:[%s2 + $0x170] sm:$0xff]
    %v8994 = vld [vmem:[%s2 + $0x178] sm:$0xff]
    %v8995 = vld [vmem:[%s2 + $0x1c0] sm:$0xff]
    %v8996 = vld [vmem:[%s2 + $0x1c8] sm:$0xff]
    %v8997 = vld [vmem:[%s2 + $0x1d0] sm:$0xff]
    %v8998 = vld [vmem:[%s2 + $0x1d8] sm:$0xff]
    %v8999 = vld [vmem:[%s2 + $0x1e0] sm:$0xff]
    %v9000 = vld [vmem:[%s2 + $0x1e8] sm:$0xff]
    %v9001 = vld [vmem:[%s2 + $0x1f0] sm:$0xff]
    %v9002 = vld [vmem:[%s2 + $0x1f8] sm:$0xff]
    %v9003 = vld [vmem:[%s2 + $0x240] sm:$0xff]
    %v9004 = vld [vmem:[%s2 + $0x248] sm:$0xff]
    %v9005 = vld [vmem:[%s2 + $0x250] sm:$0xff]
    %v9006 = vld [vmem:[%s2 + $0x258] sm:$0xff]
    %v9007 = vld [vmem:[%s2 + $0x260] sm:$0xff]
    %v9008 = vld [vmem:[%s2 + $0x268] sm:$0xff]
    %v9009 = vld [vmem:[%s2 + $0x270] sm:$0xff]
    %v9010 = vld [vmem:[%s2 + $0x278] sm:$0xff]
    %v9011 = vld [vmem:[%s2 + $0x2c0] sm:$0xff]
    %v9012 = vld [vmem:[%s2 + $0x2c8] sm:$0xff]
    %v9013 = vld [vmem:[%s2 + $0x2d0] sm:$0xff]
    %v9014 = vld [vmem:[%s2 + $0x2d8] sm:$0xff]
    %v9015 = vld [vmem:[%s2 + $0x2e0] sm:$0xff]
    %v9016 = vld [vmem:[%s2 + $0x2e8] sm:$0xff]
    %v9017 = vld [vmem:[%s2 + $0x2f0] sm:$0xff]
    %v9018 = vld [vmem:[%s2 + $0x2f8] sm:$0xff]
    %v9019 = vld [vmem:[%s2 + $0x340] sm:$0xff]
    %v9020 = vld [vmem:[%s2 + $0x348] sm:$0xff]
    %v9021 = vld [vmem:[%s2 + $0x350] sm:$0xff]
    %v9022 = vld [vmem:[%s2 + $0x358] sm:$0xff]
    %v9023 = vld [vmem:[%s2 + $0x360] sm:$0xff]
    %v9024 = vld [vmem:[%s2 + $0x368] sm:$0xff]
    %v9025 = vld [vmem:[%s2 + $0x370] sm:$0xff]
    %v9026 = vld [vmem:[%s2 + $0x378] sm:$0xff]
    %v9027 = vld [vmem:[%s2 + $0x3c0] sm:$0xff]
    %v9028 = vld [vmem:[%s2 + $0x3c8] sm:$0xff]
    %v9029 = vld [vmem:[%s2 + $0x3d0] sm:$0xff]
    %v9030 = vld [vmem:[%s2 + $0x3d8] sm:$0xff]
    %v9031 = vld [vmem:[%s2 + $0x3e0] sm:$0xff]
    %v9032 = vld [vmem:[%s2 + $0x3e8] sm:$0xff]
    %v9033 = vld [vmem:[%s2 + $0x3f0] sm:$0xff]
    %v9034 = vld [vmem:[%s2 + $0x3f8] sm:$0xff]
    %v9035 = vld [vmem:[%s2 + $0x440] sm:$0xff]
    %v9036 = vld [vmem:[%s2 + $0x448] sm:$0xff]
    %v9037 = vld [vmem:[%s2 + $0x450] sm:$0xff]
    %v9038 = vld [vmem:[%s2 + $0x458] sm:$0xff]
    %v9039 = vld [vmem:[%s2 + $0x460] sm:$0xff]
    %v9040 = vld [vmem:[%s2 + $0x468] sm:$0xff]
    %v9041 = vld [vmem:[%s2 + $0x470] sm:$0xff]
    %v9042 = vld [vmem:[%s2 + $0x478] sm:$0xff]
    %v9043 = vld [vmem:[%s2 + $0x4c0] sm:$0xff]
    %v9044 = vld [vmem:[%s2 + $0x4c8] sm:$0xff]
    %v9045 = vld [vmem:[%s2 + $0x4d0] sm:$0xff]
    %v9046 = vld [vmem:[%s2 + $0x4d8] sm:$0xff]
    %v9047 = vld [vmem:[%s2 + $0x4e0] sm:$0xff]
    %v9048 = vld [vmem:[%s2 + $0x4e8] sm:$0xff]
    %v9049 = vld [vmem:[%s2 + $0x4f0] sm:$0xff]
    %v9050 = vld [vmem:[%s2 + $0x4f8] sm:$0xff]
    %v9051 = vld [vmem:[%s2 + $0x540] sm:$0xff]
    %v9052 = vld [vmem:[%s2 + $0x548] sm:$0xff]
    %v9053 = vld [vmem:[%s2 + $0x550] sm:$0xff]
    %v9054 = vld [vmem:[%s2 + $0x558] sm:$0xff]
    %v9055 = vld [vmem:[%s2 + $0x560] sm:$0xff]
    %v9056 = vld [vmem:[%s2 + $0x568] sm:$0xff]
    %v9057 = vld [vmem:[%s2 + $0x570] sm:$0xff]
    %v9058 = vld [vmem:[%s2 + $0x578] sm:$0xff]
    %v9059 = vld [vmem:[%s2 + $0x5c0] sm:$0xff]
    %v9060 = vld [vmem:[%s2 + $0x5c8] sm:$0xff]
    %v9061 = vld [vmem:[%s2 + $0x5d0] sm:$0xff]
    %v9062 = vld [vmem:[%s2 + $0x5d8] sm:$0xff]
    %v9063 = vld [vmem:[%s2 + $0x5e0] sm:$0xff]
    %v9064 = vld [vmem:[%s2 + $0x5e8] sm:$0xff]
    %v9065 = vld [vmem:[%s2 + $0x5f0] sm:$0xff]
    %v9066 = vld [vmem:[%s2 + $0x5f8] sm:$0xff]
    %v9067 = vld [vmem:[%s2 + $0x640] sm:$0xff]
    %v9068 = vld [vmem:[%s2 + $0x648] sm:$0xff]
    %v9069 = vld [vmem:[%s2 + $0x650] sm:$0xff]
    %v9070 = vld [vmem:[%s2 + $0x658] sm:$0xff]
    %v9071 = vld [vmem:[%s2 + $0x660] sm:$0xff]
    %v9072 = vld [vmem:[%s2 + $0x668] sm:$0xff]
    %v9073 = vld [vmem:[%s2 + $0x670] sm:$0xff]
    %v9074 = vld [vmem:[%s2 + $0x678] sm:$0xff]
    %v9075 = vld [vmem:[%s2 + $0x6c0] sm:$0xff]
    %v9076 = vld [vmem:[%s2 + $0x6c8] sm:$0xff]
    %v9077 = vld [vmem:[%s2 + $0x6d0] sm:$0xff]
    %v9078 = vld [vmem:[%s2 + $0x6d8] sm:$0xff]
    %v9079 = vld [vmem:[%s2 + $0x6e0] sm:$0xff]
    %v9080 = vld [vmem:[%s2 + $0x6e8] sm:$0xff]
    %v9081 = vld [vmem:[%s2 + $0x6f0] sm:$0xff]
    %v9082 = vld [vmem:[%s2 + $0x6f8] sm:$0xff]
    %v9083 = vld [vmem:[%s2 + $0x740] sm:$0xff]
    %v9084 = vld [vmem:[%s2 + $0x748] sm:$0xff]
    %v9085 = vld [vmem:[%s2 + $0x750] sm:$0xff]
    %v9086 = vld [vmem:[%s2 + $0x758] sm:$0xff]
    %v9087 = vld [vmem:[%s2 + $0x760] sm:$0xff]
    %v9088 = vld [vmem:[%s2 + $0x768] sm:$0xff]
    %v9089 = vld [vmem:[%s2 + $0x770] sm:$0xff]
    %v9090 = vld [vmem:[%s2 + $0x778] sm:$0xff]
    %v9091 = vld [vmem:[%s2 + $0x7c0] sm:$0xff]
    %v9092 = vld [vmem:[%s2 + $0x7c8] sm:$0xff]
    %v9093 = vld [vmem:[%s2 + $0x7d0] sm:$0xff]
    %v9094 = vld [vmem:[%s2 + $0x7d8] sm:$0xff]
    %v9095 = vld [vmem:[%s2 + $0x7e0] sm:$0xff]
    %v9096 = vld [vmem:[%s2 + $0x7e8] sm:$0xff]
    %v9097 = vld [vmem:[%s2 + $0x7f0] sm:$0xff]
    %v9098 = vld [vmem:[%s2 + $0x7f8] sm:$0xff]
    %v9227 = vunpack.c.l.b16 %v8971
    %v9228 = vunpack.c.h.b16 %v8971
    %v9229 = vunpack.c.l.b16 %v8972
    %v9230 = vunpack.c.h.b16 %v8972
    %v9231 = vunpack.c.l.b16 %v8973
    %v9232 = vunpack.c.h.b16 %v8973
    %v9233 = vunpack.c.l.b16 %v8974
    %v9234 = vunpack.c.h.b16 %v8974
    %v9235 = vunpack.c.l.b16 %v8975
    %v9236 = vunpack.c.h.b16 %v8975
    %v9237 = vunpack.c.l.b16 %v8976
    %v9238 = vunpack.c.h.b16 %v8976
    %v9239 = vunpack.c.l.b16 %v8977
    %v9240 = vunpack.c.h.b16 %v8977
    %v9241 = vunpack.c.l.b16 %v8978
    %v9242 = vunpack.c.h.b16 %v8978
    %v9243 = vunpack.c.l.b16 %v8979
    %v9244 = vunpack.c.h.b16 %v8979
    %v9245 = vunpack.c.l.b16 %v8980
    %v9246 = vunpack.c.h.b16 %v8980
    %v9247 = vunpack.c.l.b16 %v8981
    %v9248 = vunpack.c.h.b16 %v8981
    %v9249 = vunpack.c.l.b16 %v8982
    %v9250 = vunpack.c.h.b16 %v8982
    %v9251 = vunpack.c.l.b16 %v8983
    %v9252 = vunpack.c.h.b16 %v8983
    %v9253 = vunpack.c.l.b16 %v8984
    %v9254 = vunpack.c.h.b16 %v8984
    %v9255 = vunpack.c.l.b16 %v8985
    %v9256 = vunpack.c.h.b16 %v8985
    %v9257 = vunpack.c.l.b16 %v8986
    %v9258 = vunpack.c.h.b16 %v8986
    %v9259 = vunpack.c.l.b16 %v8987
    %v9260 = vunpack.c.h.b16 %v8987
    %v9261 = vunpack.c.l.b16 %v8988
    %v9262 = vunpack.c.h.b16 %v8988
    %v9263 = vunpack.c.l.b16 %v8989
    %v9264 = vunpack.c.h.b16 %v8989
    %v9265 = vunpack.c.l.b16 %v8990
    %v9266 = vunpack.c.h.b16 %v8990
    %v9267 = vunpack.c.l.b16 %v8991
    %v9268 = vunpack.c.h.b16 %v8991
    %v9269 = vunpack.c.l.b16 %v8992
    %v9270 = vunpack.c.h.b16 %v8992
    %v9271 = vunpack.c.l.b16 %v8993
    %v9272 = vunpack.c.h.b16 %v8993
    %v9273 = vunpack.c.l.b16 %v8994
    %v9274 = vunpack.c.h.b16 %v8994
    %v9275 = vunpack.c.l.b16 %v8995
    %v9276 = vunpack.c.h.b16 %v8995
    %v9277 = vunpack.c.l.b16 %v8996
    %v9278 = vunpack.c.h.b16 %v8996
    %v9279 = vunpack.c.l.b16 %v8997
    %v9280 = vunpack.c.h.b16 %v8997
    %v9281 = vunpack.c.l.b16 %v8998
    %v9282 = vunpack.c.h.b16 %v8998
    %v9283 = vunpack.c.l.b16 %v8999
    %v9284 = vunpack.c.h.b16 %v8999
    %v9285 = vunpack.c.l.b16 %v9000
    %v9286 = vunpack.c.h.b16 %v9000
    %v9287 = vunpack.c.l.b16 %v9001
    %v9288 = vunpack.c.h.b16 %v9001
    %v9289 = vunpack.c.l.b16 %v9002
    %v9290 = vunpack.c.h.b16 %v9002
    %v9291 = vunpack.c.l.b16 %v9003
    %v9292 = vunpack.c.h.b16 %v9003
    %v9293 = vunpack.c.l.b16 %v9004
    %v9294 = vunpack.c.h.b16 %v9004
    %v9295 = vunpack.c.l.b16 %v9005
    %v9296 = vunpack.c.h.b16 %v9005
    %v9297 = vunpack.c.l.b16 %v9006
    %v9298 = vunpack.c.h.b16 %v9006
    %v9299 = vunpack.c.l.b16 %v9007
    %v9300 = vunpack.c.h.b16 %v9007
    %v9301 = vunpack.c.l.b16 %v9008
    %v9302 = vunpack.c.h.b16 %v9008
    %v9303 = vunpack.c.l.b16 %v9009
    %v9304 = vunpack.c.h.b16 %v9009
    %v9305 = vunpack.c.l.b16 %v9010
    %v9306 = vunpack.c.h.b16 %v9010
    %v9307 = vunpack.c.l.b16 %v9011
    %v9308 = vunpack.c.h.b16 %v9011
    %v9309 = vunpack.c.l.b16 %v9012
    %v9310 = vunpack.c.h.b16 %v9012
    %v9311 = vunpack.c.l.b16 %v9013
    %v9312 = vunpack.c.h.b16 %v9013
    %v9313 = vunpack.c.l.b16 %v9014
    %v9314 = vunpack.c.h.b16 %v9014
    %v9315 = vunpack.c.l.b16 %v9015
    %v9316 = vunpack.c.h.b16 %v9015
    %v9317 = vunpack.c.l.b16 %v9016
    %v9318 = vunpack.c.h.b16 %v9016
    %v9319 = vunpack.c.l.b16 %v9017
    %v9320 = vunpack.c.h.b16 %v9017
    %v9321 = vunpack.c.l.b16 %v9018
    %v9322 = vunpack.c.h.b16 %v9018
    %v9323 = vunpack.c.l.b16 %v9019
    %v9324 = vunpack.c.h.b16 %v9019
    %v9325 = vunpack.c.l.b16 %v9020
    %v9326 = vunpack.c.h.b16 %v9020
    %v9327 = vunpack.c.l.b16 %v9021
    %v9328 = vunpack.c.h.b16 %v9021
    %v9329 = vunpack.c.l.b16 %v9022
    %v9330 = vunpack.c.h.b16 %v9022
    %v9331 = vunpack.c.l.b16 %v9023
    %v9332 = vunpack.c.h.b16 %v9023
    %v9333 = vunpack.c.l.b16 %v9024
    %v9334 = vunpack.c.h.b16 %v9024
    %v9335 = vunpack.c.l.b16 %v9025
    %v9336 = vunpack.c.h.b16 %v9025
    %v9337 = vunpack.c.l.b16 %v9026
    %v9338 = vunpack.c.h.b16 %v9026
    %v9339 = vunpack.c.l.b16 %v9027
    %v9340 = vunpack.c.h.b16 %v9027
    %v9341 = vunpack.c.l.b16 %v9028
    %v9342 = vunpack.c.h.b16 %v9028
    %v9343 = vunpack.c.l.b16 %v9029
    %v9344 = vunpack.c.h.b16 %v9029
    %v9345 = vunpack.c.l.b16 %v9030
    %v9346 = vunpack.c.h.b16 %v9030
    %v9347 = vunpack.c.l.b16 %v9031
    %v9348 = vunpack.c.h.b16 %v9031
    %v9349 = vunpack.c.l.b16 %v9032
    %v9350 = vunpack.c.h.b16 %v9032
    %v9351 = vunpack.c.l.b16 %v9033
    %v9352 = vunpack.c.h.b16 %v9033
    %v9353 = vunpack.c.l.b16 %v9034
    %v9354 = vunpack.c.h.b16 %v9034
    %v9355 = vunpack.c.l.b16 %v9035
    %v9356 = vunpack.c.h.b16 %v9035
    %v9357 = vunpack.c.l.b16 %v9036
    %v9358 = vunpack.c.h.b16 %v9036
    %v9359 = vunpack.c.l.b16 %v9037
    %v9360 = vunpack.c.h.b16 %v9037
    %v9361 = vunpack.c.l.b16 %v9038
    %v9362 = vunpack.c.h.b16 %v9038
    %v9363 = vunpack.c.l.b16 %v9039
    %v9364 = vunpack.c.h.b16 %v9039
    %v9365 = vunpack.c.l.b16 %v9040
    %v9366 = vunpack.c.h.b16 %v9040
    %v9367 = vunpack.c.l.b16 %v9041
    %v9368 = vunpack.c.h.b16 %v9041
    %v9369 = vunpack.c.l.b16 %v9042
    %v9370 = vunpack.c.h.b16 %v9042
    %v9371 = vunpack.c.l.b16 %v9043
    %v9372 = vunpack.c.h.b16 %v9043
    %v9373 = vunpack.c.l.b16 %v9044
    %v9374 = vunpack.c.h.b16 %v9044
    %v9375 = vunpack.c.l.b16 %v9045
    %v9376 = vunpack.c.h.b16 %v9045
    %v9377 = vunpack.c.l.b16 %v9046
    %v9378 = vunpack.c.h.b16 %v9046
    %v9379 = vunpack.c.l.b16 %v9047
    %v9380 = vunpack.c.h.b16 %v9047
    %v9381 = vunpack.c.l.b16 %v9048
    %v9382 = vunpack.c.h.b16 %v9048
    %v9383 = vunpack.c.l.b16 %v9049
    %v9384 = vunpack.c.h.b16 %v9049
    %v9385 = vunpack.c.l.b16 %v9050
    %v9386 = vunpack.c.h.b16 %v9050
    %v9387 = vunpack.c.l.b16 %v9051
    %v9388 = vunpack.c.h.b16 %v9051
    %v9389 = vunpack.c.l.b16 %v9052
    %v9390 = vunpack.c.h.b16 %v9052
    %v9391 = vunpack.c.l.b16 %v9053
    %v9392 = vunpack.c.h.b16 %v9053
    %v9393 = vunpack.c.l.b16 %v9054
    %v9394 = vunpack.c.h.b16 %v9054
    %v9395 = vunpack.c.l.b16 %v9055
    %v9396 = vunpack.c.h.b16 %v9055
    %v9397 = vunpack.c.l.b16 %v9056
    %v9398 = vunpack.c.h.b16 %v9056
    %v9399 = vunpack.c.l.b16 %v9057
    %v9400 = vunpack.c.h.b16 %v9057
    %v9401 = vunpack.c.l.b16 %v9058
    %v9402 = vunpack.c.h.b16 %v9058
    %v9403 = vunpack.c.l.b16 %v9059
    %v9404 = vunpack.c.h.b16 %v9059
    %v9405 = vunpack.c.l.b16 %v9060
    %v9406 = vunpack.c.h.b16 %v9060
    %v9407 = vunpack.c.l.b16 %v9061
    %v9408 = vunpack.c.h.b16 %v9061
    %v9409 = vunpack.c.l.b16 %v9062
    %v9410 = vunpack.c.h.b16 %v9062
    %v9411 = vunpack.c.l.b16 %v9063
    %v9412 = vunpack.c.h.b16 %v9063
    %v9413 = vunpack.c.l.b16 %v9064
    %v9414 = vunpack.c.h.b16 %v9064
    %v9415 = vunpack.c.l.b16 %v9065
    %v9416 = vunpack.c.h.b16 %v9065
    %v9417 = vunpack.c.l.b16 %v9066
    %v9418 = vunpack.c.h.b16 %v9066
    %v9419 = vunpack.c.l.b16 %v9067
    %v9420 = vunpack.c.h.b16 %v9067
    %v9421 = vunpack.c.l.b16 %v9068
    %v9422 = vunpack.c.h.b16 %v9068
    %v9423 = vunpack.c.l.b16 %v9069
    %v9424 = vunpack.c.h.b16 %v9069
    %v9425 = vunpack.c.l.b16 %v9070
    %v9426 = vunpack.c.h.b16 %v9070
    %v9427 = vunpack.c.l.b16 %v9071
    %v9428 = vunpack.c.h.b16 %v9071
    %v9429 = vunpack.c.l.b16 %v9072
    %v9430 = vunpack.c.h.b16 %v9072
    %v9431 = vunpack.c.l.b16 %v9073
    %v9432 = vunpack.c.h.b16 %v9073
    %v9433 = vunpack.c.l.b16 %v9074
    %v9434 = vunpack.c.h.b16 %v9074
    %v9435 = vunpack.c.l.b16 %v9075
    %v9436 = vunpack.c.h.b16 %v9075
    %v9437 = vunpack.c.l.b16 %v9076
    %v9438 = vunpack.c.h.b16 %v9076
    %v9439 = vunpack.c.l.b16 %v9077
    %v9440 = vunpack.c.h.b16 %v9077
    %v9441 = vunpack.c.l.b16 %v9078
    %v9442 = vunpack.c.h.b16 %v9078
    %v9443 = vunpack.c.l.b16 %v9079
    %v9444 = vunpack.c.h.b16 %v9079
    %v9445 = vunpack.c.l.b16 %v9080
    %v9446 = vunpack.c.h.b16 %v9080
    %v9447 = vunpack.c.l.b16 %v9081
    %v9448 = vunpack.c.h.b16 %v9081
    %v9449 = vunpack.c.l.b16 %v9082
    %v9450 = vunpack.c.h.b16 %v9082
    %v9451 = vunpack.c.l.b16 %v9083
    %v9452 = vunpack.c.h.b16 %v9083
    %v9453 = vunpack.c.l.b16 %v9084
    %v9454 = vunpack.c.h.b16 %v9084
    %v9455 = vunpack.c.l.b16 %v9085
    %v9456 = vunpack.c.h.b16 %v9085
    %v9457 = vunpack.c.l.b16 %v9086
    %v9458 = vunpack.c.h.b16 %v9086
    %v9459 = vunpack.c.l.b16 %v9087
    %v9460 = vunpack.c.h.b16 %v9087
    %v9461 = vunpack.c.l.b16 %v9088
    %v9462 = vunpack.c.h.b16 %v9088
    %v9463 = vunpack.c.l.b16 %v9089
    %v9464 = vunpack.c.h.b16 %v9089
    %v9465 = vunpack.c.l.b16 %v9090
    %v9466 = vunpack.c.h.b16 %v9090
    %v9467 = vunpack.c.l.b16 %v9091
    %v9468 = vunpack.c.h.b16 %v9091
    %v9469 = vunpack.c.l.b16 %v9092
    %v9470 = vunpack.c.h.b16 %v9092
    %v9471 = vunpack.c.l.b16 %v9093
    %v9472 = vunpack.c.h.b16 %v9093
    %v9473 = vunpack.c.l.b16 %v9094
    %v9474 = vunpack.c.h.b16 %v9094
    %v9475 = vunpack.c.l.b16 %v9095
    %v9476 = vunpack.c.h.b16 %v9095
    %v9477 = vunpack.c.l.b16 %v9096
    %v9478 = vunpack.c.h.b16 %v9096
    %v9479 = vunpack.c.l.b16 %v9097
    %v9480 = vunpack.c.h.b16 %v9097
    %v9481 = vunpack.c.l.b16 %v9098
    %v9482 = vunpack.c.h.b16 %v9098
    %v9483 = vpack.c.b16 %v9243, %v9227
    %v9484 = vpack.c.b16 %v9244, %v9228
    %v9485 = vpack.c.b16 %v9245, %v9229
    %v9486 = vpack.c.b16 %v9246, %v9230
    %v9487 = vpack.c.b16 %v9247, %v9231
    %v9488 = vpack.c.b16 %v9248, %v9232
    %v9489 = vpack.c.b16 %v9249, %v9233
    %v9490 = vpack.c.b16 %v9250, %v9234
    %v9491 = vpack.c.b16 %v9251, %v9235
    %v9492 = vpack.c.b16 %v9252, %v9236
    %v9493 = vpack.c.b16 %v9253, %v9237
    %v9494 = vpack.c.b16 %v9254, %v9238
    %v9495 = vpack.c.b16 %v9255, %v9239
    %v9496 = vpack.c.b16 %v9256, %v9240
    %v9497 = vpack.c.b16 %v9257, %v9241
    %v9498 = vpack.c.b16 %v9258, %v9242
    %v9499 = vpack.c.b16 %v9275, %v9259
    %v9500 = vpack.c.b16 %v9276, %v9260
    %v9501 = vpack.c.b16 %v9277, %v9261
    %v9502 = vpack.c.b16 %v9278, %v9262
    %v9503 = vpack.c.b16 %v9279, %v9263
    %v9504 = vpack.c.b16 %v9280, %v9264
    %v9505 = vpack.c.b16 %v9281, %v9265
    %v9506 = vpack.c.b16 %v9282, %v9266
    %v9507 = vpack.c.b16 %v9283, %v9267
    %v9508 = vpack.c.b16 %v9284, %v9268
    %v9509 = vpack.c.b16 %v9285, %v9269
    %v9510 = vpack.c.b16 %v9286, %v9270
    %v9511 = vpack.c.b16 %v9287, %v9271
    %v9512 = vpack.c.b16 %v9288, %v9272
    %v9513 = vpack.c.b16 %v9289, %v9273
    %v9514 = vpack.c.b16 %v9290, %v9274
    %v9515 = vpack.c.b16 %v9307, %v9291
    %v9516 = vpack.c.b16 %v9308, %v9292
    %v9517 = vpack.c.b16 %v9309, %v9293
    %v9518 = vpack.c.b16 %v9310, %v9294
    %v9519 = vpack.c.b16 %v9311, %v9295
    %v9520 = vpack.c.b16 %v9312, %v9296
    %v9521 = vpack.c.b16 %v9313, %v9297
    %v9522 = vpack.c.b16 %v9314, %v9298
    %v9523 = vpack.c.b16 %v9315, %v9299
    %v9524 = vpack.c.b16 %v9316, %v9300
    %v9525 = vpack.c.b16 %v9317, %v9301
    %v9526 = vpack.c.b16 %v9318, %v9302
    %v9527 = vpack.c.b16 %v9319, %v9303
    %v9528 = vpack.c.b16 %v9320, %v9304
    %v9529 = vpack.c.b16 %v9321, %v9305
    %v9530 = vpack.c.b16 %v9322, %v9306
    %v9531 = vpack.c.b16 %v9339, %v9323
    %v9532 = vpack.c.b16 %v9340, %v9324
    %v9533 = vpack.c.b16 %v9341, %v9325
    %v9534 = vpack.c.b16 %v9342, %v9326
    %v9535 = vpack.c.b16 %v9343, %v9327
    %v9536 = vpack.c.b16 %v9344, %v9328
    %v9537 = vpack.c.b16 %v9345, %v9329
    %v9538 = vpack.c.b16 %v9346, %v9330
    %v9539 = vpack.c.b16 %v9347, %v9331
    %v9540 = vpack.c.b16 %v9348, %v9332
    %v9541 = vpack.c.b16 %v9349, %v9333
    %v9542 = vpack.c.b16 %v9350, %v9334
    %v9543 = vpack.c.b16 %v9351, %v9335
    %v9544 = vpack.c.b16 %v9352, %v9336
    %v9545 = vpack.c.b16 %v9353, %v9337
    %v9546 = vpack.c.b16 %v9354, %v9338
    %v9547 = vpack.c.b16 %v9371, %v9355
    %v9548 = vpack.c.b16 %v9372, %v9356
    %v9549 = vpack.c.b16 %v9373, %v9357
    %v9550 = vpack.c.b16 %v9374, %v9358
    %v9551 = vpack.c.b16 %v9375, %v9359
    %v9552 = vpack.c.b16 %v9376, %v9360
    %v9553 = vpack.c.b16 %v9377, %v9361
    %v9554 = vpack.c.b16 %v9378, %v9362
    %v9555 = vpack.c.b16 %v9379, %v9363
    %v9556 = vpack.c.b16 %v9380, %v9364
    %v9557 = vpack.c.b16 %v9381, %v9365
    %v9558 = vpack.c.b16 %v9382, %v9366
    %v9559 = vpack.c.b16 %v9383, %v9367
    %v9560 = vpack.c.b16 %v9384, %v9368
    %v9561 = vpack.c.b16 %v9385, %v9369
    %v9562 = vpack.c.b16 %v9386, %v9370
    %v9563 = vpack.c.b16 %v9403, %v9387
    %v9564 = vpack.c.b16 %v9404, %v9388
    %v9565 = vpack.c.b16 %v9405, %v9389
    %v9566 = vpack.c.b16 %v9406, %v9390
    %v9567 = vpack.c.b16 %v9407, %v9391
    %v9568 = vpack.c.b16 %v9408, %v9392
    %v9569 = vpack.c.b16 %v9409, %v9393
    %v9570 = vpack.c.b16 %v9410, %v9394
    %v9571 = vpack.c.b16 %v9411, %v9395
    %v9572 = vpack.c.b16 %v9412, %v9396
    %v9573 = vpack.c.b16 %v9413, %v9397
    %v9574 = vpack.c.b16 %v9414, %v9398
    %v9575 = vpack.c.b16 %v9415, %v9399
    %v9576 = vpack.c.b16 %v9416, %v9400
    %v9577 = vpack.c.b16 %v9417, %v9401
    %v9578 = vpack.c.b16 %v9418, %v9402
    %v9579 = vpack.c.b16 %v9435, %v9419
    %v9580 = vpack.c.b16 %v9436, %v9420
    %v9581 = vpack.c.b16 %v9437, %v9421
    %v9582 = vpack.c.b16 %v9438, %v9422
    %v9583 = vpack.c.b16 %v9439, %v9423
    %v9584 = vpack.c.b16 %v9440, %v9424
    %v9585 = vpack.c.b16 %v9441, %v9425
    %v9586 = vpack.c.b16 %v9442, %v9426
    %v9587 = vpack.c.b16 %v9443, %v9427
    %v9588 = vpack.c.b16 %v9444, %v9428
    %v9589 = vpack.c.b16 %v9445, %v9429
    %v9590 = vpack.c.b16 %v9446, %v9430
    %v9591 = vpack.c.b16 %v9447, %v9431
    %v9592 = vpack.c.b16 %v9448, %v9432
    %v9593 = vpack.c.b16 %v9449, %v9433
    %v9594 = vpack.c.b16 %v9450, %v9434
    %v9595 = vpack.c.b16 %v9467, %v9451
    %v9596 = vpack.c.b16 %v9468, %v9452
    %v9597 = vpack.c.b16 %v9469, %v9453
    %v9598 = vpack.c.b16 %v9470, %v9454
    %v9599 = vpack.c.b16 %v9471, %v9455
    %v9600 = vpack.c.b16 %v9472, %v9456
    %v9601 = vpack.c.b16 %v9473, %v9457
    %v9602 = vpack.c.b16 %v9474, %v9458
    %v9603 = vpack.c.b16 %v9475, %v9459
    %v9604 = vpack.c.b16 %v9476, %v9460
    %v9605 = vpack.c.b16 %v9477, %v9461
    %v9606 = vpack.c.b16 %v9478, %v9462
    %v9607 = vpack.c.b16 %v9479, %v9463
    %v9608 = vpack.c.b16 %v9480, %v9464
    %v9609 = vpack.c.b16 %v9481, %v9465
    %v9610 = vpack.c.b16 %v9482, %v9466
    %9739 = vmatprep.subr.bf16.mxu0 %v9484
    %9740 = vmatpush1.bf16.msra.mxu0 %v9483
    %9741 = vmatprep.subr.bf16.mxu0 %v9500
    %9742 = vmatpush1.bf16.msra.mxu0 %v9499
    %9743 = vmatprep.subr.bf16.mxu0 %v9516
    %9744 = vmatpush1.bf16.msra.mxu0 %v9515
    %9745 = vmatprep.subr.bf16.mxu0 %v9532
    %9746 = vmatpush1.bf16.msra.mxu0 %v9531
    %9747 = vmatprep.subr.bf16.mxu0 %v9548
    %9748 = vmatpush1.bf16.msra.mxu0 %v9547
    %9749 = vmatprep.subr.bf16.mxu0 %v9564
    %9750 = vmatpush1.bf16.msra.mxu0 %v9563
    %9751 = vmatprep.subr.bf16.mxu0 %v9580
    %9752 = vmatpush1.bf16.msra.mxu0 %v9579
    %9753 = vmatprep.subr.bf16.mxu0 %v9596
    %9754 = vmatpush1.bf16.msra.mxu0 %v9595
    %9755 = vmatprep.subr.bf16.mxu0 0
    %9756 = vmatpush1.bf16.msra.mxu0 0
    %9757 = vmatprep.subr.bf16.mxu0 0
    %9758 = vmatpush1.bf16.msra.mxu0 0
    %9759 = vmatprep.subr.bf16.mxu0 0
    %9760 = vmatpush1.bf16.msra.mxu0 0
    %9761 = vmatprep.subr.bf16.mxu0 0
    %9762 = vmatpush1.bf16.msra.mxu0 0
    %9763 = vmatprep.subr.bf16.mxu0 0
    %9764 = vmatpush1.bf16.msra.mxu0 0
    %9765 = vmatprep.subr.bf16.mxu0 0
    %9766 = vmatpush1.bf16.msra.mxu0 0
    %9767 = vmatprep.subr.bf16.mxu0 0
    %9768 = vmatpush1.bf16.msra.mxu0 0
    %9769 = vmatprep.subr.bf16.mxu0 0
    %9770 = vmatpush1.bf16.msra.mxu0 0
    %9771 = vmatprep.mubr.bf16.mxu0 0
    %9772 = vmatmul.mubr.bf16.gmra.mrb[0].mxu0 %v7610
    %v9773 = vpop.f32.mrb[0].mxu0
    %v9774 = vadd.f32 0.0, %v9773
    %v9775 = vpop.f32.mrb[0].mxu0
    %v9776 = vadd.f32 0.0, %v9775
    %v9777 = vpop.f32.mrb[0].mxu0
    %v9778 = vadd.f32 0.0, %v9777
    %v9779 = vpop.f32.mrb[0].mxu0
    %v9780 = vadd.f32 0.0, %v9779
    %9781 = vmatprep.mubr.bf16.mxu0 0
    %9782 = vmatmul.mubr.bf16.gmra.mrb[0].mxu0 %v7617
    %v9783 = vpop.f32.mrb[0].mxu0
    %v9784 = vadd.f32 0.0, %v9783
    %v9785 = vpop.f32.mrb[0].mxu0
    %v9786 = vadd.f32 0.0, %v9785
    %v9787 = vpop.f32.mrb[0].mxu0
    %v9788 = vadd.f32 0.0, %v9787
    %v9789 = vpop.f32.mrb[0].mxu0
    %v9790 = vadd.f32 0.0, %v9789
    %9791 = vdwg.mxu0
    %9792 = vmatprep.subr.bf16.mxu0 %v9486
    %9793 = vmatpush1.bf16.msra.mxu0 %v9485
    %9794 = vmatprep.subr.bf16.mxu0 %v9502
    %9795 = vmatpush1.bf16.msra.mxu0 %v9501
    %9796 = vmatprep.subr.bf16.mxu0 %v9518
    %9797 = vmatpush1.bf16.msra.mxu0 %v9517
    %9798 = vmatprep.subr.bf16.mxu0 %v9534
    %9799 = vmatpush1.bf16.msra.mxu0 %v9533
    %9800 = vmatprep.subr.bf16.mxu0 %v9550
    %9801 = vmatpush1.bf16.msra.mxu0 %v9549
    %9802 = vmatprep.subr.bf16.mxu0 %v9566
    %9803 = vmatpush1.bf16.msra.mxu0 %v9565
    %9804 = vmatprep.subr.bf16.mxu0 %v9582
    %9805 = vmatpush1.bf16.msra.mxu0 %v9581
    %9806 = vmatprep.subr.bf16.mxu0 %v9598
    %9807 = vmatpush1.bf16.msra.mxu0 %v9597
    %9808 = vmatprep.subr.bf16.mxu0 0
    %9809 = vmatpush1.bf16.msra.mxu0 0
    %9810 = vmatprep.subr.bf16.mxu0 0
    %9811 = vmatpush1.bf16.msra.mxu0 0
    %9812 = vmatprep.subr.bf16.mxu0 0
    %9813 = vmatpush1.bf16.msra.mxu0 0
    %9814 = vmatprep.subr.bf16.mxu0 0
    %9815 = vmatpush1.bf16.msra.mxu0 0
    %9816 = vmatprep.subr.bf16.mxu0 0
    %9817 = vmatpush1.bf16.msra.mxu0 0
    %9818 = vmatprep.subr.bf16.mxu0 0
    %9819 = vmatpush1.bf16.msra.mxu0 0
    %9820 = vmatprep.subr.bf16.mxu0 0
    %9821 = vmatpush1.bf16.msra.mxu0 0
    %9822 = vmatprep.subr.bf16.mxu0 0
    %9823 = vmatpush1.bf16.msra.mxu0 0
    %9824 = vmatprep.mubr.bf16.mxu0 0
    %9825 = vmatmul.mubr.bf16.gmra.mrb[0].mxu0 %v7610
    %v9826 = vpop.f32.mrb[0].mxu0
    %v9827 = vadd.f32 0.0, %v9826
    %v9828 = vpop.f32.mrb[0].mxu0
    %v9829 = vadd.f32 0.0, %v9828
    %v9830 = vpop.f32.mrb[0].mxu0
    %v9831 = vadd.f32 0.0, %v9830
    %v9832 = vpop.f32.mrb[0].mxu0
    %v9833 = vadd.f32 0.0, %v9832
    %9834 = vmatprep.mubr.bf16.mxu0 0
    %9835 = vmatmul.mubr.bf16.gmra.mrb[0].mxu0 %v7617
    %v9836 = vpop.f32.mrb[0].mxu0
    %v9837 = vadd.f32 0.0, %v9836
    %v9838 = vpop.f32.mrb[0].mxu0
    %v9839 = vadd.f32 0.0, %v9838
    %v9840 = vpop.f32.mrb[0].mxu0
    %v9841 = vadd.f32 0.0, %v9840
    %v9842 = vpop.f32.mrb[0].mxu0
    %v9843 = vadd.f32 0.0, %v9842
    %9844 = vdwg.mxu0
    %9845 = vmatprep.subr.bf16.mxu0 %v9488
    %9846 = vmatpush1.bf16.msra.mxu0 %v9487
    %9847 = vmatprep.subr.bf16.mxu0 %v9504
    %9848 = vmatpush1.bf16.msra.mxu0 %v9503
    %9849 = vmatprep.subr.bf16.mxu0 %v9520
    %9850 = vmatpush1.bf16.msra.mxu0 %v9519
    %9851 = vmatprep.subr.bf16.mxu0 %v9536
    %9852 = vmatpush1.bf16.msra.mxu0 %v9535
    %9853 = vmatprep.subr.bf16.mxu0 %v9552
    %9854 = vmatpush1.bf16.msra.mxu0 %v9551
    %9855 = vmatprep.subr.bf16.mxu0 %v9568
    %9856 = vmatpush1.bf16.msra.mxu0 %v9567
    %9857 = vmatprep.subr.bf16.mxu0 %v9584
    %9858 = vmatpush1.bf16.msra.mxu0 %v9583
    %9859 = vmatprep.subr.bf16.mxu0 %v9600
    %9860 = vmatpush1.bf16.msra.mxu0 %v9599
    %9861 = vmatprep.subr.bf16.mxu0 0
    %9862 = vmatpush1.bf16.msra.mxu0 0
    %9863 = vmatprep.subr.bf16.mxu0 0
    %9864 = vmatpush1.bf16.msra.mxu0 0
    %9865 = vmatprep.subr.bf16.mxu0 0
    %9866 = vmatpush1.bf16.msra.mxu0 0
    %9867 = vmatprep.subr.bf16.mxu0 0
    %9868 = vmatpush1.bf16.msra.mxu0 0
    %9869 = vmatprep.subr.bf16.mxu0 0
    %9870 = vmatpush1.bf16.msra.mxu0 0
    %9871 = vmatprep.subr.bf16.mxu0 0
    %9872 = vmatpush1.bf16.msra.mxu0 0
    %9873 = vmatprep.subr.bf16.mxu0 0
    %9874 = vmatpush1.bf16.msra.mxu0 0
    %9875 = vmatprep.subr.bf16.mxu0 0
    %9876 = vmatpush1.bf16.msra.mxu0 0
    %9877 = vmatprep.mubr.bf16.mxu0 0
    %9878 = vmatmul.mubr.bf16.gmra.mrb[0].mxu0 %v7610
    %v9879 = vpop.f32.mrb[0].mxu0
    %v9880 = vadd.f32 0.0, %v9879
    %v9881 = vpop.f32.mrb[0].mxu0
    %v9882 = vadd.f32 0.0, %v9881
    %v9883 = vpop.f32.mrb[0].mxu0
    %v9884 = vadd.f32 0.0, %v9883
    %v9885 = vpop.f32.mrb[0].mxu0
    %v9886 = vadd.f32 0.0, %v9885
    %9887 = vmatprep.mubr.bf16.mxu0 0
    %9888 = vmatmul.mubr.bf16.gmra.mrb[0].mxu0 %v7617
    %v9889 = vpop.f32.mrb[0].mxu0
    %v9890 = vadd.f32 0.0, %v9889
    %v9891 = vpop.f32.mrb[0].mxu0
    %v9892 = vadd.f32 0.0, %v9891
    %v9893 = vpop.f32.mrb[0].mxu0
    %v9894 = vadd.f32 0.0, %v9893
    %v9895 = vpop.f32.mrb[0].mxu0
    %v9896 = vadd.f32 0.0, %v9895
    %9897 = vdwg.mxu0
    %9898 = vmatprep.subr.bf16.mxu0 %v9490
    %9899 = vmatpush1.bf16.msra.mxu0 %v9489
    %9900 = vmatprep.subr.bf16.mxu0 %v9506
    %9901 = vmatpush1.bf16.msra.mxu0 %v9505
    %9902 = vmatprep.subr.bf16.mxu0 %v9522
    %9903 = vmatpush1.bf16.msra.mxu0 %v9521
    %9904 = vmatprep.subr.bf16.mxu0 %v9538
    %9905 = vmatpush1.bf16.msra.mxu0 %v9537
    %9906 = vmatprep.subr.bf16.mxu0 %v9554
    %9907 = vmatpush1.bf16.msra.mxu0 %v9553
    %9908 = vmatprep.subr.bf16.mxu0 %v9570
    %9909 = vmatpush1.bf16.msra.mxu0 %v9569
    %9910 = vmatprep.subr.bf16.mxu0 %v9586
    %9911 = vmatpush1.bf16.msra.mxu0 %v9585
    %9912 = vmatprep.subr.bf16.mxu0 %v9602
    %9913 = vmatpush1.bf16.msra.mxu0 %v9601
    %9914 = vmatprep.subr.bf16.mxu0 0
    %9915 = vmatpush1.bf16.msra.mxu0 0
    %9916 = vmatprep.subr.bf16.mxu0 0
    %9917 = vmatpush1.bf16.msra.mxu0 0
    %9918 = vmatprep.subr.bf16.mxu0 0
    %9919 = vmatpush1.bf16.msra.mxu0 0
    %9920 = vmatprep.subr.bf16.mxu0 0
    %9921 = vmatpush1.bf16.msra.mxu0 0
    %9922 = vmatprep.subr.bf16.mxu0 0
    %9923 = vmatpush1.bf16.msra.mxu0 0
    %9924 = vmatprep.subr.bf16.mxu0 0
    %9925 = vmatpush1.bf16.msra.mxu0 0
    %9926 = vmatprep.subr.bf16.mxu0 0
    %9927 = vmatpush1.bf16.msra.mxu0 0
    %9928 = vmatprep.subr.bf16.mxu0 0
    %9929 = vmatpush1.bf16.msra.mxu0 0
    %9930 = vmatprep.mubr.bf16.mxu0 0
    %9931 = vmatmul.mubr.bf16.gmra.mrb[0].mxu0 %v7610
    %v9932 = vpop.f32.mrb[0].mxu0
    %v9933 = vadd.f32 0.0, %v9932
    %v9934 = vpop.f32.mrb[0].mxu0
    %v9935 = vadd.f32 0.0, %v9934
    %v9936 = vpop.f32.mrb[0].mxu0
    %v9937 = vadd.f32 0.0, %v9936
    %v9938 = vpop.f32.mrb[0].mxu0
    %v9939 = vadd.f32 0.0, %v9938
    %9940 = vmatprep.mubr.bf16.mxu0 0
    %9941 = vmatmul.mubr.bf16.gmra.mrb[0].mxu0 %v7617
    %v9942 = vpop.f32.mrb[0].mxu0
    %v9943 = vadd.f32 0.0, %v9942
    %v9944 = vpop.f32.mrb[0].mxu0
    %v9945 = vadd.f32 0.0, %v9944
    %v9946 = vpop.f32.mrb[0].mxu0
    %v9947 = vadd.f32 0.0, %v9946
    %v9948 = vpop.f32.mrb[0].mxu0
    %v9949 = vadd.f32 0.0, %v9948
    %9950 = vdwg.mxu0
    %9951 = vmatprep.subr.bf16.mxu0 %v9492
    %9952 = vmatpush1.bf16.msra.mxu0 %v9491
    %9953 = vmatprep.subr.bf16.mxu0 %v9508
    %9954 = vmatpush1.bf16.msra.mxu0 %v9507
    %9955 = vmatprep.subr.bf16.mxu0 %v9524
    %9956 = vmatpush1.bf16.msra.mxu0 %v9523
    %9957 = vmatprep.subr.bf16.mxu0 %v9540
    %9958 = vmatpush1.bf16.msra.mxu0 %v9539
    %9959 = vmatprep.subr.bf16.mxu0 %v9556
    %9960 = vmatpush1.bf16.msra.mxu0 %v9555
    %9961 = vmatprep.subr.bf16.mxu0 %v9572
    %9962 = vmatpush1.bf16.msra.mxu0 %v9571
    %9963 = vmatprep.subr.bf16.mxu0 %v9588
    %9964 = vmatpush1.bf16.msra.mxu0 %v9587
    %9965 = vmatprep.subr.bf16.mxu0 %v9604
    %9966 = vmatpush1.bf16.msra.mxu0 %v9603
    %9967 = vmatprep.subr.bf16.mxu0 0
    %9968 = vmatpush1.bf16.msra.mxu0 0
    %9969 = vmatprep.subr.bf16.mxu0 0
    %9970 = vmatpush1.bf16.msra.mxu0 0
    %9971 = vmatprep.subr.bf16.mxu0 0
    %9972 = vmatpush1.bf16.msra.mxu0 0
    %9973 = vmatprep.subr.bf16.mxu0 0
    %9974 = vmatpush1.bf16.msra.mxu0 0
    %9975 = vmatprep.subr.bf16.mxu0 0
    %9976 = vmatpush1.bf16.msra.mxu0 0
    %9977 = vmatprep.subr.bf16.mxu0 0
    %9978 = vmatpush1.bf16.msra.mxu0 0
    %9979 = vmatprep.subr.bf16.mxu0 0
    %9980 = vmatpush1.bf16.msra.mxu0 0
    %9981 = vmatprep.subr.bf16.mxu0 0
    %9982 = vmatpush1.bf16.msra.mxu0 0
    %9983 = vmatprep.mubr.bf16.mxu0 0
    %9984 = vmatmul.mubr.bf16.gmra.mrb[0].mxu0 %v7610
    %v9985 = vpop.f32.mrb[0].mxu0
    %v9986 = vadd.f32 0.0, %v9985
    %v9987 = vpop.f32.mrb[0].mxu0
    %v9988 = vadd.f32 0.0, %v9987
    %v9989 = vpop.f32.mrb[0].mxu0
    %v9990 = vadd.f32 0.0, %v9989
    %v9991 = vpop.f32.mrb[0].mxu0
    %v9992 = vadd.f32 0.0, %v9991
    %9993 = vmatprep.mubr.bf16.mxu0 0
    %9994 = vmatmul.mubr.bf16.gmra.mrb[0].mxu0 %v7617
    %v9995 = vpop.f32.mrb[0].mxu0
    %v9996 = vadd.f32 0.0, %v9995
    %v9997 = vpop.f32.mrb[0].mxu0
    %v9998 = vadd.f32 0.0, %v9997
    %v9999 = vpop.f32.mrb[0].mxu0
    %v10000 = vadd.f32 0.0, %v9999
    %v10001 = vpop.f32.mrb[0].mxu0
    %v10002 = vadd.f32 0.0, %v10001
    %10003 = vdwg.mxu0
    %10004 = vmatprep.subr.bf16.mxu0 %v9494
    %10005 = vmatpush1.bf16.msra.mxu0 %v9493
    %10006 = vmatprep.subr.bf16.mxu0 %v9510
    %10007 = vmatpush1.bf16.msra.mxu0 %v9509
    %10008 = vmatprep.subr.bf16.mxu0 %v9526
    %10009 = vmatpush1.bf16.msra.mxu0 %v9525
    %10010 = vmatprep.subr.bf16.mxu0 %v9542
    %10011 = vmatpush1.bf16.msra.mxu0 %v9541
    %10012 = vmatprep.subr.bf16.mxu0 %v9558
    %10013 = vmatpush1.bf16.msra.mxu0 %v9557
    %10014 = vmatprep.subr.bf16.mxu0 %v9574
    %10015 = vmatpush1.bf16.msra.mxu0 %v9573
    %10016 = vmatprep.subr.bf16.mxu0 %v9590
    %10017 = vmatpush1.bf16.msra.mxu0 %v9589
    %10018 = vmatprep.subr.bf16.mxu0 %v9606
    %10019 = vmatpush1.bf16.msra.mxu0 %v9605
    %10020 = vmatprep.subr.bf16.mxu0 0
    %10021 = vmatpush1.bf16.msra.mxu0 0
    %10022 = vmatprep.subr.bf16.mxu0 0
    %10023 = vmatpush1.bf16.msra.mxu0 0
    %10024 = vmatprep.subr.bf16.mxu0 0
    %10025 = vmatpush1.bf16.msra.mxu0 0
    %10026 = vmatprep.subr.bf16.mxu0 0
    %10027 = vmatpush1.bf16.msra.mxu0 0
    %10028 = vmatprep.subr.bf16.mxu0 0
    %10029 = vmatpush1.bf16.msra.mxu0 0
    %10030 = vmatprep.subr.bf16.mxu0 0
    %10031 = vmatpush1.bf16.msra.mxu0 0
    %10032 = vmatprep.subr.bf16.mxu0 0
    %10033 = vmatpush1.bf16.msra.mxu0 0
    %10034 = vmatprep.subr.bf16.mxu0 0
    %10035 = vmatpush1.bf16.msra.mxu0 0
    %10036 = vmatprep.mubr.bf16.mxu0 0
    %10037 = vmatmul.mubr.bf16.gmra.mrb[0].mxu0 %v7610
    %v10038 = vpop.f32.mrb[0].mxu0
    %v10039 = vadd.f32 0.0, %v10038
    %v10040 = vpop.f32.mrb[0].mxu0
    %v10041 = vadd.f32 0.0, %v10040
    %v10042 = vpop.f32.mrb[0].mxu0
    %v10043 = vadd.f32 0.0, %v10042
    %v10044 = vpop.f32.mrb[0].mxu0
    %v10045 = vadd.f32 0.0, %v10044
    %10046 = vmatprep.mubr.bf16.mxu0 0
    %10047 = vmatmul.mubr.bf16.gmra.mrb[0].mxu0 %v7617
    %v10048 = vpop.f32.mrb[0].mxu0
    %v10049 = vadd.f32 0.0, %v10048
    %v10050 = vpop.f32.mrb[0].mxu0
    %v10051 = vadd.f32 0.0, %v10050
    %v10052 = vpop.f32.mrb[0].mxu0
    %v10053 = vadd.f32 0.0, %v10052
    %v10054 = vpop.f32.mrb[0].mxu0
    %v10055 = vadd.f32 0.0, %v10054
    %10056 = vdwg.mxu0
    %10057 = vmatprep.subr.bf16.mxu0 %v9496
    %10058 = vmatpush1.bf16.msra.mxu0 %v9495
    %10059 = vmatprep.subr.bf16.mxu0 %v9512
    %10060 = vmatpush1.bf16.msra.mxu0 %v9511
    %10061 = vmatprep.subr.bf16.mxu0 %v9528
    %10062 = vmatpush1.bf16.msra.mxu0 %v9527
    %10063 = vmatprep.subr.bf16.mxu0 %v9544
    %10064 = vmatpush1.bf16.msra.mxu0 %v9543
    %10065 = vmatprep.subr.bf16.mxu0 %v9560
    %10066 = vmatpush1.bf16.msra.mxu0 %v9559
    %10067 = vmatprep.subr.bf16.mxu0 %v9576
    %10068 = vmatpush1.bf16.msra.mxu0 %v9575
    %10069 = vmatprep.subr.bf16.mxu0 %v9592
    %10070 = vmatpush1.bf16.msra.mxu0 %v9591
    %10071 = vmatprep.subr.bf16.mxu0 %v9608
    %10072 = vmatpush1.bf16.msra.mxu0 %v9607
    %10073 = vmatprep.subr.bf16.mxu0 0
    %10074 = vmatpush1.bf16.msra.mxu0 0
    %10075 = vmatprep.subr.bf16.mxu0 0
    %10076 = vmatpush1.bf16.msra.mxu0 0
    %10077 = vmatprep.subr.bf16.mxu0 0
    %10078 = vmatpush1.bf16.msra.mxu0 0
    %10079 = vmatprep.subr.bf16.mxu0 0
    %10080 = vmatpush1.bf16.msra.mxu0 0
    %10081 = vmatprep.subr.bf16.mxu0 0
    %10082 = vmatpush1.bf16.msra.mxu0 0
    %10083 = vmatprep.subr.bf16.mxu0 0
    %10084 = vmatpush1.bf16.msra.mxu0 0
    %10085 = vmatprep.subr.bf16.mxu0 0
    %10086 = vmatpush1.bf16.msra.mxu0 0
    %10087 = vmatprep.subr.bf16.mxu0 0
    %10088 = vmatpush1.bf16.msra.mxu0 0
    %10089 = vmatprep.mubr.bf16.mxu0 0
    %10090 = vmatmul.mubr.bf16.gmra.mrb[0].mxu0 %v7610
    %v10091 = vpop.f32.mrb[0].mxu0
    %v10092 = vadd.f32 0.0, %v10091
    %v10093 = vpop.f32.mrb[0].mxu0
    %v10094 = vadd.f32 0.0, %v10093
    %v10095 = vpop.f32.mrb[0].mxu0
    %v10096 = vadd.f32 0.0, %v10095
    %v10097 = vpop.f32.mrb[0].mxu0
    %v10098 = vadd.f32 0.0, %v10097
    %10099 = vmatprep.mubr.bf16.mxu0 0
    %10100 = vmatmul.mubr.bf16.gmra.mrb[0].mxu0 %v7617
    %v10101 = vpop.f32.mrb[0].mxu0
    %v10102 = vadd.f32 0.0, %v10101
    %v10103 = vpop.f32.mrb[0].mxu0
    %v10104 = vadd.f32 0.0, %v10103
    %v10105 = vpop.f32.mrb[0].mxu0
    %v10106 = vadd.f32 0.0, %v10105
    %v10107 = vpop.f32.mrb[0].mxu0
    %v10108 = vadd.f32 0.0, %v10107
    %10109 = vdwg.mxu0
    %10110 = vmatprep.subr.bf16.mxu0 %v9498
    %10111 = vmatpush1.bf16.msra.mxu0 %v9497
    %10112 = vmatprep.subr.bf16.mxu0 %v9514
    %10113 = vmatpush1.bf16.msra.mxu0 %v9513
    %10114 = vmatprep.subr.bf16.mxu0 %v9530
    %10115 = vmatpush1.bf16.msra.mxu0 %v9529
    %10116 = vmatprep.subr.bf16.mxu0 %v9546
    %10117 = vmatpush1.bf16.msra.mxu0 %v9545
    %10118 = vmatprep.subr.bf16.mxu0 %v9562
    %10119 = vmatpush1.bf16.msra.mxu0 %v9561
    %10120 = vmatprep.subr.bf16.mxu0 %v9578
    %10121 = vmatpush1.bf16.msra.mxu0 %v9577
    %10122 = vmatprep.subr.bf16.mxu0 %v9594
    %10123 = vmatpush1.bf16.msra.mxu0 %v9593
    %10124 = vmatprep.subr.bf16.mxu0 %v9610
    %10125 = vmatpush1.bf16.msra.mxu0 %v9609
    %10126 = vmatprep.subr.bf16.mxu0 0
    %10127 = vmatpush1.bf16.msra.mxu0 0
    %10128 = vmatprep.subr.bf16.mxu0 0
    %10129 = vmatpush1.bf16.msra.mxu0 0
    %10130 = vmatprep.subr.bf16.mxu0 0
    %10131 = vmatpush1.bf16.msra.mxu0 0
    %10132 = vmatprep.subr.bf16.mxu0 0
    %10133 = vmatpush1.bf16.msra.mxu0 0
    %10134 = vmatprep.subr.bf16.mxu0 0
    %10135 = vmatpush1.bf16.msra.mxu0 0
    %10136 = vmatprep.subr.bf16.mxu0 0
    %10137 = vmatpush1.bf16.msra.mxu0 0
    %10138 = vmatprep.subr.bf16.mxu0 0
    %10139 = vmatpush1.bf16.msra.mxu0 0
    %10140 = vmatprep.subr.bf16.mxu0 0
    %10141 = vmatpush1.bf16.msra.mxu0 0
    %10142 = vmatprep.mubr.bf16.mxu0 0
    %10143 = vmatmul.mubr.bf16.gmra.mrb[0].mxu0 %v7610
    %v10144 = vpop.f32.mrb[0].mxu0
    %v10145 = vadd.f32 0.0, %v10144
    %v10146 = vpop.f32.mrb[0].mxu0
    %v10147 = vadd.f32 0.0, %v10146
    %v10148 = vpop.f32.mrb[0].mxu0
    %v10149 = vadd.f32 0.0, %v10148
    %v10150 = vpop.f32.mrb[0].mxu0
    %v10151 = vadd.f32 0.0, %v10150
    %10152 = vmatprep.mubr.bf16.mxu0 0
    %10153 = vmatmul.mubr.bf16.gmra.mrb[0].mxu0 %v7617
    %v10154 = vpop.f32.mrb[0].mxu0
    %v10155 = vadd.f32 0.0, %v10154
    %v10156 = vpop.f32.mrb[0].mxu0
    %v10157 = vadd.f32 0.0, %v10156
    %v10158 = vpop.f32.mrb[0].mxu0
    %v10159 = vadd.f32 0.0, %v10158
    %v10160 = vpop.f32.mrb[0].mxu0
    %v10161 = vadd.f32 0.0, %v10160
    %10162 = vdwg.mxu0
    %v10163 = vld [vmem:[%s0 + $0x80] sm:$0xff]
    %v10164 = vld [vmem:[%s0 + $0x88] sm:$0xff]
    %v10165 = vld [vmem:[%s0 + $0x90] sm:$0xff]
    %v10166 = vld [vmem:[%s0 + $0x98] sm:$0xff]
    %v10167 = vld [vmem:[%s0 + $0xa0] sm:$0xff]
    %v10168 = vld [vmem:[%s0 + $0xa8] sm:$0xff]
    %v10169 = vld [vmem:[%s0 + $0xb0] sm:$0xff]
    %v10170 = vld [vmem:[%s0 + $0xb8] sm:$0xff]
    %v10171 = vld [vmem:[%s0 + $0xc0] sm:$0xff]
    %v10172 = vld [vmem:[%s0 + $0xc8] sm:$0xff]
    %v10173 = vld [vmem:[%s0 + $0xd0] sm:$0xff]
    %v10174 = vld [vmem:[%s0 + $0xd8] sm:$0xff]
    %v10175 = vld [vmem:[%s0 + $0xe0] sm:$0xff]
    %v10176 = vld [vmem:[%s0 + $0xe8] sm:$0xff]
    %v10177 = vld [vmem:[%s0 + $0xf0] sm:$0xff]
    %v10178 = vld [vmem:[%s0 + $0xf8] sm:$0xff]
    %v10179 = vld [vmem:[%s0 + $0x180] sm:$0xff]
    %v10180 = vld [vmem:[%s0 + $0x188] sm:$0xff]
    %v10181 = vld [vmem:[%s0 + $0x190] sm:$0xff]
    %v10182 = vld [vmem:[%s0 + $0x198] sm:$0xff]
    %v10183 = vld [vmem:[%s0 + $0x1a0] sm:$0xff]
    %v10184 = vld [vmem:[%s0 + $0x1a8] sm:$0xff]
    %v10185 = vld [vmem:[%s0 + $0x1b0] sm:$0xff]
    %v10186 = vld [vmem:[%s0 + $0x1b8] sm:$0xff]
    %v10187 = vld [vmem:[%s0 + $0x1c0] sm:$0xff]
    %v10188 = vld [vmem:[%s0 + $0x1c8] sm:$0xff]
    %v10189 = vld [vmem:[%s0 + $0x1d0] sm:$0xff]
    %v10190 = vld [vmem:[%s0 + $0x1d8] sm:$0xff]
    %v10191 = vld [vmem:[%s0 + $0x1e0] sm:$0xff]
    %v10192 = vld [vmem:[%s0 + $0x1e8] sm:$0xff]
    %v10193 = vld [vmem:[%s0 + $0x1f0] sm:$0xff]
    %v10194 = vld [vmem:[%s0 + $0x1f8] sm:$0xff]
    %v10195 = vadd.f32 %v10163, %v9774
    %v10196 = vadd.f32 %v10164, %v9776
    %v10197 = vadd.f32 %v10165, %v9827
    %v10198 = vadd.f32 %v10166, %v9829
    %v10199 = vadd.f32 %v10167, %v9880
    %v10200 = vadd.f32 %v10168, %v9882
    %v10201 = vadd.f32 %v10169, %v9933
    %v10202 = vadd.f32 %v10170, %v9935
    %v10203 = vadd.f32 %v10171, %v9986
    %v10204 = vadd.f32 %v10172, %v9988
    %v10205 = vadd.f32 %v10173, %v10039
    %v10206 = vadd.f32 %v10174, %v10041
    %v10207 = vadd.f32 %v10175, %v10092
    %v10208 = vadd.f32 %v10176, %v10094
    %v10209 = vadd.f32 %v10177, %v10145
    %v10210 = vadd.f32 %v10178, %v10147
    %v10211 = vadd.f32 %v10179, %v9778
    %v10212 = vadd.f32 %v10180, %v9780
    %v10213 = vadd.f32 %v10181, %v9831
    %v10214 = vadd.f32 %v10182, %v9833
    %v10215 = vadd.f32 %v10183, %v9884
    %v10216 = vadd.f32 %v10184, %v9886
    %v10217 = vadd.f32 %v10185, %v9937
    %v10218 = vadd.f32 %v10186, %v9939
    %v10219 = vadd.f32 %v10187, %v9990
    %v10220 = vadd.f32 %v10188, %v9992
    %v10221 = vadd.f32 %v10189, %v10043
    %v10222 = vadd.f32 %v10190, %v10045
    %v10223 = vadd.f32 %v10191, %v10096
    %v10224 = vadd.f32 %v10192, %v10098
    %v10225 = vadd.f32 %v10193, %v10149
    %v10226 = vadd.f32 %v10194, %v10151
    %v10227 = vmul.f32 %v10163, %v10195
    %v10228 = vmul.f32 %v10164, %v10196
    %v10229 = vmul.f32 %v10165, %v10197
    %v10230 = vmul.f32 %v10166, %v10198
    %v10231 = vmul.f32 %v10167, %v10199
    %v10232 = vmul.f32 %v10168, %v10200
    %v10233 = vmul.f32 %v10169, %v10201
    %v10234 = vmul.f32 %v10170, %v10202
    %v10235 = vmul.f32 %v10171, %v10203
    %v10236 = vmul.f32 %v10172, %v10204
    %v10237 = vmul.f32 %v10173, %v10205
    %v10238 = vmul.f32 %v10174, %v10206
    %v10239 = vmul.f32 %v10175, %v10207
    %v10240 = vmul.f32 %v10176, %v10208
    %v10241 = vmul.f32 %v10177, %v10209
    %v10242 = vmul.f32 %v10178, %v10210
    %v10243 = vmul.f32 %v10179, %v10211
    %v10244 = vmul.f32 %v10180, %v10212
    %v10245 = vmul.f32 %v10181, %v10213
    %v10246 = vmul.f32 %v10182, %v10214
    %v10247 = vmul.f32 %v10183, %v10215
    %v10248 = vmul.f32 %v10184, %v10216
    %v10249 = vmul.f32 %v10185, %v10217
    %v10250 = vmul.f32 %v10186, %v10218
    %v10251 = vmul.f32 %v10187, %v10219
    %v10252 = vmul.f32 %v10188, %v10220
    %v10253 = vmul.f32 %v10189, %v10221
    %v10254 = vmul.f32 %v10190, %v10222
    %v10255 = vmul.f32 %v10191, %v10223
    %v10256 = vmul.f32 %v10192, %v10224
    %v10257 = vmul.f32 %v10193, %v10225
    %v10258 = vmul.f32 %v10194, %v10226
    %v10259 = vadd.f32 %v10227, %v9784
    %v10260 = vadd.f32 %v10228, %v9786
    %v10261 = vadd.f32 %v10229, %v9837
    %v10262 = vadd.f32 %v10230, %v9839
    %v10263 = vadd.f32 %v10231, %v9890
    %v10264 = vadd.f32 %v10232, %v9892
    %v10265 = vadd.f32 %v10233, %v9943
    %v10266 = vadd.f32 %v10234, %v9945
    %v10267 = vadd.f32 %v10235, %v9996
    %v10268 = vadd.f32 %v10236, %v9998
    %v10269 = vadd.f32 %v10237, %v10049
    %v10270 = vadd.f32 %v10238, %v10051
    %v10271 = vadd.f32 %v10239, %v10102
    %v10272 = vadd.f32 %v10240, %v10104
    %v10273 = vadd.f32 %v10241, %v10155
    %v10274 = vadd.f32 %v10242, %v10157
    %v10275 = vadd.f32 %v10243, %v9788
    %v10276 = vadd.f32 %v10244, %v9790
    %v10277 = vadd.f32 %v10245, %v9841
    %v10278 = vadd.f32 %v10246, %v9843
    %v10279 = vadd.f32 %v10247, %v9894
    %v10280 = vadd.f32 %v10248, %v9896
    %v10281 = vadd.f32 %v10249, %v9947
    %v10282 = vadd.f32 %v10250, %v9949
    %v10283 = vadd.f32 %v10251, %v10000
    %v10284 = vadd.f32 %v10252, %v10002
    %v10285 = vadd.f32 %v10253, %v10053
    %v10286 = vadd.f32 %v10254, %v10055
    %v10287 = vadd.f32 %v10255, %v10106
    %v10288 = vadd.f32 %v10256, %v10108
    %v10289 = vadd.f32 %v10257, %v10159
    %v10290 = vadd.f32 %v10258, %v10161
    %10291 = vst [vmem:[#allocation5 + $0x80] sm:$0xff] %v10259
    %10292 = vst [vmem:[#allocation5 + $0x88] sm:$0xff] %v10260
    %10293 = vst [vmem:[#allocation5 + $0x90] sm:$0xff] %v10261
    %10294 = vst [vmem:[#allocation5 + $0x98] sm:$0xff] %v10262
    %10295 = vst [vmem:[#allocation5 + $0xa0] sm:$0xff] %v10263
    %10296 = vst [vmem:[#allocation5 + $0xa8] sm:$0xff] %v10264
    %10297 = vst [vmem:[#allocation5 + $0xb0] sm:$0xff] %v10265
    %10298 = vst [vmem:[#allocation5 + $0xb8] sm:$0xff] %v10266
    %10299 = vst [vmem:[#allocation5 + $0xc0] sm:$0xff] %v10267
    %10300 = vst [vmem:[#allocation5 + $0xc8] sm:$0xff] %v10268
    %10301 = vst [vmem:[#allocation5 + $0xd0] sm:$0xff] %v10269
    %10302 = vst [vmem:[#allocation5 + $0xd8] sm:$0xff] %v10270
    %10303 = vst [vmem:[#allocation5 + $0xe0] sm:$0xff] %v10271
    %10304 = vst [vmem:[#allocation5 + $0xe8] sm:$0xff] %v10272
    %10305 = vst [vmem:[#allocation5 + $0xf0] sm:$0xff] %v10273
    %10306 = vst [vmem:[#allocation5 + $0xf8] sm:$0xff] %v10274
    %10307 = vst [vmem:[#allocation5 + $0x180] sm:$0xff] %v10275
    %10308 = vst [vmem:[#allocation5 + $0x188] sm:$0xff] %v10276
    %10309 = vst [vmem:[#allocation5 + $0x190] sm:$0xff] %v10277
    %10310 = vst [vmem:[#allocation5 + $0x198] sm:$0xff] %v10278
    %10311 = vst [vmem:[#allocation5 + $0x1a0] sm:$0xff] %v10279
    %10312 = vst [vmem:[#allocation5 + $0x1a8] sm:$0xff] %v10280
    %10313 = vst [vmem:[#allocation5 + $0x1b0] sm:$0xff] %v10281
    %10314 = vst [vmem:[#allocation5 + $0x1b8] sm:$0xff] %v10282
    %10315 = vst [vmem:[#allocation5 + $0x1c0] sm:$0xff] %v10283
    %10316 = vst [vmem:[#allocation5 + $0x1c8] sm:$0xff] %v10284
    %10317 = vst [vmem:[#allocation5 + $0x1d0] sm:$0xff] %v10285
    %10318 = vst [vmem:[#allocation5 + $0x1d8] sm:$0xff] %v10286
    %10319 = vst [vmem:[#allocation5 + $0x1e0] sm:$0xff] %v10287
    %10320 = vst [vmem:[#allocation5 + $0x1e8] sm:$0xff] %v10288
    %10321 = vst [vmem:[#allocation5 + $0x1f0] sm:$0xff] %v10289
    %10322 = vst [vmem:[#allocation5 + $0x1f8] sm:$0xff] %v10290
    // Predicated region
    $region30: #{tpu_custom_call.1} parent=1 // pred_check
      _
    $region31: #{tpu_custom_call.1} parent=1 // pred_check_branch
      %10324 = sbr.rel (0) target = $region33
    $region32: #{tpu_custom_call.1} parent=1 // pred_region
      %s10326 = ssub.s32 8192, 8192
      %10327 = vsyncadd [#allocation3], %s10326
      %s10328 = sshll.u32 [#allocation5], 4
      %s10329 = int_to_ptr.vmem [resolvable:$true] %s10328
      %10334 = dma.vmem_to_hbm [thread:$0]  %s10329, 8192, %s6, [#allocation3], 4096, 4096, 256
    $region33: #{tpu_custom_call.1} parent=1 // pred_fallthru
      _
    // Predicated region
    $region34: #{tpu_custom_call.1} parent=1 // pred_check
      _
    $region35: #{tpu_custom_call.1} parent=1 // pred_check_branch
      %10336 = sbr.rel (0) target = $region37
    $region36: #{tpu_custom_call.1} parent=1 // pred_region
      %10337 = dma.done [#allocation3], 8192
    $region37: #{tpu_custom_call.1} parent=1 // pred_fallthru
      _
    %10338 = vsyncpa [#allocation3], 1
    %10339 = vsyncpa [#allocation4], 1

</llo_original>
